<compile_context>
chip_gen: v6e
topology: v6e:2x2x1
jax: 0.10.0
libtpu: 0.0.40
codegen_flags: <defaults>
</compile_context>

<pallas_src>
import jax
import jax.numpy as jnp
from jax import lax
from jax.experimental import pallas as pl
from jax.experimental.pallas import tpu as pltpu


# ----------------------------- one-time parameter preparation --------------------------

def _flatten_conv_w(w_oihw):
    """(C_out, C_in, 3, 3) -> (C_out, 9*C_in), column order (di*3+dj)*C_in + c_in."""
    c_out, c_in, kh, kw = w_oihw.shape
    return jnp.transpose(w_oihw, (0, 2, 3, 1)).reshape(c_out, kh * kw * c_in)


def prepare_params(torch_params, *, w, h):
    """One-time layout transforms, kept out of the per-call hot path."""
    p = {"conv1": _flatten_conv_w(torch_params["conv1.weight"]).astype(jnp.float32)}
    for n in range(1, 5):
        p[f"layer{n}.conv1"] = _flatten_conv_w(
            torch_params[f"layer{n}.0.conv1.weight"]).astype(jnp.float32)
        p[f"layer{n}.conv2"] = _flatten_conv_w(
            torch_params[f"layer{n}.0.conv2.weight"]).astype(jnp.float32)
    n_out = 10 * w * h
    wt = torch_params["linear.weight"].astype(jnp.float32).T        # (8*w*h, 10*w*h)
    # Per-channel blocks: wT3[c, k, n] == W.T[c*w*h + k, n]; bf16 storage (f32 accum).
    p["linear.wT3"] = wt.reshape(8, w * h, n_out).astype(jnp.bfloat16)
    p["linear.bias"] = torch_params["linear.bias"].astype(jnp.float32).reshape(1, n_out)
    return p


def _pad_crop(x_chw, target_w, target_h):
    # TODO(synk): pad_crop() lives outside the provided module; implemented here as
    # crop-then-trailing-zero-pad to (target_w, target_h).  No-op at the demo shape.
    x_chw = x_chw[:, :min(x_chw.shape[1], target_w), :min(x_chw.shape[2], target_h)]
    pw = target_w - x_chw.shape[1]
    ph = target_h - x_chw.shape[2]
    return jnp.pad(x_chw, ((0, 0), (0, pw), (0, ph)))


# ----------------------------- fused Pallas kernel -------------------------------------

def _make_fused_kernel(w, h):
    """Build the fully-fused forward kernel for a fixed (w, h)."""
    W, H = w, h
    C1_IN, C = 10, 8
    s1 = H + 2           # row stride of the pad=1 / pad=0 canvases (W x H outputs)
    s2 = H + 4           # row stride of the pad=2 canvas ((W+2) x (H+2) outputs)

    def conv_taps(pad_val, w_ref, cin, stride, out0, out1):
        """3x3 conv as 9 accumulated MXU matmuls over static lane-shifted slices.

        pad_val: (cin, (out0+2)*stride) flattened zero-padded input canvas.
        w_ref:   (cout, 9*cin) flattened weight, column order (d0*3+d1)*cin + c.
        Returns (cout, L) with lane index y*stride + x (columns x >= out1 are junk).
        """
        L = (out0 - 1) * stride + out1
        acc = None
        for d0 in range(3):
            for d1 in range(3):
                t = d0 * 3 + d1
                wt = w_ref[:, t * cin:(t + 1) * cin]                       # (cout, cin)
                at = pad_val[:, d0 * stride + d1: d0 * stride + d1 + L]    # (cin, L)
                part = jnp.dot(wt, at, preferred_element_type=jnp.float32)
                acc = part if acc is None else acc + part
        return acc

    def kernel(x_ref, wc1_ref,
               w11_ref, w12_ref, w21_ref, w22_ref,
               w31_ref, w32_ref, w41_ref, w42_ref,
               wt_ref, b_ref, o_ref,
               pad1_ref, padA_ref, padB_ref, feat_ref):
        # Zero the two zero-padded canvases once; their borders stay zero forever and
        # their interiors are fully rewritten before every use.
        pad1_ref[...] = jnp.zeros_like(pad1_ref)
        padA_ref[...] = jnp.zeros_like(padA_ref)

        # ---- place the (10, W, H) input into the pad=1 canvas -------------------------
        x_val = x_ref[...]                                           # (10, W*H)
        for y in range(W):
            pad1_ref[:, (y + 1) * s1 + 1:(y + 1) * s1 + 1 + H] = x_val[:, y * H:y * H + H]

        # ---- conv1 (10->8, pad=1) + ReLU -> interior of the pad=2 canvas --------------
        acc = jnp.maximum(conv_taps(pad1_ref[...], wc1_ref, C1_IN, s1, W, H), 0.0)
        for y in range(W):
            padA_ref[:, (y + 2) * s2 + 2:(y + 2) * s2 + 2 + H] = acc[:, y * s1:y * s1 + H]

        # ---- 4 BasicBlocks -------------------------------------------------------------
        block_ws = [(w11_ref, w12_ref), (w21_ref, w22_ref),
                    (w31_ref, w32_ref), (w41_ref, w42_ref)]
        for n, (wb1_ref, wb2_ref) in enumerate(block_ws):
            pad_a = padA_ref[...]            # block input (also the identity shortcut)

            # conv1 (pad=2) + ReLU -> pad=0 canvas (covers the full (W+2, H+2) map)
            acc1 = jnp.maximum(conv_taps(pad_a, wb1_ref, C, s2, W + 2, H + 2), 0.0)
            for y in range(W + 2):
                padB_ref[:, y * s1:y * s1 + s1] = acc1[:, y * s2:y * s2 + s1]

            # conv2 (pad=0)
            acc2 = conv_taps(padB_ref[...], wb2_ref, C, s1, W, H)

            # + identity, ReLU; write either into the next block's canvas or into feat.
            last = n == len(block_ws) - 1
            for y in range(W):
                ident = pad_a[:, (y + 2) * s2 + 2:(y + 2) * s2 + 2 + H]
                row = jnp.maximum(acc2[:, y * s1:y * s1 + H] + ident, 0.0)
                if last:
                    feat_ref[:, y * H:y * H + H] = row
                else:
                    padA_ref[:, (y + 2) * s2 + 2:(y + 2) * s2 + 2 + H] = row

        # ---- linear: y = flatten(feat)[c-major] @ W^T + b ------------------------------
        # Computed as 8 per-channel (1, W*H) @ (W*H, 10*W*H) bf16 matmuls with f32
        # accumulation (avoids an in-kernel (8, W*H) -> (1, 8*W*H) relayout).
        y = b_ref[...]                                               # (1, 10*W*H) f32
        for c in range(C):
            row_bf = feat_ref[c:c + 1, :].astype(jnp.bfloat16)       # (1, W*H)
            y = y + jnp.dot(row_bf, wt_ref[c], preferred_element_type=jnp.float32)
        o_ref[...] = y.astype(o_ref.dtype)                           # single lane-dense store

    return kernel


def make_resnet_forward(w, h):
    kernel = _make_fused_kernel(w, h)
    n_out = 10 * w * h
    n_inputs = 12   # x + 9 conv weights + linear wT3 + bias

    fused = pl.pallas_call(
        kernel,
        out_shape=jax.ShapeDtypeStruct((1, n_out), jnp.float32),
        in_specs=[pl.BlockSpec(memory_space=pltpu.MemorySpace.VMEM)
                  for _ in range(n_inputs)],
        out_specs=pl.BlockSpec(memory_space=pltpu.MemorySpace.VMEM),
        scratch_shapes=[
            pltpu.VMEM((10, (w + 2) * (h + 2)), jnp.float32),   # pad=1 canvas (conv1 in)
            pltpu.VMEM((8, (w + 4) * (h + 4)), jnp.float32),    # pad=2 canvas (block conv1 in)
            pltpu.VMEM((8, (w + 2) * (h + 2)), jnp.float32),    # pad=0 canvas (block conv2 in)
            pltpu.VMEM((8, w * h), jnp.float32),                # final features (c, y*h+x)
        ],
    )

    def forward(x, params):
        """x: (10, input_w, input_h); returns (1, 10, w, h) like the torch module."""
        x = _pad_crop(x, w, h)                        # (10, w, h)
        x2d = x.reshape(10, w * h)
        conv_ws = [params["conv1"]]
        for n in range(1, 5):
            conv_ws += [params[f"layer{n}.conv1"], params[f"layer{n}.conv2"]]
        y = fused(x2d, *conv_ws, params["linear.wT3"], params["linear.bias"])
        return y.reshape(1, 10, w, h)

    return forward


# ----------------------------- pure-JAX reference of the torch forward -----------------

def _conv2d_ref(x_nchw, w_oihw, padding):
    return lax.conv_general_dilated(
        x_nchw, w_oihw, window_strides=(1, 1),
        padding=[(padding, padding), (padding, padding)],
        dimension_numbers=("NCHW", "OIHW", "NCHW"),
        precision=lax.Precision.HIGHEST)


def resnet_forward_ref(x, torch_params, *, w, h):
    xb = _pad_crop(x, w, h)[None]                     # (1, 10, w, h)
    out = jax.nn.relu(_conv2d_ref(xb, torch_params["conv1.weight"], 1))
    for n in range(1, 5):
        identity = out
        o = jax.nn.relu(_conv2d_ref(out, torch_params[f"layer{n}.0.conv1.weight"], 2))
        o = _conv2d_ref(o, torch_params[f"layer{n}.0.conv2.weight"], 0)
        out = jax.nn.relu(o + identity)
    flat = out.reshape(1, -1)
    y = jnp.dot(flat, torch_params["linear.weight"].T,
                precision=lax.Precision.HIGHEST) + torch_params["linear.bias"]
    return y.reshape(1, 10, w, h)


# ----------------------------- demo / self-check ---------------------------------------

if __name__ == "__main__":
    W_SP, H_SP = 8, 8                    # largest_w, largest_h ; small shapes
    C_IN = 10
    N_IN, N_OUT = 8 * W_SP * H_SP, 10 * W_SP * H_SP     # 512 -> 640

    key = jax.random.PRNGKey(0)
    keys = jax.random.split(key, 16)

    def conv_w(k, c_out, c_in):
        fan_in = c_in * 9
        return jax.random.normal(k, (c_out, c_in, 3, 3), jnp.float32) * jnp.sqrt(2.0 / fan_in)

    torch_params = {"conv1.weight": conv_w(keys[0], 8, C_IN)}
    ki = 1
    for n in range(1, 5):
        torch_params[f"layer{n}.0.conv1.weight"] = conv_w(keys[ki], 8, 8); ki += 1
        torch_params[f"layer{n}.0.conv2.weight"] = conv_w(keys[ki], 8, 8); ki += 1
    bound = 1.0 / jnp.sqrt(jnp.float32(N_IN))
    torch_params["linear.weight"] = jax.random.uniform(
        keys[ki], (N_OUT, N_IN), jnp.float32, -bound, bound); ki += 1
    torch_params["linear.bias"] = jax.random.uniform(
        keys[ki], (N_OUT,), jnp.float32, -bound, bound); ki += 1

    x = jax.random.normal(keys[ki], (C_IN, W_SP, H_SP), jnp.float32)

    params = prepare_params(torch_params, w=W_SP, h=H_SP)   # one-time layout + bf16 cast
    fwd = jax.jit(make_resnet_forward(W_SP, H_SP))

    out = jax.block_until_ready(fwd(x, params))
    ref = resnet_forward_ref(x, torch_params, w=W_SP, h=H_SP)

    assert out.shape == (1, 10, W_SP, H_SP)
    # Tolerance accounts for the bf16 storage of the linear weight / activations
    # (f32 accumulation) over the 512-deep reduction; convs are f32.
    assert jnp.allclose(out, ref, atol=3e-2, rtol=2e-2), "mismatch vs pure-JAX reference"
    print("KERNEL_OK")
</pallas_src>

<mosaic_0001>
module attributes {stable_mosaic.version = 11 : i64} {
  func.func @kernel(%arg0: memref<10x64xf32, #tpu.memory_space<vmem>>, %arg1: memref<8x90xf32, #tpu.memory_space<vmem>>, %arg2: memref<8x72xf32, #tpu.memory_space<vmem>>, %arg3: memref<8x72xf32, #tpu.memory_space<vmem>>, %arg4: memref<8x72xf32, #tpu.memory_space<vmem>>, %arg5: memref<8x72xf32, #tpu.memory_space<vmem>>, %arg6: memref<8x72xf32, #tpu.memory_space<vmem>>, %arg7: memref<8x72xf32, #tpu.memory_space<vmem>>, %arg8: memref<8x72xf32, #tpu.memory_space<vmem>>, %arg9: memref<8x72xf32, #tpu.memory_space<vmem>>, %arg10: memref<8x64x640xbf16, #tpu.memory_space<vmem>>, %arg11: memref<1x640xf32, #tpu.memory_space<vmem>>, %arg12: memref<1x640xf32, #tpu.memory_space<vmem>>, %arg13: memref<10x100xf32, #tpu.memory_space<vmem>>, %arg14: memref<8x144xf32, #tpu.memory_space<vmem>>, %arg15: memref<8x100xf32, #tpu.memory_space<vmem>>, %arg16: memref<8x64xf32, #tpu.memory_space<vmem>>) attributes {dimension_semantics = [], scalar_prefetch = 0 : i64, scratch_operands = 4 : i64, tpu.core_type = #tpu.core_type<tc>} {
    %cst = arith.constant 0.000000e+00 : f32
    %0 = vector.broadcast %cst : f32 to vector<10x100xf32>
    %c0 = arith.constant 0 : index
    %c0_0 = arith.constant 0 : index
    %1 = vector.load %arg13[%c0, %c0_0] : memref<10x100xf32, #tpu.memory_space<vmem>>, vector<10x100xf32>
    tpu.vector_store %arg13[%c0, %c0_0], %0 {strides = array<i32>} : memref<10x100xf32, #tpu.memory_space<vmem>>, vector<10x100xf32>,
    %cst_1 = arith.constant 0.000000e+00 : f32
    %2 = vector.broadcast %cst_1 : f32 to vector<8x144xf32>
    %c0_2 = arith.constant 0 : index
    %c0_3 = arith.constant 0 : index
    %3 = vector.load %arg14[%c0_2, %c0_3] : memref<8x144xf32, #tpu.memory_space<vmem>>, vector<8x144xf32>
    tpu.vector_store %arg14[%c0_2, %c0_3], %2 {strides = array<i32>} : memref<8x144xf32, #tpu.memory_space<vmem>>, vector<8x144xf32>,
    %c0_4 = arith.constant 0 : index
    %c0_5 = arith.constant 0 : index
    %4 = vector.load %arg0[%c0_4, %c0_5] : memref<10x64xf32, #tpu.memory_space<vmem>>, vector<10x64xf32>
    %5 = vector.extract_strided_slice %4 {offsets = [0, 0], sizes = [10, 8], strides = [1, 1]} : vector<10x64xf32> to vector<10x8xf32>
    %c0_6 = arith.constant 0 : index
    %c11 = arith.constant 11 : index
    %6 = vector.load %arg13[%c0_6, %c11] : memref<10x100xf32, #tpu.memory_space<vmem>>, vector<10x8xf32>
    tpu.vector_store %arg13[%c0_6, %c11], %5 {strides = array<i32>} : memref<10x100xf32, #tpu.memory_space<vmem>>, vector<10x8xf32>,
    %7 = vector.extract_strided_slice %4 {offsets = [0, 8], sizes = [10, 8], strides = [1, 1]} : vector<10x64xf32> to vector<10x8xf32>
    %c0_7 = arith.constant 0 : index
    %c21 = arith.constant 21 : index
    %8 = vector.load %arg13[%c0_7, %c21] : memref<10x100xf32, #tpu.memory_space<vmem>>, vector<10x8xf32>
    tpu.vector_store %arg13[%c0_7, %c21], %7 {strides = array<i32>} : memref<10x100xf32, #tpu.memory_space<vmem>>, vector<10x8xf32>,
    %9 = vector.extract_strided_slice %4 {offsets = [0, 16], sizes = [10, 8], strides = [1, 1]} : vector<10x64xf32> to vector<10x8xf32>
    %c0_8 = arith.constant 0 : index
    %c31 = arith.constant 31 : index
    %10 = vector.load %arg13[%c0_8, %c31] : memref<10x100xf32, #tpu.memory_space<vmem>>, vector<10x8xf32>
    tpu.vector_store %arg13[%c0_8, %c31], %9 {strides = array<i32>} : memref<10x100xf32, #tpu.memory_space<vmem>>, vector<10x8xf32>,
    %11 = vector.extract_strided_slice %4 {offsets = [0, 24], sizes = [10, 8], strides = [1, 1]} : vector<10x64xf32> to vector<10x8xf32>
    %c0_9 = arith.constant 0 : index
    %c41 = arith.constant 41 : index
    %12 = vector.load %arg13[%c0_9, %c41] : memref<10x100xf32, #tpu.memory_space<vmem>>, vector<10x8xf32>
    tpu.vector_store %arg13[%c0_9, %c41], %11 {strides = array<i32>} : memref<10x100xf32, #tpu.memory_space<vmem>>, vector<10x8xf32>,
    %13 = vector.extract_strided_slice %4 {offsets = [0, 32], sizes = [10, 8], strides = [1, 1]} : vector<10x64xf32> to vector<10x8xf32>
    %c0_10 = arith.constant 0 : index
    %c51 = arith.constant 51 : index
    %14 = vector.load %arg13[%c0_10, %c51] : memref<10x100xf32, #tpu.memory_space<vmem>>, vector<10x8xf32>
    tpu.vector_store %arg13[%c0_10, %c51], %13 {strides = array<i32>} : memref<10x100xf32, #tpu.memory_space<vmem>>, vector<10x8xf32>,
    %15 = vector.extract_strided_slice %4 {offsets = [0, 40], sizes = [10, 8], strides = [1, 1]} : vector<10x64xf32> to vector<10x8xf32>
    %c0_11 = arith.constant 0 : index
    %c61 = arith.constant 61 : index
    %16 = vector.load %arg13[%c0_11, %c61] : memref<10x100xf32, #tpu.memory_space<vmem>>, vector<10x8xf32>
    tpu.vector_store %arg13[%c0_11, %c61], %15 {strides = array<i32>} : memref<10x100xf32, #tpu.memory_space<vmem>>, vector<10x8xf32>,
    %17 = vector.extract_strided_slice %4 {offsets = [0, 48], sizes = [10, 8], strides = [1, 1]} : vector<10x64xf32> to vector<10x8xf32>
    %c0_12 = arith.constant 0 : index
    %c71 = arith.constant 71 : index
    %18 = vector.load %arg13[%c0_12, %c71] : memref<10x100xf32, #tpu.memory_space<vmem>>, vector<10x8xf32>
    tpu.vector_store %arg13[%c0_12, %c71], %17 {strides = array<i32>} : memref<10x100xf32, #tpu.memory_space<vmem>>, vector<10x8xf32>,
    %19 = vector.extract_strided_slice %4 {offsets = [0, 56], sizes = [10, 8], strides = [1, 1]} : vector<10x64xf32> to vector<10x8xf32>
    %c0_13 = arith.constant 0 : index
    %c81 = arith.constant 81 : index
    %20 = vector.load %arg13[%c0_13, %c81] : memref<10x100xf32, #tpu.memory_space<vmem>>, vector<10x8xf32>
    tpu.vector_store %arg13[%c0_13, %c81], %19 {strides = array<i32>} : memref<10x100xf32, #tpu.memory_space<vmem>>, vector<10x8xf32>,
    %c0_14 = arith.constant 0 : index
    %c0_15 = arith.constant 0 : index
    %21 = vector.load %arg13[%c0_14, %c0_15] : memref<10x100xf32, #tpu.memory_space<vmem>>, vector<10x100xf32>
    %c0_16 = arith.constant 0 : index
    %c0_17 = arith.constant 0 : index
    %22 = vector.load %arg1[%c0_16, %c0_17] : memref<8x90xf32, #tpu.memory_space<vmem>>, vector<8x10xf32>
    %23 = vector.extract_strided_slice %21 {offsets = [0, 0], sizes = [10, 78], strides = [1, 1]} : vector<10x100xf32> to vector<10x78xf32>
    %cst_18 = arith.constant dense<0.000000e+00> : vector<8x78xf32>
    %24 = tpu.matmul %22, %23, %cst_18 {dimension_numbers = #tpu.dot_dimension_numbers<[1], [0], [0], [1], [0, 0, 1, 1], [], []>} : vector<8x10xf32>, vector<10x78xf32>, vector<8x78xf32> -> vector<8x78xf32>
    %c0_19 = arith.constant 0 : index
    %c10 = arith.constant 10 : index
    %25 = vector.load %arg1[%c0_19, %c10] : memref<8x90xf32, #tpu.memory_space<vmem>>, vector<8x10xf32>
    %26 = vector.extract_strided_slice %21 {offsets = [0, 1], sizes = [10, 78], strides = [1, 1]} : vector<10x100xf32> to vector<10x78xf32>
    %cst_20 = arith.constant dense<0.000000e+00> : vector<8x78xf32>
    %27 = tpu.matmul %25, %26, %cst_20 {dimension_numbers = #tpu.dot_dimension_numbers<[1], [0], [0], [1], [0, 0, 1, 1], [], []>} : vector<8x10xf32>, vector<10x78xf32>, vector<8x78xf32> -> vector<8x78xf32>
    %28 = arith.addf %24, %27 : vector<8x78xf32>
    %c0_21 = arith.constant 0 : index
    %c20 = arith.constant 20 : index
    %29 = vector.load %arg1[%c0_21, %c20] : memref<8x90xf32, #tpu.memory_space<vmem>>, vector<8x10xf32>
    %30 = vector.extract_strided_slice %21 {offsets = [0, 2], sizes = [10, 78], strides = [1, 1]} : vector<10x100xf32> to vector<10x78xf32>
    %cst_22 = arith.constant dense<0.000000e+00> : vector<8x78xf32>
    %31 = tpu.matmul %29, %30, %cst_22 {dimension_numbers = #tpu.dot_dimension_numbers<[1], [0], [0], [1], [0, 0, 1, 1], [], []>} : vector<8x10xf32>, vector<10x78xf32>, vector<8x78xf32> -> vector<8x78xf32>
    %32 = arith.addf %28, %31 : vector<8x78xf32>
    %c0_23 = arith.constant 0 : index
    %c30 = arith.constant 30 : index
    %33 = vector.load %arg1[%c0_23, %c30] : memref<8x90xf32, #tpu.memory_space<vmem>>, vector<8x10xf32>
    %34 = vector.extract_strided_slice %21 {offsets = [0, 10], sizes = [10, 78], strides = [1, 1]} : vector<10x100xf32> to vector<10x78xf32>
    %cst_24 = arith.constant dense<0.000000e+00> : vector<8x78xf32>
    %35 = tpu.matmul %33, %34, %cst_24 {dimension_numbers = #tpu.dot_dimension_numbers<[1], [0], [0], [1], [0, 0, 1, 1], [], []>} : vector<8x10xf32>, vector<10x78xf32>, vector<8x78xf32> -> vector<8x78xf32>
    %36 = arith.addf %32, %35 : vector<8x78xf32>
    %c0_25 = arith.constant 0 : index
    %c40 = arith.constant 40 : index
    %37 = vector.load %arg1[%c0_25, %c40] : memref<8x90xf32, #tpu.memory_space<vmem>>, vector<8x10xf32>
    %38 = vector.extract_strided_slice %21 {offsets = [0, 11], sizes = [10, 78], strides = [1, 1]} : vector<10x100xf32> to vector<10x78xf32>
    %cst_26 = arith.constant dense<0.000000e+00> : vector<8x78xf32>
    %39 = tpu.matmul %37, %38, %cst_26 {dimension_numbers = #tpu.dot_dimension_numbers<[1], [0], [0], [1], [0, 0, 1, 1], [], []>} : vector<8x10xf32>, vector<10x78xf32>, vector<8x78xf32> -> vector<8x78xf32>
    %40 = arith.addf %36, %39 : vector<8x78xf32>
    %c0_27 = arith.constant 0 : index
    %c50 = arith.constant 50 : index
    %41 = vector.load %arg1[%c0_27, %c50] : memref<8x90xf32, #tpu.memory_space<vmem>>, vector<8x10xf32>
    %42 = vector.extract_strided_slice %21 {offsets = [0, 12], sizes = [10, 78], strides = [1, 1]} : vector<10x100xf32> to vector<10x78xf32>
    %cst_28 = arith.constant dense<0.000000e+00> : vector<8x78xf32>
    %43 = tpu.matmul %41, %42, %cst_28 {dimension_numbers = #tpu.dot_dimension_numbers<[1], [0], [0], [1], [0, 0, 1, 1], [], []>} : vector<8x10xf32>, vector<10x78xf32>, vector<8x78xf32> -> vector<8x78xf32>
    %44 = arith.addf %40, %43 : vector<8x78xf32>
    %c0_29 = arith.constant 0 : index
    %c60 = arith.constant 60 : index
    %45 = vector.load %arg1[%c0_29, %c60] : memref<8x90xf32, #tpu.memory_space<vmem>>, vector<8x10xf32>
    %46 = vector.extract_strided_slice %21 {offsets = [0, 20], sizes = [10, 78], strides = [1, 1]} : vector<10x100xf32> to vector<10x78xf32>
    %cst_30 = arith.constant dense<0.000000e+00> : vector<8x78xf32>
    %47 = tpu.matmul %45, %46, %cst_30 {dimension_numbers = #tpu.dot_dimension_numbers<[1], [0], [0], [1], [0, 0, 1, 1], [], []>} : vector<8x10xf32>, vector<10x78xf32>, vector<8x78xf32> -> vector<8x78xf32>
    %48 = arith.addf %44, %47 : vector<8x78xf32>
    %c0_31 = arith.constant 0 : index
    %c70 = arith.constant 70 : index
    %49 = vector.load %arg1[%c0_31, %c70] : memref<8x90xf32, #tpu.memory_space<vmem>>, vector<8x10xf32>
    %50 = vector.extract_strided_slice %21 {offsets = [0, 21], sizes = [10, 78], strides = [1, 1]} : vector<10x100xf32> to vector<10x78xf32>
    %cst_32 = arith.constant dense<0.000000e+00> : vector<8x78xf32>
    %51 = tpu.matmul %49, %50, %cst_32 {dimension_numbers = #tpu.dot_dimension_numbers<[1], [0], [0], [1], [0, 0, 1, 1], [], []>} : vector<8x10xf32>, vector<10x78xf32>, vector<8x78xf32> -> vector<8x78xf32>
    %52 = arith.addf %48, %51 : vector<8x78xf32>
    %c0_33 = arith.constant 0 : index
    %c80 = arith.constant 80 : index
    %53 = vector.load %arg1[%c0_33, %c80] : memref<8x90xf32, #tpu.memory_space<vmem>>, vector<8x10xf32>
    %54 = vector.extract_strided_slice %21 {offsets = [0, 22], sizes = [10, 78], strides = [1, 1]} : vector<10x100xf32> to vector<10x78xf32>
    %cst_34 = arith.constant dense<0.000000e+00> : vector<8x78xf32>
    %55 = tpu.matmul %53, %54, %cst_34 {dimension_numbers = #tpu.dot_dimension_numbers<[1], [0], [0], [1], [0, 0, 1, 1], [], []>} : vector<8x10xf32>, vector<10x78xf32>, vector<8x78xf32> -> vector<8x78xf32>
    %56 = arith.addf %52, %55 : vector<8x78xf32>
    %cst_35 = arith.constant 0.000000e+00 : f32
    %57 = vector.broadcast %cst_35 : f32 to vector<8x78xf32>
    %58 = arith.maximumf %56, %57 : vector<8x78xf32>
    %59 = vector.extract_strided_slice %58 {offsets = [0, 0], sizes = [8, 8], strides = [1, 1]} : vector<8x78xf32> to vector<8x8xf32>
    %c0_36 = arith.constant 0 : index
    %c26 = arith.constant 26 : index
    %60 = vector.load %arg14[%c0_36, %c26] : memref<8x144xf32, #tpu.memory_space<vmem>>, vector<8x8xf32>
    tpu.vector_store %arg14[%c0_36, %c26], %59 {strides = array<i32>} : memref<8x144xf32, #tpu.memory_space<vmem>>, vector<8x8xf32>,
    %61 = vector.extract_strided_slice %58 {offsets = [0, 10], sizes = [8, 8], strides = [1, 1]} : vector<8x78xf32> to vector<8x8xf32>
    %c0_37 = arith.constant 0 : index
    %c38 = arith.constant 38 : index
    %62 = vector.load %arg14[%c0_37, %c38] : memref<8x144xf32, #tpu.memory_space<vmem>>, vector<8x8xf32>
    tpu.vector_store %arg14[%c0_37, %c38], %61 {strides = array<i32>} : memref<8x144xf32, #tpu.memory_space<vmem>>, vector<8x8xf32>,
    %63 = vector.extract_strided_slice %58 {offsets = [0, 20], sizes = [8, 8], strides = [1, 1]} : vector<8x78xf32> to vector<8x8xf32>
    %c0_38 = arith.constant 0 : index
    %c50_39 = arith.constant 50 : index
    %64 = vector.load %arg14[%c0_38, %c50_39] : memref<8x144xf32, #tpu.memory_space<vmem>>, vector<8x8xf32>
    tpu.vector_store %arg14[%c0_38, %c50_39], %63 {strides = array<i32>} : memref<8x144xf32, #tpu.memory_space<vmem>>, vector<8x8xf32>,
    %65 = vector.extract_strided_slice %58 {offsets = [0, 30], sizes = [8, 8], strides = [1, 1]} : vector<8x78xf32> to vector<8x8xf32>
    %c0_40 = arith.constant 0 : index
    %c62 = arith.constant 62 : index
    %66 = vector.load %arg14[%c0_40, %c62] : memref<8x144xf32, #tpu.memory_space<vmem>>, vector<8x8xf32>
    tpu.vector_store %arg14[%c0_40, %c62], %65 {strides = array<i32>} : memref<8x144xf32, #tpu.memory_space<vmem>>, vector<8x8xf32>,
    %67 = vector.extract_strided_slice %58 {offsets = [0, 40], sizes = [8, 8], strides = [1, 1]} : vector<8x78xf32> to vector<8x8xf32>
    %c0_41 = arith.constant 0 : index
    %c74 = arith.constant 74 : index
    %68 = vector.load %arg14[%c0_41, %c74] : memref<8x144xf32, #tpu.memory_space<vmem>>, vector<8x8xf32>
    tpu.vector_store %arg14[%c0_41, %c74], %67 {strides = array<i32>} : memref<8x144xf32, #tpu.memory_space<vmem>>, vector<8x8xf32>,
    %69 = vector.extract_strided_slice %58 {offsets = [0, 50], sizes = [8, 8], strides = [1, 1]} : vector<8x78xf32> to vector<8x8xf32>
    %c0_42 = arith.constant 0 : index
    %c86 = arith.constant 86 : index
    %70 = vector.load %arg14[%c0_42, %c86] : memref<8x144xf32, #tpu.memory_space<vmem>>, vector<8x8xf32>
    tpu.vector_store %arg14[%c0_42, %c86], %69 {strides = array<i32>} : memref<8x144xf32, #tpu.memory_space<vmem>>, vector<8x8xf32>,
    %71 = vector.extract_strided_slice %58 {offsets = [0, 60], sizes = [8, 8], strides = [1, 1]} : vector<8x78xf32> to vector<8x8xf32>
    %c0_43 = arith.constant 0 : index
    %c98 = arith.constant 98 : index
    %72 = vector.load %arg14[%c0_43, %c98] : memref<8x144xf32, #tpu.memory_space<vmem>>, vector<8x8xf32>
    tpu.vector_store %arg14[%c0_43, %c98], %71 {strides = array<i32>} : memref<8x144xf32, #tpu.memory_space<vmem>>, vector<8x8xf32>,
    %73 = vector.extract_strided_slice %58 {offsets = [0, 70], sizes = [8, 8], strides = [1, 1]} : vector<8x78xf32> to vector<8x8xf32>
    %c0_44 = arith.constant 0 : index
    %c110 = arith.constant 110 : index
    %74 = vector.load %arg14[%c0_44, %c110] : memref<8x144xf32, #tpu.memory_space<vmem>>, vector<8x8xf32>
    tpu.vector_store %arg14[%c0_44, %c110], %73 {strides = array<i32>} : memref<8x144xf32, #tpu.memory_space<vmem>>, vector<8x8xf32>,
    %c0_45 = arith.constant 0 : index
    %c0_46 = arith.constant 0 : index
    %75 = vector.load %arg14[%c0_45, %c0_46] : memref<8x144xf32, #tpu.memory_space<vmem>>, vector<8x144xf32>
    %c0_47 = arith.constant 0 : index
    %c0_48 = arith.constant 0 : index
    %76 = vector.load %arg2[%c0_47, %c0_48] : memref<8x72xf32, #tpu.memory_space<vmem>>, vector<8x8xf32>
    %77 = vector.extract_strided_slice %75 {offsets = [0, 0], sizes = [8, 118], strides = [1, 1]} : vector<8x144xf32> to vector<8x118xf32>
    %cst_49 = arith.constant dense<0.000000e+00> : vector<8x118xf32>
    %78 = tpu.matmul %76, %77, %cst_49 {dimension_numbers = #tpu.dot_dimension_numbers<[1], [0], [0], [1], [0, 0, 1, 1], [], []>} : vector<8x8xf32>, vector<8x118xf32>, vector<8x118xf32> -> vector<8x118xf32>
    %c0_50 = arith.constant 0 : index
    %c8 = arith.constant 8 : index
    %79 = vector.load %arg2[%c0_50, %c8] : memref<8x72xf32, #tpu.memory_space<vmem>>, vector<8x8xf32>
    %80 = vector.extract_strided_slice %75 {offsets = [0, 1], sizes = [8, 118], strides = [1, 1]} : vector<8x144xf32> to vector<8x118xf32>
    %cst_51 = arith.constant dense<0.000000e+00> : vector<8x118xf32>
    %81 = tpu.matmul %79, %80, %cst_51 {dimension_numbers = #tpu.dot_dimension_numbers<[1], [0], [0], [1], [0, 0, 1, 1], [], []>} : vector<8x8xf32>, vector<8x118xf32>, vector<8x118xf32> -> vector<8x118xf32>
    %82 = arith.addf %78, %81 : vector<8x118xf32>
    %c0_52 = arith.constant 0 : index
    %c16 = arith.constant 16 : index
    %83 = vector.load %arg2[%c0_52, %c16] : memref<8x72xf32, #tpu.memory_space<vmem>>, vector<8x8xf32>
    %84 = vector.extract_strided_slice %75 {offsets = [0, 2], sizes = [8, 118], strides = [1, 1]} : vector<8x144xf32> to vector<8x118xf32>
    %cst_53 = arith.constant dense<0.000000e+00> : vector<8x118xf32>
    %85 = tpu.matmul %83, %84, %cst_53 {dimension_numbers = #tpu.dot_dimension_numbers<[1], [0], [0], [1], [0, 0, 1, 1], [], []>} : vector<8x8xf32>, vector<8x118xf32>, vector<8x118xf32> -> vector<8x118xf32>
    %86 = arith.addf %82, %85 : vector<8x118xf32>
    %c0_54 = arith.constant 0 : index
    %c24 = arith.constant 24 : index
    %87 = vector.load %arg2[%c0_54, %c24] : memref<8x72xf32, #tpu.memory_space<vmem>>, vector<8x8xf32>
    %88 = vector.extract_strided_slice %75 {offsets = [0, 12], sizes = [8, 118], strides = [1, 1]} : vector<8x144xf32> to vector<8x118xf32>
    %cst_55 = arith.constant dense<0.000000e+00> : vector<8x118xf32>
    %89 = tpu.matmul %87, %88, %cst_55 {dimension_numbers = #tpu.dot_dimension_numbers<[1], [0], [0], [1], [0, 0, 1, 1], [], []>} : vector<8x8xf32>, vector<8x118xf32>, vector<8x118xf32> -> vector<8x118xf32>
    %90 = arith.addf %86, %89 : vector<8x118xf32>
    %c0_56 = arith.constant 0 : index
    %c32 = arith.constant 32 : index
    %91 = vector.load %arg2[%c0_56, %c32] : memref<8x72xf32, #tpu.memory_space<vmem>>, vector<8x8xf32>
    %92 = vector.extract_strided_slice %75 {offsets = [0, 13], sizes = [8, 118], strides = [1, 1]} : vector<8x144xf32> to vector<8x118xf32>
    %cst_57 = arith.constant dense<0.000000e+00> : vector<8x118xf32>
    %93 = tpu.matmul %91, %92, %cst_57 {dimension_numbers = #tpu.dot_dimension_numbers<[1], [0], [0], [1], [0, 0, 1, 1], [], []>} : vector<8x8xf32>, vector<8x118xf32>, vector<8x118xf32> -> vector<8x118xf32>
    %94 = arith.addf %90, %93 : vector<8x118xf32>
    %c0_58 = arith.constant 0 : index
    %c40_59 = arith.constant 40 : index
    %95 = vector.load %arg2[%c0_58, %c40_59] : memref<8x72xf32, #tpu.memory_space<vmem>>, vector<8x8xf32>
    %96 = vector.extract_strided_slice %75 {offsets = [0, 14], sizes = [8, 118], strides = [1, 1]} : vector<8x144xf32> to vector<8x118xf32>
    %cst_60 = arith.constant dense<0.000000e+00> : vector<8x118xf32>
    %97 = tpu.matmul %95, %96, %cst_60 {dimension_numbers = #tpu.dot_dimension_numbers<[1], [0], [0], [1], [0, 0, 1, 1], [], []>} : vector<8x8xf32>, vector<8x118xf32>, vector<8x118xf32> -> vector<8x118xf32>
    %98 = arith.addf %94, %97 : vector<8x118xf32>
    %c0_61 = arith.constant 0 : index
    %c48 = arith.constant 48 : index
    %99 = vector.load %arg2[%c0_61, %c48] : memref<8x72xf32, #tpu.memory_space<vmem>>, vector<8x8xf32>
    %100 = vector.extract_strided_slice %75 {offsets = [0, 24], sizes = [8, 118], strides = [1, 1]} : vector<8x144xf32> to vector<8x118xf32>
    %cst_62 = arith.constant dense<0.000000e+00> : vector<8x118xf32>
    %101 = tpu.matmul %99, %100, %cst_62 {dimension_numbers = #tpu.dot_dimension_numbers<[1], [0], [0], [1], [0, 0, 1, 1], [], []>} : vector<8x8xf32>, vector<8x118xf32>, vector<8x118xf32> -> vector<8x118xf32>
    %102 = arith.addf %98, %101 : vector<8x118xf32>
    %c0_63 = arith.constant 0 : index
    %c56 = arith.constant 56 : index
    %103 = vector.load %arg2[%c0_63, %c56] : memref<8x72xf32, #tpu.memory_space<vmem>>, vector<8x8xf32>
    %104 = vector.extract_strided_slice %75 {offsets = [0, 25], sizes = [8, 118], strides = [1, 1]} : vector<8x144xf32> to vector<8x118xf32>
    %cst_64 = arith.constant dense<0.000000e+00> : vector<8x118xf32>
    %105 = tpu.matmul %103, %104, %cst_64 {dimension_numbers = #tpu.dot_dimension_numbers<[1], [0], [0], [1], [0, 0, 1, 1], [], []>} : vector<8x8xf32>, vector<8x118xf32>, vector<8x118xf32> -> vector<8x118xf32>
    %106 = arith.addf %102, %105 : vector<8x118xf32>
    %c0_65 = arith.constant 0 : index
    %c64 = arith.constant 64 : index
    %107 = vector.load %arg2[%c0_65, %c64] : memref<8x72xf32, #tpu.memory_space<vmem>>, vector<8x8xf32>
    %108 = vector.extract_strided_slice %75 {offsets = [0, 26], sizes = [8, 118], strides = [1, 1]} : vector<8x144xf32> to vector<8x118xf32>
    %cst_66 = arith.constant dense<0.000000e+00> : vector<8x118xf32>
    %109 = tpu.matmul %107, %108, %cst_66 {dimension_numbers = #tpu.dot_dimension_numbers<[1], [0], [0], [1], [0, 0, 1, 1], [], []>} : vector<8x8xf32>, vector<8x118xf32>, vector<8x118xf32> -> vector<8x118xf32>
    %110 = arith.addf %106, %109 : vector<8x118xf32>
    %cst_67 = arith.constant 0.000000e+00 : f32
    %111 = vector.broadcast %cst_67 : f32 to vector<8x118xf32>
    %112 = arith.maximumf %110, %111 : vector<8x118xf32>
    %113 = vector.extract_strided_slice %112 {offsets = [0, 0], sizes = [8, 10], strides = [1, 1]} : vector<8x118xf32> to vector<8x10xf32>
    %c0_68 = arith.constant 0 : index
    %c0_69 = arith.constant 0 : index
    %114 = vector.load %arg15[%c0_68, %c0_69] : memref<8x100xf32, #tpu.memory_space<vmem>>, vector<8x10xf32>
    tpu.vector_store %arg15[%c0_68, %c0_69], %113 {strides = array<i32>} : memref<8x100xf32, #tpu.memory_space<vmem>>, vector<8x10xf32>,
    %115 = vector.extract_strided_slice %112 {offsets = [0, 12], sizes = [8, 10], strides = [1, 1]} : vector<8x118xf32> to vector<8x10xf32>
    %c0_70 = arith.constant 0 : index
    %c10_71 = arith.constant 10 : index
    %116 = vector.load %arg15[%c0_70, %c10_71] : memref<8x100xf32, #tpu.memory_space<vmem>>, vector<8x10xf32>
    tpu.vector_store %arg15[%c0_70, %c10_71], %115 {strides = array<i32>} : memref<8x100xf32, #tpu.memory_space<vmem>>, vector<8x10xf32>,
    %117 = vector.extract_strided_slice %112 {offsets = [0, 24], sizes = [8, 10], strides = [1, 1]} : vector<8x118xf32> to vector<8x10xf32>
    %c0_72 = arith.constant 0 : index
    %c20_73 = arith.constant 20 : index
    %118 = vector.load %arg15[%c0_72, %c20_73] : memref<8x100xf32, #tpu.memory_space<vmem>>, vector<8x10xf32>
    tpu.vector_store %arg15[%c0_72, %c20_73], %117 {strides = array<i32>} : memref<8x100xf32, #tpu.memory_space<vmem>>, vector<8x10xf32>,
    %119 = vector.extract_strided_slice %112 {offsets = [0, 36], sizes = [8, 10], strides = [1, 1]} : vector<8x118xf32> to vector<8x10xf32>
    %c0_74 = arith.constant 0 : index
    %c30_75 = arith.constant 30 : index
    %120 = vector.load %arg15[%c0_74, %c30_75] : memref<8x100xf32, #tpu.memory_space<vmem>>, vector<8x10xf32>
    tpu.vector_store %arg15[%c0_74, %c30_75], %119 {strides = array<i32>} : memref<8x100xf32, #tpu.memory_space<vmem>>, vector<8x10xf32>,
    %121 = vector.extract_strided_slice %112 {offsets = [0, 48], sizes = [8, 10], strides = [1, 1]} : vector<8x118xf32> to vector<8x10xf32>
    %c0_76 = arith.constant 0 : index
    %c40_77 = arith.constant 40 : index
    %122 = vector.load %arg15[%c0_76, %c40_77] : memref<8x100xf32, #tpu.memory_space<vmem>>, vector<8x10xf32>
    tpu.vector_store %arg15[%c0_76, %c40_77], %121 {strides = array<i32>} : memref<8x100xf32, #tpu.memory_space<vmem>>, vector<8x10xf32>,
    %123 = vector.extract_strided_slice %112 {offsets = [0, 60], sizes = [8, 10], strides = [1, 1]} : vector<8x118xf32> to vector<8x10xf32>
    %c0_78 = arith.constant 0 : index
    %c50_79 = arith.constant 50 : index
    %124 = vector.load %arg15[%c0_78, %c50_79] : memref<8x100xf32, #tpu.memory_space<vmem>>, vector<8x10xf32>
    tpu.vector_store %arg15[%c0_78, %c50_79], %123 {strides = array<i32>} : memref<8x100xf32, #tpu.memory_space<vmem>>, vector<8x10xf32>,
    %125 = vector.extract_strided_slice %112 {offsets = [0, 72], sizes = [8, 10], strides = [1, 1]} : vector<8x118xf32> to vector<8x10xf32>
    %c0_80 = arith.constant 0 : index
    %c60_81 = arith.constant 60 : index
    %126 = vector.load %arg15[%c0_80, %c60_81] : memref<8x100xf32, #tpu.memory_space<vmem>>, vector<8x10xf32>
    tpu.vector_store %arg15[%c0_80, %c60_81], %125 {strides = array<i32>} : memref<8x100xf32, #tpu.memory_space<vmem>>, vector<8x10xf32>,
    %127 = vector.extract_strided_slice %112 {offsets = [0, 84], sizes = [8, 10], strides = [1, 1]} : vector<8x118xf32> to vector<8x10xf32>
    %c0_82 = arith.constant 0 : index
    %c70_83 = arith.constant 70 : index
    %128 = vector.load %arg15[%c0_82, %c70_83] : memref<8x100xf32, #tpu.memory_space<vmem>>, vector<8x10xf32>
    tpu.vector_store %arg15[%c0_82, %c70_83], %127 {strides = array<i32>} : memref<8x100xf32, #tpu.memory_space<vmem>>, vector<8x10xf32>,
    %129 = vector.extract_strided_slice %112 {offsets = [0, 96], sizes = [8, 10], strides = [1, 1]} : vector<8x118xf32> to vector<8x10xf32>
    %c0_84 = arith.constant 0 : index
    %c80_85 = arith.constant 80 : index
    %130 = vector.load %arg15[%c0_84, %c80_85] : memref<8x100xf32, #tpu.memory_space<vmem>>, vector<8x10xf32>
    tpu.vector_store %arg15[%c0_84, %c80_85], %129 {strides = array<i32>} : memref<8x100xf32, #tpu.memory_space<vmem>>, vector<8x10xf32>,
    %131 = vector.extract_strided_slice %112 {offsets = [0, 108], sizes = [8, 10], strides = [1, 1]} : vector<8x118xf32> to vector<8x10xf32>
    %c0_86 = arith.constant 0 : index
    %c90 = arith.constant 90 : index
    %132 = vector.load %arg15[%c0_86, %c90] : memref<8x100xf32, #tpu.memory_space<vmem>>, vector<8x10xf32>
    tpu.vector_store %arg15[%c0_86, %c90], %131 {strides = array<i32>} : memref<8x100xf32, #tpu.memory_space<vmem>>, vector<8x10xf32>,
    %c0_87 = arith.constant 0 : index
    %c0_88 = arith.constant 0 : index
    %133 = vector.load %arg15[%c0_87, %c0_88] : memref<8x100xf32, #tpu.memory_space<vmem>>, vector<8x100xf32>
    %c0_89 = arith.constant 0 : index
    %c0_90 = arith.constant 0 : index
    %134 = vector.load %arg3[%c0_89, %c0_90] : memref<8x72xf32, #tpu.memory_space<vmem>>, vector<8x8xf32>
    %135 = vector.extract_strided_slice %133 {offsets = [0, 0], sizes = [8, 78], strides = [1, 1]} : vector<8x100xf32> to vector<8x78xf32>
    %cst_91 = arith.constant dense<0.000000e+00> : vector<8x78xf32>
    %136 = tpu.matmul %134, %135, %cst_91 {dimension_numbers = #tpu.dot_dimension_numbers<[1], [0], [0], [1], [0, 0, 1, 1], [], []>} : vector<8x8xf32>, vector<8x78xf32>, vector<8x78xf32> -> vector<8x78xf32>
    %c0_92 = arith.constant 0 : index
    %c8_93 = arith.constant 8 : index
    %137 = vector.load %arg3[%c0_92, %c8_93] : memref<8x72xf32, #tpu.memory_space<vmem>>, vector<8x8xf32>
    %138 = vector.extract_strided_slice %133 {offsets = [0, 1], sizes = [8, 78], strides = [1, 1]} : vector<8x100xf32> to vector<8x78xf32>
    %cst_94 = arith.constant dense<0.000000e+00> : vector<8x78xf32>
    %139 = tpu.matmul %137, %138, %cst_94 {dimension_numbers = #tpu.dot_dimension_numbers<[1], [0], [0], [1], [0, 0, 1, 1], [], []>} : vector<8x8xf32>, vector<8x78xf32>, vector<8x78xf32> -> vector<8x78xf32>
    %140 = arith.addf %136, %139 : vector<8x78xf32>
    %c0_95 = arith.constant 0 : index
    %c16_96 = arith.constant 16 : index
    %141 = vector.load %arg3[%c0_95, %c16_96] : memref<8x72xf32, #tpu.memory_space<vmem>>, vector<8x8xf32>
    %142 = vector.extract_strided_slice %133 {offsets = [0, 2], sizes = [8, 78], strides = [1, 1]} : vector<8x100xf32> to vector<8x78xf32>
    %cst_97 = arith.constant dense<0.000000e+00> : vector<8x78xf32>
    %143 = tpu.matmul %141, %142, %cst_97 {dimension_numbers = #tpu.dot_dimension_numbers<[1], [0], [0], [1], [0, 0, 1, 1], [], []>} : vector<8x8xf32>, vector<8x78xf32>, vector<8x78xf32> -> vector<8x78xf32>
    %144 = arith.addf %140, %143 : vector<8x78xf32>
    %c0_98 = arith.constant 0 : index
    %c24_99 = arith.constant 24 : index
    %145 = vector.load %arg3[%c0_98, %c24_99] : memref<8x72xf32, #tpu.memory_space<vmem>>, vector<8x8xf32>
    %146 = vector.extract_strided_slice %133 {offsets = [0, 10], sizes = [8, 78], strides = [1, 1]} : vector<8x100xf32> to vector<8x78xf32>
    %cst_100 = arith.constant dense<0.000000e+00> : vector<8x78xf32>
    %147 = tpu.matmul %145, %146, %cst_100 {dimension_numbers = #tpu.dot_dimension_numbers<[1], [0], [0], [1], [0, 0, 1, 1], [], []>} : vector<8x8xf32>, vector<8x78xf32>, vector<8x78xf32> -> vector<8x78xf32>
    %148 = arith.addf %144, %147 : vector<8x78xf32>
    %c0_101 = arith.constant 0 : index
    %c32_102 = arith.constant 32 : index
    %149 = vector.load %arg3[%c0_101, %c32_102] : memref<8x72xf32, #tpu.memory_space<vmem>>, vector<8x8xf32>
    %150 = vector.extract_strided_slice %133 {offsets = [0, 11], sizes = [8, 78], strides = [1, 1]} : vector<8x100xf32> to vector<8x78xf32>
    %cst_103 = arith.constant dense<0.000000e+00> : vector<8x78xf32>
    %151 = tpu.matmul %149, %150, %cst_103 {dimension_numbers = #tpu.dot_dimension_numbers<[1], [0], [0], [1], [0, 0, 1, 1], [], []>} : vector<8x8xf32>, vector<8x78xf32>, vector<8x78xf32> -> vector<8x78xf32>
    %152 = arith.addf %148, %151 : vector<8x78xf32>
    %c0_104 = arith.constant 0 : index
    %c40_105 = arith.constant 40 : index
    %153 = vector.load %arg3[%c0_104, %c40_105] : memref<8x72xf32, #tpu.memory_space<vmem>>, vector<8x8xf32>
    %154 = vector.extract_strided_slice %133 {offsets = [0, 12], sizes = [8, 78], strides = [1, 1]} : vector<8x100xf32> to vector<8x78xf32>
    %cst_106 = arith.constant dense<0.000000e+00> : vector<8x78xf32>
    %155 = tpu.matmul %153, %154, %cst_106 {dimension_numbers = #tpu.dot_dimension_numbers<[1], [0], [0], [1], [0, 0, 1, 1], [], []>} : vector<8x8xf32>, vector<8x78xf32>, vector<8x78xf32> -> vector<8x78xf32>
    %156 = arith.addf %152, %155 : vector<8x78xf32>
    %c0_107 = arith.constant 0 : index
    %c48_108 = arith.constant 48 : index
    %157 = vector.load %arg3[%c0_107, %c48_108] : memref<8x72xf32, #tpu.memory_space<vmem>>, vector<8x8xf32>
    %158 = vector.extract_strided_slice %133 {offsets = [0, 20], sizes = [8, 78], strides = [1, 1]} : vector<8x100xf32> to vector<8x78xf32>
    %cst_109 = arith.constant dense<0.000000e+00> : vector<8x78xf32>
    %159 = tpu.matmul %157, %158, %cst_109 {dimension_numbers = #tpu.dot_dimension_numbers<[1], [0], [0], [1], [0, 0, 1, 1], [], []>} : vector<8x8xf32>, vector<8x78xf32>, vector<8x78xf32> -> vector<8x78xf32>
    %160 = arith.addf %156, %159 : vector<8x78xf32>
    %c0_110 = arith.constant 0 : index
    %c56_111 = arith.constant 56 : index
    %161 = vector.load %arg3[%c0_110, %c56_111] : memref<8x72xf32, #tpu.memory_space<vmem>>, vector<8x8xf32>
    %162 = vector.extract_strided_slice %133 {offsets = [0, 21], sizes = [8, 78], strides = [1, 1]} : vector<8x100xf32> to vector<8x78xf32>
    %cst_112 = arith.constant dense<0.000000e+00> : vector<8x78xf32>
    %163 = tpu.matmul %161, %162, %cst_112 {dimension_numbers = #tpu.dot_dimension_numbers<[1], [0], [0], [1], [0, 0, 1, 1], [], []>} : vector<8x8xf32>, vector<8x78xf32>, vector<8x78xf32> -> vector<8x78xf32>
    %164 = arith.addf %160, %163 : vector<8x78xf32>
    %c0_113 = arith.constant 0 : index
    %c64_114 = arith.constant 64 : index
    %165 = vector.load %arg3[%c0_113, %c64_114] : memref<8x72xf32, #tpu.memory_space<vmem>>, vector<8x8xf32>
    %166 = vector.extract_strided_slice %133 {offsets = [0, 22], sizes = [8, 78], strides = [1, 1]} : vector<8x100xf32> to vector<8x78xf32>
    %cst_115 = arith.constant dense<0.000000e+00> : vector<8x78xf32>
    %167 = tpu.matmul %165, %166, %cst_115 {dimension_numbers = #tpu.dot_dimension_numbers<[1], [0], [0], [1], [0, 0, 1, 1], [], []>} : vector<8x8xf32>, vector<8x78xf32>, vector<8x78xf32> -> vector<8x78xf32>
    %168 = arith.addf %164, %167 : vector<8x78xf32>
    %169 = vector.extract_strided_slice %75 {offsets = [0, 26], sizes = [8, 8], strides = [1, 1]} : vector<8x144xf32> to vector<8x8xf32>
    %170 = vector.extract_strided_slice %168 {offsets = [0, 0], sizes = [8, 8], strides = [1, 1]} : vector<8x78xf32> to vector<8x8xf32>
    %171 = arith.addf %170, %169 : vector<8x8xf32>
    %cst_116 = arith.constant 0.000000e+00 : f32
    %172 = vector.broadcast %cst_116 : f32 to vector<8x8xf32>
    %173 = arith.maximumf %171, %172 : vector<8x8xf32>
    %c0_117 = arith.constant 0 : index
    %c26_118 = arith.constant 26 : index
    %174 = vector.load %arg14[%c0_117, %c26_118] : memref<8x144xf32, #tpu.memory_space<vmem>>, vector<8x8xf32>
    tpu.vector_store %arg14[%c0_117, %c26_118], %173 {strides = array<i32>} : memref<8x144xf32, #tpu.memory_space<vmem>>, vector<8x8xf32>,
    %175 = vector.extract_strided_slice %75 {offsets = [0, 38], sizes = [8, 8], strides = [1, 1]} : vector<8x144xf32> to vector<8x8xf32>
    %176 = vector.extract_strided_slice %168 {offsets = [0, 10], sizes = [8, 8], strides = [1, 1]} : vector<8x78xf32> to vector<8x8xf32>
    %177 = arith.addf %176, %175 : vector<8x8xf32>
    %cst_119 = arith.constant 0.000000e+00 : f32
    %178 = vector.broadcast %cst_119 : f32 to vector<8x8xf32>
    %179 = arith.maximumf %177, %178 : vector<8x8xf32>
    %c0_120 = arith.constant 0 : index
    %c38_121 = arith.constant 38 : index
    %180 = vector.load %arg14[%c0_120, %c38_121] : memref<8x144xf32, #tpu.memory_space<vmem>>, vector<8x8xf32>
    tpu.vector_store %arg14[%c0_120, %c38_121], %179 {strides = array<i32>} : memref<8x144xf32, #tpu.memory_space<vmem>>, vector<8x8xf32>,
    %181 = vector.extract_strided_slice %75 {offsets = [0, 50], sizes = [8, 8], strides = [1, 1]} : vector<8x144xf32> to vector<8x8xf32>
    %182 = vector.extract_strided_slice %168 {offsets = [0, 20], sizes = [8, 8], strides = [1, 1]} : vector<8x78xf32> to vector<8x8xf32>
    %183 = arith.addf %182, %181 : vector<8x8xf32>
    %cst_122 = arith.constant 0.000000e+00 : f32
    %184 = vector.broadcast %cst_122 : f32 to vector<8x8xf32>
    %185 = arith.maximumf %183, %184 : vector<8x8xf32>
    %c0_123 = arith.constant 0 : index
    %c50_124 = arith.constant 50 : index
    %186 = vector.load %arg14[%c0_123, %c50_124] : memref<8x144xf32, #tpu.memory_space<vmem>>, vector<8x8xf32>
    tpu.vector_store %arg14[%c0_123, %c50_124], %185 {strides = array<i32>} : memref<8x144xf32, #tpu.memory_space<vmem>>, vector<8x8xf32>,
    %187 = vector.extract_strided_slice %75 {offsets = [0, 62], sizes = [8, 8], strides = [1, 1]} : vector<8x144xf32> to vector<8x8xf32>
    %188 = vector.extract_strided_slice %168 {offsets = [0, 30], sizes = [8, 8], strides = [1, 1]} : vector<8x78xf32> to vector<8x8xf32>
    %189 = arith.addf %188, %187 : vector<8x8xf32>
    %cst_125 = arith.constant 0.000000e+00 : f32
    %190 = vector.broadcast %cst_125 : f32 to vector<8x8xf32>
    %191 = arith.maximumf %189, %190 : vector<8x8xf32>
    %c0_126 = arith.constant 0 : index
    %c62_127 = arith.constant 62 : index
    %192 = vector.load %arg14[%c0_126, %c62_127] : memref<8x144xf32, #tpu.memory_space<vmem>>, vector<8x8xf32>
    tpu.vector_store %arg14[%c0_126, %c62_127], %191 {strides = array<i32>} : memref<8x144xf32, #tpu.memory_space<vmem>>, vector<8x8xf32>,
    %193 = vector.extract_strided_slice %75 {offsets = [0, 74], sizes = [8, 8], strides = [1, 1]} : vector<8x144xf32> to vector<8x8xf32>
    %194 = vector.extract_strided_slice %168 {offsets = [0, 40], sizes = [8, 8], strides = [1, 1]} : vector<8x78xf32> to vector<8x8xf32>
    %195 = arith.addf %194, %193 : vector<8x8xf32>
    %cst_128 = arith.constant 0.000000e+00 : f32
    %196 = vector.broadcast %cst_128 : f32 to vector<8x8xf32>
    %197 = arith.maximumf %195, %196 : vector<8x8xf32>
    %c0_129 = arith.constant 0 : index
    %c74_130 = arith.constant 74 : index
    %198 = vector.load %arg14[%c0_129, %c74_130] : memref<8x144xf32, #tpu.memory_space<vmem>>, vector<8x8xf32>
    tpu.vector_store %arg14[%c0_129, %c74_130], %197 {strides = array<i32>} : memref<8x144xf32, #tpu.memory_space<vmem>>, vector<8x8xf32>,
    %199 = vector.extract_strided_slice %75 {offsets = [0, 86], sizes = [8, 8], strides = [1, 1]} : vector<8x144xf32> to vector<8x8xf32>
    %200 = vector.extract_strided_slice %168 {offsets = [0, 50], sizes = [8, 8], strides = [1, 1]} : vector<8x78xf32> to vector<8x8xf32>
    %201 = arith.addf %200, %199 : vector<8x8xf32>
    %cst_131 = arith.constant 0.000000e+00 : f32
    %202 = vector.broadcast %cst_131 : f32 to vector<8x8xf32>
    %203 = arith.maximumf %201, %202 : vector<8x8xf32>
    %c0_132 = arith.constant 0 : index
    %c86_133 = arith.constant 86 : index
    %204 = vector.load %arg14[%c0_132, %c86_133] : memref<8x144xf32, #tpu.memory_space<vmem>>, vector<8x8xf32>
    tpu.vector_store %arg14[%c0_132, %c86_133], %203 {strides = array<i32>} : memref<8x144xf32, #tpu.memory_space<vmem>>, vector<8x8xf32>,
    %205 = vector.extract_strided_slice %75 {offsets = [0, 98], sizes = [8, 8], strides = [1, 1]} : vector<8x144xf32> to vector<8x8xf32>
    %206 = vector.extract_strided_slice %168 {offsets = [0, 60], sizes = [8, 8], strides = [1, 1]} : vector<8x78xf32> to vector<8x8xf32>
    %207 = arith.addf %206, %205 : vector<8x8xf32>
    %cst_134 = arith.constant 0.000000e+00 : f32
    %208 = vector.broadcast %cst_134 : f32 to vector<8x8xf32>
    %209 = arith.maximumf %207, %208 : vector<8x8xf32>
    %c0_135 = arith.constant 0 : index
    %c98_136 = arith.constant 98 : index
    %210 = vector.load %arg14[%c0_135, %c98_136] : memref<8x144xf32, #tpu.memory_space<vmem>>, vector<8x8xf32>
    tpu.vector_store %arg14[%c0_135, %c98_136], %209 {strides = array<i32>} : memref<8x144xf32, #tpu.memory_space<vmem>>, vector<8x8xf32>,
    %211 = vector.extract_strided_slice %75 {offsets = [0, 110], sizes = [8, 8], strides = [1, 1]} : vector<8x144xf32> to vector<8x8xf32>
    %212 = vector.extract_strided_slice %168 {offsets = [0, 70], sizes = [8, 8], strides = [1, 1]} : vector<8x78xf32> to vector<8x8xf32>
    %213 = arith.addf %212, %211 : vector<8x8xf32>
    %cst_137 = arith.constant 0.000000e+00 : f32
    %214 = vector.broadcast %cst_137 : f32 to vector<8x8xf32>
    %215 = arith.maximumf %213, %214 : vector<8x8xf32>
    %c0_138 = arith.constant 0 : index
    %c110_139 = arith.constant 110 : index
    %216 = vector.load %arg14[%c0_138, %c110_139] : memref<8x144xf32, #tpu.memory_space<vmem>>, vector<8x8xf32>
    tpu.vector_store %arg14[%c0_138, %c110_139], %215 {strides = array<i32>} : memref<8x144xf32, #tpu.memory_space<vmem>>, vector<8x8xf32>,
    %c0_140 = arith.constant 0 : index
    %c0_141 = arith.constant 0 : index
    %217 = vector.load %arg14[%c0_140, %c0_141] : memref<8x144xf32, #tpu.memory_space<vmem>>, vector<8x144xf32>
    %c0_142 = arith.constant 0 : index
    %c0_143 = arith.constant 0 : index
    %218 = vector.load %arg4[%c0_142, %c0_143] : memref<8x72xf32, #tpu.memory_space<vmem>>, vector<8x8xf32>
    %219 = vector.extract_strided_slice %217 {offsets = [0, 0], sizes = [8, 118], strides = [1, 1]} : vector<8x144xf32> to vector<8x118xf32>
    %cst_144 = arith.constant dense<0.000000e+00> : vector<8x118xf32>
    %220 = tpu.matmul %218, %219, %cst_144 {dimension_numbers = #tpu.dot_dimension_numbers<[1], [0], [0], [1], [0, 0, 1, 1], [], []>} : vector<8x8xf32>, vector<8x118xf32>, vector<8x118xf32> -> vector<8x118xf32>
    %c0_145 = arith.constant 0 : index
    %c8_146 = arith.constant 8 : index
    %221 = vector.load %arg4[%c0_145, %c8_146] : memref<8x72xf32, #tpu.memory_space<vmem>>, vector<8x8xf32>
    %222 = vector.extract_strided_slice %217 {offsets = [0, 1], sizes = [8, 118], strides = [1, 1]} : vector<8x144xf32> to vector<8x118xf32>
    %cst_147 = arith.constant dense<0.000000e+00> : vector<8x118xf32>
    %223 = tpu.matmul %221, %222, %cst_147 {dimension_numbers = #tpu.dot_dimension_numbers<[1], [0], [0], [1], [0, 0, 1, 1], [], []>} : vector<8x8xf32>, vector<8x118xf32>, vector<8x118xf32> -> vector<8x118xf32>
    %224 = arith.addf %220, %223 : vector<8x118xf32>
    %c0_148 = arith.constant 0 : index
    %c16_149 = arith.constant 16 : index
    %225 = vector.load %arg4[%c0_148, %c16_149] : memref<8x72xf32, #tpu.memory_space<vmem>>, vector<8x8xf32>
    %226 = vector.extract_strided_slice %217 {offsets = [0, 2], sizes = [8, 118], strides = [1, 1]} : vector<8x144xf32> to vector<8x118xf32>
    %cst_150 = arith.constant dense<0.000000e+00> : vector<8x118xf32>
    %227 = tpu.matmul %225, %226, %cst_150 {dimension_numbers = #tpu.dot_dimension_numbers<[1], [0], [0], [1], [0, 0, 1, 1], [], []>} : vector<8x8xf32>, vector<8x118xf32>, vector<8x118xf32> -> vector<8x118xf32>
    %228 = arith.addf %224, %227 : vector<8x118xf32>
    %c0_151 = arith.constant 0 : index
    %c24_152 = arith.constant 24 : index
    %229 = vector.load %arg4[%c0_151, %c24_152] : memref<8x72xf32, #tpu.memory_space<vmem>>, vector<8x8xf32>
    %230 = vector.extract_strided_slice %217 {offsets = [0, 12], sizes = [8, 118], strides = [1, 1]} : vector<8x144xf32> to vector<8x118xf32>
    %cst_153 = arith.constant dense<0.000000e+00> : vector<8x118xf32>
    %231 = tpu.matmul %229, %230, %cst_153 {dimension_numbers = #tpu.dot_dimension_numbers<[1], [0], [0], [1], [0, 0, 1, 1], [], []>} : vector<8x8xf32>, vector<8x118xf32>, vector<8x118xf32> -> vector<8x118xf32>
    %232 = arith.addf %228, %231 : vector<8x118xf32>
    %c0_154 = arith.constant 0 : index
    %c32_155 = arith.constant 32 : index
    %233 = vector.load %arg4[%c0_154, %c32_155] : memref<8x72xf32, #tpu.memory_space<vmem>>, vector<8x8xf32>
    %234 = vector.extract_strided_slice %217 {offsets = [0, 13], sizes = [8, 118], strides = [1, 1]} : vector<8x144xf32> to vector<8x118xf32>
    %cst_156 = arith.constant dense<0.000000e+00> : vector<8x118xf32>
    %235 = tpu.matmul %233, %234, %cst_156 {dimension_numbers = #tpu.dot_dimension_numbers<[1], [0], [0], [1], [0, 0, 1, 1], [], []>} : vector<8x8xf32>, vector<8x118xf32>, vector<8x118xf32> -> vector<8x118xf32>
    %236 = arith.addf %232, %235 : vector<8x118xf32>
    %c0_157 = arith.constant 0 : index
    %c40_158 = arith.constant 40 : index
    %237 = vector.load %arg4[%c0_157, %c40_158] : memref<8x72xf32, #tpu.memory_space<vmem>>, vector<8x8xf32>
    %238 = vector.extract_strided_slice %217 {offsets = [0, 14], sizes = [8, 118], strides = [1, 1]} : vector<8x144xf32> to vector<8x118xf32>
    %cst_159 = arith.constant dense<0.000000e+00> : vector<8x118xf32>
    %239 = tpu.matmul %237, %238, %cst_159 {dimension_numbers = #tpu.dot_dimension_numbers<[1], [0], [0], [1], [0, 0, 1, 1], [], []>} : vector<8x8xf32>, vector<8x118xf32>, vector<8x118xf32> -> vector<8x118xf32>
    %240 = arith.addf %236, %239 : vector<8x118xf32>
    %c0_160 = arith.constant 0 : index
    %c48_161 = arith.constant 48 : index
    %241 = vector.load %arg4[%c0_160, %c48_161] : memref<8x72xf32, #tpu.memory_space<vmem>>, vector<8x8xf32>
    %242 = vector.extract_strided_slice %217 {offsets = [0, 24], sizes = [8, 118], strides = [1, 1]} : vector<8x144xf32> to vector<8x118xf32>
    %cst_162 = arith.constant dense<0.000000e+00> : vector<8x118xf32>
    %243 = tpu.matmul %241, %242, %cst_162 {dimension_numbers = #tpu.dot_dimension_numbers<[1], [0], [0], [1], [0, 0, 1, 1], [], []>} : vector<8x8xf32>, vector<8x118xf32>, vector<8x118xf32> -> vector<8x118xf32>
    %244 = arith.addf %240, %243 : vector<8x118xf32>
    %c0_163 = arith.constant 0 : index
    %c56_164 = arith.constant 56 : index
    %245 = vector.load %arg4[%c0_163, %c56_164] : memref<8x72xf32, #tpu.memory_space<vmem>>, vector<8x8xf32>
    %246 = vector.extract_strided_slice %217 {offsets = [0, 25], sizes = [8, 118], strides = [1, 1]} : vector<8x144xf32> to vector<8x118xf32>
    %cst_165 = arith.constant dense<0.000000e+00> : vector<8x118xf32>
    %247 = tpu.matmul %245, %246, %cst_165 {dimension_numbers = #tpu.dot_dimension_numbers<[1], [0], [0], [1], [0, 0, 1, 1], [], []>} : vector<8x8xf32>, vector<8x118xf32>, vector<8x118xf32> -> vector<8x118xf32>
    %248 = arith.addf %244, %247 : vector<8x118xf32>
    %c0_166 = arith.constant 0 : index
    %c64_167 = arith.constant 64 : index
    %249 = vector.load %arg4[%c0_166, %c64_167] : memref<8x72xf32, #tpu.memory_space<vmem>>, vector<8x8xf32>
    %250 = vector.extract_strided_slice %217 {offsets = [0, 26], sizes = [8, 118], strides = [1, 1]} : vector<8x144xf32> to vector<8x118xf32>
    %cst_168 = arith.constant dense<0.000000e+00> : vector<8x118xf32>
    %251 = tpu.matmul %249, %250, %cst_168 {dimension_numbers = #tpu.dot_dimension_numbers<[1], [0], [0], [1], [0, 0, 1, 1], [], []>} : vector<8x8xf32>, vector<8x118xf32>, vector<8x118xf32> -> vector<8x118xf32>
    %252 = arith.addf %248, %251 : vector<8x118xf32>
    %cst_169 = arith.constant 0.000000e+00 : f32
    %253 = vector.broadcast %cst_169 : f32 to vector<8x118xf32>
    %254 = arith.maximumf %252, %253 : vector<8x118xf32>
    %255 = vector.extract_strided_slice %254 {offsets = [0, 0], sizes = [8, 10], strides = [1, 1]} : vector<8x118xf32> to vector<8x10xf32>
    %c0_170 = arith.constant 0 : index
    %c0_171 = arith.constant 0 : index
    %256 = vector.load %arg15[%c0_170, %c0_171] : memref<8x100xf32, #tpu.memory_space<vmem>>, vector<8x10xf32>
    tpu.vector_store %arg15[%c0_170, %c0_171], %255 {strides = array<i32>} : memref<8x100xf32, #tpu.memory_space<vmem>>, vector<8x10xf32>,
    %257 = vector.extract_strided_slice %254 {offsets = [0, 12], sizes = [8, 10], strides = [1, 1]} : vector<8x118xf32> to vector<8x10xf32>
    %c0_172 = arith.constant 0 : index
    %c10_173 = arith.constant 10 : index
    %258 = vector.load %arg15[%c0_172, %c10_173] : memref<8x100xf32, #tpu.memory_space<vmem>>, vector<8x10xf32>
    tpu.vector_store %arg15[%c0_172, %c10_173], %257 {strides = array<i32>} : memref<8x100xf32, #tpu.memory_space<vmem>>, vector<8x10xf32>,
    %259 = vector.extract_strided_slice %254 {offsets = [0, 24], sizes = [8, 10], strides = [1, 1]} : vector<8x118xf32> to vector<8x10xf32>
    %c0_174 = arith.constant 0 : index
    %c20_175 = arith.constant 20 : index
    %260 = vector.load %arg15[%c0_174, %c20_175] : memref<8x100xf32, #tpu.memory_space<vmem>>, vector<8x10xf32>
    tpu.vector_store %arg15[%c0_174, %c20_175], %259 {strides = array<i32>} : memref<8x100xf32, #tpu.memory_space<vmem>>, vector<8x10xf32>,
    %261 = vector.extract_strided_slice %254 {offsets = [0, 36], sizes = [8, 10], strides = [1, 1]} : vector<8x118xf32> to vector<8x10xf32>
    %c0_176 = arith.constant 0 : index
    %c30_177 = arith.constant 30 : index
    %262 = vector.load %arg15[%c0_176, %c30_177] : memref<8x100xf32, #tpu.memory_space<vmem>>, vector<8x10xf32>
    tpu.vector_store %arg15[%c0_176, %c30_177], %261 {strides = array<i32>} : memref<8x100xf32, #tpu.memory_space<vmem>>, vector<8x10xf32>,
    %263 = vector.extract_strided_slice %254 {offsets = [0, 48], sizes = [8, 10], strides = [1, 1]} : vector<8x118xf32> to vector<8x10xf32>
    %c0_178 = arith.constant 0 : index
    %c40_179 = arith.constant 40 : index
    %264 = vector.load %arg15[%c0_178, %c40_179] : memref<8x100xf32, #tpu.memory_space<vmem>>, vector<8x10xf32>
    tpu.vector_store %arg15[%c0_178, %c40_179], %263 {strides = array<i32>} : memref<8x100xf32, #tpu.memory_space<vmem>>, vector<8x10xf32>,
    %265 = vector.extract_strided_slice %254 {offsets = [0, 60], sizes = [8, 10], strides = [1, 1]} : vector<8x118xf32> to vector<8x10xf32>
    %c0_180 = arith.constant 0 : index
    %c50_181 = arith.constant 50 : index
    %266 = vector.load %arg15[%c0_180, %c50_181] : memref<8x100xf32, #tpu.memory_space<vmem>>, vector<8x10xf32>
    tpu.vector_store %arg15[%c0_180, %c50_181], %265 {strides = array<i32>} : memref<8x100xf32, #tpu.memory_space<vmem>>, vector<8x10xf32>,
    %267 = vector.extract_strided_slice %254 {offsets = [0, 72], sizes = [8, 10], strides = [1, 1]} : vector<8x118xf32> to vector<8x10xf32>
    %c0_182 = arith.constant 0 : index
    %c60_183 = arith.constant 60 : index
    %268 = vector.load %arg15[%c0_182, %c60_183] : memref<8x100xf32, #tpu.memory_space<vmem>>, vector<8x10xf32>
    tpu.vector_store %arg15[%c0_182, %c60_183], %267 {strides = array<i32>} : memref<8x100xf32, #tpu.memory_space<vmem>>, vector<8x10xf32>,
    %269 = vector.extract_strided_slice %254 {offsets = [0, 84], sizes = [8, 10], strides = [1, 1]} : vector<8x118xf32> to vector<8x10xf32>
    %c0_184 = arith.constant 0 : index
    %c70_185 = arith.constant 70 : index
    %270 = vector.load %arg15[%c0_184, %c70_185] : memref<8x100xf32, #tpu.memory_space<vmem>>, vector<8x10xf32>
    tpu.vector_store %arg15[%c0_184, %c70_185], %269 {strides = array<i32>} : memref<8x100xf32, #tpu.memory_space<vmem>>, vector<8x10xf32>,
    %271 = vector.extract_strided_slice %254 {offsets = [0, 96], sizes = [8, 10], strides = [1, 1]} : vector<8x118xf32> to vector<8x10xf32>
    %c0_186 = arith.constant 0 : index
    %c80_187 = arith.constant 80 : index
    %272 = vector.load %arg15[%c0_186, %c80_187] : memref<8x100xf32, #tpu.memory_space<vmem>>, vector<8x10xf32>
    tpu.vector_store %arg15[%c0_186, %c80_187], %271 {strides = array<i32>} : memref<8x100xf32, #tpu.memory_space<vmem>>, vector<8x10xf32>,
    %273 = vector.extract_strided_slice %254 {offsets = [0, 108], sizes = [8, 10], strides = [1, 1]} : vector<8x118xf32> to vector<8x10xf32>
    %c0_188 = arith.constant 0 : index
    %c90_189 = arith.constant 90 : index
    %274 = vector.load %arg15[%c0_188, %c90_189] : memref<8x100xf32, #tpu.memory_space<vmem>>, vector<8x10xf32>
    tpu.vector_store %arg15[%c0_188, %c90_189], %273 {strides = array<i32>} : memref<8x100xf32, #tpu.memory_space<vmem>>, vector<8x10xf32>,
    %c0_190 = arith.constant 0 : index
    %c0_191 = arith.constant 0 : index
    %275 = vector.load %arg15[%c0_190, %c0_191] : memref<8x100xf32, #tpu.memory_space<vmem>>, vector<8x100xf32>
    %c0_192 = arith.constant 0 : index
    %c0_193 = arith.constant 0 : index
    %276 = vector.load %arg5[%c0_192, %c0_193] : memref<8x72xf32, #tpu.memory_space<vmem>>, vector<8x8xf32>
    %277 = vector.extract_strided_slice %275 {offsets = [0, 0], sizes = [8, 78], strides = [1, 1]} : vector<8x100xf32> to vector<8x78xf32>
    %cst_194 = arith.constant dense<0.000000e+00> : vector<8x78xf32>
    %278 = tpu.matmul %276, %277, %cst_194 {dimension_numbers = #tpu.dot_dimension_numbers<[1], [0], [0], [1], [0, 0, 1, 1], [], []>} : vector<8x8xf32>, vector<8x78xf32>, vector<8x78xf32> -> vector<8x78xf32>
    %c0_195 = arith.constant 0 : index
    %c8_196 = arith.constant 8 : index
    %279 = vector.load %arg5[%c0_195, %c8_196] : memref<8x72xf32, #tpu.memory_space<vmem>>, vector<8x8xf32>
    %280 = vector.extract_strided_slice %275 {offsets = [0, 1], sizes = [8, 78], strides = [1, 1]} : vector<8x100xf32> to vector<8x78xf32>
    %cst_197 = arith.constant dense<0.000000e+00> : vector<8x78xf32>
    %281 = tpu.matmul %279, %280, %cst_197 {dimension_numbers = #tpu.dot_dimension_numbers<[1], [0], [0], [1], [0, 0, 1, 1], [], []>} : vector<8x8xf32>, vector<8x78xf32>, vector<8x78xf32> -> vector<8x78xf32>
    %282 = arith.addf %278, %281 : vector<8x78xf32>
    %c0_198 = arith.constant 0 : index
    %c16_199 = arith.constant 16 : index
    %283 = vector.load %arg5[%c0_198, %c16_199] : memref<8x72xf32, #tpu.memory_space<vmem>>, vector<8x8xf32>
    %284 = vector.extract_strided_slice %275 {offsets = [0, 2], sizes = [8, 78], strides = [1, 1]} : vector<8x100xf32> to vector<8x78xf32>
    %cst_200 = arith.constant dense<0.000000e+00> : vector<8x78xf32>
    %285 = tpu.matmul %283, %284, %cst_200 {dimension_numbers = #tpu.dot_dimension_numbers<[1], [0], [0], [1], [0, 0, 1, 1], [], []>} : vector<8x8xf32>, vector<8x78xf32>, vector<8x78xf32> -> vector<8x78xf32>
    %286 = arith.addf %282, %285 : vector<8x78xf32>
    %c0_201 = arith.constant 0 : index
    %c24_202 = arith.constant 24 : index
    %287 = vector.load %arg5[%c0_201, %c24_202] : memref<8x72xf32, #tpu.memory_space<vmem>>, vector<8x8xf32>
    %288 = vector.extract_strided_slice %275 {offsets = [0, 10], sizes = [8, 78], strides = [1, 1]} : vector<8x100xf32> to vector<8x78xf32>
    %cst_203 = arith.constant dense<0.000000e+00> : vector<8x78xf32>
    %289 = tpu.matmul %287, %288, %cst_203 {dimension_numbers = #tpu.dot_dimension_numbers<[1], [0], [0], [1], [0, 0, 1, 1], [], []>} : vector<8x8xf32>, vector<8x78xf32>, vector<8x78xf32> -> vector<8x78xf32>
    %290 = arith.addf %286, %289 : vector<8x78xf32>
    %c0_204 = arith.constant 0 : index
    %c32_205 = arith.constant 32 : index
    %291 = vector.load %arg5[%c0_204, %c32_205] : memref<8x72xf32, #tpu.memory_space<vmem>>, vector<8x8xf32>
    %292 = vector.extract_strided_slice %275 {offsets = [0, 11], sizes = [8, 78], strides = [1, 1]} : vector<8x100xf32> to vector<8x78xf32>
    %cst_206 = arith.constant dense<0.000000e+00> : vector<8x78xf32>
    %293 = tpu.matmul %291, %292, %cst_206 {dimension_numbers = #tpu.dot_dimension_numbers<[1], [0], [0], [1], [0, 0, 1, 1], [], []>} : vector<8x8xf32>, vector<8x78xf32>, vector<8x78xf32> -> vector<8x78xf32>
    %294 = arith.addf %290, %293 : vector<8x78xf32>
    %c0_207 = arith.constant 0 : index
    %c40_208 = arith.constant 40 : index
    %295 = vector.load %arg5[%c0_207, %c40_208] : memref<8x72xf32, #tpu.memory_space<vmem>>, vector<8x8xf32>
    %296 = vector.extract_strided_slice %275 {offsets = [0, 12], sizes = [8, 78], strides = [1, 1]} : vector<8x100xf32> to vector<8x78xf32>
    %cst_209 = arith.constant dense<0.000000e+00> : vector<8x78xf32>
    %297 = tpu.matmul %295, %296, %cst_209 {dimension_numbers = #tpu.dot_dimension_numbers<[1], [0], [0], [1], [0, 0, 1, 1], [], []>} : vector<8x8xf32>, vector<8x78xf32>, vector<8x78xf32> -> vector<8x78xf32>
    %298 = arith.addf %294, %297 : vector<8x78xf32>
    %c0_210 = arith.constant 0 : index
    %c48_211 = arith.constant 48 : index
    %299 = vector.load %arg5[%c0_210, %c48_211] : memref<8x72xf32, #tpu.memory_space<vmem>>, vector<8x8xf32>
    %300 = vector.extract_strided_slice %275 {offsets = [0, 20], sizes = [8, 78], strides = [1, 1]} : vector<8x100xf32> to vector<8x78xf32>
    %cst_212 = arith.constant dense<0.000000e+00> : vector<8x78xf32>
    %301 = tpu.matmul %299, %300, %cst_212 {dimension_numbers = #tpu.dot_dimension_numbers<[1], [0], [0], [1], [0, 0, 1, 1], [], []>} : vector<8x8xf32>, vector<8x78xf32>, vector<8x78xf32> -> vector<8x78xf32>
    %302 = arith.addf %298, %301 : vector<8x78xf32>
    %c0_213 = arith.constant 0 : index
    %c56_214 = arith.constant 56 : index
    %303 = vector.load %arg5[%c0_213, %c56_214] : memref<8x72xf32, #tpu.memory_space<vmem>>, vector<8x8xf32>
    %304 = vector.extract_strided_slice %275 {offsets = [0, 21], sizes = [8, 78], strides = [1, 1]} : vector<8x100xf32> to vector<8x78xf32>
    %cst_215 = arith.constant dense<0.000000e+00> : vector<8x78xf32>
    %305 = tpu.matmul %303, %304, %cst_215 {dimension_numbers = #tpu.dot_dimension_numbers<[1], [0], [0], [1], [0, 0, 1, 1], [], []>} : vector<8x8xf32>, vector<8x78xf32>, vector<8x78xf32> -> vector<8x78xf32>
    %306 = arith.addf %302, %305 : vector<8x78xf32>
    %c0_216 = arith.constant 0 : index
    %c64_217 = arith.constant 64 : index
    %307 = vector.load %arg5[%c0_216, %c64_217] : memref<8x72xf32, #tpu.memory_space<vmem>>, vector<8x8xf32>
    %308 = vector.extract_strided_slice %275 {offsets = [0, 22], sizes = [8, 78], strides = [1, 1]} : vector<8x100xf32> to vector<8x78xf32>
    %cst_218 = arith.constant dense<0.000000e+00> : vector<8x78xf32>
    %309 = tpu.matmul %307, %308, %cst_218 {dimension_numbers = #tpu.dot_dimension_numbers<[1], [0], [0], [1], [0, 0, 1, 1], [], []>} : vector<8x8xf32>, vector<8x78xf32>, vector<8x78xf32> -> vector<8x78xf32>
    %310 = arith.addf %306, %309 : vector<8x78xf32>
    %311 = vector.extract_strided_slice %217 {offsets = [0, 26], sizes = [8, 8], strides = [1, 1]} : vector<8x144xf32> to vector<8x8xf32>
    %312 = vector.extract_strided_slice %310 {offsets = [0, 0], sizes = [8, 8], strides = [1, 1]} : vector<8x78xf32> to vector<8x8xf32>
    %313 = arith.addf %312, %311 : vector<8x8xf32>
    %cst_219 = arith.constant 0.000000e+00 : f32
    %314 = vector.broadcast %cst_219 : f32 to vector<8x8xf32>
    %315 = arith.maximumf %313, %314 : vector<8x8xf32>
    %c0_220 = arith.constant 0 : index
    %c26_221 = arith.constant 26 : index
    %316 = vector.load %arg14[%c0_220, %c26_221] : memref<8x144xf32, #tpu.memory_space<vmem>>, vector<8x8xf32>
    tpu.vector_store %arg14[%c0_220, %c26_221], %315 {strides = array<i32>} : memref<8x144xf32, #tpu.memory_space<vmem>>, vector<8x8xf32>,
    %317 = vector.extract_strided_slice %217 {offsets = [0, 38], sizes = [8, 8], strides = [1, 1]} : vector<8x144xf32> to vector<8x8xf32>
    %318 = vector.extract_strided_slice %310 {offsets = [0, 10], sizes = [8, 8], strides = [1, 1]} : vector<8x78xf32> to vector<8x8xf32>
    %319 = arith.addf %318, %317 : vector<8x8xf32>
    %cst_222 = arith.constant 0.000000e+00 : f32
    %320 = vector.broadcast %cst_222 : f32 to vector<8x8xf32>
    %321 = arith.maximumf %319, %320 : vector<8x8xf32>
    %c0_223 = arith.constant 0 : index
    %c38_224 = arith.constant 38 : index
    %322 = vector.load %arg14[%c0_223, %c38_224] : memref<8x144xf32, #tpu.memory_space<vmem>>, vector<8x8xf32>
    tpu.vector_store %arg14[%c0_223, %c38_224], %321 {strides = array<i32>} : memref<8x144xf32, #tpu.memory_space<vmem>>, vector<8x8xf32>,
    %323 = vector.extract_strided_slice %217 {offsets = [0, 50], sizes = [8, 8], strides = [1, 1]} : vector<8x144xf32> to vector<8x8xf32>
    %324 = vector.extract_strided_slice %310 {offsets = [0, 20], sizes = [8, 8], strides = [1, 1]} : vector<8x78xf32> to vector<8x8xf32>
    %325 = arith.addf %324, %323 : vector<8x8xf32>
    %cst_225 = arith.constant 0.000000e+00 : f32
    %326 = vector.broadcast %cst_225 : f32 to vector<8x8xf32>
    %327 = arith.maximumf %325, %326 : vector<8x8xf32>
    %c0_226 = arith.constant 0 : index
    %c50_227 = arith.constant 50 : index
    %328 = vector.load %arg14[%c0_226, %c50_227] : memref<8x144xf32, #tpu.memory_space<vmem>>, vector<8x8xf32>
    tpu.vector_store %arg14[%c0_226, %c50_227], %327 {strides = array<i32>} : memref<8x144xf32, #tpu.memory_space<vmem>>, vector<8x8xf32>,
    %329 = vector.extract_strided_slice %217 {offsets = [0, 62], sizes = [8, 8], strides = [1, 1]} : vector<8x144xf32> to vector<8x8xf32>
    %330 = vector.extract_strided_slice %310 {offsets = [0, 30], sizes = [8, 8], strides = [1, 1]} : vector<8x78xf32> to vector<8x8xf32>
    %331 = arith.addf %330, %329 : vector<8x8xf32>
    %cst_228 = arith.constant 0.000000e+00 : f32
    %332 = vector.broadcast %cst_228 : f32 to vector<8x8xf32>
    %333 = arith.maximumf %331, %332 : vector<8x8xf32>
    %c0_229 = arith.constant 0 : index
    %c62_230 = arith.constant 62 : index
    %334 = vector.load %arg14[%c0_229, %c62_230] : memref<8x144xf32, #tpu.memory_space<vmem>>, vector<8x8xf32>
    tpu.vector_store %arg14[%c0_229, %c62_230], %333 {strides = array<i32>} : memref<8x144xf32, #tpu.memory_space<vmem>>, vector<8x8xf32>,
    %335 = vector.extract_strided_slice %217 {offsets = [0, 74], sizes = [8, 8], strides = [1, 1]} : vector<8x144xf32> to vector<8x8xf32>
    %336 = vector.extract_strided_slice %310 {offsets = [0, 40], sizes = [8, 8], strides = [1, 1]} : vector<8x78xf32> to vector<8x8xf32>
    %337 = arith.addf %336, %335 : vector<8x8xf32>
    %cst_231 = arith.constant 0.000000e+00 : f32
    %338 = vector.broadcast %cst_231 : f32 to vector<8x8xf32>
    %339 = arith.maximumf %337, %338 : vector<8x8xf32>
    %c0_232 = arith.constant 0 : index
    %c74_233 = arith.constant 74 : index
    %340 = vector.load %arg14[%c0_232, %c74_233] : memref<8x144xf32, #tpu.memory_space<vmem>>, vector<8x8xf32>
    tpu.vector_store %arg14[%c0_232, %c74_233], %339 {strides = array<i32>} : memref<8x144xf32, #tpu.memory_space<vmem>>, vector<8x8xf32>,
    %341 = vector.extract_strided_slice %217 {offsets = [0, 86], sizes = [8, 8], strides = [1, 1]} : vector<8x144xf32> to vector<8x8xf32>
    %342 = vector.extract_strided_slice %310 {offsets = [0, 50], sizes = [8, 8], strides = [1, 1]} : vector<8x78xf32> to vector<8x8xf32>
    %343 = arith.addf %342, %341 : vector<8x8xf32>
    %cst_234 = arith.constant 0.000000e+00 : f32
    %344 = vector.broadcast %cst_234 : f32 to vector<8x8xf32>
    %345 = arith.maximumf %343, %344 : vector<8x8xf32>
    %c0_235 = arith.constant 0 : index
    %c86_236 = arith.constant 86 : index
    %346 = vector.load %arg14[%c0_235, %c86_236] : memref<8x144xf32, #tpu.memory_space<vmem>>, vector<8x8xf32>
    tpu.vector_store %arg14[%c0_235, %c86_236], %345 {strides = array<i32>} : memref<8x144xf32, #tpu.memory_space<vmem>>, vector<8x8xf32>,
    %347 = vector.extract_strided_slice %217 {offsets = [0, 98], sizes = [8, 8], strides = [1, 1]} : vector<8x144xf32> to vector<8x8xf32>
    %348 = vector.extract_strided_slice %310 {offsets = [0, 60], sizes = [8, 8], strides = [1, 1]} : vector<8x78xf32> to vector<8x8xf32>
    %349 = arith.addf %348, %347 : vector<8x8xf32>
    %cst_237 = arith.constant 0.000000e+00 : f32
    %350 = vector.broadcast %cst_237 : f32 to vector<8x8xf32>
    %351 = arith.maximumf %349, %350 : vector<8x8xf32>
    %c0_238 = arith.constant 0 : index
    %c98_239 = arith.constant 98 : index
    %352 = vector.load %arg14[%c0_238, %c98_239] : memref<8x144xf32, #tpu.memory_space<vmem>>, vector<8x8xf32>
    tpu.vector_store %arg14[%c0_238, %c98_239], %351 {strides = array<i32>} : memref<8x144xf32, #tpu.memory_space<vmem>>, vector<8x8xf32>,
    %353 = vector.extract_strided_slice %217 {offsets = [0, 110], sizes = [8, 8], strides = [1, 1]} : vector<8x144xf32> to vector<8x8xf32>
    %354 = vector.extract_strided_slice %310 {offsets = [0, 70], sizes = [8, 8], strides = [1, 1]} : vector<8x78xf32> to vector<8x8xf32>
    %355 = arith.addf %354, %353 : vector<8x8xf32>
    %cst_240 = arith.constant 0.000000e+00 : f32
    %356 = vector.broadcast %cst_240 : f32 to vector<8x8xf32>
    %357 = arith.maximumf %355, %356 : vector<8x8xf32>
    %c0_241 = arith.constant 0 : index
    %c110_242 = arith.constant 110 : index
    %358 = vector.load %arg14[%c0_241, %c110_242] : memref<8x144xf32, #tpu.memory_space<vmem>>, vector<8x8xf32>
    tpu.vector_store %arg14[%c0_241, %c110_242], %357 {strides = array<i32>} : memref<8x144xf32, #tpu.memory_space<vmem>>, vector<8x8xf32>,
    %c0_243 = arith.constant 0 : index
    %c0_244 = arith.constant 0 : index
    %359 = vector.load %arg14[%c0_243, %c0_244] : memref<8x144xf32, #tpu.memory_space<vmem>>, vector<8x144xf32>
    %c0_245 = arith.constant 0 : index
    %c0_246 = arith.constant 0 : index
    %360 = vector.load %arg6[%c0_245, %c0_246] : memref<8x72xf32, #tpu.memory_space<vmem>>, vector<8x8xf32>
    %361 = vector.extract_strided_slice %359 {offsets = [0, 0], sizes = [8, 118], strides = [1, 1]} : vector<8x144xf32> to vector<8x118xf32>
    %cst_247 = arith.constant dense<0.000000e+00> : vector<8x118xf32>
    %362 = tpu.matmul %360, %361, %cst_247 {dimension_numbers = #tpu.dot_dimension_numbers<[1], [0], [0], [1], [0, 0, 1, 1], [], []>} : vector<8x8xf32>, vector<8x118xf32>, vector<8x118xf32> -> vector<8x118xf32>
    %c0_248 = arith.constant 0 : index
    %c8_249 = arith.constant 8 : index
    %363 = vector.load %arg6[%c0_248, %c8_249] : memref<8x72xf32, #tpu.memory_space<vmem>>, vector<8x8xf32>
    %364 = vector.extract_strided_slice %359 {offsets = [0, 1], sizes = [8, 118], strides = [1, 1]} : vector<8x144xf32> to vector<8x118xf32>
    %cst_250 = arith.constant dense<0.000000e+00> : vector<8x118xf32>
    %365 = tpu.matmul %363, %364, %cst_250 {dimension_numbers = #tpu.dot_dimension_numbers<[1], [0], [0], [1], [0, 0, 1, 1], [], []>} : vector<8x8xf32>, vector<8x118xf32>, vector<8x118xf32> -> vector<8x118xf32>
    %366 = arith.addf %362, %365 : vector<8x118xf32>
    %c0_251 = arith.constant 0 : index
    %c16_252 = arith.constant 16 : index
    %367 = vector.load %arg6[%c0_251, %c16_252] : memref<8x72xf32, #tpu.memory_space<vmem>>, vector<8x8xf32>
    %368 = vector.extract_strided_slice %359 {offsets = [0, 2], sizes = [8, 118], strides = [1, 1]} : vector<8x144xf32> to vector<8x118xf32>
    %cst_253 = arith.constant dense<0.000000e+00> : vector<8x118xf32>
    %369 = tpu.matmul %367, %368, %cst_253 {dimension_numbers = #tpu.dot_dimension_numbers<[1], [0], [0], [1], [0, 0, 1, 1], [], []>} : vector<8x8xf32>, vector<8x118xf32>, vector<8x118xf32> -> vector<8x118xf32>
    %370 = arith.addf %366, %369 : vector<8x118xf32>
    %c0_254 = arith.constant 0 : index
    %c24_255 = arith.constant 24 : index
    %371 = vector.load %arg6[%c0_254, %c24_255] : memref<8x72xf32, #tpu.memory_space<vmem>>, vector<8x8xf32>
    %372 = vector.extract_strided_slice %359 {offsets = [0, 12], sizes = [8, 118], strides = [1, 1]} : vector<8x144xf32> to vector<8x118xf32>
    %cst_256 = arith.constant dense<0.000000e+00> : vector<8x118xf32>
    %373 = tpu.matmul %371, %372, %cst_256 {dimension_numbers = #tpu.dot_dimension_numbers<[1], [0], [0], [1], [0, 0, 1, 1], [], []>} : vector<8x8xf32>, vector<8x118xf32>, vector<8x118xf32> -> vector<8x118xf32>
    %374 = arith.addf %370, %373 : vector<8x118xf32>
    %c0_257 = arith.constant 0 : index
    %c32_258 = arith.constant 32 : index
    %375 = vector.load %arg6[%c0_257, %c32_258] : memref<8x72xf32, #tpu.memory_space<vmem>>, vector<8x8xf32>
    %376 = vector.extract_strided_slice %359 {offsets = [0, 13], sizes = [8, 118], strides = [1, 1]} : vector<8x144xf32> to vector<8x118xf32>
    %cst_259 = arith.constant dense<0.000000e+00> : vector<8x118xf32>
    %377 = tpu.matmul %375, %376, %cst_259 {dimension_numbers = #tpu.dot_dimension_numbers<[1], [0], [0], [1], [0, 0, 1, 1], [], []>} : vector<8x8xf32>, vector<8x118xf32>, vector<8x118xf32> -> vector<8x118xf32>
    %378 = arith.addf %374, %377 : vector<8x118xf32>
    %c0_260 = arith.constant 0 : index
    %c40_261 = arith.constant 40 : index
    %379 = vector.load %arg6[%c0_260, %c40_261] : memref<8x72xf32, #tpu.memory_space<vmem>>, vector<8x8xf32>
    %380 = vector.extract_strided_slice %359 {offsets = [0, 14], sizes = [8, 118], strides = [1, 1]} : vector<8x144xf32> to vector<8x118xf32>
    %cst_262 = arith.constant dense<0.000000e+00> : vector<8x118xf32>
    %381 = tpu.matmul %379, %380, %cst_262 {dimension_numbers = #tpu.dot_dimension_numbers<[1], [0], [0], [1], [0, 0, 1, 1], [], []>} : vector<8x8xf32>, vector<8x118xf32>, vector<8x118xf32> -> vector<8x118xf32>
    %382 = arith.addf %378, %381 : vector<8x118xf32>
    %c0_263 = arith.constant 0 : index
    %c48_264 = arith.constant 48 : index
    %383 = vector.load %arg6[%c0_263, %c48_264] : memref<8x72xf32, #tpu.memory_space<vmem>>, vector<8x8xf32>
    %384 = vector.extract_strided_slice %359 {offsets = [0, 24], sizes = [8, 118], strides = [1, 1]} : vector<8x144xf32> to vector<8x118xf32>
    %cst_265 = arith.constant dense<0.000000e+00> : vector<8x118xf32>
    %385 = tpu.matmul %383, %384, %cst_265 {dimension_numbers = #tpu.dot_dimension_numbers<[1], [0], [0], [1], [0, 0, 1, 1], [], []>} : vector<8x8xf32>, vector<8x118xf32>, vector<8x118xf32> -> vector<8x118xf32>
    %386 = arith.addf %382, %385 : vector<8x118xf32>
    %c0_266 = arith.constant 0 : index
    %c56_267 = arith.constant 56 : index
    %387 = vector.load %arg6[%c0_266, %c56_267] : memref<8x72xf32, #tpu.memory_space<vmem>>, vector<8x8xf32>
    %388 = vector.extract_strided_slice %359 {offsets = [0, 25], sizes = [8, 118], strides = [1, 1]} : vector<8x144xf32> to vector<8x118xf32>
    %cst_268 = arith.constant dense<0.000000e+00> : vector<8x118xf32>
    %389 = tpu.matmul %387, %388, %cst_268 {dimension_numbers = #tpu.dot_dimension_numbers<[1], [0], [0], [1], [0, 0, 1, 1], [], []>} : vector<8x8xf32>, vector<8x118xf32>, vector<8x118xf32> -> vector<8x118xf32>
    %390 = arith.addf %386, %389 : vector<8x118xf32>
    %c0_269 = arith.constant 0 : index
    %c64_270 = arith.constant 64 : index
    %391 = vector.load %arg6[%c0_269, %c64_270] : memref<8x72xf32, #tpu.memory_space<vmem>>, vector<8x8xf32>
    %392 = vector.extract_strided_slice %359 {offsets = [0, 26], sizes = [8, 118], strides = [1, 1]} : vector<8x144xf32> to vector<8x118xf32>
    %cst_271 = arith.constant dense<0.000000e+00> : vector<8x118xf32>
    %393 = tpu.matmul %391, %392, %cst_271 {dimension_numbers = #tpu.dot_dimension_numbers<[1], [0], [0], [1], [0, 0, 1, 1], [], []>} : vector<8x8xf32>, vector<8x118xf32>, vector<8x118xf32> -> vector<8x118xf32>
    %394 = arith.addf %390, %393 : vector<8x118xf32>
    %cst_272 = arith.constant 0.000000e+00 : f32
    %395 = vector.broadcast %cst_272 : f32 to vector<8x118xf32>
    %396 = arith.maximumf %394, %395 : vector<8x118xf32>
    %397 = vector.extract_strided_slice %396 {offsets = [0, 0], sizes = [8, 10], strides = [1, 1]} : vector<8x118xf32> to vector<8x10xf32>
    %c0_273 = arith.constant 0 : index
    %c0_274 = arith.constant 0 : index
    %398 = vector.load %arg15[%c0_273, %c0_274] : memref<8x100xf32, #tpu.memory_space<vmem>>, vector<8x10xf32>
    tpu.vector_store %arg15[%c0_273, %c0_274], %397 {strides = array<i32>} : memref<8x100xf32, #tpu.memory_space<vmem>>, vector<8x10xf32>,
    %399 = vector.extract_strided_slice %396 {offsets = [0, 12], sizes = [8, 10], strides = [1, 1]} : vector<8x118xf32> to vector<8x10xf32>
    %c0_275 = arith.constant 0 : index
    %c10_276 = arith.constant 10 : index
    %400 = vector.load %arg15[%c0_275, %c10_276] : memref<8x100xf32, #tpu.memory_space<vmem>>, vector<8x10xf32>
    tpu.vector_store %arg15[%c0_275, %c10_276], %399 {strides = array<i32>} : memref<8x100xf32, #tpu.memory_space<vmem>>, vector<8x10xf32>,
    %401 = vector.extract_strided_slice %396 {offsets = [0, 24], sizes = [8, 10], strides = [1, 1]} : vector<8x118xf32> to vector<8x10xf32>
    %c0_277 = arith.constant 0 : index
    %c20_278 = arith.constant 20 : index
    %402 = vector.load %arg15[%c0_277, %c20_278] : memref<8x100xf32, #tpu.memory_space<vmem>>, vector<8x10xf32>
    tpu.vector_store %arg15[%c0_277, %c20_278], %401 {strides = array<i32>} : memref<8x100xf32, #tpu.memory_space<vmem>>, vector<8x10xf32>,
    %403 = vector.extract_strided_slice %396 {offsets = [0, 36], sizes = [8, 10], strides = [1, 1]} : vector<8x118xf32> to vector<8x10xf32>
    %c0_279 = arith.constant 0 : index
    %c30_280 = arith.constant 30 : index
    %404 = vector.load %arg15[%c0_279, %c30_280] : memref<8x100xf32, #tpu.memory_space<vmem>>, vector<8x10xf32>
    tpu.vector_store %arg15[%c0_279, %c30_280], %403 {strides = array<i32>} : memref<8x100xf32, #tpu.memory_space<vmem>>, vector<8x10xf32>,
    %405 = vector.extract_strided_slice %396 {offsets = [0, 48], sizes = [8, 10], strides = [1, 1]} : vector<8x118xf32> to vector<8x10xf32>
    %c0_281 = arith.constant 0 : index
    %c40_282 = arith.constant 40 : index
    %406 = vector.load %arg15[%c0_281, %c40_282] : memref<8x100xf32, #tpu.memory_space<vmem>>, vector<8x10xf32>
    tpu.vector_store %arg15[%c0_281, %c40_282], %405 {strides = array<i32>} : memref<8x100xf32, #tpu.memory_space<vmem>>, vector<8x10xf32>,
    %407 = vector.extract_strided_slice %396 {offsets = [0, 60], sizes = [8, 10], strides = [1, 1]} : vector<8x118xf32> to vector<8x10xf32>
    %c0_283 = arith.constant 0 : index
    %c50_284 = arith.constant 50 : index
    %408 = vector.load %arg15[%c0_283, %c50_284] : memref<8x100xf32, #tpu.memory_space<vmem>>, vector<8x10xf32>
    tpu.vector_store %arg15[%c0_283, %c50_284], %407 {strides = array<i32>} : memref<8x100xf32, #tpu.memory_space<vmem>>, vector<8x10xf32>,
    %409 = vector.extract_strided_slice %396 {offsets = [0, 72], sizes = [8, 10], strides = [1, 1]} : vector<8x118xf32> to vector<8x10xf32>
    %c0_285 = arith.constant 0 : index
    %c60_286 = arith.constant 60 : index
    %410 = vector.load %arg15[%c0_285, %c60_286] : memref<8x100xf32, #tpu.memory_space<vmem>>, vector<8x10xf32>
    tpu.vector_store %arg15[%c0_285, %c60_286], %409 {strides = array<i32>} : memref<8x100xf32, #tpu.memory_space<vmem>>, vector<8x10xf32>,
    %411 = vector.extract_strided_slice %396 {offsets = [0, 84], sizes = [8, 10], strides = [1, 1]} : vector<8x118xf32> to vector<8x10xf32>
    %c0_287 = arith.constant 0 : index
    %c70_288 = arith.constant 70 : index
    %412 = vector.load %arg15[%c0_287, %c70_288] : memref<8x100xf32, #tpu.memory_space<vmem>>, vector<8x10xf32>
    tpu.vector_store %arg15[%c0_287, %c70_288], %411 {strides = array<i32>} : memref<8x100xf32, #tpu.memory_space<vmem>>, vector<8x10xf32>,
    %413 = vector.extract_strided_slice %396 {offsets = [0, 96], sizes = [8, 10], strides = [1, 1]} : vector<8x118xf32> to vector<8x10xf32>
    %c0_289 = arith.constant 0 : index
    %c80_290 = arith.constant 80 : index
    %414 = vector.load %arg15[%c0_289, %c80_290] : memref<8x100xf32, #tpu.memory_space<vmem>>, vector<8x10xf32>
    tpu.vector_store %arg15[%c0_289, %c80_290], %413 {strides = array<i32>} : memref<8x100xf32, #tpu.memory_space<vmem>>, vector<8x10xf32>,
    %415 = vector.extract_strided_slice %396 {offsets = [0, 108], sizes = [8, 10], strides = [1, 1]} : vector<8x118xf32> to vector<8x10xf32>
    %c0_291 = arith.constant 0 : index
    %c90_292 = arith.constant 90 : index
    %416 = vector.load %arg15[%c0_291, %c90_292] : memref<8x100xf32, #tpu.memory_space<vmem>>, vector<8x10xf32>
    tpu.vector_store %arg15[%c0_291, %c90_292], %415 {strides = array<i32>} : memref<8x100xf32, #tpu.memory_space<vmem>>, vector<8x10xf32>,
    %c0_293 = arith.constant 0 : index
    %c0_294 = arith.constant 0 : index
    %417 = vector.load %arg15[%c0_293, %c0_294] : memref<8x100xf32, #tpu.memory_space<vmem>>, vector<8x100xf32>
    %c0_295 = arith.constant 0 : index
    %c0_296 = arith.constant 0 : index
    %418 = vector.load %arg7[%c0_295, %c0_296] : memref<8x72xf32, #tpu.memory_space<vmem>>, vector<8x8xf32>
    %419 = vector.extract_strided_slice %417 {offsets = [0, 0], sizes = [8, 78], strides = [1, 1]} : vector<8x100xf32> to vector<8x78xf32>
    %cst_297 = arith.constant dense<0.000000e+00> : vector<8x78xf32>
    %420 = tpu.matmul %418, %419, %cst_297 {dimension_numbers = #tpu.dot_dimension_numbers<[1], [0], [0], [1], [0, 0, 1, 1], [], []>} : vector<8x8xf32>, vector<8x78xf32>, vector<8x78xf32> -> vector<8x78xf32>
    %c0_298 = arith.constant 0 : index
    %c8_299 = arith.constant 8 : index
    %421 = vector.load %arg7[%c0_298, %c8_299] : memref<8x72xf32, #tpu.memory_space<vmem>>, vector<8x8xf32>
    %422 = vector.extract_strided_slice %417 {offsets = [0, 1], sizes = [8, 78], strides = [1, 1]} : vector<8x100xf32> to vector<8x78xf32>
    %cst_300 = arith.constant dense<0.000000e+00> : vector<8x78xf32>
    %423 = tpu.matmul %421, %422, %cst_300 {dimension_numbers = #tpu.dot_dimension_numbers<[1], [0], [0], [1], [0, 0, 1, 1], [], []>} : vector<8x8xf32>, vector<8x78xf32>, vector<8x78xf32> -> vector<8x78xf32>
    %424 = arith.addf %420, %423 : vector<8x78xf32>
    %c0_301 = arith.constant 0 : index
    %c16_302 = arith.constant 16 : index
    %425 = vector.load %arg7[%c0_301, %c16_302] : memref<8x72xf32, #tpu.memory_space<vmem>>, vector<8x8xf32>
    %426 = vector.extract_strided_slice %417 {offsets = [0, 2], sizes = [8, 78], strides = [1, 1]} : vector<8x100xf32> to vector<8x78xf32>
    %cst_303 = arith.constant dense<0.000000e+00> : vector<8x78xf32>
    %427 = tpu.matmul %425, %426, %cst_303 {dimension_numbers = #tpu.dot_dimension_numbers<[1], [0], [0], [1], [0, 0, 1, 1], [], []>} : vector<8x8xf32>, vector<8x78xf32>, vector<8x78xf32> -> vector<8x78xf32>
    %428 = arith.addf %424, %427 : vector<8x78xf32>
    %c0_304 = arith.constant 0 : index
    %c24_305 = arith.constant 24 : index
    %429 = vector.load %arg7[%c0_304, %c24_305] : memref<8x72xf32, #tpu.memory_space<vmem>>, vector<8x8xf32>
    %430 = vector.extract_strided_slice %417 {offsets = [0, 10], sizes = [8, 78], strides = [1, 1]} : vector<8x100xf32> to vector<8x78xf32>
    %cst_306 = arith.constant dense<0.000000e+00> : vector<8x78xf32>
    %431 = tpu.matmul %429, %430, %cst_306 {dimension_numbers = #tpu.dot_dimension_numbers<[1], [0], [0], [1], [0, 0, 1, 1], [], []>} : vector<8x8xf32>, vector<8x78xf32>, vector<8x78xf32> -> vector<8x78xf32>
    %432 = arith.addf %428, %431 : vector<8x78xf32>
    %c0_307 = arith.constant 0 : index
    %c32_308 = arith.constant 32 : index
    %433 = vector.load %arg7[%c0_307, %c32_308] : memref<8x72xf32, #tpu.memory_space<vmem>>, vector<8x8xf32>
    %434 = vector.extract_strided_slice %417 {offsets = [0, 11], sizes = [8, 78], strides = [1, 1]} : vector<8x100xf32> to vector<8x78xf32>
    %cst_309 = arith.constant dense<0.000000e+00> : vector<8x78xf32>
    %435 = tpu.matmul %433, %434, %cst_309 {dimension_numbers = #tpu.dot_dimension_numbers<[1], [0], [0], [1], [0, 0, 1, 1], [], []>} : vector<8x8xf32>, vector<8x78xf32>, vector<8x78xf32> -> vector<8x78xf32>
    %436 = arith.addf %432, %435 : vector<8x78xf32>
    %c0_310 = arith.constant 0 : index
    %c40_311 = arith.constant 40 : index
    %437 = vector.load %arg7[%c0_310, %c40_311] : memref<8x72xf32, #tpu.memory_space<vmem>>, vector<8x8xf32>
    %438 = vector.extract_strided_slice %417 {offsets = [0, 12], sizes = [8, 78], strides = [1, 1]} : vector<8x100xf32> to vector<8x78xf32>
    %cst_312 = arith.constant dense<0.000000e+00> : vector<8x78xf32>
    %439 = tpu.matmul %437, %438, %cst_312 {dimension_numbers = #tpu.dot_dimension_numbers<[1], [0], [0], [1], [0, 0, 1, 1], [], []>} : vector<8x8xf32>, vector<8x78xf32>, vector<8x78xf32> -> vector<8x78xf32>
    %440 = arith.addf %436, %439 : vector<8x78xf32>
    %c0_313 = arith.constant 0 : index
    %c48_314 = arith.constant 48 : index
    %441 = vector.load %arg7[%c0_313, %c48_314] : memref<8x72xf32, #tpu.memory_space<vmem>>, vector<8x8xf32>
    %442 = vector.extract_strided_slice %417 {offsets = [0, 20], sizes = [8, 78], strides = [1, 1]} : vector<8x100xf32> to vector<8x78xf32>
    %cst_315 = arith.constant dense<0.000000e+00> : vector<8x78xf32>
    %443 = tpu.matmul %441, %442, %cst_315 {dimension_numbers = #tpu.dot_dimension_numbers<[1], [0], [0], [1], [0, 0, 1, 1], [], []>} : vector<8x8xf32>, vector<8x78xf32>, vector<8x78xf32> -> vector<8x78xf32>
    %444 = arith.addf %440, %443 : vector<8x78xf32>
    %c0_316 = arith.constant 0 : index
    %c56_317 = arith.constant 56 : index
    %445 = vector.load %arg7[%c0_316, %c56_317] : memref<8x72xf32, #tpu.memory_space<vmem>>, vector<8x8xf32>
    %446 = vector.extract_strided_slice %417 {offsets = [0, 21], sizes = [8, 78], strides = [1, 1]} : vector<8x100xf32> to vector<8x78xf32>
    %cst_318 = arith.constant dense<0.000000e+00> : vector<8x78xf32>
    %447 = tpu.matmul %445, %446, %cst_318 {dimension_numbers = #tpu.dot_dimension_numbers<[1], [0], [0], [1], [0, 0, 1, 1], [], []>} : vector<8x8xf32>, vector<8x78xf32>, vector<8x78xf32> -> vector<8x78xf32>
    %448 = arith.addf %444, %447 : vector<8x78xf32>
    %c0_319 = arith.constant 0 : index
    %c64_320 = arith.constant 64 : index
    %449 = vector.load %arg7[%c0_319, %c64_320] : memref<8x72xf32, #tpu.memory_space<vmem>>, vector<8x8xf32>
    %450 = vector.extract_strided_slice %417 {offsets = [0, 22], sizes = [8, 78], strides = [1, 1]} : vector<8x100xf32> to vector<8x78xf32>
    %cst_321 = arith.constant dense<0.000000e+00> : vector<8x78xf32>
    %451 = tpu.matmul %449, %450, %cst_321 {dimension_numbers = #tpu.dot_dimension_numbers<[1], [0], [0], [1], [0, 0, 1, 1], [], []>} : vector<8x8xf32>, vector<8x78xf32>, vector<8x78xf32> -> vector<8x78xf32>
    %452 = arith.addf %448, %451 : vector<8x78xf32>
    %453 = vector.extract_strided_slice %359 {offsets = [0, 26], sizes = [8, 8], strides = [1, 1]} : vector<8x144xf32> to vector<8x8xf32>
    %454 = vector.extract_strided_slice %452 {offsets = [0, 0], sizes = [8, 8], strides = [1, 1]} : vector<8x78xf32> to vector<8x8xf32>
    %455 = arith.addf %454, %453 : vector<8x8xf32>
    %cst_322 = arith.constant 0.000000e+00 : f32
    %456 = vector.broadcast %cst_322 : f32 to vector<8x8xf32>
    %457 = arith.maximumf %455, %456 : vector<8x8xf32>
    %c0_323 = arith.constant 0 : index
    %c26_324 = arith.constant 26 : index
    %458 = vector.load %arg14[%c0_323, %c26_324] : memref<8x144xf32, #tpu.memory_space<vmem>>, vector<8x8xf32>
    tpu.vector_store %arg14[%c0_323, %c26_324], %457 {strides = array<i32>} : memref<8x144xf32, #tpu.memory_space<vmem>>, vector<8x8xf32>,
    %459 = vector.extract_strided_slice %359 {offsets = [0, 38], sizes = [8, 8], strides = [1, 1]} : vector<8x144xf32> to vector<8x8xf32>
    %460 = vector.extract_strided_slice %452 {offsets = [0, 10], sizes = [8, 8], strides = [1, 1]} : vector<8x78xf32> to vector<8x8xf32>
    %461 = arith.addf %460, %459 : vector<8x8xf32>
    %cst_325 = arith.constant 0.000000e+00 : f32
    %462 = vector.broadcast %cst_325 : f32 to vector<8x8xf32>
    %463 = arith.maximumf %461, %462 : vector<8x8xf32>
    %c0_326 = arith.constant 0 : index
    %c38_327 = arith.constant 38 : index
    %464 = vector.load %arg14[%c0_326, %c38_327] : memref<8x144xf32, #tpu.memory_space<vmem>>, vector<8x8xf32>
    tpu.vector_store %arg14[%c0_326, %c38_327], %463 {strides = array<i32>} : memref<8x144xf32, #tpu.memory_space<vmem>>, vector<8x8xf32>,
    %465 = vector.extract_strided_slice %359 {offsets = [0, 50], sizes = [8, 8], strides = [1, 1]} : vector<8x144xf32> to vector<8x8xf32>
    %466 = vector.extract_strided_slice %452 {offsets = [0, 20], sizes = [8, 8], strides = [1, 1]} : vector<8x78xf32> to vector<8x8xf32>
    %467 = arith.addf %466, %465 : vector<8x8xf32>
    %cst_328 = arith.constant 0.000000e+00 : f32
    %468 = vector.broadcast %cst_328 : f32 to vector<8x8xf32>
    %469 = arith.maximumf %467, %468 : vector<8x8xf32>
    %c0_329 = arith.constant 0 : index
    %c50_330 = arith.constant 50 : index
    %470 = vector.load %arg14[%c0_329, %c50_330] : memref<8x144xf32, #tpu.memory_space<vmem>>, vector<8x8xf32>
    tpu.vector_store %arg14[%c0_329, %c50_330], %469 {strides = array<i32>} : memref<8x144xf32, #tpu.memory_space<vmem>>, vector<8x8xf32>,
    %471 = vector.extract_strided_slice %359 {offsets = [0, 62], sizes = [8, 8], strides = [1, 1]} : vector<8x144xf32> to vector<8x8xf32>
    %472 = vector.extract_strided_slice %452 {offsets = [0, 30], sizes = [8, 8], strides = [1, 1]} : vector<8x78xf32> to vector<8x8xf32>
    %473 = arith.addf %472, %471 : vector<8x8xf32>
    %cst_331 = arith.constant 0.000000e+00 : f32
    %474 = vector.broadcast %cst_331 : f32 to vector<8x8xf32>
    %475 = arith.maximumf %473, %474 : vector<8x8xf32>
    %c0_332 = arith.constant 0 : index
    %c62_333 = arith.constant 62 : index
    %476 = vector.load %arg14[%c0_332, %c62_333] : memref<8x144xf32, #tpu.memory_space<vmem>>, vector<8x8xf32>
    tpu.vector_store %arg14[%c0_332, %c62_333], %475 {strides = array<i32>} : memref<8x144xf32, #tpu.memory_space<vmem>>, vector<8x8xf32>,
    %477 = vector.extract_strided_slice %359 {offsets = [0, 74], sizes = [8, 8], strides = [1, 1]} : vector<8x144xf32> to vector<8x8xf32>
    %478 = vector.extract_strided_slice %452 {offsets = [0, 40], sizes = [8, 8], strides = [1, 1]} : vector<8x78xf32> to vector<8x8xf32>
    %479 = arith.addf %478, %477 : vector<8x8xf32>
    %cst_334 = arith.constant 0.000000e+00 : f32
    %480 = vector.broadcast %cst_334 : f32 to vector<8x8xf32>
    %481 = arith.maximumf %479, %480 : vector<8x8xf32>
    %c0_335 = arith.constant 0 : index
    %c74_336 = arith.constant 74 : index
    %482 = vector.load %arg14[%c0_335, %c74_336] : memref<8x144xf32, #tpu.memory_space<vmem>>, vector<8x8xf32>
    tpu.vector_store %arg14[%c0_335, %c74_336], %481 {strides = array<i32>} : memref<8x144xf32, #tpu.memory_space<vmem>>, vector<8x8xf32>,
    %483 = vector.extract_strided_slice %359 {offsets = [0, 86], sizes = [8, 8], strides = [1, 1]} : vector<8x144xf32> to vector<8x8xf32>
    %484 = vector.extract_strided_slice %452 {offsets = [0, 50], sizes = [8, 8], strides = [1, 1]} : vector<8x78xf32> to vector<8x8xf32>
    %485 = arith.addf %484, %483 : vector<8x8xf32>
    %cst_337 = arith.constant 0.000000e+00 : f32
    %486 = vector.broadcast %cst_337 : f32 to vector<8x8xf32>
    %487 = arith.maximumf %485, %486 : vector<8x8xf32>
    %c0_338 = arith.constant 0 : index
    %c86_339 = arith.constant 86 : index
    %488 = vector.load %arg14[%c0_338, %c86_339] : memref<8x144xf32, #tpu.memory_space<vmem>>, vector<8x8xf32>
    tpu.vector_store %arg14[%c0_338, %c86_339], %487 {strides = array<i32>} : memref<8x144xf32, #tpu.memory_space<vmem>>, vector<8x8xf32>,
    %489 = vector.extract_strided_slice %359 {offsets = [0, 98], sizes = [8, 8], strides = [1, 1]} : vector<8x144xf32> to vector<8x8xf32>
    %490 = vector.extract_strided_slice %452 {offsets = [0, 60], sizes = [8, 8], strides = [1, 1]} : vector<8x78xf32> to vector<8x8xf32>
    %491 = arith.addf %490, %489 : vector<8x8xf32>
    %cst_340 = arith.constant 0.000000e+00 : f32
    %492 = vector.broadcast %cst_340 : f32 to vector<8x8xf32>
    %493 = arith.maximumf %491, %492 : vector<8x8xf32>
    %c0_341 = arith.constant 0 : index
    %c98_342 = arith.constant 98 : index
    %494 = vector.load %arg14[%c0_341, %c98_342] : memref<8x144xf32, #tpu.memory_space<vmem>>, vector<8x8xf32>
    tpu.vector_store %arg14[%c0_341, %c98_342], %493 {strides = array<i32>} : memref<8x144xf32, #tpu.memory_space<vmem>>, vector<8x8xf32>,
    %495 = vector.extract_strided_slice %359 {offsets = [0, 110], sizes = [8, 8], strides = [1, 1]} : vector<8x144xf32> to vector<8x8xf32>
    %496 = vector.extract_strided_slice %452 {offsets = [0, 70], sizes = [8, 8], strides = [1, 1]} : vector<8x78xf32> to vector<8x8xf32>
    %497 = arith.addf %496, %495 : vector<8x8xf32>
    %cst_343 = arith.constant 0.000000e+00 : f32
    %498 = vector.broadcast %cst_343 : f32 to vector<8x8xf32>
    %499 = arith.maximumf %497, %498 : vector<8x8xf32>
    %c0_344 = arith.constant 0 : index
    %c110_345 = arith.constant 110 : index
    %500 = vector.load %arg14[%c0_344, %c110_345] : memref<8x144xf32, #tpu.memory_space<vmem>>, vector<8x8xf32>
    tpu.vector_store %arg14[%c0_344, %c110_345], %499 {strides = array<i32>} : memref<8x144xf32, #tpu.memory_space<vmem>>, vector<8x8xf32>,
    %c0_346 = arith.constant 0 : index
    %c0_347 = arith.constant 0 : index
    %501 = vector.load %arg14[%c0_346, %c0_347] : memref<8x144xf32, #tpu.memory_space<vmem>>, vector<8x144xf32>
    %c0_348 = arith.constant 0 : index
    %c0_349 = arith.constant 0 : index
    %502 = vector.load %arg8[%c0_348, %c0_349] : memref<8x72xf32, #tpu.memory_space<vmem>>, vector<8x8xf32>
    %503 = vector.extract_strided_slice %501 {offsets = [0, 0], sizes = [8, 118], strides = [1, 1]} : vector<8x144xf32> to vector<8x118xf32>
    %cst_350 = arith.constant dense<0.000000e+00> : vector<8x118xf32>
    %504 = tpu.matmul %502, %503, %cst_350 {dimension_numbers = #tpu.dot_dimension_numbers<[1], [0], [0], [1], [0, 0, 1, 1], [], []>} : vector<8x8xf32>, vector<8x118xf32>, vector<8x118xf32> -> vector<8x118xf32>
    %c0_351 = arith.constant 0 : index
    %c8_352 = arith.constant 8 : index
    %505 = vector.load %arg8[%c0_351, %c8_352] : memref<8x72xf32, #tpu.memory_space<vmem>>, vector<8x8xf32>
    %506 = vector.extract_strided_slice %501 {offsets = [0, 1], sizes = [8, 118], strides = [1, 1]} : vector<8x144xf32> to vector<8x118xf32>
    %cst_353 = arith.constant dense<0.000000e+00> : vector<8x118xf32>
    %507 = tpu.matmul %505, %506, %cst_353 {dimension_numbers = #tpu.dot_dimension_numbers<[1], [0], [0], [1], [0, 0, 1, 1], [], []>} : vector<8x8xf32>, vector<8x118xf32>, vector<8x118xf32> -> vector<8x118xf32>
    %508 = arith.addf %504, %507 : vector<8x118xf32>
    %c0_354 = arith.constant 0 : index
    %c16_355 = arith.constant 16 : index
    %509 = vector.load %arg8[%c0_354, %c16_355] : memref<8x72xf32, #tpu.memory_space<vmem>>, vector<8x8xf32>
    %510 = vector.extract_strided_slice %501 {offsets = [0, 2], sizes = [8, 118], strides = [1, 1]} : vector<8x144xf32> to vector<8x118xf32>
    %cst_356 = arith.constant dense<0.000000e+00> : vector<8x118xf32>
    %511 = tpu.matmul %509, %510, %cst_356 {dimension_numbers = #tpu.dot_dimension_numbers<[1], [0], [0], [1], [0, 0, 1, 1], [], []>} : vector<8x8xf32>, vector<8x118xf32>, vector<8x118xf32> -> vector<8x118xf32>
    %512 = arith.addf %508, %511 : vector<8x118xf32>
    %c0_357 = arith.constant 0 : index
    %c24_358 = arith.constant 24 : index
    %513 = vector.load %arg8[%c0_357, %c24_358] : memref<8x72xf32, #tpu.memory_space<vmem>>, vector<8x8xf32>
    %514 = vector.extract_strided_slice %501 {offsets = [0, 12], sizes = [8, 118], strides = [1, 1]} : vector<8x144xf32> to vector<8x118xf32>
    %cst_359 = arith.constant dense<0.000000e+00> : vector<8x118xf32>
    %515 = tpu.matmul %513, %514, %cst_359 {dimension_numbers = #tpu.dot_dimension_numbers<[1], [0], [0], [1], [0, 0, 1, 1], [], []>} : vector<8x8xf32>, vector<8x118xf32>, vector<8x118xf32> -> vector<8x118xf32>
    %516 = arith.addf %512, %515 : vector<8x118xf32>
    %c0_360 = arith.constant 0 : index
    %c32_361 = arith.constant 32 : index
    %517 = vector.load %arg8[%c0_360, %c32_361] : memref<8x72xf32, #tpu.memory_space<vmem>>, vector<8x8xf32>
    %518 = vector.extract_strided_slice %501 {offsets = [0, 13], sizes = [8, 118], strides = [1, 1]} : vector<8x144xf32> to vector<8x118xf32>
    %cst_362 = arith.constant dense<0.000000e+00> : vector<8x118xf32>
    %519 = tpu.matmul %517, %518, %cst_362 {dimension_numbers = #tpu.dot_dimension_numbers<[1], [0], [0], [1], [0, 0, 1, 1], [], []>} : vector<8x8xf32>, vector<8x118xf32>, vector<8x118xf32> -> vector<8x118xf32>
    %520 = arith.addf %516, %519 : vector<8x118xf32>
    %c0_363 = arith.constant 0 : index
    %c40_364 = arith.constant 40 : index
    %521 = vector.load %arg8[%c0_363, %c40_364] : memref<8x72xf32, #tpu.memory_space<vmem>>, vector<8x8xf32>
    %522 = vector.extract_strided_slice %501 {offsets = [0, 14], sizes = [8, 118], strides = [1, 1]} : vector<8x144xf32> to vector<8x118xf32>
    %cst_365 = arith.constant dense<0.000000e+00> : vector<8x118xf32>
    %523 = tpu.matmul %521, %522, %cst_365 {dimension_numbers = #tpu.dot_dimension_numbers<[1], [0], [0], [1], [0, 0, 1, 1], [], []>} : vector<8x8xf32>, vector<8x118xf32>, vector<8x118xf32> -> vector<8x118xf32>
    %524 = arith.addf %520, %523 : vector<8x118xf32>
    %c0_366 = arith.constant 0 : index
    %c48_367 = arith.constant 48 : index
    %525 = vector.load %arg8[%c0_366, %c48_367] : memref<8x72xf32, #tpu.memory_space<vmem>>, vector<8x8xf32>
    %526 = vector.extract_strided_slice %501 {offsets = [0, 24], sizes = [8, 118], strides = [1, 1]} : vector<8x144xf32> to vector<8x118xf32>
    %cst_368 = arith.constant dense<0.000000e+00> : vector<8x118xf32>
    %527 = tpu.matmul %525, %526, %cst_368 {dimension_numbers = #tpu.dot_dimension_numbers<[1], [0], [0], [1], [0, 0, 1, 1], [], []>} : vector<8x8xf32>, vector<8x118xf32>, vector<8x118xf32> -> vector<8x118xf32>
    %528 = arith.addf %524, %527 : vector<8x118xf32>
    %c0_369 = arith.constant 0 : index
    %c56_370 = arith.constant 56 : index
    %529 = vector.load %arg8[%c0_369, %c56_370] : memref<8x72xf32, #tpu.memory_space<vmem>>, vector<8x8xf32>
    %530 = vector.extract_strided_slice %501 {offsets = [0, 25], sizes = [8, 118], strides = [1, 1]} : vector<8x144xf32> to vector<8x118xf32>
    %cst_371 = arith.constant dense<0.000000e+00> : vector<8x118xf32>
    %531 = tpu.matmul %529, %530, %cst_371 {dimension_numbers = #tpu.dot_dimension_numbers<[1], [0], [0], [1], [0, 0, 1, 1], [], []>} : vector<8x8xf32>, vector<8x118xf32>, vector<8x118xf32> -> vector<8x118xf32>
    %532 = arith.addf %528, %531 : vector<8x118xf32>
    %c0_372 = arith.constant 0 : index
    %c64_373 = arith.constant 64 : index
    %533 = vector.load %arg8[%c0_372, %c64_373] : memref<8x72xf32, #tpu.memory_space<vmem>>, vector<8x8xf32>
    %534 = vector.extract_strided_slice %501 {offsets = [0, 26], sizes = [8, 118], strides = [1, 1]} : vector<8x144xf32> to vector<8x118xf32>
    %cst_374 = arith.constant dense<0.000000e+00> : vector<8x118xf32>
    %535 = tpu.matmul %533, %534, %cst_374 {dimension_numbers = #tpu.dot_dimension_numbers<[1], [0], [0], [1], [0, 0, 1, 1], [], []>} : vector<8x8xf32>, vector<8x118xf32>, vector<8x118xf32> -> vector<8x118xf32>
    %536 = arith.addf %532, %535 : vector<8x118xf32>
    %cst_375 = arith.constant 0.000000e+00 : f32
    %537 = vector.broadcast %cst_375 : f32 to vector<8x118xf32>
    %538 = arith.maximumf %536, %537 : vector<8x118xf32>
    %539 = vector.extract_strided_slice %538 {offsets = [0, 0], sizes = [8, 10], strides = [1, 1]} : vector<8x118xf32> to vector<8x10xf32>
    %c0_376 = arith.constant 0 : index
    %c0_377 = arith.constant 0 : index
    %540 = vector.load %arg15[%c0_376, %c0_377] : memref<8x100xf32, #tpu.memory_space<vmem>>, vector<8x10xf32>
    tpu.vector_store %arg15[%c0_376, %c0_377], %539 {strides = array<i32>} : memref<8x100xf32, #tpu.memory_space<vmem>>, vector<8x10xf32>,
    %541 = vector.extract_strided_slice %538 {offsets = [0, 12], sizes = [8, 10], strides = [1, 1]} : vector<8x118xf32> to vector<8x10xf32>
    %c0_378 = arith.constant 0 : index
    %c10_379 = arith.constant 10 : index
    %542 = vector.load %arg15[%c0_378, %c10_379] : memref<8x100xf32, #tpu.memory_space<vmem>>, vector<8x10xf32>
    tpu.vector_store %arg15[%c0_378, %c10_379], %541 {strides = array<i32>} : memref<8x100xf32, #tpu.memory_space<vmem>>, vector<8x10xf32>,
    %543 = vector.extract_strided_slice %538 {offsets = [0, 24], sizes = [8, 10], strides = [1, 1]} : vector<8x118xf32> to vector<8x10xf32>
    %c0_380 = arith.constant 0 : index
    %c20_381 = arith.constant 20 : index
    %544 = vector.load %arg15[%c0_380, %c20_381] : memref<8x100xf32, #tpu.memory_space<vmem>>, vector<8x10xf32>
    tpu.vector_store %arg15[%c0_380, %c20_381], %543 {strides = array<i32>} : memref<8x100xf32, #tpu.memory_space<vmem>>, vector<8x10xf32>,
    %545 = vector.extract_strided_slice %538 {offsets = [0, 36], sizes = [8, 10], strides = [1, 1]} : vector<8x118xf32> to vector<8x10xf32>
    %c0_382 = arith.constant 0 : index
    %c30_383 = arith.constant 30 : index
    %546 = vector.load %arg15[%c0_382, %c30_383] : memref<8x100xf32, #tpu.memory_space<vmem>>, vector<8x10xf32>
    tpu.vector_store %arg15[%c0_382, %c30_383], %545 {strides = array<i32>} : memref<8x100xf32, #tpu.memory_space<vmem>>, vector<8x10xf32>,
    %547 = vector.extract_strided_slice %538 {offsets = [0, 48], sizes = [8, 10], strides = [1, 1]} : vector<8x118xf32> to vector<8x10xf32>
    %c0_384 = arith.constant 0 : index
    %c40_385 = arith.constant 40 : index
    %548 = vector.load %arg15[%c0_384, %c40_385] : memref<8x100xf32, #tpu.memory_space<vmem>>, vector<8x10xf32>
    tpu.vector_store %arg15[%c0_384, %c40_385], %547 {strides = array<i32>} : memref<8x100xf32, #tpu.memory_space<vmem>>, vector<8x10xf32>,
    %549 = vector.extract_strided_slice %538 {offsets = [0, 60], sizes = [8, 10], strides = [1, 1]} : vector<8x118xf32> to vector<8x10xf32>
    %c0_386 = arith.constant 0 : index
    %c50_387 = arith.constant 50 : index
    %550 = vector.load %arg15[%c0_386, %c50_387] : memref<8x100xf32, #tpu.memory_space<vmem>>, vector<8x10xf32>
    tpu.vector_store %arg15[%c0_386, %c50_387], %549 {strides = array<i32>} : memref<8x100xf32, #tpu.memory_space<vmem>>, vector<8x10xf32>,
    %551 = vector.extract_strided_slice %538 {offsets = [0, 72], sizes = [8, 10], strides = [1, 1]} : vector<8x118xf32> to vector<8x10xf32>
    %c0_388 = arith.constant 0 : index
    %c60_389 = arith.constant 60 : index
    %552 = vector.load %arg15[%c0_388, %c60_389] : memref<8x100xf32, #tpu.memory_space<vmem>>, vector<8x10xf32>
    tpu.vector_store %arg15[%c0_388, %c60_389], %551 {strides = array<i32>} : memref<8x100xf32, #tpu.memory_space<vmem>>, vector<8x10xf32>,
    %553 = vector.extract_strided_slice %538 {offsets = [0, 84], sizes = [8, 10], strides = [1, 1]} : vector<8x118xf32> to vector<8x10xf32>
    %c0_390 = arith.constant 0 : index
    %c70_391 = arith.constant 70 : index
    %554 = vector.load %arg15[%c0_390, %c70_391] : memref<8x100xf32, #tpu.memory_space<vmem>>, vector<8x10xf32>
    tpu.vector_store %arg15[%c0_390, %c70_391], %553 {strides = array<i32>} : memref<8x100xf32, #tpu.memory_space<vmem>>, vector<8x10xf32>,
    %555 = vector.extract_strided_slice %538 {offsets = [0, 96], sizes = [8, 10], strides = [1, 1]} : vector<8x118xf32> to vector<8x10xf32>
    %c0_392 = arith.constant 0 : index
    %c80_393 = arith.constant 80 : index
    %556 = vector.load %arg15[%c0_392, %c80_393] : memref<8x100xf32, #tpu.memory_space<vmem>>, vector<8x10xf32>
    tpu.vector_store %arg15[%c0_392, %c80_393], %555 {strides = array<i32>} : memref<8x100xf32, #tpu.memory_space<vmem>>, vector<8x10xf32>,
    %557 = vector.extract_strided_slice %538 {offsets = [0, 108], sizes = [8, 10], strides = [1, 1]} : vector<8x118xf32> to vector<8x10xf32>
    %c0_394 = arith.constant 0 : index
    %c90_395 = arith.constant 90 : index
    %558 = vector.load %arg15[%c0_394, %c90_395] : memref<8x100xf32, #tpu.memory_space<vmem>>, vector<8x10xf32>
    tpu.vector_store %arg15[%c0_394, %c90_395], %557 {strides = array<i32>} : memref<8x100xf32, #tpu.memory_space<vmem>>, vector<8x10xf32>,
    %c0_396 = arith.constant 0 : index
    %c0_397 = arith.constant 0 : index
    %559 = vector.load %arg15[%c0_396, %c0_397] : memref<8x100xf32, #tpu.memory_space<vmem>>, vector<8x100xf32>
    %c0_398 = arith.constant 0 : index
    %c0_399 = arith.constant 0 : index
    %560 = vector.load %arg9[%c0_398, %c0_399] : memref<8x72xf32, #tpu.memory_space<vmem>>, vector<8x8xf32>
    %561 = vector.extract_strided_slice %559 {offsets = [0, 0], sizes = [8, 78], strides = [1, 1]} : vector<8x100xf32> to vector<8x78xf32>
    %cst_400 = arith.constant dense<0.000000e+00> : vector<8x78xf32>
    %562 = tpu.matmul %560, %561, %cst_400 {dimension_numbers = #tpu.dot_dimension_numbers<[1], [0], [0], [1], [0, 0, 1, 1], [], []>} : vector<8x8xf32>, vector<8x78xf32>, vector<8x78xf32> -> vector<8x78xf32>
    %c0_401 = arith.constant 0 : index
    %c8_402 = arith.constant 8 : index
    %563 = vector.load %arg9[%c0_401, %c8_402] : memref<8x72xf32, #tpu.memory_space<vmem>>, vector<8x8xf32>
    %564 = vector.extract_strided_slice %559 {offsets = [0, 1], sizes = [8, 78], strides = [1, 1]} : vector<8x100xf32> to vector<8x78xf32>
    %cst_403 = arith.constant dense<0.000000e+00> : vector<8x78xf32>
    %565 = tpu.matmul %563, %564, %cst_403 {dimension_numbers = #tpu.dot_dimension_numbers<[1], [0], [0], [1], [0, 0, 1, 1], [], []>} : vector<8x8xf32>, vector<8x78xf32>, vector<8x78xf32> -> vector<8x78xf32>
    %566 = arith.addf %562, %565 : vector<8x78xf32>
    %c0_404 = arith.constant 0 : index
    %c16_405 = arith.constant 16 : index
    %567 = vector.load %arg9[%c0_404, %c16_405] : memref<8x72xf32, #tpu.memory_space<vmem>>, vector<8x8xf32>
    %568 = vector.extract_strided_slice %559 {offsets = [0, 2], sizes = [8, 78], strides = [1, 1]} : vector<8x100xf32> to vector<8x78xf32>
    %cst_406 = arith.constant dense<0.000000e+00> : vector<8x78xf32>
    %569 = tpu.matmul %567, %568, %cst_406 {dimension_numbers = #tpu.dot_dimension_numbers<[1], [0], [0], [1], [0, 0, 1, 1], [], []>} : vector<8x8xf32>, vector<8x78xf32>, vector<8x78xf32> -> vector<8x78xf32>
    %570 = arith.addf %566, %569 : vector<8x78xf32>
    %c0_407 = arith.constant 0 : index
    %c24_408 = arith.constant 24 : index
    %571 = vector.load %arg9[%c0_407, %c24_408] : memref<8x72xf32, #tpu.memory_space<vmem>>, vector<8x8xf32>
    %572 = vector.extract_strided_slice %559 {offsets = [0, 10], sizes = [8, 78], strides = [1, 1]} : vector<8x100xf32> to vector<8x78xf32>
    %cst_409 = arith.constant dense<0.000000e+00> : vector<8x78xf32>
    %573 = tpu.matmul %571, %572, %cst_409 {dimension_numbers = #tpu.dot_dimension_numbers<[1], [0], [0], [1], [0, 0, 1, 1], [], []>} : vector<8x8xf32>, vector<8x78xf32>, vector<8x78xf32> -> vector<8x78xf32>
    %574 = arith.addf %570, %573 : vector<8x78xf32>
    %c0_410 = arith.constant 0 : index
    %c32_411 = arith.constant 32 : index
    %575 = vector.load %arg9[%c0_410, %c32_411] : memref<8x72xf32, #tpu.memory_space<vmem>>, vector<8x8xf32>
    %576 = vector.extract_strided_slice %559 {offsets = [0, 11], sizes = [8, 78], strides = [1, 1]} : vector<8x100xf32> to vector<8x78xf32>
    %cst_412 = arith.constant dense<0.000000e+00> : vector<8x78xf32>
    %577 = tpu.matmul %575, %576, %cst_412 {dimension_numbers = #tpu.dot_dimension_numbers<[1], [0], [0], [1], [0, 0, 1, 1], [], []>} : vector<8x8xf32>, vector<8x78xf32>, vector<8x78xf32> -> vector<8x78xf32>
    %578 = arith.addf %574, %577 : vector<8x78xf32>
    %c0_413 = arith.constant 0 : index
    %c40_414 = arith.constant 40 : index
    %579 = vector.load %arg9[%c0_413, %c40_414] : memref<8x72xf32, #tpu.memory_space<vmem>>, vector<8x8xf32>
    %580 = vector.extract_strided_slice %559 {offsets = [0, 12], sizes = [8, 78], strides = [1, 1]} : vector<8x100xf32> to vector<8x78xf32>
    %cst_415 = arith.constant dense<0.000000e+00> : vector<8x78xf32>
    %581 = tpu.matmul %579, %580, %cst_415 {dimension_numbers = #tpu.dot_dimension_numbers<[1], [0], [0], [1], [0, 0, 1, 1], [], []>} : vector<8x8xf32>, vector<8x78xf32>, vector<8x78xf32> -> vector<8x78xf32>
    %582 = arith.addf %578, %581 : vector<8x78xf32>
    %c0_416 = arith.constant 0 : index
    %c48_417 = arith.constant 48 : index
    %583 = vector.load %arg9[%c0_416, %c48_417] : memref<8x72xf32, #tpu.memory_space<vmem>>, vector<8x8xf32>
    %584 = vector.extract_strided_slice %559 {offsets = [0, 20], sizes = [8, 78], strides = [1, 1]} : vector<8x100xf32> to vector<8x78xf32>
    %cst_418 = arith.constant dense<0.000000e+00> : vector<8x78xf32>
    %585 = tpu.matmul %583, %584, %cst_418 {dimension_numbers = #tpu.dot_dimension_numbers<[1], [0], [0], [1], [0, 0, 1, 1], [], []>} : vector<8x8xf32>, vector<8x78xf32>, vector<8x78xf32> -> vector<8x78xf32>
    %586 = arith.addf %582, %585 : vector<8x78xf32>
    %c0_419 = arith.constant 0 : index
    %c56_420 = arith.constant 56 : index
    %587 = vector.load %arg9[%c0_419, %c56_420] : memref<8x72xf32, #tpu.memory_space<vmem>>, vector<8x8xf32>
    %588 = vector.extract_strided_slice %559 {offsets = [0, 21], sizes = [8, 78], strides = [1, 1]} : vector<8x100xf32> to vector<8x78xf32>
    %cst_421 = arith.constant dense<0.000000e+00> : vector<8x78xf32>
    %589 = tpu.matmul %587, %588, %cst_421 {dimension_numbers = #tpu.dot_dimension_numbers<[1], [0], [0], [1], [0, 0, 1, 1], [], []>} : vector<8x8xf32>, vector<8x78xf32>, vector<8x78xf32> -> vector<8x78xf32>
    %590 = arith.addf %586, %589 : vector<8x78xf32>
    %c0_422 = arith.constant 0 : index
    %c64_423 = arith.constant 64 : index
    %591 = vector.load %arg9[%c0_422, %c64_423] : memref<8x72xf32, #tpu.memory_space<vmem>>, vector<8x8xf32>
    %592 = vector.extract_strided_slice %559 {offsets = [0, 22], sizes = [8, 78], strides = [1, 1]} : vector<8x100xf32> to vector<8x78xf32>
    %cst_424 = arith.constant dense<0.000000e+00> : vector<8x78xf32>
    %593 = tpu.matmul %591, %592, %cst_424 {dimension_numbers = #tpu.dot_dimension_numbers<[1], [0], [0], [1], [0, 0, 1, 1], [], []>} : vector<8x8xf32>, vector<8x78xf32>, vector<8x78xf32> -> vector<8x78xf32>
    %594 = arith.addf %590, %593 : vector<8x78xf32>
    %595 = vector.extract_strided_slice %501 {offsets = [0, 26], sizes = [8, 8], strides = [1, 1]} : vector<8x144xf32> to vector<8x8xf32>
    %596 = vector.extract_strided_slice %594 {offsets = [0, 0], sizes = [8, 8], strides = [1, 1]} : vector<8x78xf32> to vector<8x8xf32>
    %597 = arith.addf %596, %595 : vector<8x8xf32>
    %cst_425 = arith.constant 0.000000e+00 : f32
    %598 = vector.broadcast %cst_425 : f32 to vector<8x8xf32>
    %599 = arith.maximumf %597, %598 : vector<8x8xf32>
    %c0_426 = arith.constant 0 : index
    %c0_427 = arith.constant 0 : index
    %600 = vector.load %arg16[%c0_426, %c0_427] : memref<8x64xf32, #tpu.memory_space<vmem>>, vector<8x8xf32>
    tpu.vector_store %arg16[%c0_426, %c0_427], %599 {strides = array<i32>} : memref<8x64xf32, #tpu.memory_space<vmem>>, vector<8x8xf32>,
    %601 = vector.extract_strided_slice %501 {offsets = [0, 38], sizes = [8, 8], strides = [1, 1]} : vector<8x144xf32> to vector<8x8xf32>
    %602 = vector.extract_strided_slice %594 {offsets = [0, 10], sizes = [8, 8], strides = [1, 1]} : vector<8x78xf32> to vector<8x8xf32>
    %603 = arith.addf %602, %601 : vector<8x8xf32>
    %cst_428 = arith.constant 0.000000e+00 : f32
    %604 = vector.broadcast %cst_428 : f32 to vector<8x8xf32>
    %605 = arith.maximumf %603, %604 : vector<8x8xf32>
    %c0_429 = arith.constant 0 : index
    %c8_430 = arith.constant 8 : index
    %606 = vector.load %arg16[%c0_429, %c8_430] : memref<8x64xf32, #tpu.memory_space<vmem>>, vector<8x8xf32>
    tpu.vector_store %arg16[%c0_429, %c8_430], %605 {strides = array<i32>} : memref<8x64xf32, #tpu.memory_space<vmem>>, vector<8x8xf32>,
    %607 = vector.extract_strided_slice %501 {offsets = [0, 50], sizes = [8, 8], strides = [1, 1]} : vector<8x144xf32> to vector<8x8xf32>
    %608 = vector.extract_strided_slice %594 {offsets = [0, 20], sizes = [8, 8], strides = [1, 1]} : vector<8x78xf32> to vector<8x8xf32>
    %609 = arith.addf %608, %607 : vector<8x8xf32>
    %cst_431 = arith.constant 0.000000e+00 : f32
    %610 = vector.broadcast %cst_431 : f32 to vector<8x8xf32>
    %611 = arith.maximumf %609, %610 : vector<8x8xf32>
    %c0_432 = arith.constant 0 : index
    %c16_433 = arith.constant 16 : index
    %612 = vector.load %arg16[%c0_432, %c16_433] : memref<8x64xf32, #tpu.memory_space<vmem>>, vector<8x8xf32>
    tpu.vector_store %arg16[%c0_432, %c16_433], %611 {strides = array<i32>} : memref<8x64xf32, #tpu.memory_space<vmem>>, vector<8x8xf32>,
    %613 = vector.extract_strided_slice %501 {offsets = [0, 62], sizes = [8, 8], strides = [1, 1]} : vector<8x144xf32> to vector<8x8xf32>
    %614 = vector.extract_strided_slice %594 {offsets = [0, 30], sizes = [8, 8], strides = [1, 1]} : vector<8x78xf32> to vector<8x8xf32>
    %615 = arith.addf %614, %613 : vector<8x8xf32>
    %cst_434 = arith.constant 0.000000e+00 : f32
    %616 = vector.broadcast %cst_434 : f32 to vector<8x8xf32>
    %617 = arith.maximumf %615, %616 : vector<8x8xf32>
    %c0_435 = arith.constant 0 : index
    %c24_436 = arith.constant 24 : index
    %618 = vector.load %arg16[%c0_435, %c24_436] : memref<8x64xf32, #tpu.memory_space<vmem>>, vector<8x8xf32>
    tpu.vector_store %arg16[%c0_435, %c24_436], %617 {strides = array<i32>} : memref<8x64xf32, #tpu.memory_space<vmem>>, vector<8x8xf32>,
    %619 = vector.extract_strided_slice %501 {offsets = [0, 74], sizes = [8, 8], strides = [1, 1]} : vector<8x144xf32> to vector<8x8xf32>
    %620 = vector.extract_strided_slice %594 {offsets = [0, 40], sizes = [8, 8], strides = [1, 1]} : vector<8x78xf32> to vector<8x8xf32>
    %621 = arith.addf %620, %619 : vector<8x8xf32>
    %cst_437 = arith.constant 0.000000e+00 : f32
    %622 = vector.broadcast %cst_437 : f32 to vector<8x8xf32>
    %623 = arith.maximumf %621, %622 : vector<8x8xf32>
    %c0_438 = arith.constant 0 : index
    %c32_439 = arith.constant 32 : index
    %624 = vector.load %arg16[%c0_438, %c32_439] : memref<8x64xf32, #tpu.memory_space<vmem>>, vector<8x8xf32>
    tpu.vector_store %arg16[%c0_438, %c32_439], %623 {strides = array<i32>} : memref<8x64xf32, #tpu.memory_space<vmem>>, vector<8x8xf32>,
    %625 = vector.extract_strided_slice %501 {offsets = [0, 86], sizes = [8, 8], strides = [1, 1]} : vector<8x144xf32> to vector<8x8xf32>
    %626 = vector.extract_strided_slice %594 {offsets = [0, 50], sizes = [8, 8], strides = [1, 1]} : vector<8x78xf32> to vector<8x8xf32>
    %627 = arith.addf %626, %625 : vector<8x8xf32>
    %cst_440 = arith.constant 0.000000e+00 : f32
    %628 = vector.broadcast %cst_440 : f32 to vector<8x8xf32>
    %629 = arith.maximumf %627, %628 : vector<8x8xf32>
    %c0_441 = arith.constant 0 : index
    %c40_442 = arith.constant 40 : index
    %630 = vector.load %arg16[%c0_441, %c40_442] : memref<8x64xf32, #tpu.memory_space<vmem>>, vector<8x8xf32>
    tpu.vector_store %arg16[%c0_441, %c40_442], %629 {strides = array<i32>} : memref<8x64xf32, #tpu.memory_space<vmem>>, vector<8x8xf32>,
    %631 = vector.extract_strided_slice %501 {offsets = [0, 98], sizes = [8, 8], strides = [1, 1]} : vector<8x144xf32> to vector<8x8xf32>
    %632 = vector.extract_strided_slice %594 {offsets = [0, 60], sizes = [8, 8], strides = [1, 1]} : vector<8x78xf32> to vector<8x8xf32>
    %633 = arith.addf %632, %631 : vector<8x8xf32>
    %cst_443 = arith.constant 0.000000e+00 : f32
    %634 = vector.broadcast %cst_443 : f32 to vector<8x8xf32>
    %635 = arith.maximumf %633, %634 : vector<8x8xf32>
    %c0_444 = arith.constant 0 : index
    %c48_445 = arith.constant 48 : index
    %636 = vector.load %arg16[%c0_444, %c48_445] : memref<8x64xf32, #tpu.memory_space<vmem>>, vector<8x8xf32>
    tpu.vector_store %arg16[%c0_444, %c48_445], %635 {strides = array<i32>} : memref<8x64xf32, #tpu.memory_space<vmem>>, vector<8x8xf32>,
    %637 = vector.extract_strided_slice %501 {offsets = [0, 110], sizes = [8, 8], strides = [1, 1]} : vector<8x144xf32> to vector<8x8xf32>
    %638 = vector.extract_strided_slice %594 {offsets = [0, 70], sizes = [8, 8], strides = [1, 1]} : vector<8x78xf32> to vector<8x8xf32>
    %639 = arith.addf %638, %637 : vector<8x8xf32>
    %cst_446 = arith.constant 0.000000e+00 : f32
    %640 = vector.broadcast %cst_446 : f32 to vector<8x8xf32>
    %641 = arith.maximumf %639, %640 : vector<8x8xf32>
    %c0_447 = arith.constant 0 : index
    %c56_448 = arith.constant 56 : index
    %642 = vector.load %arg16[%c0_447, %c56_448] : memref<8x64xf32, #tpu.memory_space<vmem>>, vector<8x8xf32>
    tpu.vector_store %arg16[%c0_447, %c56_448], %641 {strides = array<i32>} : memref<8x64xf32, #tpu.memory_space<vmem>>, vector<8x8xf32>,
    %c0_449 = arith.constant 0 : index
    %c0_450 = arith.constant 0 : index
    %643 = vector.load %arg11[%c0_449, %c0_450] : memref<1x640xf32, #tpu.memory_space<vmem>>, vector<1x640xf32>
    %c0_451 = arith.constant 0 : index
    %c0_452 = arith.constant 0 : index
    %644 = vector.load %arg16[%c0_451, %c0_452] : memref<8x64xf32, #tpu.memory_space<vmem>>, vector<1x64xf32>
    %645 = arith.truncf %644 : vector<1x64xf32> to vector<1x64xbf16>
    %c0_453 = arith.constant 0 : index
    %c0_454 = arith.constant 0 : index
    %c0_455 = arith.constant 0 : index
    %646 = vector.load %arg10[%c0_453, %c0_454, %c0_455] : memref<8x64x640xbf16, #tpu.memory_space<vmem>>, vector<1x64x640xbf16>
    %647 = vector.shape_cast %646 : vector<1x64x640xbf16> to vector<64x640xbf16>
    %cst_456 = arith.constant dense<0.000000e+00> : vector<1x640xf32>
    %648 = tpu.matmul %645, %647, %cst_456 {dimension_numbers = #tpu.dot_dimension_numbers<[1], [0], [0], [1], [0, 0, 1, 1], [], []>} : vector<1x64xbf16>, vector<64x640xbf16>, vector<1x640xf32> -> vector<1x640xf32>
    %649 = arith.addf %643, %648 : vector<1x640xf32>
    %c1 = arith.constant 1 : index
    %c0_457 = arith.constant 0 : index
    %650 = vector.load %arg16[%c1, %c0_457] : memref<8x64xf32, #tpu.memory_space<vmem>>, vector<1x64xf32>
    %651 = arith.truncf %650 : vector<1x64xf32> to vector<1x64xbf16>
    %c1_458 = arith.constant 1 : index
    %c0_459 = arith.constant 0 : index
    %c0_460 = arith.constant 0 : index
    %652 = vector.load %arg10[%c1_458, %c0_459, %c0_460] : memref<8x64x640xbf16, #tpu.memory_space<vmem>>, vector<1x64x640xbf16>
    %653 = vector.shape_cast %652 : vector<1x64x640xbf16> to vector<64x640xbf16>
    %cst_461 = arith.constant dense<0.000000e+00> : vector<1x640xf32>
    %654 = tpu.matmul %651, %653, %cst_461 {dimension_numbers = #tpu.dot_dimension_numbers<[1], [0], [0], [1], [0, 0, 1, 1], [], []>} : vector<1x64xbf16>, vector<64x640xbf16>, vector<1x640xf32> -> vector<1x640xf32>
    %655 = arith.addf %649, %654 : vector<1x640xf32>
    %c2 = arith.constant 2 : index
    %c0_462 = arith.constant 0 : index
    %656 = vector.load %arg16[%c2, %c0_462] : memref<8x64xf32, #tpu.memory_space<vmem>>, vector<1x64xf32>
    %657 = arith.truncf %656 : vector<1x64xf32> to vector<1x64xbf16>
    %c2_463 = arith.constant 2 : index
    %c0_464 = arith.constant 0 : index
    %c0_465 = arith.constant 0 : index
    %658 = vector.load %arg10[%c2_463, %c0_464, %c0_465] : memref<8x64x640xbf16, #tpu.memory_space<vmem>>, vector<1x64x640xbf16>
    %659 = vector.shape_cast %658 : vector<1x64x640xbf16> to vector<64x640xbf16>
    %cst_466 = arith.constant dense<0.000000e+00> : vector<1x640xf32>
    %660 = tpu.matmul %657, %659, %cst_466 {dimension_numbers = #tpu.dot_dimension_numbers<[1], [0], [0], [1], [0, 0, 1, 1], [], []>} : vector<1x64xbf16>, vector<64x640xbf16>, vector<1x640xf32> -> vector<1x640xf32>
    %661 = arith.addf %655, %660 : vector<1x640xf32>
    %c3 = arith.constant 3 : index
    %c0_467 = arith.constant 0 : index
    %662 = vector.load %arg16[%c3, %c0_467] : memref<8x64xf32, #tpu.memory_space<vmem>>, vector<1x64xf32>
    %663 = arith.truncf %662 : vector<1x64xf32> to vector<1x64xbf16>
    %c3_468 = arith.constant 3 : index
    %c0_469 = arith.constant 0 : index
    %c0_470 = arith.constant 0 : index
    %664 = vector.load %arg10[%c3_468, %c0_469, %c0_470] : memref<8x64x640xbf16, #tpu.memory_space<vmem>>, vector<1x64x640xbf16>
    %665 = vector.shape_cast %664 : vector<1x64x640xbf16> to vector<64x640xbf16>
    %cst_471 = arith.constant dense<0.000000e+00> : vector<1x640xf32>
    %666 = tpu.matmul %663, %665, %cst_471 {dimension_numbers = #tpu.dot_dimension_numbers<[1], [0], [0], [1], [0, 0, 1, 1], [], []>} : vector<1x64xbf16>, vector<64x640xbf16>, vector<1x640xf32> -> vector<1x640xf32>
    %667 = arith.addf %661, %666 : vector<1x640xf32>
    %c4 = arith.constant 4 : index
    %c0_472 = arith.constant 0 : index
    %668 = vector.load %arg16[%c4, %c0_472] : memref<8x64xf32, #tpu.memory_space<vmem>>, vector<1x64xf32>
    %669 = arith.truncf %668 : vector<1x64xf32> to vector<1x64xbf16>
    %c4_473 = arith.constant 4 : index
    %c0_474 = arith.constant 0 : index
    %c0_475 = arith.constant 0 : index
    %670 = vector.load %arg10[%c4_473, %c0_474, %c0_475] : memref<8x64x640xbf16, #tpu.memory_space<vmem>>, vector<1x64x640xbf16>
    %671 = vector.shape_cast %670 : vector<1x64x640xbf16> to vector<64x640xbf16>
    %cst_476 = arith.constant dense<0.000000e+00> : vector<1x640xf32>
    %672 = tpu.matmul %669, %671, %cst_476 {dimension_numbers = #tpu.dot_dimension_numbers<[1], [0], [0], [1], [0, 0, 1, 1], [], []>} : vector<1x64xbf16>, vector<64x640xbf16>, vector<1x640xf32> -> vector<1x640xf32>
    %673 = arith.addf %667, %672 : vector<1x640xf32>
    %c5 = arith.constant 5 : index
    %c0_477 = arith.constant 0 : index
    %674 = vector.load %arg16[%c5, %c0_477] : memref<8x64xf32, #tpu.memory_space<vmem>>, vector<1x64xf32>
    %675 = arith.truncf %674 : vector<1x64xf32> to vector<1x64xbf16>
    %c5_478 = arith.constant 5 : index
    %c0_479 = arith.constant 0 : index
    %c0_480 = arith.constant 0 : index
    %676 = vector.load %arg10[%c5_478, %c0_479, %c0_480] : memref<8x64x640xbf16, #tpu.memory_space<vmem>>, vector<1x64x640xbf16>
    %677 = vector.shape_cast %676 : vector<1x64x640xbf16> to vector<64x640xbf16>
    %cst_481 = arith.constant dense<0.000000e+00> : vector<1x640xf32>
    %678 = tpu.matmul %675, %677, %cst_481 {dimension_numbers = #tpu.dot_dimension_numbers<[1], [0], [0], [1], [0, 0, 1, 1], [], []>} : vector<1x64xbf16>, vector<64x640xbf16>, vector<1x640xf32> -> vector<1x640xf32>
    %679 = arith.addf %673, %678 : vector<1x640xf32>
    %c6 = arith.constant 6 : index
    %c0_482 = arith.constant 0 : index
    %680 = vector.load %arg16[%c6, %c0_482] : memref<8x64xf32, #tpu.memory_space<vmem>>, vector<1x64xf32>
    %681 = arith.truncf %680 : vector<1x64xf32> to vector<1x64xbf16>
    %c6_483 = arith.constant 6 : index
    %c0_484 = arith.constant 0 : index
    %c0_485 = arith.constant 0 : index
    %682 = vector.load %arg10[%c6_483, %c0_484, %c0_485] : memref<8x64x640xbf16, #tpu.memory_space<vmem>>, vector<1x64x640xbf16>
    %683 = vector.shape_cast %682 : vector<1x64x640xbf16> to vector<64x640xbf16>
    %cst_486 = arith.constant dense<0.000000e+00> : vector<1x640xf32>
    %684 = tpu.matmul %681, %683, %cst_486 {dimension_numbers = #tpu.dot_dimension_numbers<[1], [0], [0], [1], [0, 0, 1, 1], [], []>} : vector<1x64xbf16>, vector<64x640xbf16>, vector<1x640xf32> -> vector<1x640xf32>
    %685 = arith.addf %679, %684 : vector<1x640xf32>
    %c7 = arith.constant 7 : index
    %c0_487 = arith.constant 0 : index
    %686 = vector.load %arg16[%c7, %c0_487] : memref<8x64xf32, #tpu.memory_space<vmem>>, vector<1x64xf32>
    %687 = arith.truncf %686 : vector<1x64xf32> to vector<1x64xbf16>
    %c7_488 = arith.constant 7 : index
    %c0_489 = arith.constant 0 : index
    %c0_490 = arith.constant 0 : index
    %688 = vector.load %arg10[%c7_488, %c0_489, %c0_490] : memref<8x64x640xbf16, #tpu.memory_space<vmem>>, vector<1x64x640xbf16>
    %689 = vector.shape_cast %688 : vector<1x64x640xbf16> to vector<64x640xbf16>
    %cst_491 = arith.constant dense<0.000000e+00> : vector<1x640xf32>
    %690 = tpu.matmul %687, %689, %cst_491 {dimension_numbers = #tpu.dot_dimension_numbers<[1], [0], [0], [1], [0, 0, 1, 1], [], []>} : vector<1x64xbf16>, vector<64x640xbf16>, vector<1x640xf32> -> vector<1x640xf32>
    %691 = arith.addf %685, %690 : vector<1x640xf32>
    %c0_492 = arith.constant 0 : index
    %c0_493 = arith.constant 0 : index
    %692 = vector.load %arg12[%c0_492, %c0_493] : memref<1x640xf32, #tpu.memory_space<vmem>>, vector<1x640xf32>
    tpu.vector_store %arg12[%c0_492, %c0_493], %691 {strides = array<i32>} : memref<1x640xf32, #tpu.memory_space<vmem>>, vector<1x640xf32>,
    return
  }
}

</mosaic_0001>

<llo_original>
// kernel: forward.1
$region0: #{forward.1}
  #allocation0 [shape = 'u32[]', space=smem, size = 0x4, offset = 0x4, fixed_abs, tag = 'smem constant byte address 0x4 - core index']
  #allocation1 [shape = 'u32[144,128]{1,0:T(1,128)}', space=vmem, size = 0x12000, scoped, tag = 'internal scratch']
  #allocation2 [shape = 'f32[10,100]{1,0:T(8,128)}', space=vmem, size = 0x2000, scoped, tag = 'scratch operand']
  #allocation3 [shape = 'f32[8,144]{1,0:T(8,128)}', space=vmem, size = 0x2000, scoped, tag = 'scratch operand']
  #allocation4 [shape = 'f32[8,100]{1,0:T(8,128)}', space=vmem, size = 0x1000, scoped, tag = 'scratch operand']
  #allocation5 [shape = 'f32[8,64]{1,0:T(8,128)}', space=vmem, size = 0x1000, scoped, tag = 'scratch operand']
  %s0 = inlined_call_operand.vmem [shape: f32[10,64], index: 0, kind: input, shape index: {}]
  %s1 = inlined_call_operand.vmem [shape: f32[8,90], index: 1, kind: input, shape index: {}]
  %s2 = inlined_call_operand.vmem [shape: f32[8,72], index: 2, kind: input, shape index: {}]
  %s3 = inlined_call_operand.vmem [shape: f32[8,72], index: 3, kind: input, shape index: {}]
  %s4 = inlined_call_operand.vmem [shape: f32[8,72], index: 4, kind: input, shape index: {}]
  %s5 = inlined_call_operand.vmem [shape: f32[8,72], index: 5, kind: input, shape index: {}]
  %s6 = inlined_call_operand.vmem [shape: f32[8,72], index: 6, kind: input, shape index: {}]
  %s7 = inlined_call_operand.vmem [shape: f32[8,72], index: 7, kind: input, shape index: {}]
  %s8 = inlined_call_operand.vmem [shape: f32[8,72], index: 8, kind: input, shape index: {}]
  %s9 = inlined_call_operand.vmem [shape: f32[8,72], index: 9, kind: input, shape index: {}]
  %s10 = inlined_call_operand.hbm [shape: bf16[8,64,640], index: 10, kind: input, shape index: {}]
  %s11 = inlined_call_operand.vmem [shape: f32[1,640], index: 11, kind: input, shape index: {}]
  %s12 = inlined_call_operand.vmem [shape: f32[1,640], index: 12, kind: output, shape index: {}]
  %s13 = sld [smem:[#allocation0]]
  $region62: #{forward.1} parent=0
    _
  %s15 = ssub.s32 1, %s13
  %s16 = scalar_select 0, %s15, %s13
  $region1: #{forward.1} parent=0
    #allocation6 [shape = 'u8[655360]{0}', space=vmem, size = 0xa0000, scoped, tag = 'input window, operand 10, single buffered']
    #allocation7 [shape = 's32[1]{0}', space=sflag, size = 0x4, scoped, tag = 'scoped memory for forward.1']
    %17 = vsyncpa [#allocation7], 0
    // Predicated region
    $region2: #{forward.1} parent=1 // pred_check
      _
    $region3: #{forward.1} parent=1 // pred_check_branch
      %19 = sbr.rel (0) target = $region5
    $region4: #{forward.1} parent=1 // pred_region
      _
    $region5: #{forward.1} parent=1 // pred_fallthru
      _
    // Predicated region
    $region6: #{forward.1} parent=1 // pred_check
      _
    $region7: #{forward.1} parent=1 // pred_check_branch
      %21 = sbr.rel (0) target = $region9
    $region8: #{forward.1} parent=1 // pred_region
      _
    $region9: #{forward.1} parent=1 // pred_fallthru
      _
    // Predicated region
    $region10: #{forward.1} parent=1 // pred_check
      _
    $region11: #{forward.1} parent=1 // pred_check_branch
      %23 = sbr.rel (0) target = $region13
    $region12: #{forward.1} parent=1 // pred_region
      _
    $region13: #{forward.1} parent=1 // pred_fallthru
      _
    // Predicated region
    $region14: #{forward.1} parent=1 // pred_check
      _
    $region15: #{forward.1} parent=1 // pred_check_branch
      %25 = sbr.rel (0) target = $region17
    $region16: #{forward.1} parent=1 // pred_region
      _
    $region17: #{forward.1} parent=1 // pred_fallthru
      _
    // Predicated region
    $region18: #{forward.1} parent=1 // pred_check
      _
    $region19: #{forward.1} parent=1 // pred_check_branch
      %27 = sbr.rel (0) target = $region21
    $region20: #{forward.1} parent=1 // pred_region
      _
    $region21: #{forward.1} parent=1 // pred_fallthru
      _
    // Predicated region
    $region22: #{forward.1} parent=1 // pred_check
      _
    $region23: #{forward.1} parent=1 // pred_check_branch
      %29 = sbr.rel (0) target = $region25
    $region24: #{forward.1} parent=1 // pred_region
      _
    $region25: #{forward.1} parent=1 // pred_fallthru
      _
    // Predicated region
    $region26: #{forward.1} parent=1 // pred_check
      _
    $region27: #{forward.1} parent=1 // pred_check_branch
      %31 = sbr.rel (0) target = $region29
    $region28: #{forward.1} parent=1 // pred_region
      _
    $region29: #{forward.1} parent=1 // pred_fallthru
      _
    // Predicated region
    $region30: #{forward.1} parent=1 // pred_check
      _
    $region31: #{forward.1} parent=1 // pred_check_branch
      %33 = sbr.rel (0) target = $region33
    $region32: #{forward.1} parent=1 // pred_region
      _
    $region33: #{forward.1} parent=1 // pred_fallthru
      _
    // Predicated region
    $region34: #{forward.1} parent=1 // pred_check
      _
    $region35: #{forward.1} parent=1 // pred_check_branch
      %35 = sbr.rel (0) target = $region37
    $region36: #{forward.1} parent=1 // pred_region
      _
    $region37: #{forward.1} parent=1 // pred_fallthru
      _
    // Predicated region
    $region38: #{forward.1} parent=1 // pred_check
      _
    $region39: #{forward.1} parent=1 // pred_check_branch
      %37 = sbr.rel (0) target = $region41
    $region40: #{forward.1} parent=1 // pred_region
      _
    $region41: #{forward.1} parent=1 // pred_fallthru
      _
    // Predicated region
    $region42: #{forward.1} parent=1 // pred_check
      _
    $region43: #{forward.1} parent=1 // pred_check_branch
      %39 = sbr.rel (0) target = $region45
    $region44: #{forward.1} parent=1 // pred_region
      %s41 = ssub.s32 20480, 20480
      %42 = vsyncadd [#allocation7], %s41
      %s43 = sshll.u32 [#allocation6], 4
      %s44 = int_to_ptr.vmem [resolvable:$true] %s43
      %49 = dma.hbm_to_vmem [thread:$0]  %s10, 20480, %s44, [#allocation7], 320, 320, 20
    $region45: #{forward.1} parent=1 // pred_fallthru
      _
    // Predicated region
    $region46: #{forward.1} parent=1 // pred_check
      _
    $region47: #{forward.1} parent=1 // pred_check_branch
      %51 = sbr.rel (0) target = $region49
    $region48: #{forward.1} parent=1 // pred_region
      _
    $region49: #{forward.1} parent=1 // pred_fallthru
      _
    // Predicated region
    $region50: #{forward.1} parent=1 // pred_check
      _
    $region51: #{forward.1} parent=1 // pred_check_branch
      %53 = sbr.rel (0) target = $region53
    $region52: #{forward.1} parent=1 // pred_region
      %54 = dma.done [#allocation7], 20480
    $region53: #{forward.1} parent=1 // pred_fallthru
      _
    %vm56 = vcmask 818176
    %57 = vst.msk [vmem:[#allocation2] sm:$0xff] %vm56, 0.0
    %vm58 = vcmask 812032
    %59 = vst.msk [vmem:[#allocation2 + $0x8] sm:$0x3] %vm58, 0.0
    %60 = vst [vmem:[#allocation3] sm:$0xff] 0.0
    %vm61 = vcmask 130048
    %62 = vst.msk [vmem:[#allocation3 + $0x8] sm:$0xff] %vm61, 0.0
    %v63 = vld [vmem:[%s0] sm:$0xff]
    %v64 = vld [vmem:[%s0 + $0x8] sm:$0x3]
    %67 = vrot.lane.b32.xlu0 %v63, 11
    %v68 = vpop.permute.xlu0 %67
    %69 = vrot.lane.b32.xlu0 %v64, 11
    %v70 = vpop.permute.xlu0 %69
    %vm73 = vcmask 154712
    %74 = vst.msk [vmem:[#allocation2] sm:$0xff] %vm73, %v68
    %vm75 = vcmask 148568
    %76 = vst.msk [vmem:[#allocation2 + $0x8] sm:$0x3] %vm75, %v70
    %77 = vrot.lane.b32.xlu0 %v63, 13
    %v78 = vpop.permute.xlu0 %77
    %79 = vrot.lane.b32.xlu0 %v64, 13
    %v80 = vpop.permute.xlu0 %79
    %vm83 = vcmask 236712
    %84 = vst.msk [vmem:[#allocation2] sm:$0xff] %vm83, %v78
    %vm85 = vcmask 230568
    %86 = vst.msk [vmem:[#allocation2 + $0x8] sm:$0x3] %vm85, %v80
    %87 = vrot.lane.b32.xlu0 %v63, 15
    %v88 = vpop.permute.xlu0 %87
    %89 = vrot.lane.b32.xlu0 %v64, 15
    %v90 = vpop.permute.xlu0 %89
    %vm93 = vcmask 318712
    %94 = vst.msk [vmem:[#allocation2] sm:$0xff] %vm93, %v88
    %vm95 = vcmask 312568
    %96 = vst.msk [vmem:[#allocation2 + $0x8] sm:$0x3] %vm95, %v90
    %97 = vrot.lane.b32.xlu0 %v63, 17
    %v98 = vpop.permute.xlu0 %97
    %99 = vrot.lane.b32.xlu0 %v64, 17
    %v100 = vpop.permute.xlu0 %99
    %vm103 = vcmask 400712
    %104 = vst.msk [vmem:[#allocation2] sm:$0xff] %vm103, %v98
    %vm105 = vcmask 394568
    %106 = vst.msk [vmem:[#allocation2 + $0x8] sm:$0x3] %vm105, %v100
    %107 = vrot.lane.b32.xlu0 %v63, 19
    %v108 = vpop.permute.xlu0 %107
    %109 = vrot.lane.b32.xlu0 %v64, 19
    %v110 = vpop.permute.xlu0 %109
    %vm113 = vcmask 482712
    %114 = vst.msk [vmem:[#allocation2] sm:$0xff] %vm113, %v108
    %vm115 = vcmask 476568
    %116 = vst.msk [vmem:[#allocation2 + $0x8] sm:$0x3] %vm115, %v110
    %117 = vrot.lane.b32.xlu0 %v63, 21
    %v118 = vpop.permute.xlu0 %117
    %119 = vrot.lane.b32.xlu0 %v64, 21
    %v120 = vpop.permute.xlu0 %119
    %vm123 = vcmask 564712
    %124 = vst.msk [vmem:[#allocation2] sm:$0xff] %vm123, %v118
    %vm125 = vcmask 558568
    %126 = vst.msk [vmem:[#allocation2 + $0x8] sm:$0x3] %vm125, %v120
    %127 = vrot.lane.b32.xlu0 %v63, 23
    %v128 = vpop.permute.xlu0 %127
    %129 = vrot.lane.b32.xlu0 %v64, 23
    %v130 = vpop.permute.xlu0 %129
    %vm133 = vcmask 646712
    %134 = vst.msk [vmem:[#allocation2] sm:$0xff] %vm133, %v128
    %vm135 = vcmask 640568
    %136 = vst.msk [vmem:[#allocation2 + $0x8] sm:$0x3] %vm135, %v130
    %137 = vrot.lane.b32.xlu0 %v63, 25
    %v138 = vpop.permute.xlu0 %137
    %139 = vrot.lane.b32.xlu0 %v64, 25
    %v140 = vpop.permute.xlu0 %139
    %vm143 = vcmask 728712
    %144 = vst.msk [vmem:[#allocation2] sm:$0xff] %vm143, %v138
    %vm145 = vcmask 722568
    %146 = vst.msk [vmem:[#allocation2 + $0x8] sm:$0x3] %vm145, %v140
    %v147 = vld [vmem:[#allocation2] sm:$0xff]
    %v148 = vld [vmem:[#allocation2 + $0x8] sm:$0x3]
    %v149 = vld [vmem:[%s1] sm:$0xff]
    %151 = vrot.lane.b32.xlu0 %v149, 118
    %v152 = vpop.permute.xlu0 %151
    %155 = vrot.lane.b32.xlu0 %v147, 127
    %v156 = vpop.permute.xlu0 %155
    %157 = vrot.lane.b32.xlu0 %v148, 127
    %v158 = vpop.permute.xlu0 %157
    %vm160 = vcmask 80896
    %v161 = vsel %vm160, %v152, 0
    %vm163 = vcmask 1041408
    %v164 = vsel %vm163, %v158, 0
    %166 = vmatprep.subr.mxu0 0.0
    %167 = vmatpush1.msra.mxu0 0.0
    %168 = vmatprep.subr.mxu0 0.0
    %169 = vmatpush1.msra.mxu0 0.0
    %170 = vmatprep.subr.mxu0 0.0
    %171 = vmatpush1.msra.mxu0 0.0
    %172 = vmatprep.subr.mxu0 0.0
    %173 = vmatpush1.msra.mxu0 0.0
    %174 = vmatprep.subr.mxu0 0.0
    %175 = vmatpush1.msra.mxu0 0.0
    %176 = vmatprep.subr.mxu0 0.0
    %177 = vmatpush1.msra.mxu0 0.0
    %178 = vmatprep.subr.mxu0 0.0
    %179 = vmatpush1.msra.mxu0 0.0
    %180 = vmatprep.subr.mxu0 0.0
    %181 = vmatpush1.msra.mxu0 0.0
    %182 = vmatprep.subr.mxu0 0.0
    %183 = vmatpush1.msra.mxu0 0.0
    %184 = vmatprep.subr.mxu0 0.0
    %185 = vmatpush1.msra.mxu0 0.0
    %186 = vmatprep.subr.mxu0 0.0
    %187 = vmatpush1.msra.mxu0 0.0
    %188 = vmatprep.subr.mxu0 0.0
    %189 = vmatpush1.msra.mxu0 0.0
    %190 = vmatprep.subr.mxu0 0.0
    %191 = vmatpush1.msra.mxu0 0.0
    %192 = vmatprep.subr.mxu0 0.0
    %193 = vmatpush1.msra.mxu0 0.0
    %194 = vmatprep.subr.mxu0 0.0
    %195 = vmatpush1.msra.mxu0 %v164
    %196 = vmatprep.subr.mxu0 0.0
    %197 = vmatpush1.msra.mxu0 %v156
    %198 = vmatprep.subr.mxu0 0.0
    %199 = vmatpush2.msra.mxu0 0.0
    %200 = vmatprep.subr.mxu0 0.0
    %201 = vmatpush2.msra.mxu0 0.0
    %202 = vmatprep.subr.mxu0 0.0
    %203 = vmatpush2.msra.mxu0 0.0
    %204 = vmatprep.subr.mxu0 0.0
    %205 = vmatpush2.msra.mxu0 0.0
    %206 = vmatprep.subr.mxu0 0.0
    %207 = vmatpush2.msra.mxu0 0.0
    %208 = vmatprep.subr.mxu0 0.0
    %209 = vmatpush2.msra.mxu0 0.0
    %210 = vmatprep.subr.mxu0 0.0
    %211 = vmatpush2.msra.mxu0 0.0
    %212 = vmatprep.subr.mxu0 0.0
    %213 = vmatpush2.msra.mxu0 0.0
    %214 = vmatprep.subr.mxu0 0.0
    %215 = vmatpush2.msra.mxu0 0.0
    %216 = vmatprep.subr.mxu0 0.0
    %217 = vmatpush2.msra.mxu0 0.0
    %218 = vmatprep.subr.mxu0 0.0
    %219 = vmatpush2.msra.mxu0 0.0
    %220 = vmatprep.subr.mxu0 0.0
    %221 = vmatpush2.msra.mxu0 0.0
    %222 = vmatprep.subr.mxu0 0.0
    %223 = vmatpush2.msra.mxu0 0.0
    %224 = vmatprep.subr.mxu0 0.0
    %225 = vmatpush2.msra.mxu0 0.0
    %226 = vmatprep.subr.mxu0 0.0
    %227 = vmatpush2.msra.mxu0 0.0
    %228 = vmatprep.subr.mxu0 0.0
    %229 = vmatpush2.msra.mxu0 0.0
    %230 = vmatprep.mubr.f32.mxu0 0.0
    %231 = vmatmul.mubr.f32.gmra.mxu0 %v161
    %v232 = vpop.f32.mrf.mxu0
    %v233 = vadd.f32 0.0, %v232
    %v234 = vpop.f32.mrf.mxu0
    %235 = vdwg.mxu0
    %v236 = vsel %vm160, %v149, 0
    %v238 = vsel %vm163, %v148, 0
    %240 = vmatprep.subr.mxu0 0.0
    %241 = vmatpush1.msra.mxu0 0.0
    %242 = vmatprep.subr.mxu0 0.0
    %243 = vmatpush1.msra.mxu0 0.0
    %244 = vmatprep.subr.mxu0 0.0
    %245 = vmatpush1.msra.mxu0 0.0
    %246 = vmatprep.subr.mxu0 0.0
    %247 = vmatpush1.msra.mxu0 0.0
    %248 = vmatprep.subr.mxu0 0.0
    %249 = vmatpush1.msra.mxu0 0.0
    %250 = vmatprep.subr.mxu0 0.0
    %251 = vmatpush1.msra.mxu0 0.0
    %252 = vmatprep.subr.mxu0 0.0
    %253 = vmatpush1.msra.mxu0 0.0
    %254 = vmatprep.subr.mxu0 0.0
    %255 = vmatpush1.msra.mxu0 0.0
    %256 = vmatprep.subr.mxu0 0.0
    %257 = vmatpush1.msra.mxu0 0.0
    %258 = vmatprep.subr.mxu0 0.0
    %259 = vmatpush1.msra.mxu0 0.0
    %260 = vmatprep.subr.mxu0 0.0
    %261 = vmatpush1.msra.mxu0 0.0
    %262 = vmatprep.subr.mxu0 0.0
    %263 = vmatpush1.msra.mxu0 0.0
    %264 = vmatprep.subr.mxu0 0.0
    %265 = vmatpush1.msra.mxu0 0.0
    %266 = vmatprep.subr.mxu0 0.0
    %267 = vmatpush1.msra.mxu0 0.0
    %268 = vmatprep.subr.mxu0 0.0
    %269 = vmatpush1.msra.mxu0 %v238
    %270 = vmatprep.subr.mxu0 0.0
    %271 = vmatpush1.msra.mxu0 %v147
    %272 = vmatprep.subr.mxu0 0.0
    %273 = vmatpush2.msra.mxu0 0.0
    %274 = vmatprep.subr.mxu0 0.0
    %275 = vmatpush2.msra.mxu0 0.0
    %276 = vmatprep.subr.mxu0 0.0
    %277 = vmatpush2.msra.mxu0 0.0
    %278 = vmatprep.subr.mxu0 0.0
    %279 = vmatpush2.msra.mxu0 0.0
    %280 = vmatprep.subr.mxu0 0.0
    %281 = vmatpush2.msra.mxu0 0.0
    %282 = vmatprep.subr.mxu0 0.0
    %283 = vmatpush2.msra.mxu0 0.0
    %284 = vmatprep.subr.mxu0 0.0
    %285 = vmatpush2.msra.mxu0 0.0
    %286 = vmatprep.subr.mxu0 0.0
    %287 = vmatpush2.msra.mxu0 0.0
    %288 = vmatprep.subr.mxu0 0.0
    %289 = vmatpush2.msra.mxu0 0.0
    %290 = vmatprep.subr.mxu0 0.0
    %291 = vmatpush2.msra.mxu0 0.0
    %292 = vmatprep.subr.mxu0 0.0
    %293 = vmatpush2.msra.mxu0 0.0
    %294 = vmatprep.subr.mxu0 0.0
    %295 = vmatpush2.msra.mxu0 0.0
    %296 = vmatprep.subr.mxu0 0.0
    %297 = vmatpush2.msra.mxu0 0.0
    %298 = vmatprep.subr.mxu0 0.0
    %299 = vmatpush2.msra.mxu0 0.0
    %300 = vmatprep.subr.mxu0 0.0
    %301 = vmatpush2.msra.mxu0 0.0
    %302 = vmatprep.subr.mxu0 0.0
    %303 = vmatpush2.msra.mxu0 0.0
    %304 = vmatprep.mubr.f32.mxu0 0.0
    %305 = vmatmul.mubr.f32.gmra.mxu0 %v236
    %v306 = vpop.f32.mrf.mxu0
    %v307 = vadd.f32 %v233, %v306
    %v308 = vpop.f32.mrf.mxu0
    %309 = vdwg.mxu0
    %310 = vrot.lane.b32.xlu0 %v149, 108
    %v311 = vpop.permute.xlu0 %310
    %312 = vrot.lane.b32.xlu0 %v147, 126
    %v313 = vpop.permute.xlu0 %312
    %314 = vrot.lane.b32.xlu0 %v148, 126
    %v315 = vpop.permute.xlu0 %314
    %v317 = vsel %vm160, %v311, 0
    %v319 = vsel %vm163, %v315, 0
    %321 = vmatprep.subr.mxu0 0.0
    %322 = vmatpush1.msra.mxu0 0.0
    %323 = vmatprep.subr.mxu0 0.0
    %324 = vmatpush1.msra.mxu0 0.0
    %325 = vmatprep.subr.mxu0 0.0
    %326 = vmatpush1.msra.mxu0 0.0
    %327 = vmatprep.subr.mxu0 0.0
    %328 = vmatpush1.msra.mxu0 0.0
    %329 = vmatprep.subr.mxu0 0.0
    %330 = vmatpush1.msra.mxu0 0.0
    %331 = vmatprep.subr.mxu0 0.0
    %332 = vmatpush1.msra.mxu0 0.0
    %333 = vmatprep.subr.mxu0 0.0
    %334 = vmatpush1.msra.mxu0 0.0
    %335 = vmatprep.subr.mxu0 0.0
    %336 = vmatpush1.msra.mxu0 0.0
    %337 = vmatprep.subr.mxu0 0.0
    %338 = vmatpush1.msra.mxu0 0.0
    %339 = vmatprep.subr.mxu0 0.0
    %340 = vmatpush1.msra.mxu0 0.0
    %341 = vmatprep.subr.mxu0 0.0
    %342 = vmatpush1.msra.mxu0 0.0
    %343 = vmatprep.subr.mxu0 0.0
    %344 = vmatpush1.msra.mxu0 0.0
    %345 = vmatprep.subr.mxu0 0.0
    %346 = vmatpush1.msra.mxu0 0.0
    %347 = vmatprep.subr.mxu0 0.0
    %348 = vmatpush1.msra.mxu0 0.0
    %349 = vmatprep.subr.mxu0 0.0
    %350 = vmatpush1.msra.mxu0 %v319
    %351 = vmatprep.subr.mxu0 0.0
    %352 = vmatpush1.msra.mxu0 %v313
    %353 = vmatprep.subr.mxu0 0.0
    %354 = vmatpush2.msra.mxu0 0.0
    %355 = vmatprep.subr.mxu0 0.0
    %356 = vmatpush2.msra.mxu0 0.0
    %357 = vmatprep.subr.mxu0 0.0
    %358 = vmatpush2.msra.mxu0 0.0
    %359 = vmatprep.subr.mxu0 0.0
    %360 = vmatpush2.msra.mxu0 0.0
    %361 = vmatprep.subr.mxu0 0.0
    %362 = vmatpush2.msra.mxu0 0.0
    %363 = vmatprep.subr.mxu0 0.0
    %364 = vmatpush2.msra.mxu0 0.0
    %365 = vmatprep.subr.mxu0 0.0
    %366 = vmatpush2.msra.mxu0 0.0
    %367 = vmatprep.subr.mxu0 0.0
    %368 = vmatpush2.msra.mxu0 0.0
    %369 = vmatprep.subr.mxu0 0.0
    %370 = vmatpush2.msra.mxu0 0.0
    %371 = vmatprep.subr.mxu0 0.0
    %372 = vmatpush2.msra.mxu0 0.0
    %373 = vmatprep.subr.mxu0 0.0
    %374 = vmatpush2.msra.mxu0 0.0
    %375 = vmatprep.subr.mxu0 0.0
    %376 = vmatpush2.msra.mxu0 0.0
    %377 = vmatprep.subr.mxu0 0.0
    %378 = vmatpush2.msra.mxu0 0.0
    %379 = vmatprep.subr.mxu0 0.0
    %380 = vmatpush2.msra.mxu0 0.0
    %381 = vmatprep.subr.mxu0 0.0
    %382 = vmatpush2.msra.mxu0 0.0
    %383 = vmatprep.subr.mxu0 0.0
    %384 = vmatpush2.msra.mxu0 0.0
    %385 = vmatprep.mubr.f32.mxu0 0.0
    %386 = vmatmul.mubr.f32.gmra.mxu0 %v317
    %v387 = vpop.f32.mrf.mxu0
    %v388 = vadd.f32 0.0, %v387
    %v389 = vpop.f32.mrf.mxu0
    %390 = vdwg.mxu0
    %v391 = vadd.f32 %v307, %v388
    %392 = vrot.lane.b32.xlu0 %v149, 98
    %v393 = vpop.permute.xlu0 %392
    %394 = vrot.lane.b32.xlu0 %v147, 118
    %v395 = vpop.permute.xlu0 %394
    %396 = vrot.lane.b32.xlu0 %v148, 118
    %v397 = vpop.permute.xlu0 %396
    %v399 = vsel %vm160, %v393, 0
    %v401 = vsel %vm163, %v397, 0
    %403 = vmatprep.subr.mxu0 0.0
    %404 = vmatpush1.msra.mxu0 0.0
    %405 = vmatprep.subr.mxu0 0.0
    %406 = vmatpush1.msra.mxu0 0.0
    %407 = vmatprep.subr.mxu0 0.0
    %408 = vmatpush1.msra.mxu0 0.0
    %409 = vmatprep.subr.mxu0 0.0
    %410 = vmatpush1.msra.mxu0 0.0
    %411 = vmatprep.subr.mxu0 0.0
    %412 = vmatpush1.msra.mxu0 0.0
    %413 = vmatprep.subr.mxu0 0.0
    %414 = vmatpush1.msra.mxu0 0.0
    %415 = vmatprep.subr.mxu0 0.0
    %416 = vmatpush1.msra.mxu0 0.0
    %417 = vmatprep.subr.mxu0 0.0
    %418 = vmatpush1.msra.mxu0 0.0
    %419 = vmatprep.subr.mxu0 0.0
    %420 = vmatpush1.msra.mxu0 0.0
    %421 = vmatprep.subr.mxu0 0.0
    %422 = vmatpush1.msra.mxu0 0.0
    %423 = vmatprep.subr.mxu0 0.0
    %424 = vmatpush1.msra.mxu0 0.0
    %425 = vmatprep.subr.mxu0 0.0
    %426 = vmatpush1.msra.mxu0 0.0
    %427 = vmatprep.subr.mxu0 0.0
    %428 = vmatpush1.msra.mxu0 0.0
    %429 = vmatprep.subr.mxu0 0.0
    %430 = vmatpush1.msra.mxu0 0.0
    %431 = vmatprep.subr.mxu0 0.0
    %432 = vmatpush1.msra.mxu0 %v401
    %433 = vmatprep.subr.mxu0 0.0
    %434 = vmatpush1.msra.mxu0 %v395
    %435 = vmatprep.subr.mxu0 0.0
    %436 = vmatpush2.msra.mxu0 0.0
    %437 = vmatprep.subr.mxu0 0.0
    %438 = vmatpush2.msra.mxu0 0.0
    %439 = vmatprep.subr.mxu0 0.0
    %440 = vmatpush2.msra.mxu0 0.0
    %441 = vmatprep.subr.mxu0 0.0
    %442 = vmatpush2.msra.mxu0 0.0
    %443 = vmatprep.subr.mxu0 0.0
    %444 = vmatpush2.msra.mxu0 0.0
    %445 = vmatprep.subr.mxu0 0.0
    %446 = vmatpush2.msra.mxu0 0.0
    %447 = vmatprep.subr.mxu0 0.0
    %448 = vmatpush2.msra.mxu0 0.0
    %449 = vmatprep.subr.mxu0 0.0
    %450 = vmatpush2.msra.mxu0 0.0
    %451 = vmatprep.subr.mxu0 0.0
    %452 = vmatpush2.msra.mxu0 0.0
    %453 = vmatprep.subr.mxu0 0.0
    %454 = vmatpush2.msra.mxu0 0.0
    %455 = vmatprep.subr.mxu0 0.0
    %456 = vmatpush2.msra.mxu0 0.0
    %457 = vmatprep.subr.mxu0 0.0
    %458 = vmatpush2.msra.mxu0 0.0
    %459 = vmatprep.subr.mxu0 0.0
    %460 = vmatpush2.msra.mxu0 0.0
    %461 = vmatprep.subr.mxu0 0.0
    %462 = vmatpush2.msra.mxu0 0.0
    %463 = vmatprep.subr.mxu0 0.0
    %464 = vmatpush2.msra.mxu0 0.0
    %465 = vmatprep.subr.mxu0 0.0
    %466 = vmatpush2.msra.mxu0 0.0
    %467 = vmatprep.mubr.f32.mxu0 0.0
    %468 = vmatmul.mubr.f32.gmra.mxu0 %v399
    %v469 = vpop.f32.mrf.mxu0
    %v470 = vadd.f32 0.0, %v469
    %v471 = vpop.f32.mrf.mxu0
    %472 = vdwg.mxu0
    %v473 = vadd.f32 %v391, %v470
    %474 = vrot.lane.b32.xlu0 %v149, 88
    %v475 = vpop.permute.xlu0 %474
    %476 = vrot.lane.b32.xlu0 %v147, 117
    %v477 = vpop.permute.xlu0 %476
    %478 = vrot.lane.b32.xlu0 %v148, 117
    %v479 = vpop.permute.xlu0 %478
    %v481 = vsel %vm160, %v475, 0
    %v483 = vsel %vm163, %v479, 0
    %485 = vmatprep.subr.mxu0 0.0
    %486 = vmatpush1.msra.mxu0 0.0
    %487 = vmatprep.subr.mxu0 0.0
    %488 = vmatpush1.msra.mxu0 0.0
    %489 = vmatprep.subr.mxu0 0.0
    %490 = vmatpush1.msra.mxu0 0.0
    %491 = vmatprep.subr.mxu0 0.0
    %492 = vmatpush1.msra.mxu0 0.0
    %493 = vmatprep.subr.mxu0 0.0
    %494 = vmatpush1.msra.mxu0 0.0
    %495 = vmatprep.subr.mxu0 0.0
    %496 = vmatpush1.msra.mxu0 0.0
    %497 = vmatprep.subr.mxu0 0.0
    %498 = vmatpush1.msra.mxu0 0.0
    %499 = vmatprep.subr.mxu0 0.0
    %500 = vmatpush1.msra.mxu0 0.0
    %501 = vmatprep.subr.mxu0 0.0
    %502 = vmatpush1.msra.mxu0 0.0
    %503 = vmatprep.subr.mxu0 0.0
    %504 = vmatpush1.msra.mxu0 0.0
    %505 = vmatprep.subr.mxu0 0.0
    %506 = vmatpush1.msra.mxu0 0.0
    %507 = vmatprep.subr.mxu0 0.0
    %508 = vmatpush1.msra.mxu0 0.0
    %509 = vmatprep.subr.mxu0 0.0
    %510 = vmatpush1.msra.mxu0 0.0
    %511 = vmatprep.subr.mxu0 0.0
    %512 = vmatpush1.msra.mxu0 0.0
    %513 = vmatprep.subr.mxu0 0.0
    %514 = vmatpush1.msra.mxu0 %v483
    %515 = vmatprep.subr.mxu0 0.0
    %516 = vmatpush1.msra.mxu0 %v477
    %517 = vmatprep.subr.mxu0 0.0
    %518 = vmatpush2.msra.mxu0 0.0
    %519 = vmatprep.subr.mxu0 0.0
    %520 = vmatpush2.msra.mxu0 0.0
    %521 = vmatprep.subr.mxu0 0.0
    %522 = vmatpush2.msra.mxu0 0.0
    %523 = vmatprep.subr.mxu0 0.0
    %524 = vmatpush2.msra.mxu0 0.0
    %525 = vmatprep.subr.mxu0 0.0
    %526 = vmatpush2.msra.mxu0 0.0
    %527 = vmatprep.subr.mxu0 0.0
    %528 = vmatpush2.msra.mxu0 0.0
    %529 = vmatprep.subr.mxu0 0.0
    %530 = vmatpush2.msra.mxu0 0.0
    %531 = vmatprep.subr.mxu0 0.0
    %532 = vmatpush2.msra.mxu0 0.0
    %533 = vmatprep.subr.mxu0 0.0
    %534 = vmatpush2.msra.mxu0 0.0
    %535 = vmatprep.subr.mxu0 0.0
    %536 = vmatpush2.msra.mxu0 0.0
    %537 = vmatprep.subr.mxu0 0.0
    %538 = vmatpush2.msra.mxu0 0.0
    %539 = vmatprep.subr.mxu0 0.0
    %540 = vmatpush2.msra.mxu0 0.0
    %541 = vmatprep.subr.mxu0 0.0
    %542 = vmatpush2.msra.mxu0 0.0
    %543 = vmatprep.subr.mxu0 0.0
    %544 = vmatpush2.msra.mxu0 0.0
    %545 = vmatprep.subr.mxu0 0.0
    %546 = vmatpush2.msra.mxu0 0.0
    %547 = vmatprep.subr.mxu0 0.0
    %548 = vmatpush2.msra.mxu0 0.0
    %549 = vmatprep.mubr.f32.mxu0 0.0
    %550 = vmatmul.mubr.f32.gmra.mxu0 %v481
    %v551 = vpop.f32.mrf.mxu0
    %v552 = vadd.f32 0.0, %v551
    %v553 = vpop.f32.mrf.mxu0
    %554 = vdwg.mxu0
    %v555 = vadd.f32 %v473, %v552
    %556 = vrot.lane.b32.xlu0 %v149, 78
    %v557 = vpop.permute.xlu0 %556
    %558 = vrot.lane.b32.xlu0 %v147, 116
    %v559 = vpop.permute.xlu0 %558
    %560 = vrot.lane.b32.xlu0 %v148, 116
    %v561 = vpop.permute.xlu0 %560
    %v563 = vsel %vm160, %v557, 0
    %v565 = vsel %vm163, %v561, 0
    %567 = vmatprep.subr.mxu0 0.0
    %568 = vmatpush1.msra.mxu0 0.0
    %569 = vmatprep.subr.mxu0 0.0
    %570 = vmatpush1.msra.mxu0 0.0
    %571 = vmatprep.subr.mxu0 0.0
    %572 = vmatpush1.msra.mxu0 0.0
    %573 = vmatprep.subr.mxu0 0.0
    %574 = vmatpush1.msra.mxu0 0.0
    %575 = vmatprep.subr.mxu0 0.0
    %576 = vmatpush1.msra.mxu0 0.0
    %577 = vmatprep.subr.mxu0 0.0
    %578 = vmatpush1.msra.mxu0 0.0
    %579 = vmatprep.subr.mxu0 0.0
    %580 = vmatpush1.msra.mxu0 0.0
    %581 = vmatprep.subr.mxu0 0.0
    %582 = vmatpush1.msra.mxu0 0.0
    %583 = vmatprep.subr.mxu0 0.0
    %584 = vmatpush1.msra.mxu0 0.0
    %585 = vmatprep.subr.mxu0 0.0
    %586 = vmatpush1.msra.mxu0 0.0
    %587 = vmatprep.subr.mxu0 0.0
    %588 = vmatpush1.msra.mxu0 0.0
    %589 = vmatprep.subr.mxu0 0.0
    %590 = vmatpush1.msra.mxu0 0.0
    %591 = vmatprep.subr.mxu0 0.0
    %592 = vmatpush1.msra.mxu0 0.0
    %593 = vmatprep.subr.mxu0 0.0
    %594 = vmatpush1.msra.mxu0 0.0
    %595 = vmatprep.subr.mxu0 0.0
    %596 = vmatpush1.msra.mxu0 %v565
    %597 = vmatprep.subr.mxu0 0.0
    %598 = vmatpush1.msra.mxu0 %v559
    %599 = vmatprep.subr.mxu0 0.0
    %600 = vmatpush2.msra.mxu0 0.0
    %601 = vmatprep.subr.mxu0 0.0
    %602 = vmatpush2.msra.mxu0 0.0
    %603 = vmatprep.subr.mxu0 0.0
    %604 = vmatpush2.msra.mxu0 0.0
    %605 = vmatprep.subr.mxu0 0.0
    %606 = vmatpush2.msra.mxu0 0.0
    %607 = vmatprep.subr.mxu0 0.0
    %608 = vmatpush2.msra.mxu0 0.0
    %609 = vmatprep.subr.mxu0 0.0
    %610 = vmatpush2.msra.mxu0 0.0
    %611 = vmatprep.subr.mxu0 0.0
    %612 = vmatpush2.msra.mxu0 0.0
    %613 = vmatprep.subr.mxu0 0.0
    %614 = vmatpush2.msra.mxu0 0.0
    %615 = vmatprep.subr.mxu0 0.0
    %616 = vmatpush2.msra.mxu0 0.0
    %617 = vmatprep.subr.mxu0 0.0
    %618 = vmatpush2.msra.mxu0 0.0
    %619 = vmatprep.subr.mxu0 0.0
    %620 = vmatpush2.msra.mxu0 0.0
    %621 = vmatprep.subr.mxu0 0.0
    %622 = vmatpush2.msra.mxu0 0.0
    %623 = vmatprep.subr.mxu0 0.0
    %624 = vmatpush2.msra.mxu0 0.0
    %625 = vmatprep.subr.mxu0 0.0
    %626 = vmatpush2.msra.mxu0 0.0
    %627 = vmatprep.subr.mxu0 0.0
    %628 = vmatpush2.msra.mxu0 0.0
    %629 = vmatprep.subr.mxu0 0.0
    %630 = vmatpush2.msra.mxu0 0.0
    %631 = vmatprep.mubr.f32.mxu0 0.0
    %632 = vmatmul.mubr.f32.gmra.mxu0 %v563
    %v633 = vpop.f32.mrf.mxu0
    %v634 = vadd.f32 0.0, %v633
    %v635 = vpop.f32.mrf.mxu0
    %636 = vdwg.mxu0
    %v637 = vadd.f32 %v555, %v634
    %638 = vrot.lane.b32.xlu0 %v149, 68
    %v639 = vpop.permute.xlu0 %638
    %640 = vrot.lane.b32.xlu0 %v147, 108
    %v641 = vpop.permute.xlu0 %640
    %642 = vrot.lane.b32.xlu0 %v148, 108
    %v643 = vpop.permute.xlu0 %642
    %v645 = vsel %vm160, %v639, 0
    %v647 = vsel %vm163, %v643, 0
    %649 = vmatprep.subr.mxu0 0.0
    %650 = vmatpush1.msra.mxu0 0.0
    %651 = vmatprep.subr.mxu0 0.0
    %652 = vmatpush1.msra.mxu0 0.0
    %653 = vmatprep.subr.mxu0 0.0
    %654 = vmatpush1.msra.mxu0 0.0
    %655 = vmatprep.subr.mxu0 0.0
    %656 = vmatpush1.msra.mxu0 0.0
    %657 = vmatprep.subr.mxu0 0.0
    %658 = vmatpush1.msra.mxu0 0.0
    %659 = vmatprep.subr.mxu0 0.0
    %660 = vmatpush1.msra.mxu0 0.0
    %661 = vmatprep.subr.mxu0 0.0
    %662 = vmatpush1.msra.mxu0 0.0
    %663 = vmatprep.subr.mxu0 0.0
    %664 = vmatpush1.msra.mxu0 0.0
    %665 = vmatprep.subr.mxu0 0.0
    %666 = vmatpush1.msra.mxu0 0.0
    %667 = vmatprep.subr.mxu0 0.0
    %668 = vmatpush1.msra.mxu0 0.0
    %669 = vmatprep.subr.mxu0 0.0
    %670 = vmatpush1.msra.mxu0 0.0
    %671 = vmatprep.subr.mxu0 0.0
    %672 = vmatpush1.msra.mxu0 0.0
    %673 = vmatprep.subr.mxu0 0.0
    %674 = vmatpush1.msra.mxu0 0.0
    %675 = vmatprep.subr.mxu0 0.0
    %676 = vmatpush1.msra.mxu0 0.0
    %677 = vmatprep.subr.mxu0 0.0
    %678 = vmatpush1.msra.mxu0 %v647
    %679 = vmatprep.subr.mxu0 0.0
    %680 = vmatpush1.msra.mxu0 %v641
    %681 = vmatprep.subr.mxu0 0.0
    %682 = vmatpush2.msra.mxu0 0.0
    %683 = vmatprep.subr.mxu0 0.0
    %684 = vmatpush2.msra.mxu0 0.0
    %685 = vmatprep.subr.mxu0 0.0
    %686 = vmatpush2.msra.mxu0 0.0
    %687 = vmatprep.subr.mxu0 0.0
    %688 = vmatpush2.msra.mxu0 0.0
    %689 = vmatprep.subr.mxu0 0.0
    %690 = vmatpush2.msra.mxu0 0.0
    %691 = vmatprep.subr.mxu0 0.0
    %692 = vmatpush2.msra.mxu0 0.0
    %693 = vmatprep.subr.mxu0 0.0
    %694 = vmatpush2.msra.mxu0 0.0
    %695 = vmatprep.subr.mxu0 0.0
    %696 = vmatpush2.msra.mxu0 0.0
    %697 = vmatprep.subr.mxu0 0.0
    %698 = vmatpush2.msra.mxu0 0.0
    %699 = vmatprep.subr.mxu0 0.0
    %700 = vmatpush2.msra.mxu0 0.0
    %701 = vmatprep.subr.mxu0 0.0
    %702 = vmatpush2.msra.mxu0 0.0
    %703 = vmatprep.subr.mxu0 0.0
    %704 = vmatpush2.msra.mxu0 0.0
    %705 = vmatprep.subr.mxu0 0.0
    %706 = vmatpush2.msra.mxu0 0.0
    %707 = vmatprep.subr.mxu0 0.0
    %708 = vmatpush2.msra.mxu0 0.0
    %709 = vmatprep.subr.mxu0 0.0
    %710 = vmatpush2.msra.mxu0 0.0
    %711 = vmatprep.subr.mxu0 0.0
    %712 = vmatpush2.msra.mxu0 0.0
    %713 = vmatprep.mubr.f32.mxu0 0.0
    %714 = vmatmul.mubr.f32.gmra.mxu0 %v645
    %v715 = vpop.f32.mrf.mxu0
    %v716 = vadd.f32 0.0, %v715
    %v717 = vpop.f32.mrf.mxu0
    %718 = vdwg.mxu0
    %v719 = vadd.f32 %v637, %v716
    %720 = vrot.lane.b32.xlu0 %v149, 58
    %v721 = vpop.permute.xlu0 %720
    %722 = vrot.lane.b32.xlu0 %v147, 107
    %v723 = vpop.permute.xlu0 %722
    %724 = vrot.lane.b32.xlu0 %v148, 107
    %v725 = vpop.permute.xlu0 %724
    %v727 = vsel %vm160, %v721, 0
    %v729 = vsel %vm163, %v725, 0
    %731 = vmatprep.subr.mxu0 0.0
    %732 = vmatpush1.msra.mxu0 0.0
    %733 = vmatprep.subr.mxu0 0.0
    %734 = vmatpush1.msra.mxu0 0.0
    %735 = vmatprep.subr.mxu0 0.0
    %736 = vmatpush1.msra.mxu0 0.0
    %737 = vmatprep.subr.mxu0 0.0
    %738 = vmatpush1.msra.mxu0 0.0
    %739 = vmatprep.subr.mxu0 0.0
    %740 = vmatpush1.msra.mxu0 0.0
    %741 = vmatprep.subr.mxu0 0.0
    %742 = vmatpush1.msra.mxu0 0.0
    %743 = vmatprep.subr.mxu0 0.0
    %744 = vmatpush1.msra.mxu0 0.0
    %745 = vmatprep.subr.mxu0 0.0
    %746 = vmatpush1.msra.mxu0 0.0
    %747 = vmatprep.subr.mxu0 0.0
    %748 = vmatpush1.msra.mxu0 0.0
    %749 = vmatprep.subr.mxu0 0.0
    %750 = vmatpush1.msra.mxu0 0.0
    %751 = vmatprep.subr.mxu0 0.0
    %752 = vmatpush1.msra.mxu0 0.0
    %753 = vmatprep.subr.mxu0 0.0
    %754 = vmatpush1.msra.mxu0 0.0
    %755 = vmatprep.subr.mxu0 0.0
    %756 = vmatpush1.msra.mxu0 0.0
    %757 = vmatprep.subr.mxu0 0.0
    %758 = vmatpush1.msra.mxu0 0.0
    %759 = vmatprep.subr.mxu0 0.0
    %760 = vmatpush1.msra.mxu0 %v729
    %761 = vmatprep.subr.mxu0 0.0
    %762 = vmatpush1.msra.mxu0 %v723
    %763 = vmatprep.subr.mxu0 0.0
    %764 = vmatpush2.msra.mxu0 0.0
    %765 = vmatprep.subr.mxu0 0.0
    %766 = vmatpush2.msra.mxu0 0.0
    %767 = vmatprep.subr.mxu0 0.0
    %768 = vmatpush2.msra.mxu0 0.0
    %769 = vmatprep.subr.mxu0 0.0
    %770 = vmatpush2.msra.mxu0 0.0
    %771 = vmatprep.subr.mxu0 0.0
    %772 = vmatpush2.msra.mxu0 0.0
    %773 = vmatprep.subr.mxu0 0.0
    %774 = vmatpush2.msra.mxu0 0.0
    %775 = vmatprep.subr.mxu0 0.0
    %776 = vmatpush2.msra.mxu0 0.0
    %777 = vmatprep.subr.mxu0 0.0
    %778 = vmatpush2.msra.mxu0 0.0
    %779 = vmatprep.subr.mxu0 0.0
    %780 = vmatpush2.msra.mxu0 0.0
    %781 = vmatprep.subr.mxu0 0.0
    %782 = vmatpush2.msra.mxu0 0.0
    %783 = vmatprep.subr.mxu0 0.0
    %784 = vmatpush2.msra.mxu0 0.0
    %785 = vmatprep.subr.mxu0 0.0
    %786 = vmatpush2.msra.mxu0 0.0
    %787 = vmatprep.subr.mxu0 0.0
    %788 = vmatpush2.msra.mxu0 0.0
    %789 = vmatprep.subr.mxu0 0.0
    %790 = vmatpush2.msra.mxu0 0.0
    %791 = vmatprep.subr.mxu0 0.0
    %792 = vmatpush2.msra.mxu0 0.0
    %793 = vmatprep.subr.mxu0 0.0
    %794 = vmatpush2.msra.mxu0 0.0
    %795 = vmatprep.mubr.f32.mxu0 0.0
    %796 = vmatmul.mubr.f32.gmra.mxu0 %v727
    %v797 = vpop.f32.mrf.mxu0
    %v798 = vadd.f32 0.0, %v797
    %v799 = vpop.f32.mrf.mxu0
    %800 = vdwg.mxu0
    %v801 = vadd.f32 %v719, %v798
    %802 = vrot.lane.b32.xlu0 %v149, 48
    %v803 = vpop.permute.xlu0 %802
    %804 = vrot.lane.b32.xlu0 %v147, 106
    %v805 = vpop.permute.xlu0 %804
    %806 = vrot.lane.b32.xlu0 %v148, 106
    %v807 = vpop.permute.xlu0 %806
    %v809 = vsel %vm160, %v803, 0
    %v811 = vsel %vm163, %v807, 0
    %813 = vmatprep.subr.mxu0 0.0
    %814 = vmatpush1.msra.mxu0 0.0
    %815 = vmatprep.subr.mxu0 0.0
    %816 = vmatpush1.msra.mxu0 0.0
    %817 = vmatprep.subr.mxu0 0.0
    %818 = vmatpush1.msra.mxu0 0.0
    %819 = vmatprep.subr.mxu0 0.0
    %820 = vmatpush1.msra.mxu0 0.0
    %821 = vmatprep.subr.mxu0 0.0
    %822 = vmatpush1.msra.mxu0 0.0
    %823 = vmatprep.subr.mxu0 0.0
    %824 = vmatpush1.msra.mxu0 0.0
    %825 = vmatprep.subr.mxu0 0.0
    %826 = vmatpush1.msra.mxu0 0.0
    %827 = vmatprep.subr.mxu0 0.0
    %828 = vmatpush1.msra.mxu0 0.0
    %829 = vmatprep.subr.mxu0 0.0
    %830 = vmatpush1.msra.mxu0 0.0
    %831 = vmatprep.subr.mxu0 0.0
    %832 = vmatpush1.msra.mxu0 0.0
    %833 = vmatprep.subr.mxu0 0.0
    %834 = vmatpush1.msra.mxu0 0.0
    %835 = vmatprep.subr.mxu0 0.0
    %836 = vmatpush1.msra.mxu0 0.0
    %837 = vmatprep.subr.mxu0 0.0
    %838 = vmatpush1.msra.mxu0 0.0
    %839 = vmatprep.subr.mxu0 0.0
    %840 = vmatpush1.msra.mxu0 0.0
    %841 = vmatprep.subr.mxu0 0.0
    %842 = vmatpush1.msra.mxu0 %v811
    %843 = vmatprep.subr.mxu0 0.0
    %844 = vmatpush1.msra.mxu0 %v805
    %845 = vmatprep.subr.mxu0 0.0
    %846 = vmatpush2.msra.mxu0 0.0
    %847 = vmatprep.subr.mxu0 0.0
    %848 = vmatpush2.msra.mxu0 0.0
    %849 = vmatprep.subr.mxu0 0.0
    %850 = vmatpush2.msra.mxu0 0.0
    %851 = vmatprep.subr.mxu0 0.0
    %852 = vmatpush2.msra.mxu0 0.0
    %853 = vmatprep.subr.mxu0 0.0
    %854 = vmatpush2.msra.mxu0 0.0
    %855 = vmatprep.subr.mxu0 0.0
    %856 = vmatpush2.msra.mxu0 0.0
    %857 = vmatprep.subr.mxu0 0.0
    %858 = vmatpush2.msra.mxu0 0.0
    %859 = vmatprep.subr.mxu0 0.0
    %860 = vmatpush2.msra.mxu0 0.0
    %861 = vmatprep.subr.mxu0 0.0
    %862 = vmatpush2.msra.mxu0 0.0
    %863 = vmatprep.subr.mxu0 0.0
    %864 = vmatpush2.msra.mxu0 0.0
    %865 = vmatprep.subr.mxu0 0.0
    %866 = vmatpush2.msra.mxu0 0.0
    %867 = vmatprep.subr.mxu0 0.0
    %868 = vmatpush2.msra.mxu0 0.0
    %869 = vmatprep.subr.mxu0 0.0
    %870 = vmatpush2.msra.mxu0 0.0
    %871 = vmatprep.subr.mxu0 0.0
    %872 = vmatpush2.msra.mxu0 0.0
    %873 = vmatprep.subr.mxu0 0.0
    %874 = vmatpush2.msra.mxu0 0.0
    %875 = vmatprep.subr.mxu0 0.0
    %876 = vmatpush2.msra.mxu0 0.0
    %877 = vmatprep.mubr.f32.mxu0 0.0
    %878 = vmatmul.mubr.f32.gmra.mxu0 %v809
    %v879 = vpop.f32.mrf.mxu0
    %v880 = vadd.f32 0.0, %v879
    %v881 = vpop.f32.mrf.mxu0
    %882 = vdwg.mxu0
    %v883 = vadd.f32 %v801, %v880
    %v884 = vmax.f32 %v883, 0.0
    %886 = vrot.lane.b32.xlu0 %v884, 26
    %v887 = vpop.permute.xlu0 %886
    %vm889 = vcmask 277712
    %890 = vst.msk [vmem:[#allocation3] sm:$0xff] %vm889, %v887
    %891 = vrot.lane.b32.xlu0 %v884, 28
    %v892 = vpop.permute.xlu0 %891
    %vm894 = vcmask 376112
    %895 = vst.msk [vmem:[#allocation3] sm:$0xff] %vm894, %v892
    %896 = vrot.lane.b32.xlu0 %v884, 30
    %v897 = vpop.permute.xlu0 %896
    %vm899 = vcmask 474512
    %900 = vst.msk [vmem:[#allocation3] sm:$0xff] %vm899, %v897
    %901 = vrot.lane.b32.xlu0 %v884, 32
    %v902 = vpop.permute.xlu0 %901
    %vm904 = vcmask 572912
    %905 = vst.msk [vmem:[#allocation3] sm:$0xff] %vm904, %v902
    %906 = vrot.lane.b32.xlu0 %v884, 34
    %v907 = vpop.permute.xlu0 %906
    %vm909 = vcmask 671312
    %910 = vst.msk [vmem:[#allocation3] sm:$0xff] %vm909, %v907
    %911 = vrot.lane.b32.xlu0 %v884, 36
    %v912 = vpop.permute.xlu0 %911
    %vm914 = vcmask 769712
    %915 = vst.msk [vmem:[#allocation3] sm:$0xff] %vm914, %v912
    %916 = vrot.lane.b32.xlu0 %v884, 38
    %v917 = vpop.permute.xlu0 %916
    %vm919 = vcmask 868112
    %920 = vst.msk [vmem:[#allocation3] sm:$0xff] %vm919, %v917
    %921 = vrot.lane.b32.xlu0 %v884, 40
    %v922 = vpop.permute.xlu0 %921
    %vm924 = vcmask 966512
    %925 = vst.msk [vmem:[#allocation3] sm:$0xff] %vm924, %v922
    %v926 = vld [vmem:[#allocation3] sm:$0xff]
    %v927 = vld [vmem:[#allocation3 + $0x8] sm:$0xff]
    %v928 = vld [vmem:[%s2] sm:$0xff]
    %930 = vrot.lane.b32.xlu0 %v928, 120
    %v931 = vpop.permute.xlu0 %930
    %933 = vrot.lane.b32.xlu0 %v926, 127
    %v934 = vpop.permute.xlu0 %933
    %vm936 = vcmask 64512
    %v937 = vsel %vm936, %v931, 0
    %939 = vmatprep.subr.mxu0 0.0
    %940 = vmatpush1.msra.mxu0 0.0
    %941 = vmatprep.subr.mxu0 0.0
    %942 = vmatpush1.msra.mxu0 0.0
    %943 = vmatprep.subr.mxu0 0.0
    %944 = vmatpush1.msra.mxu0 0.0
    %945 = vmatprep.subr.mxu0 0.0
    %946 = vmatpush1.msra.mxu0 0.0
    %947 = vmatprep.subr.mxu0 0.0
    %948 = vmatpush1.msra.mxu0 0.0
    %949 = vmatprep.subr.mxu0 0.0
    %950 = vmatpush1.msra.mxu0 0.0
    %951 = vmatprep.subr.mxu0 0.0
    %952 = vmatpush1.msra.mxu0 0.0
    %953 = vmatprep.subr.mxu0 0.0
    %954 = vmatpush1.msra.mxu0 0.0
    %955 = vmatprep.subr.mxu0 0.0
    %956 = vmatpush1.msra.mxu0 0.0
    %957 = vmatprep.subr.mxu0 0.0
    %958 = vmatpush1.msra.mxu0 0.0
    %959 = vmatprep.subr.mxu0 0.0
    %960 = vmatpush1.msra.mxu0 0.0
    %961 = vmatprep.subr.mxu0 0.0
    %962 = vmatpush1.msra.mxu0 0.0
    %963 = vmatprep.subr.mxu0 0.0
    %964 = vmatpush1.msra.mxu0 0.0
    %965 = vmatprep.subr.mxu0 0.0
    %966 = vmatpush1.msra.mxu0 0.0
    %967 = vmatprep.subr.mxu0 0.0
    %968 = vmatpush1.msra.mxu0 0.0
    %969 = vmatprep.subr.mxu0 0.0
    %970 = vmatpush1.msra.mxu0 %v934
    %971 = vmatprep.subr.mxu0 0.0
    %972 = vmatpush2.msra.mxu0 0.0
    %973 = vmatprep.subr.mxu0 0.0
    %974 = vmatpush2.msra.mxu0 0.0
    %975 = vmatprep.subr.mxu0 0.0
    %976 = vmatpush2.msra.mxu0 0.0
    %977 = vmatprep.subr.mxu0 0.0
    %978 = vmatpush2.msra.mxu0 0.0
    %979 = vmatprep.subr.mxu0 0.0
    %980 = vmatpush2.msra.mxu0 0.0
    %981 = vmatprep.subr.mxu0 0.0
    %982 = vmatpush2.msra.mxu0 0.0
    %983 = vmatprep.subr.mxu0 0.0
    %984 = vmatpush2.msra.mxu0 0.0
    %985 = vmatprep.subr.mxu0 0.0
    %986 = vmatpush2.msra.mxu0 0.0
    %987 = vmatprep.subr.mxu0 0.0
    %988 = vmatpush2.msra.mxu0 0.0
    %989 = vmatprep.subr.mxu0 0.0
    %990 = vmatpush2.msra.mxu0 0.0
    %991 = vmatprep.subr.mxu0 0.0
    %992 = vmatpush2.msra.mxu0 0.0
    %993 = vmatprep.subr.mxu0 0.0
    %994 = vmatpush2.msra.mxu0 0.0
    %995 = vmatprep.subr.mxu0 0.0
    %996 = vmatpush2.msra.mxu0 0.0
    %997 = vmatprep.subr.mxu0 0.0
    %998 = vmatpush2.msra.mxu0 0.0
    %999 = vmatprep.subr.mxu0 0.0
    %1000 = vmatpush2.msra.mxu0 0.0
    %1001 = vmatprep.subr.mxu0 0.0
    %1002 = vmatpush2.msra.mxu0 0.0
    %1003 = vmatprep.mubr.f32.mxu0 0.0
    %1004 = vmatmul.mubr.f32.gmra.mxu0 %v937
    %v1005 = vpop.f32.mrf.mxu0
    %v1006 = vadd.f32 0.0, %v1005
    %v1007 = vpop.f32.mrf.mxu0
    %1008 = vdwg.mxu0
    %v1009 = vsel %vm936, %v928, 0
    %1011 = vmatprep.subr.mxu0 0.0
    %1012 = vmatpush1.msra.mxu0 0.0
    %1013 = vmatprep.subr.mxu0 0.0
    %1014 = vmatpush1.msra.mxu0 0.0
    %1015 = vmatprep.subr.mxu0 0.0
    %1016 = vmatpush1.msra.mxu0 0.0
    %1017 = vmatprep.subr.mxu0 0.0
    %1018 = vmatpush1.msra.mxu0 0.0
    %1019 = vmatprep.subr.mxu0 0.0
    %1020 = vmatpush1.msra.mxu0 0.0
    %1021 = vmatprep.subr.mxu0 0.0
    %1022 = vmatpush1.msra.mxu0 0.0
    %1023 = vmatprep.subr.mxu0 0.0
    %1024 = vmatpush1.msra.mxu0 0.0
    %1025 = vmatprep.subr.mxu0 0.0
    %1026 = vmatpush1.msra.mxu0 0.0
    %1027 = vmatprep.subr.mxu0 0.0
    %1028 = vmatpush1.msra.mxu0 0.0
    %1029 = vmatprep.subr.mxu0 0.0
    %1030 = vmatpush1.msra.mxu0 0.0
    %1031 = vmatprep.subr.mxu0 0.0
    %1032 = vmatpush1.msra.mxu0 0.0
    %1033 = vmatprep.subr.mxu0 0.0
    %1034 = vmatpush1.msra.mxu0 0.0
    %1035 = vmatprep.subr.mxu0 0.0
    %1036 = vmatpush1.msra.mxu0 0.0
    %1037 = vmatprep.subr.mxu0 0.0
    %1038 = vmatpush1.msra.mxu0 0.0
    %1039 = vmatprep.subr.mxu0 0.0
    %1040 = vmatpush1.msra.mxu0 0.0
    %1041 = vmatprep.subr.mxu0 0.0
    %1042 = vmatpush1.msra.mxu0 %v926
    %1043 = vmatprep.subr.mxu0 0.0
    %1044 = vmatpush2.msra.mxu0 0.0
    %1045 = vmatprep.subr.mxu0 0.0
    %1046 = vmatpush2.msra.mxu0 0.0
    %1047 = vmatprep.subr.mxu0 0.0
    %1048 = vmatpush2.msra.mxu0 0.0
    %1049 = vmatprep.subr.mxu0 0.0
    %1050 = vmatpush2.msra.mxu0 0.0
    %1051 = vmatprep.subr.mxu0 0.0
    %1052 = vmatpush2.msra.mxu0 0.0
    %1053 = vmatprep.subr.mxu0 0.0
    %1054 = vmatpush2.msra.mxu0 0.0
    %1055 = vmatprep.subr.mxu0 0.0
    %1056 = vmatpush2.msra.mxu0 0.0
    %1057 = vmatprep.subr.mxu0 0.0
    %1058 = vmatpush2.msra.mxu0 0.0
    %1059 = vmatprep.subr.mxu0 0.0
    %1060 = vmatpush2.msra.mxu0 0.0
    %1061 = vmatprep.subr.mxu0 0.0
    %1062 = vmatpush2.msra.mxu0 0.0
    %1063 = vmatprep.subr.mxu0 0.0
    %1064 = vmatpush2.msra.mxu0 0.0
    %1065 = vmatprep.subr.mxu0 0.0
    %1066 = vmatpush2.msra.mxu0 0.0
    %1067 = vmatprep.subr.mxu0 0.0
    %1068 = vmatpush2.msra.mxu0 0.0
    %1069 = vmatprep.subr.mxu0 0.0
    %1070 = vmatpush2.msra.mxu0 0.0
    %1071 = vmatprep.subr.mxu0 0.0
    %1072 = vmatpush2.msra.mxu0 0.0
    %1073 = vmatprep.subr.mxu0 0.0
    %1074 = vmatpush2.msra.mxu0 0.0
    %1075 = vmatprep.mubr.f32.mxu0 0.0
    %1076 = vmatmul.mubr.f32.gmra.mxu0 %v1009
    %v1077 = vpop.f32.mrf.mxu0
    %v1078 = vadd.f32 %v1006, %v1077
    %v1079 = vpop.f32.mrf.mxu0
    %1080 = vdwg.mxu0
    %1081 = vrot.lane.b32.xlu0 %v928, 112
    %v1082 = vpop.permute.xlu0 %1081
    %1083 = vrot.lane.b32.xlu0 %v926, 126
    %v1084 = vpop.permute.xlu0 %1083
    %v1086 = vsel %vm936, %v1082, 0
    %1088 = vmatprep.subr.mxu0 0.0
    %1089 = vmatpush1.msra.mxu0 0.0
    %1090 = vmatprep.subr.mxu0 0.0
    %1091 = vmatpush1.msra.mxu0 0.0
    %1092 = vmatprep.subr.mxu0 0.0
    %1093 = vmatpush1.msra.mxu0 0.0
    %1094 = vmatprep.subr.mxu0 0.0
    %1095 = vmatpush1.msra.mxu0 0.0
    %1096 = vmatprep.subr.mxu0 0.0
    %1097 = vmatpush1.msra.mxu0 0.0
    %1098 = vmatprep.subr.mxu0 0.0
    %1099 = vmatpush1.msra.mxu0 0.0
    %1100 = vmatprep.subr.mxu0 0.0
    %1101 = vmatpush1.msra.mxu0 0.0
    %1102 = vmatprep.subr.mxu0 0.0
    %1103 = vmatpush1.msra.mxu0 0.0
    %1104 = vmatprep.subr.mxu0 0.0
    %1105 = vmatpush1.msra.mxu0 0.0
    %1106 = vmatprep.subr.mxu0 0.0
    %1107 = vmatpush1.msra.mxu0 0.0
    %1108 = vmatprep.subr.mxu0 0.0
    %1109 = vmatpush1.msra.mxu0 0.0
    %1110 = vmatprep.subr.mxu0 0.0
    %1111 = vmatpush1.msra.mxu0 0.0
    %1112 = vmatprep.subr.mxu0 0.0
    %1113 = vmatpush1.msra.mxu0 0.0
    %1114 = vmatprep.subr.mxu0 0.0
    %1115 = vmatpush1.msra.mxu0 0.0
    %1116 = vmatprep.subr.mxu0 0.0
    %1117 = vmatpush1.msra.mxu0 0.0
    %1118 = vmatprep.subr.mxu0 0.0
    %1119 = vmatpush1.msra.mxu0 %v1084
    %1120 = vmatprep.subr.mxu0 0.0
    %1121 = vmatpush2.msra.mxu0 0.0
    %1122 = vmatprep.subr.mxu0 0.0
    %1123 = vmatpush2.msra.mxu0 0.0
    %1124 = vmatprep.subr.mxu0 0.0
    %1125 = vmatpush2.msra.mxu0 0.0
    %1126 = vmatprep.subr.mxu0 0.0
    %1127 = vmatpush2.msra.mxu0 0.0
    %1128 = vmatprep.subr.mxu0 0.0
    %1129 = vmatpush2.msra.mxu0 0.0
    %1130 = vmatprep.subr.mxu0 0.0
    %1131 = vmatpush2.msra.mxu0 0.0
    %1132 = vmatprep.subr.mxu0 0.0
    %1133 = vmatpush2.msra.mxu0 0.0
    %1134 = vmatprep.subr.mxu0 0.0
    %1135 = vmatpush2.msra.mxu0 0.0
    %1136 = vmatprep.subr.mxu0 0.0
    %1137 = vmatpush2.msra.mxu0 0.0
    %1138 = vmatprep.subr.mxu0 0.0
    %1139 = vmatpush2.msra.mxu0 0.0
    %1140 = vmatprep.subr.mxu0 0.0
    %1141 = vmatpush2.msra.mxu0 0.0
    %1142 = vmatprep.subr.mxu0 0.0
    %1143 = vmatpush2.msra.mxu0 0.0
    %1144 = vmatprep.subr.mxu0 0.0
    %1145 = vmatpush2.msra.mxu0 0.0
    %1146 = vmatprep.subr.mxu0 0.0
    %1147 = vmatpush2.msra.mxu0 0.0
    %1148 = vmatprep.subr.mxu0 0.0
    %1149 = vmatpush2.msra.mxu0 0.0
    %1150 = vmatprep.subr.mxu0 0.0
    %1151 = vmatpush2.msra.mxu0 0.0
    %1152 = vmatprep.mubr.f32.mxu0 0.0
    %1153 = vmatmul.mubr.f32.gmra.mxu0 %v1086
    %v1154 = vpop.f32.mrf.mxu0
    %v1155 = vadd.f32 0.0, %v1154
    %v1156 = vpop.f32.mrf.mxu0
    %1157 = vdwg.mxu0
    %v1158 = vadd.f32 %v1078, %v1155
    %1159 = vrot.lane.b32.xlu0 %v928, 104
    %v1160 = vpop.permute.xlu0 %1159
    %1162 = vrot.lane.b32.xlu0 %v926, 116
    %v1163 = vpop.permute.xlu0 %1162
    %1164 = vrot.lane.b32.xlu0 %v927, 116
    %v1165 = vpop.permute.xlu0 %1164
    %vm1166 = vcmask 949248
    %v1167 = vsel %vm1166, %v1163, %v1165
    %v1169 = vsel %vm936, %v1160, 0
    %1171 = vmatprep.subr.mxu0 0.0
    %1172 = vmatpush1.msra.mxu0 0.0
    %1173 = vmatprep.subr.mxu0 0.0
    %1174 = vmatpush1.msra.mxu0 0.0
    %1175 = vmatprep.subr.mxu0 0.0
    %1176 = vmatpush1.msra.mxu0 0.0
    %1177 = vmatprep.subr.mxu0 0.0
    %1178 = vmatpush1.msra.mxu0 0.0
    %1179 = vmatprep.subr.mxu0 0.0
    %1180 = vmatpush1.msra.mxu0 0.0
    %1181 = vmatprep.subr.mxu0 0.0
    %1182 = vmatpush1.msra.mxu0 0.0
    %1183 = vmatprep.subr.mxu0 0.0
    %1184 = vmatpush1.msra.mxu0 0.0
    %1185 = vmatprep.subr.mxu0 0.0
    %1186 = vmatpush1.msra.mxu0 0.0
    %1187 = vmatprep.subr.mxu0 0.0
    %1188 = vmatpush1.msra.mxu0 0.0
    %1189 = vmatprep.subr.mxu0 0.0
    %1190 = vmatpush1.msra.mxu0 0.0
    %1191 = vmatprep.subr.mxu0 0.0
    %1192 = vmatpush1.msra.mxu0 0.0
    %1193 = vmatprep.subr.mxu0 0.0
    %1194 = vmatpush1.msra.mxu0 0.0
    %1195 = vmatprep.subr.mxu0 0.0
    %1196 = vmatpush1.msra.mxu0 0.0
    %1197 = vmatprep.subr.mxu0 0.0
    %1198 = vmatpush1.msra.mxu0 0.0
    %1199 = vmatprep.subr.mxu0 0.0
    %1200 = vmatpush1.msra.mxu0 0.0
    %1201 = vmatprep.subr.mxu0 0.0
    %1202 = vmatpush1.msra.mxu0 %v1167
    %1203 = vmatprep.subr.mxu0 0.0
    %1204 = vmatpush2.msra.mxu0 0.0
    %1205 = vmatprep.subr.mxu0 0.0
    %1206 = vmatpush2.msra.mxu0 0.0
    %1207 = vmatprep.subr.mxu0 0.0
    %1208 = vmatpush2.msra.mxu0 0.0
    %1209 = vmatprep.subr.mxu0 0.0
    %1210 = vmatpush2.msra.mxu0 0.0
    %1211 = vmatprep.subr.mxu0 0.0
    %1212 = vmatpush2.msra.mxu0 0.0
    %1213 = vmatprep.subr.mxu0 0.0
    %1214 = vmatpush2.msra.mxu0 0.0
    %1215 = vmatprep.subr.mxu0 0.0
    %1216 = vmatpush2.msra.mxu0 0.0
    %1217 = vmatprep.subr.mxu0 0.0
    %1218 = vmatpush2.msra.mxu0 0.0
    %1219 = vmatprep.subr.mxu0 0.0
    %1220 = vmatpush2.msra.mxu0 0.0
    %1221 = vmatprep.subr.mxu0 0.0
    %1222 = vmatpush2.msra.mxu0 0.0
    %1223 = vmatprep.subr.mxu0 0.0
    %1224 = vmatpush2.msra.mxu0 0.0
    %1225 = vmatprep.subr.mxu0 0.0
    %1226 = vmatpush2.msra.mxu0 0.0
    %1227 = vmatprep.subr.mxu0 0.0
    %1228 = vmatpush2.msra.mxu0 0.0
    %1229 = vmatprep.subr.mxu0 0.0
    %1230 = vmatpush2.msra.mxu0 0.0
    %1231 = vmatprep.subr.mxu0 0.0
    %1232 = vmatpush2.msra.mxu0 0.0
    %1233 = vmatprep.subr.mxu0 0.0
    %1234 = vmatpush2.msra.mxu0 0.0
    %1235 = vmatprep.mubr.f32.mxu0 0.0
    %1236 = vmatmul.mubr.f32.gmra.mxu0 %v1169
    %v1237 = vpop.f32.mrf.mxu0
    %v1238 = vadd.f32 0.0, %v1237
    %v1239 = vpop.f32.mrf.mxu0
    %1240 = vdwg.mxu0
    %v1241 = vadd.f32 %v1158, %v1238
    %1242 = vrot.lane.b32.xlu0 %v928, 96
    %v1243 = vpop.permute.xlu0 %1242
    %1244 = vrot.lane.b32.xlu0 %v926, 115
    %v1245 = vpop.permute.xlu0 %1244
    %1246 = vrot.lane.b32.xlu0 %v927, 115
    %v1247 = vpop.permute.xlu0 %1246
    %vm1248 = vcmask 941056
    %v1249 = vsel %vm1248, %v1245, %v1247
    %v1251 = vsel %vm936, %v1243, 0
    %1253 = vmatprep.subr.mxu0 0.0
    %1254 = vmatpush1.msra.mxu0 0.0
    %1255 = vmatprep.subr.mxu0 0.0
    %1256 = vmatpush1.msra.mxu0 0.0
    %1257 = vmatprep.subr.mxu0 0.0
    %1258 = vmatpush1.msra.mxu0 0.0
    %1259 = vmatprep.subr.mxu0 0.0
    %1260 = vmatpush1.msra.mxu0 0.0
    %1261 = vmatprep.subr.mxu0 0.0
    %1262 = vmatpush1.msra.mxu0 0.0
    %1263 = vmatprep.subr.mxu0 0.0
    %1264 = vmatpush1.msra.mxu0 0.0
    %1265 = vmatprep.subr.mxu0 0.0
    %1266 = vmatpush1.msra.mxu0 0.0
    %1267 = vmatprep.subr.mxu0 0.0
    %1268 = vmatpush1.msra.mxu0 0.0
    %1269 = vmatprep.subr.mxu0 0.0
    %1270 = vmatpush1.msra.mxu0 0.0
    %1271 = vmatprep.subr.mxu0 0.0
    %1272 = vmatpush1.msra.mxu0 0.0
    %1273 = vmatprep.subr.mxu0 0.0
    %1274 = vmatpush1.msra.mxu0 0.0
    %1275 = vmatprep.subr.mxu0 0.0
    %1276 = vmatpush1.msra.mxu0 0.0
    %1277 = vmatprep.subr.mxu0 0.0
    %1278 = vmatpush1.msra.mxu0 0.0
    %1279 = vmatprep.subr.mxu0 0.0
    %1280 = vmatpush1.msra.mxu0 0.0
    %1281 = vmatprep.subr.mxu0 0.0
    %1282 = vmatpush1.msra.mxu0 0.0
    %1283 = vmatprep.subr.mxu0 0.0
    %1284 = vmatpush1.msra.mxu0 %v1249
    %1285 = vmatprep.subr.mxu0 0.0
    %1286 = vmatpush2.msra.mxu0 0.0
    %1287 = vmatprep.subr.mxu0 0.0
    %1288 = vmatpush2.msra.mxu0 0.0
    %1289 = vmatprep.subr.mxu0 0.0
    %1290 = vmatpush2.msra.mxu0 0.0
    %1291 = vmatprep.subr.mxu0 0.0
    %1292 = vmatpush2.msra.mxu0 0.0
    %1293 = vmatprep.subr.mxu0 0.0
    %1294 = vmatpush2.msra.mxu0 0.0
    %1295 = vmatprep.subr.mxu0 0.0
    %1296 = vmatpush2.msra.mxu0 0.0
    %1297 = vmatprep.subr.mxu0 0.0
    %1298 = vmatpush2.msra.mxu0 0.0
    %1299 = vmatprep.subr.mxu0 0.0
    %1300 = vmatpush2.msra.mxu0 0.0
    %1301 = vmatprep.subr.mxu0 0.0
    %1302 = vmatpush2.msra.mxu0 0.0
    %1303 = vmatprep.subr.mxu0 0.0
    %1304 = vmatpush2.msra.mxu0 0.0
    %1305 = vmatprep.subr.mxu0 0.0
    %1306 = vmatpush2.msra.mxu0 0.0
    %1307 = vmatprep.subr.mxu0 0.0
    %1308 = vmatpush2.msra.mxu0 0.0
    %1309 = vmatprep.subr.mxu0 0.0
    %1310 = vmatpush2.msra.mxu0 0.0
    %1311 = vmatprep.subr.mxu0 0.0
    %1312 = vmatpush2.msra.mxu0 0.0
    %1313 = vmatprep.subr.mxu0 0.0
    %1314 = vmatpush2.msra.mxu0 0.0
    %1315 = vmatprep.subr.mxu0 0.0
    %1316 = vmatpush2.msra.mxu0 0.0
    %1317 = vmatprep.mubr.f32.mxu0 0.0
    %1318 = vmatmul.mubr.f32.gmra.mxu0 %v1251
    %v1319 = vpop.f32.mrf.mxu0
    %v1320 = vadd.f32 0.0, %v1319
    %v1321 = vpop.f32.mrf.mxu0
    %1322 = vdwg.mxu0
    %v1323 = vadd.f32 %v1241, %v1320
    %1324 = vrot.lane.b32.xlu0 %v928, 88
    %v1325 = vpop.permute.xlu0 %1324
    %1326 = vrot.lane.b32.xlu0 %v926, 114
    %v1327 = vpop.permute.xlu0 %1326
    %1328 = vrot.lane.b32.xlu0 %v927, 114
    %v1329 = vpop.permute.xlu0 %1328
    %vm1330 = vcmask 932864
    %v1331 = vsel %vm1330, %v1327, %v1329
    %v1333 = vsel %vm936, %v1325, 0
    %1335 = vmatprep.subr.mxu0 0.0
    %1336 = vmatpush1.msra.mxu0 0.0
    %1337 = vmatprep.subr.mxu0 0.0
    %1338 = vmatpush1.msra.mxu0 0.0
    %1339 = vmatprep.subr.mxu0 0.0
    %1340 = vmatpush1.msra.mxu0 0.0
    %1341 = vmatprep.subr.mxu0 0.0
    %1342 = vmatpush1.msra.mxu0 0.0
    %1343 = vmatprep.subr.mxu0 0.0
    %1344 = vmatpush1.msra.mxu0 0.0
    %1345 = vmatprep.subr.mxu0 0.0
    %1346 = vmatpush1.msra.mxu0 0.0
    %1347 = vmatprep.subr.mxu0 0.0
    %1348 = vmatpush1.msra.mxu0 0.0
    %1349 = vmatprep.subr.mxu0 0.0
    %1350 = vmatpush1.msra.mxu0 0.0
    %1351 = vmatprep.subr.mxu0 0.0
    %1352 = vmatpush1.msra.mxu0 0.0
    %1353 = vmatprep.subr.mxu0 0.0
    %1354 = vmatpush1.msra.mxu0 0.0
    %1355 = vmatprep.subr.mxu0 0.0
    %1356 = vmatpush1.msra.mxu0 0.0
    %1357 = vmatprep.subr.mxu0 0.0
    %1358 = vmatpush1.msra.mxu0 0.0
    %1359 = vmatprep.subr.mxu0 0.0
    %1360 = vmatpush1.msra.mxu0 0.0
    %1361 = vmatprep.subr.mxu0 0.0
    %1362 = vmatpush1.msra.mxu0 0.0
    %1363 = vmatprep.subr.mxu0 0.0
    %1364 = vmatpush1.msra.mxu0 0.0
    %1365 = vmatprep.subr.mxu0 0.0
    %1366 = vmatpush1.msra.mxu0 %v1331
    %1367 = vmatprep.subr.mxu0 0.0
    %1368 = vmatpush2.msra.mxu0 0.0
    %1369 = vmatprep.subr.mxu0 0.0
    %1370 = vmatpush2.msra.mxu0 0.0
    %1371 = vmatprep.subr.mxu0 0.0
    %1372 = vmatpush2.msra.mxu0 0.0
    %1373 = vmatprep.subr.mxu0 0.0
    %1374 = vmatpush2.msra.mxu0 0.0
    %1375 = vmatprep.subr.mxu0 0.0
    %1376 = vmatpush2.msra.mxu0 0.0
    %1377 = vmatprep.subr.mxu0 0.0
    %1378 = vmatpush2.msra.mxu0 0.0
    %1379 = vmatprep.subr.mxu0 0.0
    %1380 = vmatpush2.msra.mxu0 0.0
    %1381 = vmatprep.subr.mxu0 0.0
    %1382 = vmatpush2.msra.mxu0 0.0
    %1383 = vmatprep.subr.mxu0 0.0
    %1384 = vmatpush2.msra.mxu0 0.0
    %1385 = vmatprep.subr.mxu0 0.0
    %1386 = vmatpush2.msra.mxu0 0.0
    %1387 = vmatprep.subr.mxu0 0.0
    %1388 = vmatpush2.msra.mxu0 0.0
    %1389 = vmatprep.subr.mxu0 0.0
    %1390 = vmatpush2.msra.mxu0 0.0
    %1391 = vmatprep.subr.mxu0 0.0
    %1392 = vmatpush2.msra.mxu0 0.0
    %1393 = vmatprep.subr.mxu0 0.0
    %1394 = vmatpush2.msra.mxu0 0.0
    %1395 = vmatprep.subr.mxu0 0.0
    %1396 = vmatpush2.msra.mxu0 0.0
    %1397 = vmatprep.subr.mxu0 0.0
    %1398 = vmatpush2.msra.mxu0 0.0
    %1399 = vmatprep.mubr.f32.mxu0 0.0
    %1400 = vmatmul.mubr.f32.gmra.mxu0 %v1333
    %v1401 = vpop.f32.mrf.mxu0
    %v1402 = vadd.f32 0.0, %v1401
    %v1403 = vpop.f32.mrf.mxu0
    %1404 = vdwg.mxu0
    %v1405 = vadd.f32 %v1323, %v1402
    %1406 = vrot.lane.b32.xlu0 %v928, 80
    %v1407 = vpop.permute.xlu0 %1406
    %1408 = vrot.lane.b32.xlu0 %v926, 104
    %v1409 = vpop.permute.xlu0 %1408
    %1410 = vrot.lane.b32.xlu0 %v927, 104
    %v1411 = vpop.permute.xlu0 %1410
    %vm1412 = vcmask 850944
    %v1413 = vsel %vm1412, %v1409, %v1411
    %v1415 = vsel %vm936, %v1407, 0
    %1417 = vmatprep.subr.mxu0 0.0
    %1418 = vmatpush1.msra.mxu0 0.0
    %1419 = vmatprep.subr.mxu0 0.0
    %1420 = vmatpush1.msra.mxu0 0.0
    %1421 = vmatprep.subr.mxu0 0.0
    %1422 = vmatpush1.msra.mxu0 0.0
    %1423 = vmatprep.subr.mxu0 0.0
    %1424 = vmatpush1.msra.mxu0 0.0
    %1425 = vmatprep.subr.mxu0 0.0
    %1426 = vmatpush1.msra.mxu0 0.0
    %1427 = vmatprep.subr.mxu0 0.0
    %1428 = vmatpush1.msra.mxu0 0.0
    %1429 = vmatprep.subr.mxu0 0.0
    %1430 = vmatpush1.msra.mxu0 0.0
    %1431 = vmatprep.subr.mxu0 0.0
    %1432 = vmatpush1.msra.mxu0 0.0
    %1433 = vmatprep.subr.mxu0 0.0
    %1434 = vmatpush1.msra.mxu0 0.0
    %1435 = vmatprep.subr.mxu0 0.0
    %1436 = vmatpush1.msra.mxu0 0.0
    %1437 = vmatprep.subr.mxu0 0.0
    %1438 = vmatpush1.msra.mxu0 0.0
    %1439 = vmatprep.subr.mxu0 0.0
    %1440 = vmatpush1.msra.mxu0 0.0
    %1441 = vmatprep.subr.mxu0 0.0
    %1442 = vmatpush1.msra.mxu0 0.0
    %1443 = vmatprep.subr.mxu0 0.0
    %1444 = vmatpush1.msra.mxu0 0.0
    %1445 = vmatprep.subr.mxu0 0.0
    %1446 = vmatpush1.msra.mxu0 0.0
    %1447 = vmatprep.subr.mxu0 0.0
    %1448 = vmatpush1.msra.mxu0 %v1413
    %1449 = vmatprep.subr.mxu0 0.0
    %1450 = vmatpush2.msra.mxu0 0.0
    %1451 = vmatprep.subr.mxu0 0.0
    %1452 = vmatpush2.msra.mxu0 0.0
    %1453 = vmatprep.subr.mxu0 0.0
    %1454 = vmatpush2.msra.mxu0 0.0
    %1455 = vmatprep.subr.mxu0 0.0
    %1456 = vmatpush2.msra.mxu0 0.0
    %1457 = vmatprep.subr.mxu0 0.0
    %1458 = vmatpush2.msra.mxu0 0.0
    %1459 = vmatprep.subr.mxu0 0.0
    %1460 = vmatpush2.msra.mxu0 0.0
    %1461 = vmatprep.subr.mxu0 0.0
    %1462 = vmatpush2.msra.mxu0 0.0
    %1463 = vmatprep.subr.mxu0 0.0
    %1464 = vmatpush2.msra.mxu0 0.0
    %1465 = vmatprep.subr.mxu0 0.0
    %1466 = vmatpush2.msra.mxu0 0.0
    %1467 = vmatprep.subr.mxu0 0.0
    %1468 = vmatpush2.msra.mxu0 0.0
    %1469 = vmatprep.subr.mxu0 0.0
    %1470 = vmatpush2.msra.mxu0 0.0
    %1471 = vmatprep.subr.mxu0 0.0
    %1472 = vmatpush2.msra.mxu0 0.0
    %1473 = vmatprep.subr.mxu0 0.0
    %1474 = vmatpush2.msra.mxu0 0.0
    %1475 = vmatprep.subr.mxu0 0.0
    %1476 = vmatpush2.msra.mxu0 0.0
    %1477 = vmatprep.subr.mxu0 0.0
    %1478 = vmatpush2.msra.mxu0 0.0
    %1479 = vmatprep.subr.mxu0 0.0
    %1480 = vmatpush2.msra.mxu0 0.0
    %1481 = vmatprep.mubr.f32.mxu0 0.0
    %1482 = vmatmul.mubr.f32.gmra.mxu0 %v1415
    %v1483 = vpop.f32.mrf.mxu0
    %v1484 = vadd.f32 0.0, %v1483
    %v1485 = vpop.f32.mrf.mxu0
    %1486 = vdwg.mxu0
    %v1487 = vadd.f32 %v1405, %v1484
    %1488 = vrot.lane.b32.xlu0 %v928, 72
    %v1489 = vpop.permute.xlu0 %1488
    %1490 = vrot.lane.b32.xlu0 %v926, 103
    %v1491 = vpop.permute.xlu0 %1490
    %1492 = vrot.lane.b32.xlu0 %v927, 103
    %v1493 = vpop.permute.xlu0 %1492
    %vm1494 = vcmask 842752
    %v1495 = vsel %vm1494, %v1491, %v1493
    %v1497 = vsel %vm936, %v1489, 0
    %1499 = vmatprep.subr.mxu0 0.0
    %1500 = vmatpush1.msra.mxu0 0.0
    %1501 = vmatprep.subr.mxu0 0.0
    %1502 = vmatpush1.msra.mxu0 0.0
    %1503 = vmatprep.subr.mxu0 0.0
    %1504 = vmatpush1.msra.mxu0 0.0
    %1505 = vmatprep.subr.mxu0 0.0
    %1506 = vmatpush1.msra.mxu0 0.0
    %1507 = vmatprep.subr.mxu0 0.0
    %1508 = vmatpush1.msra.mxu0 0.0
    %1509 = vmatprep.subr.mxu0 0.0
    %1510 = vmatpush1.msra.mxu0 0.0
    %1511 = vmatprep.subr.mxu0 0.0
    %1512 = vmatpush1.msra.mxu0 0.0
    %1513 = vmatprep.subr.mxu0 0.0
    %1514 = vmatpush1.msra.mxu0 0.0
    %1515 = vmatprep.subr.mxu0 0.0
    %1516 = vmatpush1.msra.mxu0 0.0
    %1517 = vmatprep.subr.mxu0 0.0
    %1518 = vmatpush1.msra.mxu0 0.0
    %1519 = vmatprep.subr.mxu0 0.0
    %1520 = vmatpush1.msra.mxu0 0.0
    %1521 = vmatprep.subr.mxu0 0.0
    %1522 = vmatpush1.msra.mxu0 0.0
    %1523 = vmatprep.subr.mxu0 0.0
    %1524 = vmatpush1.msra.mxu0 0.0
    %1525 = vmatprep.subr.mxu0 0.0
    %1526 = vmatpush1.msra.mxu0 0.0
    %1527 = vmatprep.subr.mxu0 0.0
    %1528 = vmatpush1.msra.mxu0 0.0
    %1529 = vmatprep.subr.mxu0 0.0
    %1530 = vmatpush1.msra.mxu0 %v1495
    %1531 = vmatprep.subr.mxu0 0.0
    %1532 = vmatpush2.msra.mxu0 0.0
    %1533 = vmatprep.subr.mxu0 0.0
    %1534 = vmatpush2.msra.mxu0 0.0
    %1535 = vmatprep.subr.mxu0 0.0
    %1536 = vmatpush2.msra.mxu0 0.0
    %1537 = vmatprep.subr.mxu0 0.0
    %1538 = vmatpush2.msra.mxu0 0.0
    %1539 = vmatprep.subr.mxu0 0.0
    %1540 = vmatpush2.msra.mxu0 0.0
    %1541 = vmatprep.subr.mxu0 0.0
    %1542 = vmatpush2.msra.mxu0 0.0
    %1543 = vmatprep.subr.mxu0 0.0
    %1544 = vmatpush2.msra.mxu0 0.0
    %1545 = vmatprep.subr.mxu0 0.0
    %1546 = vmatpush2.msra.mxu0 0.0
    %1547 = vmatprep.subr.mxu0 0.0
    %1548 = vmatpush2.msra.mxu0 0.0
    %1549 = vmatprep.subr.mxu0 0.0
    %1550 = vmatpush2.msra.mxu0 0.0
    %1551 = vmatprep.subr.mxu0 0.0
    %1552 = vmatpush2.msra.mxu0 0.0
    %1553 = vmatprep.subr.mxu0 0.0
    %1554 = vmatpush2.msra.mxu0 0.0
    %1555 = vmatprep.subr.mxu0 0.0
    %1556 = vmatpush2.msra.mxu0 0.0
    %1557 = vmatprep.subr.mxu0 0.0
    %1558 = vmatpush2.msra.mxu0 0.0
    %1559 = vmatprep.subr.mxu0 0.0
    %1560 = vmatpush2.msra.mxu0 0.0
    %1561 = vmatprep.subr.mxu0 0.0
    %1562 = vmatpush2.msra.mxu0 0.0
    %1563 = vmatprep.mubr.f32.mxu0 0.0
    %1564 = vmatmul.mubr.f32.gmra.mxu0 %v1497
    %v1565 = vpop.f32.mrf.mxu0
    %v1566 = vadd.f32 0.0, %v1565
    %v1567 = vpop.f32.mrf.mxu0
    %1568 = vdwg.mxu0
    %v1569 = vadd.f32 %v1487, %v1566
    %1570 = vrot.lane.b32.xlu0 %v928, 64
    %v1571 = vpop.permute.xlu0 %1570
    %1572 = vrot.lane.b32.xlu0 %v926, 102
    %v1573 = vpop.permute.xlu0 %1572
    %1574 = vrot.lane.b32.xlu0 %v927, 102
    %v1575 = vpop.permute.xlu0 %1574
    %vm1576 = vcmask 834560
    %v1577 = vsel %vm1576, %v1573, %v1575
    %v1579 = vsel %vm936, %v1571, 0
    %1581 = vmatprep.subr.mxu0 0.0
    %1582 = vmatpush1.msra.mxu0 0.0
    %1583 = vmatprep.subr.mxu0 0.0
    %1584 = vmatpush1.msra.mxu0 0.0
    %1585 = vmatprep.subr.mxu0 0.0
    %1586 = vmatpush1.msra.mxu0 0.0
    %1587 = vmatprep.subr.mxu0 0.0
    %1588 = vmatpush1.msra.mxu0 0.0
    %1589 = vmatprep.subr.mxu0 0.0
    %1590 = vmatpush1.msra.mxu0 0.0
    %1591 = vmatprep.subr.mxu0 0.0
    %1592 = vmatpush1.msra.mxu0 0.0
    %1593 = vmatprep.subr.mxu0 0.0
    %1594 = vmatpush1.msra.mxu0 0.0
    %1595 = vmatprep.subr.mxu0 0.0
    %1596 = vmatpush1.msra.mxu0 0.0
    %1597 = vmatprep.subr.mxu0 0.0
    %1598 = vmatpush1.msra.mxu0 0.0
    %1599 = vmatprep.subr.mxu0 0.0
    %1600 = vmatpush1.msra.mxu0 0.0
    %1601 = vmatprep.subr.mxu0 0.0
    %1602 = vmatpush1.msra.mxu0 0.0
    %1603 = vmatprep.subr.mxu0 0.0
    %1604 = vmatpush1.msra.mxu0 0.0
    %1605 = vmatprep.subr.mxu0 0.0
    %1606 = vmatpush1.msra.mxu0 0.0
    %1607 = vmatprep.subr.mxu0 0.0
    %1608 = vmatpush1.msra.mxu0 0.0
    %1609 = vmatprep.subr.mxu0 0.0
    %1610 = vmatpush1.msra.mxu0 0.0
    %1611 = vmatprep.subr.mxu0 0.0
    %1612 = vmatpush1.msra.mxu0 %v1577
    %1613 = vmatprep.subr.mxu0 0.0
    %1614 = vmatpush2.msra.mxu0 0.0
    %1615 = vmatprep.subr.mxu0 0.0
    %1616 = vmatpush2.msra.mxu0 0.0
    %1617 = vmatprep.subr.mxu0 0.0
    %1618 = vmatpush2.msra.mxu0 0.0
    %1619 = vmatprep.subr.mxu0 0.0
    %1620 = vmatpush2.msra.mxu0 0.0
    %1621 = vmatprep.subr.mxu0 0.0
    %1622 = vmatpush2.msra.mxu0 0.0
    %1623 = vmatprep.subr.mxu0 0.0
    %1624 = vmatpush2.msra.mxu0 0.0
    %1625 = vmatprep.subr.mxu0 0.0
    %1626 = vmatpush2.msra.mxu0 0.0
    %1627 = vmatprep.subr.mxu0 0.0
    %1628 = vmatpush2.msra.mxu0 0.0
    %1629 = vmatprep.subr.mxu0 0.0
    %1630 = vmatpush2.msra.mxu0 0.0
    %1631 = vmatprep.subr.mxu0 0.0
    %1632 = vmatpush2.msra.mxu0 0.0
    %1633 = vmatprep.subr.mxu0 0.0
    %1634 = vmatpush2.msra.mxu0 0.0
    %1635 = vmatprep.subr.mxu0 0.0
    %1636 = vmatpush2.msra.mxu0 0.0
    %1637 = vmatprep.subr.mxu0 0.0
    %1638 = vmatpush2.msra.mxu0 0.0
    %1639 = vmatprep.subr.mxu0 0.0
    %1640 = vmatpush2.msra.mxu0 0.0
    %1641 = vmatprep.subr.mxu0 0.0
    %1642 = vmatpush2.msra.mxu0 0.0
    %1643 = vmatprep.subr.mxu0 0.0
    %1644 = vmatpush2.msra.mxu0 0.0
    %1645 = vmatprep.mubr.f32.mxu0 0.0
    %1646 = vmatmul.mubr.f32.gmra.mxu0 %v1579
    %v1647 = vpop.f32.mrf.mxu0
    %v1648 = vadd.f32 0.0, %v1647
    %v1649 = vpop.f32.mrf.mxu0
    %1650 = vdwg.mxu0
    %v1651 = vadd.f32 %v1569, %v1648
    %v1652 = vmax.f32 %v1651, 0.0
    %1653 = vst.msk [vmem:[#allocation4] sm:$0xff] %vm160, %v1652
    %1655 = vrot.lane.b32.xlu0 %v1652, 126
    %v1656 = vpop.permute.xlu0 %1655
    %vm1658 = vcmask 162896
    %1659 = vst.msk [vmem:[#allocation4] sm:$0xff] %vm1658, %v1656
    %1660 = vrot.lane.b32.xlu0 %v1652, 124
    %v1661 = vpop.permute.xlu0 %1660
    %vm1663 = vcmask 244896
    %1664 = vst.msk [vmem:[#allocation4] sm:$0xff] %vm1663, %v1661
    %1665 = vrot.lane.b32.xlu0 %v1652, 122
    %v1666 = vpop.permute.xlu0 %1665
    %vm1668 = vcmask 326896
    %1669 = vst.msk [vmem:[#allocation4] sm:$0xff] %vm1668, %v1666
    %1670 = vrot.lane.b32.xlu0 %v1652, 120
    %v1671 = vpop.permute.xlu0 %1670
    %vm1673 = vcmask 408896
    %1674 = vst.msk [vmem:[#allocation4] sm:$0xff] %vm1673, %v1671
    %1675 = vrot.lane.b32.xlu0 %v1652, 118
    %v1676 = vpop.permute.xlu0 %1675
    %vm1678 = vcmask 490896
    %1679 = vst.msk [vmem:[#allocation4] sm:$0xff] %vm1678, %v1676
    %1680 = vrot.lane.b32.xlu0 %v1652, 116
    %v1681 = vpop.permute.xlu0 %1680
    %vm1683 = vcmask 572896
    %1684 = vst.msk [vmem:[#allocation4] sm:$0xff] %vm1683, %v1681
    %1685 = vrot.lane.b32.xlu0 %v1652, 114
    %v1686 = vpop.permute.xlu0 %1685
    %vm1688 = vcmask 654896
    %1689 = vst.msk [vmem:[#allocation4] sm:$0xff] %vm1688, %v1686
    %1690 = vrot.lane.b32.xlu0 %v1652, 112
    %v1691 = vpop.permute.xlu0 %1690
    %vm1693 = vcmask 736896
    %1694 = vst.msk [vmem:[#allocation4] sm:$0xff] %vm1693, %v1691
    %1695 = vrot.lane.b32.xlu0 %v1652, 110
    %v1696 = vpop.permute.xlu0 %1695
    %vm1698 = vcmask 818896
    %1699 = vst.msk [vmem:[#allocation4] sm:$0xff] %vm1698, %v1696
    %v1700 = vld [vmem:[#allocation4] sm:$0xff]
    %v1701 = vld [vmem:[%s3] sm:$0xff]
    %1703 = vrot.lane.b32.xlu0 %v1701, 120
    %v1704 = vpop.permute.xlu0 %1703
    %1706 = vrot.lane.b32.xlu0 %v1700, 127
    %v1707 = vpop.permute.xlu0 %1706
    %v1709 = vsel %vm936, %v1704, 0
    %1711 = vmatprep.subr.mxu0 0.0
    %1712 = vmatpush1.msra.mxu0 0.0
    %1713 = vmatprep.subr.mxu0 0.0
    %1714 = vmatpush1.msra.mxu0 0.0
    %1715 = vmatprep.subr.mxu0 0.0
    %1716 = vmatpush1.msra.mxu0 0.0
    %1717 = vmatprep.subr.mxu0 0.0
    %1718 = vmatpush1.msra.mxu0 0.0
    %1719 = vmatprep.subr.mxu0 0.0
    %1720 = vmatpush1.msra.mxu0 0.0
    %1721 = vmatprep.subr.mxu0 0.0
    %1722 = vmatpush1.msra.mxu0 0.0
    %1723 = vmatprep.subr.mxu0 0.0
    %1724 = vmatpush1.msra.mxu0 0.0
    %1725 = vmatprep.subr.mxu0 0.0
    %1726 = vmatpush1.msra.mxu0 0.0
    %1727 = vmatprep.subr.mxu0 0.0
    %1728 = vmatpush1.msra.mxu0 0.0
    %1729 = vmatprep.subr.mxu0 0.0
    %1730 = vmatpush1.msra.mxu0 0.0
    %1731 = vmatprep.subr.mxu0 0.0
    %1732 = vmatpush1.msra.mxu0 0.0
    %1733 = vmatprep.subr.mxu0 0.0
    %1734 = vmatpush1.msra.mxu0 0.0
    %1735 = vmatprep.subr.mxu0 0.0
    %1736 = vmatpush1.msra.mxu0 0.0
    %1737 = vmatprep.subr.mxu0 0.0
    %1738 = vmatpush1.msra.mxu0 0.0
    %1739 = vmatprep.subr.mxu0 0.0
    %1740 = vmatpush1.msra.mxu0 0.0
    %1741 = vmatprep.subr.mxu0 0.0
    %1742 = vmatpush1.msra.mxu0 %v1707
    %1743 = vmatprep.subr.mxu0 0.0
    %1744 = vmatpush2.msra.mxu0 0.0
    %1745 = vmatprep.subr.mxu0 0.0
    %1746 = vmatpush2.msra.mxu0 0.0
    %1747 = vmatprep.subr.mxu0 0.0
    %1748 = vmatpush2.msra.mxu0 0.0
    %1749 = vmatprep.subr.mxu0 0.0
    %1750 = vmatpush2.msra.mxu0 0.0
    %1751 = vmatprep.subr.mxu0 0.0
    %1752 = vmatpush2.msra.mxu0 0.0
    %1753 = vmatprep.subr.mxu0 0.0
    %1754 = vmatpush2.msra.mxu0 0.0
    %1755 = vmatprep.subr.mxu0 0.0
    %1756 = vmatpush2.msra.mxu0 0.0
    %1757 = vmatprep.subr.mxu0 0.0
    %1758 = vmatpush2.msra.mxu0 0.0
    %1759 = vmatprep.subr.mxu0 0.0
    %1760 = vmatpush2.msra.mxu0 0.0
    %1761 = vmatprep.subr.mxu0 0.0
    %1762 = vmatpush2.msra.mxu0 0.0
    %1763 = vmatprep.subr.mxu0 0.0
    %1764 = vmatpush2.msra.mxu0 0.0
    %1765 = vmatprep.subr.mxu0 0.0
    %1766 = vmatpush2.msra.mxu0 0.0
    %1767 = vmatprep.subr.mxu0 0.0
    %1768 = vmatpush2.msra.mxu0 0.0
    %1769 = vmatprep.subr.mxu0 0.0
    %1770 = vmatpush2.msra.mxu0 0.0
    %1771 = vmatprep.subr.mxu0 0.0
    %1772 = vmatpush2.msra.mxu0 0.0
    %1773 = vmatprep.subr.mxu0 0.0
    %1774 = vmatpush2.msra.mxu0 0.0
    %1775 = vmatprep.mubr.f32.mxu0 0.0
    %1776 = vmatmul.mubr.f32.gmra.mxu0 %v1709
    %v1777 = vpop.f32.mrf.mxu0
    %v1778 = vadd.f32 0.0, %v1777
    %v1779 = vpop.f32.mrf.mxu0
    %1780 = vdwg.mxu0
    %v1781 = vsel %vm936, %v1701, 0
    %1783 = vmatprep.subr.mxu0 0.0
    %1784 = vmatpush1.msra.mxu0 0.0
    %1785 = vmatprep.subr.mxu0 0.0
    %1786 = vmatpush1.msra.mxu0 0.0
    %1787 = vmatprep.subr.mxu0 0.0
    %1788 = vmatpush1.msra.mxu0 0.0
    %1789 = vmatprep.subr.mxu0 0.0
    %1790 = vmatpush1.msra.mxu0 0.0
    %1791 = vmatprep.subr.mxu0 0.0
    %1792 = vmatpush1.msra.mxu0 0.0
    %1793 = vmatprep.subr.mxu0 0.0
    %1794 = vmatpush1.msra.mxu0 0.0
    %1795 = vmatprep.subr.mxu0 0.0
    %1796 = vmatpush1.msra.mxu0 0.0
    %1797 = vmatprep.subr.mxu0 0.0
    %1798 = vmatpush1.msra.mxu0 0.0
    %1799 = vmatprep.subr.mxu0 0.0
    %1800 = vmatpush1.msra.mxu0 0.0
    %1801 = vmatprep.subr.mxu0 0.0
    %1802 = vmatpush1.msra.mxu0 0.0
    %1803 = vmatprep.subr.mxu0 0.0
    %1804 = vmatpush1.msra.mxu0 0.0
    %1805 = vmatprep.subr.mxu0 0.0
    %1806 = vmatpush1.msra.mxu0 0.0
    %1807 = vmatprep.subr.mxu0 0.0
    %1808 = vmatpush1.msra.mxu0 0.0
    %1809 = vmatprep.subr.mxu0 0.0
    %1810 = vmatpush1.msra.mxu0 0.0
    %1811 = vmatprep.subr.mxu0 0.0
    %1812 = vmatpush1.msra.mxu0 0.0
    %1813 = vmatprep.subr.mxu0 0.0
    %1814 = vmatpush1.msra.mxu0 %v1700
    %1815 = vmatprep.subr.mxu0 0.0
    %1816 = vmatpush2.msra.mxu0 0.0
    %1817 = vmatprep.subr.mxu0 0.0
    %1818 = vmatpush2.msra.mxu0 0.0
    %1819 = vmatprep.subr.mxu0 0.0
    %1820 = vmatpush2.msra.mxu0 0.0
    %1821 = vmatprep.subr.mxu0 0.0
    %1822 = vmatpush2.msra.mxu0 0.0
    %1823 = vmatprep.subr.mxu0 0.0
    %1824 = vmatpush2.msra.mxu0 0.0
    %1825 = vmatprep.subr.mxu0 0.0
    %1826 = vmatpush2.msra.mxu0 0.0
    %1827 = vmatprep.subr.mxu0 0.0
    %1828 = vmatpush2.msra.mxu0 0.0
    %1829 = vmatprep.subr.mxu0 0.0
    %1830 = vmatpush2.msra.mxu0 0.0
    %1831 = vmatprep.subr.mxu0 0.0
    %1832 = vmatpush2.msra.mxu0 0.0
    %1833 = vmatprep.subr.mxu0 0.0
    %1834 = vmatpush2.msra.mxu0 0.0
    %1835 = vmatprep.subr.mxu0 0.0
    %1836 = vmatpush2.msra.mxu0 0.0
    %1837 = vmatprep.subr.mxu0 0.0
    %1838 = vmatpush2.msra.mxu0 0.0
    %1839 = vmatprep.subr.mxu0 0.0
    %1840 = vmatpush2.msra.mxu0 0.0
    %1841 = vmatprep.subr.mxu0 0.0
    %1842 = vmatpush2.msra.mxu0 0.0
    %1843 = vmatprep.subr.mxu0 0.0
    %1844 = vmatpush2.msra.mxu0 0.0
    %1845 = vmatprep.subr.mxu0 0.0
    %1846 = vmatpush2.msra.mxu0 0.0
    %1847 = vmatprep.mubr.f32.mxu0 0.0
    %1848 = vmatmul.mubr.f32.gmra.mxu0 %v1781
    %v1849 = vpop.f32.mrf.mxu0
    %v1850 = vadd.f32 %v1778, %v1849
    %v1851 = vpop.f32.mrf.mxu0
    %1852 = vdwg.mxu0
    %1853 = vrot.lane.b32.xlu0 %v1701, 112
    %v1854 = vpop.permute.xlu0 %1853
    %1855 = vrot.lane.b32.xlu0 %v1700, 126
    %v1856 = vpop.permute.xlu0 %1855
    %v1858 = vsel %vm936, %v1854, 0
    %1860 = vmatprep.subr.mxu0 0.0
    %1861 = vmatpush1.msra.mxu0 0.0
    %1862 = vmatprep.subr.mxu0 0.0
    %1863 = vmatpush1.msra.mxu0 0.0
    %1864 = vmatprep.subr.mxu0 0.0
    %1865 = vmatpush1.msra.mxu0 0.0
    %1866 = vmatprep.subr.mxu0 0.0
    %1867 = vmatpush1.msra.mxu0 0.0
    %1868 = vmatprep.subr.mxu0 0.0
    %1869 = vmatpush1.msra.mxu0 0.0
    %1870 = vmatprep.subr.mxu0 0.0
    %1871 = vmatpush1.msra.mxu0 0.0
    %1872 = vmatprep.subr.mxu0 0.0
    %1873 = vmatpush1.msra.mxu0 0.0
    %1874 = vmatprep.subr.mxu0 0.0
    %1875 = vmatpush1.msra.mxu0 0.0
    %1876 = vmatprep.subr.mxu0 0.0
    %1877 = vmatpush1.msra.mxu0 0.0
    %1878 = vmatprep.subr.mxu0 0.0
    %1879 = vmatpush1.msra.mxu0 0.0
    %1880 = vmatprep.subr.mxu0 0.0
    %1881 = vmatpush1.msra.mxu0 0.0
    %1882 = vmatprep.subr.mxu0 0.0
    %1883 = vmatpush1.msra.mxu0 0.0
    %1884 = vmatprep.subr.mxu0 0.0
    %1885 = vmatpush1.msra.mxu0 0.0
    %1886 = vmatprep.subr.mxu0 0.0
    %1887 = vmatpush1.msra.mxu0 0.0
    %1888 = vmatprep.subr.mxu0 0.0
    %1889 = vmatpush1.msra.mxu0 0.0
    %1890 = vmatprep.subr.mxu0 0.0
    %1891 = vmatpush1.msra.mxu0 %v1856
    %1892 = vmatprep.subr.mxu0 0.0
    %1893 = vmatpush2.msra.mxu0 0.0
    %1894 = vmatprep.subr.mxu0 0.0
    %1895 = vmatpush2.msra.mxu0 0.0
    %1896 = vmatprep.subr.mxu0 0.0
    %1897 = vmatpush2.msra.mxu0 0.0
    %1898 = vmatprep.subr.mxu0 0.0
    %1899 = vmatpush2.msra.mxu0 0.0
    %1900 = vmatprep.subr.mxu0 0.0
    %1901 = vmatpush2.msra.mxu0 0.0
    %1902 = vmatprep.subr.mxu0 0.0
    %1903 = vmatpush2.msra.mxu0 0.0
    %1904 = vmatprep.subr.mxu0 0.0
    %1905 = vmatpush2.msra.mxu0 0.0
    %1906 = vmatprep.subr.mxu0 0.0
    %1907 = vmatpush2.msra.mxu0 0.0
    %1908 = vmatprep.subr.mxu0 0.0
    %1909 = vmatpush2.msra.mxu0 0.0
    %1910 = vmatprep.subr.mxu0 0.0
    %1911 = vmatpush2.msra.mxu0 0.0
    %1912 = vmatprep.subr.mxu0 0.0
    %1913 = vmatpush2.msra.mxu0 0.0
    %1914 = vmatprep.subr.mxu0 0.0
    %1915 = vmatpush2.msra.mxu0 0.0
    %1916 = vmatprep.subr.mxu0 0.0
    %1917 = vmatpush2.msra.mxu0 0.0
    %1918 = vmatprep.subr.mxu0 0.0
    %1919 = vmatpush2.msra.mxu0 0.0
    %1920 = vmatprep.subr.mxu0 0.0
    %1921 = vmatpush2.msra.mxu0 0.0
    %1922 = vmatprep.subr.mxu0 0.0
    %1923 = vmatpush2.msra.mxu0 0.0
    %1924 = vmatprep.mubr.f32.mxu0 0.0
    %1925 = vmatmul.mubr.f32.gmra.mxu0 %v1858
    %v1926 = vpop.f32.mrf.mxu0
    %v1927 = vadd.f32 0.0, %v1926
    %v1928 = vpop.f32.mrf.mxu0
    %1929 = vdwg.mxu0
    %v1930 = vadd.f32 %v1850, %v1927
    %1931 = vrot.lane.b32.xlu0 %v1701, 104
    %v1932 = vpop.permute.xlu0 %1931
    %1933 = vrot.lane.b32.xlu0 %v1700, 118
    %v1934 = vpop.permute.xlu0 %1933
    %v1936 = vsel %vm936, %v1932, 0
    %1938 = vmatprep.subr.mxu0 0.0
    %1939 = vmatpush1.msra.mxu0 0.0
    %1940 = vmatprep.subr.mxu0 0.0
    %1941 = vmatpush1.msra.mxu0 0.0
    %1942 = vmatprep.subr.mxu0 0.0
    %1943 = vmatpush1.msra.mxu0 0.0
    %1944 = vmatprep.subr.mxu0 0.0
    %1945 = vmatpush1.msra.mxu0 0.0
    %1946 = vmatprep.subr.mxu0 0.0
    %1947 = vmatpush1.msra.mxu0 0.0
    %1948 = vmatprep.subr.mxu0 0.0
    %1949 = vmatpush1.msra.mxu0 0.0
    %1950 = vmatprep.subr.mxu0 0.0
    %1951 = vmatpush1.msra.mxu0 0.0
    %1952 = vmatprep.subr.mxu0 0.0
    %1953 = vmatpush1.msra.mxu0 0.0
    %1954 = vmatprep.subr.mxu0 0.0
    %1955 = vmatpush1.msra.mxu0 0.0
    %1956 = vmatprep.subr.mxu0 0.0
    %1957 = vmatpush1.msra.mxu0 0.0
    %1958 = vmatprep.subr.mxu0 0.0
    %1959 = vmatpush1.msra.mxu0 0.0
    %1960 = vmatprep.subr.mxu0 0.0
    %1961 = vmatpush1.msra.mxu0 0.0
    %1962 = vmatprep.subr.mxu0 0.0
    %1963 = vmatpush1.msra.mxu0 0.0
    %1964 = vmatprep.subr.mxu0 0.0
    %1965 = vmatpush1.msra.mxu0 0.0
    %1966 = vmatprep.subr.mxu0 0.0
    %1967 = vmatpush1.msra.mxu0 0.0
    %1968 = vmatprep.subr.mxu0 0.0
    %1969 = vmatpush1.msra.mxu0 %v1934
    %1970 = vmatprep.subr.mxu0 0.0
    %1971 = vmatpush2.msra.mxu0 0.0
    %1972 = vmatprep.subr.mxu0 0.0
    %1973 = vmatpush2.msra.mxu0 0.0
    %1974 = vmatprep.subr.mxu0 0.0
    %1975 = vmatpush2.msra.mxu0 0.0
    %1976 = vmatprep.subr.mxu0 0.0
    %1977 = vmatpush2.msra.mxu0 0.0
    %1978 = vmatprep.subr.mxu0 0.0
    %1979 = vmatpush2.msra.mxu0 0.0
    %1980 = vmatprep.subr.mxu0 0.0
    %1981 = vmatpush2.msra.mxu0 0.0
    %1982 = vmatprep.subr.mxu0 0.0
    %1983 = vmatpush2.msra.mxu0 0.0
    %1984 = vmatprep.subr.mxu0 0.0
    %1985 = vmatpush2.msra.mxu0 0.0
    %1986 = vmatprep.subr.mxu0 0.0
    %1987 = vmatpush2.msra.mxu0 0.0
    %1988 = vmatprep.subr.mxu0 0.0
    %1989 = vmatpush2.msra.mxu0 0.0
    %1990 = vmatprep.subr.mxu0 0.0
    %1991 = vmatpush2.msra.mxu0 0.0
    %1992 = vmatprep.subr.mxu0 0.0
    %1993 = vmatpush2.msra.mxu0 0.0
    %1994 = vmatprep.subr.mxu0 0.0
    %1995 = vmatpush2.msra.mxu0 0.0
    %1996 = vmatprep.subr.mxu0 0.0
    %1997 = vmatpush2.msra.mxu0 0.0
    %1998 = vmatprep.subr.mxu0 0.0
    %1999 = vmatpush2.msra.mxu0 0.0
    %2000 = vmatprep.subr.mxu0 0.0
    %2001 = vmatpush2.msra.mxu0 0.0
    %2002 = vmatprep.mubr.f32.mxu0 0.0
    %2003 = vmatmul.mubr.f32.gmra.mxu0 %v1936
    %v2004 = vpop.f32.mrf.mxu0
    %v2005 = vadd.f32 0.0, %v2004
    %v2006 = vpop.f32.mrf.mxu0
    %2007 = vdwg.mxu0
    %v2008 = vadd.f32 %v1930, %v2005
    %2009 = vrot.lane.b32.xlu0 %v1701, 96
    %v2010 = vpop.permute.xlu0 %2009
    %2011 = vrot.lane.b32.xlu0 %v1700, 117
    %v2012 = vpop.permute.xlu0 %2011
    %v2014 = vsel %vm936, %v2010, 0
    %2016 = vmatprep.subr.mxu0 0.0
    %2017 = vmatpush1.msra.mxu0 0.0
    %2018 = vmatprep.subr.mxu0 0.0
    %2019 = vmatpush1.msra.mxu0 0.0
    %2020 = vmatprep.subr.mxu0 0.0
    %2021 = vmatpush1.msra.mxu0 0.0
    %2022 = vmatprep.subr.mxu0 0.0
    %2023 = vmatpush1.msra.mxu0 0.0
    %2024 = vmatprep.subr.mxu0 0.0
    %2025 = vmatpush1.msra.mxu0 0.0
    %2026 = vmatprep.subr.mxu0 0.0
    %2027 = vmatpush1.msra.mxu0 0.0
    %2028 = vmatprep.subr.mxu0 0.0
    %2029 = vmatpush1.msra.mxu0 0.0
    %2030 = vmatprep.subr.mxu0 0.0
    %2031 = vmatpush1.msra.mxu0 0.0
    %2032 = vmatprep.subr.mxu0 0.0
    %2033 = vmatpush1.msra.mxu0 0.0
    %2034 = vmatprep.subr.mxu0 0.0
    %2035 = vmatpush1.msra.mxu0 0.0
    %2036 = vmatprep.subr.mxu0 0.0
    %2037 = vmatpush1.msra.mxu0 0.0
    %2038 = vmatprep.subr.mxu0 0.0
    %2039 = vmatpush1.msra.mxu0 0.0
    %2040 = vmatprep.subr.mxu0 0.0
    %2041 = vmatpush1.msra.mxu0 0.0
    %2042 = vmatprep.subr.mxu0 0.0
    %2043 = vmatpush1.msra.mxu0 0.0
    %2044 = vmatprep.subr.mxu0 0.0
    %2045 = vmatpush1.msra.mxu0 0.0
    %2046 = vmatprep.subr.mxu0 0.0
    %2047 = vmatpush1.msra.mxu0 %v2012
    %2048 = vmatprep.subr.mxu0 0.0
    %2049 = vmatpush2.msra.mxu0 0.0
    %2050 = vmatprep.subr.mxu0 0.0
    %2051 = vmatpush2.msra.mxu0 0.0
    %2052 = vmatprep.subr.mxu0 0.0
    %2053 = vmatpush2.msra.mxu0 0.0
    %2054 = vmatprep.subr.mxu0 0.0
    %2055 = vmatpush2.msra.mxu0 0.0
    %2056 = vmatprep.subr.mxu0 0.0
    %2057 = vmatpush2.msra.mxu0 0.0
    %2058 = vmatprep.subr.mxu0 0.0
    %2059 = vmatpush2.msra.mxu0 0.0
    %2060 = vmatprep.subr.mxu0 0.0
    %2061 = vmatpush2.msra.mxu0 0.0
    %2062 = vmatprep.subr.mxu0 0.0
    %2063 = vmatpush2.msra.mxu0 0.0
    %2064 = vmatprep.subr.mxu0 0.0
    %2065 = vmatpush2.msra.mxu0 0.0
    %2066 = vmatprep.subr.mxu0 0.0
    %2067 = vmatpush2.msra.mxu0 0.0
    %2068 = vmatprep.subr.mxu0 0.0
    %2069 = vmatpush2.msra.mxu0 0.0
    %2070 = vmatprep.subr.mxu0 0.0
    %2071 = vmatpush2.msra.mxu0 0.0
    %2072 = vmatprep.subr.mxu0 0.0
    %2073 = vmatpush2.msra.mxu0 0.0
    %2074 = vmatprep.subr.mxu0 0.0
    %2075 = vmatpush2.msra.mxu0 0.0
    %2076 = vmatprep.subr.mxu0 0.0
    %2077 = vmatpush2.msra.mxu0 0.0
    %2078 = vmatprep.subr.mxu0 0.0
    %2079 = vmatpush2.msra.mxu0 0.0
    %2080 = vmatprep.mubr.f32.mxu0 0.0
    %2081 = vmatmul.mubr.f32.gmra.mxu0 %v2014
    %v2082 = vpop.f32.mrf.mxu0
    %v2083 = vadd.f32 0.0, %v2082
    %v2084 = vpop.f32.mrf.mxu0
    %2085 = vdwg.mxu0
    %v2086 = vadd.f32 %v2008, %v2083
    %2087 = vrot.lane.b32.xlu0 %v1701, 88
    %v2088 = vpop.permute.xlu0 %2087
    %2089 = vrot.lane.b32.xlu0 %v1700, 116
    %v2090 = vpop.permute.xlu0 %2089
    %v2092 = vsel %vm936, %v2088, 0
    %2094 = vmatprep.subr.mxu0 0.0
    %2095 = vmatpush1.msra.mxu0 0.0
    %2096 = vmatprep.subr.mxu0 0.0
    %2097 = vmatpush1.msra.mxu0 0.0
    %2098 = vmatprep.subr.mxu0 0.0
    %2099 = vmatpush1.msra.mxu0 0.0
    %2100 = vmatprep.subr.mxu0 0.0
    %2101 = vmatpush1.msra.mxu0 0.0
    %2102 = vmatprep.subr.mxu0 0.0
    %2103 = vmatpush1.msra.mxu0 0.0
    %2104 = vmatprep.subr.mxu0 0.0
    %2105 = vmatpush1.msra.mxu0 0.0
    %2106 = vmatprep.subr.mxu0 0.0
    %2107 = vmatpush1.msra.mxu0 0.0
    %2108 = vmatprep.subr.mxu0 0.0
    %2109 = vmatpush1.msra.mxu0 0.0
    %2110 = vmatprep.subr.mxu0 0.0
    %2111 = vmatpush1.msra.mxu0 0.0
    %2112 = vmatprep.subr.mxu0 0.0
    %2113 = vmatpush1.msra.mxu0 0.0
    %2114 = vmatprep.subr.mxu0 0.0
    %2115 = vmatpush1.msra.mxu0 0.0
    %2116 = vmatprep.subr.mxu0 0.0
    %2117 = vmatpush1.msra.mxu0 0.0
    %2118 = vmatprep.subr.mxu0 0.0
    %2119 = vmatpush1.msra.mxu0 0.0
    %2120 = vmatprep.subr.mxu0 0.0
    %2121 = vmatpush1.msra.mxu0 0.0
    %2122 = vmatprep.subr.mxu0 0.0
    %2123 = vmatpush1.msra.mxu0 0.0
    %2124 = vmatprep.subr.mxu0 0.0
    %2125 = vmatpush1.msra.mxu0 %v2090
    %2126 = vmatprep.subr.mxu0 0.0
    %2127 = vmatpush2.msra.mxu0 0.0
    %2128 = vmatprep.subr.mxu0 0.0
    %2129 = vmatpush2.msra.mxu0 0.0
    %2130 = vmatprep.subr.mxu0 0.0
    %2131 = vmatpush2.msra.mxu0 0.0
    %2132 = vmatprep.subr.mxu0 0.0
    %2133 = vmatpush2.msra.mxu0 0.0
    %2134 = vmatprep.subr.mxu0 0.0
    %2135 = vmatpush2.msra.mxu0 0.0
    %2136 = vmatprep.subr.mxu0 0.0
    %2137 = vmatpush2.msra.mxu0 0.0
    %2138 = vmatprep.subr.mxu0 0.0
    %2139 = vmatpush2.msra.mxu0 0.0
    %2140 = vmatprep.subr.mxu0 0.0
    %2141 = vmatpush2.msra.mxu0 0.0
    %2142 = vmatprep.subr.mxu0 0.0
    %2143 = vmatpush2.msra.mxu0 0.0
    %2144 = vmatprep.subr.mxu0 0.0
    %2145 = vmatpush2.msra.mxu0 0.0
    %2146 = vmatprep.subr.mxu0 0.0
    %2147 = vmatpush2.msra.mxu0 0.0
    %2148 = vmatprep.subr.mxu0 0.0
    %2149 = vmatpush2.msra.mxu0 0.0
    %2150 = vmatprep.subr.mxu0 0.0
    %2151 = vmatpush2.msra.mxu0 0.0
    %2152 = vmatprep.subr.mxu0 0.0
    %2153 = vmatpush2.msra.mxu0 0.0
    %2154 = vmatprep.subr.mxu0 0.0
    %2155 = vmatpush2.msra.mxu0 0.0
    %2156 = vmatprep.subr.mxu0 0.0
    %2157 = vmatpush2.msra.mxu0 0.0
    %2158 = vmatprep.mubr.f32.mxu0 0.0
    %2159 = vmatmul.mubr.f32.gmra.mxu0 %v2092
    %v2160 = vpop.f32.mrf.mxu0
    %v2161 = vadd.f32 0.0, %v2160
    %v2162 = vpop.f32.mrf.mxu0
    %2163 = vdwg.mxu0
    %v2164 = vadd.f32 %v2086, %v2161
    %2165 = vrot.lane.b32.xlu0 %v1701, 80
    %v2166 = vpop.permute.xlu0 %2165
    %2167 = vrot.lane.b32.xlu0 %v1700, 108
    %v2168 = vpop.permute.xlu0 %2167
    %v2170 = vsel %vm936, %v2166, 0
    %2172 = vmatprep.subr.mxu0 0.0
    %2173 = vmatpush1.msra.mxu0 0.0
    %2174 = vmatprep.subr.mxu0 0.0
    %2175 = vmatpush1.msra.mxu0 0.0
    %2176 = vmatprep.subr.mxu0 0.0
    %2177 = vmatpush1.msra.mxu0 0.0
    %2178 = vmatprep.subr.mxu0 0.0
    %2179 = vmatpush1.msra.mxu0 0.0
    %2180 = vmatprep.subr.mxu0 0.0
    %2181 = vmatpush1.msra.mxu0 0.0
    %2182 = vmatprep.subr.mxu0 0.0
    %2183 = vmatpush1.msra.mxu0 0.0
    %2184 = vmatprep.subr.mxu0 0.0
    %2185 = vmatpush1.msra.mxu0 0.0
    %2186 = vmatprep.subr.mxu0 0.0
    %2187 = vmatpush1.msra.mxu0 0.0
    %2188 = vmatprep.subr.mxu0 0.0
    %2189 = vmatpush1.msra.mxu0 0.0
    %2190 = vmatprep.subr.mxu0 0.0
    %2191 = vmatpush1.msra.mxu0 0.0
    %2192 = vmatprep.subr.mxu0 0.0
    %2193 = vmatpush1.msra.mxu0 0.0
    %2194 = vmatprep.subr.mxu0 0.0
    %2195 = vmatpush1.msra.mxu0 0.0
    %2196 = vmatprep.subr.mxu0 0.0
    %2197 = vmatpush1.msra.mxu0 0.0
    %2198 = vmatprep.subr.mxu0 0.0
    %2199 = vmatpush1.msra.mxu0 0.0
    %2200 = vmatprep.subr.mxu0 0.0
    %2201 = vmatpush1.msra.mxu0 0.0
    %2202 = vmatprep.subr.mxu0 0.0
    %2203 = vmatpush1.msra.mxu0 %v2168
    %2204 = vmatprep.subr.mxu0 0.0
    %2205 = vmatpush2.msra.mxu0 0.0
    %2206 = vmatprep.subr.mxu0 0.0
    %2207 = vmatpush2.msra.mxu0 0.0
    %2208 = vmatprep.subr.mxu0 0.0
    %2209 = vmatpush2.msra.mxu0 0.0
    %2210 = vmatprep.subr.mxu0 0.0
    %2211 = vmatpush2.msra.mxu0 0.0
    %2212 = vmatprep.subr.mxu0 0.0
    %2213 = vmatpush2.msra.mxu0 0.0
    %2214 = vmatprep.subr.mxu0 0.0
    %2215 = vmatpush2.msra.mxu0 0.0
    %2216 = vmatprep.subr.mxu0 0.0
    %2217 = vmatpush2.msra.mxu0 0.0
    %2218 = vmatprep.subr.mxu0 0.0
    %2219 = vmatpush2.msra.mxu0 0.0
    %2220 = vmatprep.subr.mxu0 0.0
    %2221 = vmatpush2.msra.mxu0 0.0
    %2222 = vmatprep.subr.mxu0 0.0
    %2223 = vmatpush2.msra.mxu0 0.0
    %2224 = vmatprep.subr.mxu0 0.0
    %2225 = vmatpush2.msra.mxu0 0.0
    %2226 = vmatprep.subr.mxu0 0.0
    %2227 = vmatpush2.msra.mxu0 0.0
    %2228 = vmatprep.subr.mxu0 0.0
    %2229 = vmatpush2.msra.mxu0 0.0
    %2230 = vmatprep.subr.mxu0 0.0
    %2231 = vmatpush2.msra.mxu0 0.0
    %2232 = vmatprep.subr.mxu0 0.0
    %2233 = vmatpush2.msra.mxu0 0.0
    %2234 = vmatprep.subr.mxu0 0.0
    %2235 = vmatpush2.msra.mxu0 0.0
    %2236 = vmatprep.mubr.f32.mxu0 0.0
    %2237 = vmatmul.mubr.f32.gmra.mxu0 %v2170
    %v2238 = vpop.f32.mrf.mxu0
    %v2239 = vadd.f32 0.0, %v2238
    %v2240 = vpop.f32.mrf.mxu0
    %2241 = vdwg.mxu0
    %v2242 = vadd.f32 %v2164, %v2239
    %2243 = vrot.lane.b32.xlu0 %v1701, 72
    %v2244 = vpop.permute.xlu0 %2243
    %2245 = vrot.lane.b32.xlu0 %v1700, 107
    %v2246 = vpop.permute.xlu0 %2245
    %v2248 = vsel %vm936, %v2244, 0
    %2250 = vmatprep.subr.mxu0 0.0
    %2251 = vmatpush1.msra.mxu0 0.0
    %2252 = vmatprep.subr.mxu0 0.0
    %2253 = vmatpush1.msra.mxu0 0.0
    %2254 = vmatprep.subr.mxu0 0.0
    %2255 = vmatpush1.msra.mxu0 0.0
    %2256 = vmatprep.subr.mxu0 0.0
    %2257 = vmatpush1.msra.mxu0 0.0
    %2258 = vmatprep.subr.mxu0 0.0
    %2259 = vmatpush1.msra.mxu0 0.0
    %2260 = vmatprep.subr.mxu0 0.0
    %2261 = vmatpush1.msra.mxu0 0.0
    %2262 = vmatprep.subr.mxu0 0.0
    %2263 = vmatpush1.msra.mxu0 0.0
    %2264 = vmatprep.subr.mxu0 0.0
    %2265 = vmatpush1.msra.mxu0 0.0
    %2266 = vmatprep.subr.mxu0 0.0
    %2267 = vmatpush1.msra.mxu0 0.0
    %2268 = vmatprep.subr.mxu0 0.0
    %2269 = vmatpush1.msra.mxu0 0.0
    %2270 = vmatprep.subr.mxu0 0.0
    %2271 = vmatpush1.msra.mxu0 0.0
    %2272 = vmatprep.subr.mxu0 0.0
    %2273 = vmatpush1.msra.mxu0 0.0
    %2274 = vmatprep.subr.mxu0 0.0
    %2275 = vmatpush1.msra.mxu0 0.0
    %2276 = vmatprep.subr.mxu0 0.0
    %2277 = vmatpush1.msra.mxu0 0.0
    %2278 = vmatprep.subr.mxu0 0.0
    %2279 = vmatpush1.msra.mxu0 0.0
    %2280 = vmatprep.subr.mxu0 0.0
    %2281 = vmatpush1.msra.mxu0 %v2246
    %2282 = vmatprep.subr.mxu0 0.0
    %2283 = vmatpush2.msra.mxu0 0.0
    %2284 = vmatprep.subr.mxu0 0.0
    %2285 = vmatpush2.msra.mxu0 0.0
    %2286 = vmatprep.subr.mxu0 0.0
    %2287 = vmatpush2.msra.mxu0 0.0
    %2288 = vmatprep.subr.mxu0 0.0
    %2289 = vmatpush2.msra.mxu0 0.0
    %2290 = vmatprep.subr.mxu0 0.0
    %2291 = vmatpush2.msra.mxu0 0.0
    %2292 = vmatprep.subr.mxu0 0.0
    %2293 = vmatpush2.msra.mxu0 0.0
    %2294 = vmatprep.subr.mxu0 0.0
    %2295 = vmatpush2.msra.mxu0 0.0
    %2296 = vmatprep.subr.mxu0 0.0
    %2297 = vmatpush2.msra.mxu0 0.0
    %2298 = vmatprep.subr.mxu0 0.0
    %2299 = vmatpush2.msra.mxu0 0.0
    %2300 = vmatprep.subr.mxu0 0.0
    %2301 = vmatpush2.msra.mxu0 0.0
    %2302 = vmatprep.subr.mxu0 0.0
    %2303 = vmatpush2.msra.mxu0 0.0
    %2304 = vmatprep.subr.mxu0 0.0
    %2305 = vmatpush2.msra.mxu0 0.0
    %2306 = vmatprep.subr.mxu0 0.0
    %2307 = vmatpush2.msra.mxu0 0.0
    %2308 = vmatprep.subr.mxu0 0.0
    %2309 = vmatpush2.msra.mxu0 0.0
    %2310 = vmatprep.subr.mxu0 0.0
    %2311 = vmatpush2.msra.mxu0 0.0
    %2312 = vmatprep.subr.mxu0 0.0
    %2313 = vmatpush2.msra.mxu0 0.0
    %2314 = vmatprep.mubr.f32.mxu0 0.0
    %2315 = vmatmul.mubr.f32.gmra.mxu0 %v2248
    %v2316 = vpop.f32.mrf.mxu0
    %v2317 = vadd.f32 0.0, %v2316
    %v2318 = vpop.f32.mrf.mxu0
    %2319 = vdwg.mxu0
    %v2320 = vadd.f32 %v2242, %v2317
    %2321 = vrot.lane.b32.xlu0 %v1701, 64
    %v2322 = vpop.permute.xlu0 %2321
    %2323 = vrot.lane.b32.xlu0 %v1700, 106
    %v2324 = vpop.permute.xlu0 %2323
    %v2326 = vsel %vm936, %v2322, 0
    %2328 = vmatprep.subr.mxu0 0.0
    %2329 = vmatpush1.msra.mxu0 0.0
    %2330 = vmatprep.subr.mxu0 0.0
    %2331 = vmatpush1.msra.mxu0 0.0
    %2332 = vmatprep.subr.mxu0 0.0
    %2333 = vmatpush1.msra.mxu0 0.0
    %2334 = vmatprep.subr.mxu0 0.0
    %2335 = vmatpush1.msra.mxu0 0.0
    %2336 = vmatprep.subr.mxu0 0.0
    %2337 = vmatpush1.msra.mxu0 0.0
    %2338 = vmatprep.subr.mxu0 0.0
    %2339 = vmatpush1.msra.mxu0 0.0
    %2340 = vmatprep.subr.mxu0 0.0
    %2341 = vmatpush1.msra.mxu0 0.0
    %2342 = vmatprep.subr.mxu0 0.0
    %2343 = vmatpush1.msra.mxu0 0.0
    %2344 = vmatprep.subr.mxu0 0.0
    %2345 = vmatpush1.msra.mxu0 0.0
    %2346 = vmatprep.subr.mxu0 0.0
    %2347 = vmatpush1.msra.mxu0 0.0
    %2348 = vmatprep.subr.mxu0 0.0
    %2349 = vmatpush1.msra.mxu0 0.0
    %2350 = vmatprep.subr.mxu0 0.0
    %2351 = vmatpush1.msra.mxu0 0.0
    %2352 = vmatprep.subr.mxu0 0.0
    %2353 = vmatpush1.msra.mxu0 0.0
    %2354 = vmatprep.subr.mxu0 0.0
    %2355 = vmatpush1.msra.mxu0 0.0
    %2356 = vmatprep.subr.mxu0 0.0
    %2357 = vmatpush1.msra.mxu0 0.0
    %2358 = vmatprep.subr.mxu0 0.0
    %2359 = vmatpush1.msra.mxu0 %v2324
    %2360 = vmatprep.subr.mxu0 0.0
    %2361 = vmatpush2.msra.mxu0 0.0
    %2362 = vmatprep.subr.mxu0 0.0
    %2363 = vmatpush2.msra.mxu0 0.0
    %2364 = vmatprep.subr.mxu0 0.0
    %2365 = vmatpush2.msra.mxu0 0.0
    %2366 = vmatprep.subr.mxu0 0.0
    %2367 = vmatpush2.msra.mxu0 0.0
    %2368 = vmatprep.subr.mxu0 0.0
    %2369 = vmatpush2.msra.mxu0 0.0
    %2370 = vmatprep.subr.mxu0 0.0
    %2371 = vmatpush2.msra.mxu0 0.0
    %2372 = vmatprep.subr.mxu0 0.0
    %2373 = vmatpush2.msra.mxu0 0.0
    %2374 = vmatprep.subr.mxu0 0.0
    %2375 = vmatpush2.msra.mxu0 0.0
    %2376 = vmatprep.subr.mxu0 0.0
    %2377 = vmatpush2.msra.mxu0 0.0
    %2378 = vmatprep.subr.mxu0 0.0
    %2379 = vmatpush2.msra.mxu0 0.0
    %2380 = vmatprep.subr.mxu0 0.0
    %2381 = vmatpush2.msra.mxu0 0.0
    %2382 = vmatprep.subr.mxu0 0.0
    %2383 = vmatpush2.msra.mxu0 0.0
    %2384 = vmatprep.subr.mxu0 0.0
    %2385 = vmatpush2.msra.mxu0 0.0
    %2386 = vmatprep.subr.mxu0 0.0
    %2387 = vmatpush2.msra.mxu0 0.0
    %2388 = vmatprep.subr.mxu0 0.0
    %2389 = vmatpush2.msra.mxu0 0.0
    %2390 = vmatprep.subr.mxu0 0.0
    %2391 = vmatpush2.msra.mxu0 0.0
    %2392 = vmatprep.mubr.f32.mxu0 0.0
    %2393 = vmatmul.mubr.f32.gmra.mxu0 %v2326
    %v2394 = vpop.f32.mrf.mxu0
    %v2395 = vadd.f32 0.0, %v2394
    %v2396 = vpop.f32.mrf.mxu0
    %2397 = vdwg.mxu0
    %v2398 = vadd.f32 %v2320, %v2395
    %v2400 = vadd.f32 %v2398, %v1573
    %v2401 = vmax.f32 %v2400, 0.0
    %2403 = vrot.lane.b32.xlu0 %v2401, 26
    %v2404 = vpop.permute.xlu0 %2403
    %2406 = vst.msk [vmem:[#allocation3] sm:$0xff] %vm889, %v2404
    %2407 = vrot.lane.b32.xlu0 %v926, 100
    %v2408 = vpop.permute.xlu0 %2407
    %v2410 = vadd.f32 %v2398, %v2408
    %v2411 = vmax.f32 %v2410, 0.0
    %2413 = vrot.lane.b32.xlu0 %v2411, 28
    %v2414 = vpop.permute.xlu0 %2413
    %2416 = vst.msk [vmem:[#allocation3] sm:$0xff] %vm894, %v2414
    %2417 = vrot.lane.b32.xlu0 %v926, 98
    %v2418 = vpop.permute.xlu0 %2417
    %v2420 = vadd.f32 %v2398, %v2418
    %v2421 = vmax.f32 %v2420, 0.0
    %2423 = vrot.lane.b32.xlu0 %v2421, 30
    %v2424 = vpop.permute.xlu0 %2423
    %2426 = vst.msk [vmem:[#allocation3] sm:$0xff] %vm899, %v2424
    %2427 = vrot.lane.b32.xlu0 %v926, 96
    %v2428 = vpop.permute.xlu0 %2427
    %v2430 = vadd.f32 %v2398, %v2428
    %v2431 = vmax.f32 %v2430, 0.0
    %2433 = vrot.lane.b32.xlu0 %v2431, 32
    %v2434 = vpop.permute.xlu0 %2433
    %2436 = vst.msk [vmem:[#allocation3] sm:$0xff] %vm904, %v2434
    %2437 = vrot.lane.b32.xlu0 %v926, 94
    %v2438 = vpop.permute.xlu0 %2437
    %v2440 = vadd.f32 %v2398, %v2438
    %v2441 = vmax.f32 %v2440, 0.0
    %2443 = vrot.lane.b32.xlu0 %v2441, 34
    %v2444 = vpop.permute.xlu0 %2443
    %2446 = vst.msk [vmem:[#allocation3] sm:$0xff] %vm909, %v2444
    %2447 = vrot.lane.b32.xlu0 %v926, 92
    %v2448 = vpop.permute.xlu0 %2447
    %v2450 = vadd.f32 %v2398, %v2448
    %v2451 = vmax.f32 %v2450, 0.0
    %2453 = vrot.lane.b32.xlu0 %v2451, 36
    %v2454 = vpop.permute.xlu0 %2453
    %2456 = vst.msk [vmem:[#allocation3] sm:$0xff] %vm914, %v2454
    %2457 = vrot.lane.b32.xlu0 %v926, 90
    %v2458 = vpop.permute.xlu0 %2457
    %v2460 = vadd.f32 %v2398, %v2458
    %v2461 = vmax.f32 %v2460, 0.0
    %2463 = vrot.lane.b32.xlu0 %v2461, 38
    %v2464 = vpop.permute.xlu0 %2463
    %2466 = vst.msk [vmem:[#allocation3] sm:$0xff] %vm919, %v2464
    %2467 = vrot.lane.b32.xlu0 %v926, 88
    %v2468 = vpop.permute.xlu0 %2467
    %v2470 = vadd.f32 %v2398, %v2468
    %v2471 = vmax.f32 %v2470, 0.0
    %2473 = vrot.lane.b32.xlu0 %v2471, 40
    %v2474 = vpop.permute.xlu0 %2473
    %2476 = vst.msk [vmem:[#allocation3] sm:$0xff] %vm924, %v2474
    %v2477 = vld [vmem:[#allocation3] sm:$0xff]
    %v2478 = vld [vmem:[#allocation3 + $0x8] sm:$0xff]
    %v2479 = vld [vmem:[%s4] sm:$0xff]
    %2481 = vrot.lane.b32.xlu0 %v2479, 120
    %v2482 = vpop.permute.xlu0 %2481
    %2484 = vrot.lane.b32.xlu0 %v2477, 127
    %v2485 = vpop.permute.xlu0 %2484
    %v2487 = vsel %vm936, %v2482, 0
    %2489 = vmatprep.subr.mxu0 0.0
    %2490 = vmatpush1.msra.mxu0 0.0
    %2491 = vmatprep.subr.mxu0 0.0
    %2492 = vmatpush1.msra.mxu0 0.0
    %2493 = vmatprep.subr.mxu0 0.0
    %2494 = vmatpush1.msra.mxu0 0.0
    %2495 = vmatprep.subr.mxu0 0.0
    %2496 = vmatpush1.msra.mxu0 0.0
    %2497 = vmatprep.subr.mxu0 0.0
    %2498 = vmatpush1.msra.mxu0 0.0
    %2499 = vmatprep.subr.mxu0 0.0
    %2500 = vmatpush1.msra.mxu0 0.0
    %2501 = vmatprep.subr.mxu0 0.0
    %2502 = vmatpush1.msra.mxu0 0.0
    %2503 = vmatprep.subr.mxu0 0.0
    %2504 = vmatpush1.msra.mxu0 0.0
    %2505 = vmatprep.subr.mxu0 0.0
    %2506 = vmatpush1.msra.mxu0 0.0
    %2507 = vmatprep.subr.mxu0 0.0
    %2508 = vmatpush1.msra.mxu0 0.0
    %2509 = vmatprep.subr.mxu0 0.0
    %2510 = vmatpush1.msra.mxu0 0.0
    %2511 = vmatprep.subr.mxu0 0.0
    %2512 = vmatpush1.msra.mxu0 0.0
    %2513 = vmatprep.subr.mxu0 0.0
    %2514 = vmatpush1.msra.mxu0 0.0
    %2515 = vmatprep.subr.mxu0 0.0
    %2516 = vmatpush1.msra.mxu0 0.0
    %2517 = vmatprep.subr.mxu0 0.0
    %2518 = vmatpush1.msra.mxu0 0.0
    %2519 = vmatprep.subr.mxu0 0.0
    %2520 = vmatpush1.msra.mxu0 %v2485
    %2521 = vmatprep.subr.mxu0 0.0
    %2522 = vmatpush2.msra.mxu0 0.0
    %2523 = vmatprep.subr.mxu0 0.0
    %2524 = vmatpush2.msra.mxu0 0.0
    %2525 = vmatprep.subr.mxu0 0.0
    %2526 = vmatpush2.msra.mxu0 0.0
    %2527 = vmatprep.subr.mxu0 0.0
    %2528 = vmatpush2.msra.mxu0 0.0
    %2529 = vmatprep.subr.mxu0 0.0
    %2530 = vmatpush2.msra.mxu0 0.0
    %2531 = vmatprep.subr.mxu0 0.0
    %2532 = vmatpush2.msra.mxu0 0.0
    %2533 = vmatprep.subr.mxu0 0.0
    %2534 = vmatpush2.msra.mxu0 0.0
    %2535 = vmatprep.subr.mxu0 0.0
    %2536 = vmatpush2.msra.mxu0 0.0
    %2537 = vmatprep.subr.mxu0 0.0
    %2538 = vmatpush2.msra.mxu0 0.0
    %2539 = vmatprep.subr.mxu0 0.0
    %2540 = vmatpush2.msra.mxu0 0.0
    %2541 = vmatprep.subr.mxu0 0.0
    %2542 = vmatpush2.msra.mxu0 0.0
    %2543 = vmatprep.subr.mxu0 0.0
    %2544 = vmatpush2.msra.mxu0 0.0
    %2545 = vmatprep.subr.mxu0 0.0
    %2546 = vmatpush2.msra.mxu0 0.0
    %2547 = vmatprep.subr.mxu0 0.0
    %2548 = vmatpush2.msra.mxu0 0.0
    %2549 = vmatprep.subr.mxu0 0.0
    %2550 = vmatpush2.msra.mxu0 0.0
    %2551 = vmatprep.subr.mxu0 0.0
    %2552 = vmatpush2.msra.mxu0 0.0
    %2553 = vmatprep.mubr.f32.mxu0 0.0
    %2554 = vmatmul.mubr.f32.gmra.mxu0 %v2487
    %v2555 = vpop.f32.mrf.mxu0
    %v2556 = vadd.f32 0.0, %v2555
    %v2557 = vpop.f32.mrf.mxu0
    %2558 = vdwg.mxu0
    %v2559 = vsel %vm936, %v2479, 0
    %2561 = vmatprep.subr.mxu0 0.0
    %2562 = vmatpush1.msra.mxu0 0.0
    %2563 = vmatprep.subr.mxu0 0.0
    %2564 = vmatpush1.msra.mxu0 0.0
    %2565 = vmatprep.subr.mxu0 0.0
    %2566 = vmatpush1.msra.mxu0 0.0
    %2567 = vmatprep.subr.mxu0 0.0
    %2568 = vmatpush1.msra.mxu0 0.0
    %2569 = vmatprep.subr.mxu0 0.0
    %2570 = vmatpush1.msra.mxu0 0.0
    %2571 = vmatprep.subr.mxu0 0.0
    %2572 = vmatpush1.msra.mxu0 0.0
    %2573 = vmatprep.subr.mxu0 0.0
    %2574 = vmatpush1.msra.mxu0 0.0
    %2575 = vmatprep.subr.mxu0 0.0
    %2576 = vmatpush1.msra.mxu0 0.0
    %2577 = vmatprep.subr.mxu0 0.0
    %2578 = vmatpush1.msra.mxu0 0.0
    %2579 = vmatprep.subr.mxu0 0.0
    %2580 = vmatpush1.msra.mxu0 0.0
    %2581 = vmatprep.subr.mxu0 0.0
    %2582 = vmatpush1.msra.mxu0 0.0
    %2583 = vmatprep.subr.mxu0 0.0
    %2584 = vmatpush1.msra.mxu0 0.0
    %2585 = vmatprep.subr.mxu0 0.0
    %2586 = vmatpush1.msra.mxu0 0.0
    %2587 = vmatprep.subr.mxu0 0.0
    %2588 = vmatpush1.msra.mxu0 0.0
    %2589 = vmatprep.subr.mxu0 0.0
    %2590 = vmatpush1.msra.mxu0 0.0
    %2591 = vmatprep.subr.mxu0 0.0
    %2592 = vmatpush1.msra.mxu0 %v2477
    %2593 = vmatprep.subr.mxu0 0.0
    %2594 = vmatpush2.msra.mxu0 0.0
    %2595 = vmatprep.subr.mxu0 0.0
    %2596 = vmatpush2.msra.mxu0 0.0
    %2597 = vmatprep.subr.mxu0 0.0
    %2598 = vmatpush2.msra.mxu0 0.0
    %2599 = vmatprep.subr.mxu0 0.0
    %2600 = vmatpush2.msra.mxu0 0.0
    %2601 = vmatprep.subr.mxu0 0.0
    %2602 = vmatpush2.msra.mxu0 0.0
    %2603 = vmatprep.subr.mxu0 0.0
    %2604 = vmatpush2.msra.mxu0 0.0
    %2605 = vmatprep.subr.mxu0 0.0
    %2606 = vmatpush2.msra.mxu0 0.0
    %2607 = vmatprep.subr.mxu0 0.0
    %2608 = vmatpush2.msra.mxu0 0.0
    %2609 = vmatprep.subr.mxu0 0.0
    %2610 = vmatpush2.msra.mxu0 0.0
    %2611 = vmatprep.subr.mxu0 0.0
    %2612 = vmatpush2.msra.mxu0 0.0
    %2613 = vmatprep.subr.mxu0 0.0
    %2614 = vmatpush2.msra.mxu0 0.0
    %2615 = vmatprep.subr.mxu0 0.0
    %2616 = vmatpush2.msra.mxu0 0.0
    %2617 = vmatprep.subr.mxu0 0.0
    %2618 = vmatpush2.msra.mxu0 0.0
    %2619 = vmatprep.subr.mxu0 0.0
    %2620 = vmatpush2.msra.mxu0 0.0
    %2621 = vmatprep.subr.mxu0 0.0
    %2622 = vmatpush2.msra.mxu0 0.0
    %2623 = vmatprep.subr.mxu0 0.0
    %2624 = vmatpush2.msra.mxu0 0.0
    %2625 = vmatprep.mubr.f32.mxu0 0.0
    %2626 = vmatmul.mubr.f32.gmra.mxu0 %v2559
    %v2627 = vpop.f32.mrf.mxu0
    %v2628 = vadd.f32 %v2556, %v2627
    %v2629 = vpop.f32.mrf.mxu0
    %2630 = vdwg.mxu0
    %2631 = vrot.lane.b32.xlu0 %v2479, 112
    %v2632 = vpop.permute.xlu0 %2631
    %2633 = vrot.lane.b32.xlu0 %v2477, 126
    %v2634 = vpop.permute.xlu0 %2633
    %v2636 = vsel %vm936, %v2632, 0
    %2638 = vmatprep.subr.mxu0 0.0
    %2639 = vmatpush1.msra.mxu0 0.0
    %2640 = vmatprep.subr.mxu0 0.0
    %2641 = vmatpush1.msra.mxu0 0.0
    %2642 = vmatprep.subr.mxu0 0.0
    %2643 = vmatpush1.msra.mxu0 0.0
    %2644 = vmatprep.subr.mxu0 0.0
    %2645 = vmatpush1.msra.mxu0 0.0
    %2646 = vmatprep.subr.mxu0 0.0
    %2647 = vmatpush1.msra.mxu0 0.0
    %2648 = vmatprep.subr.mxu0 0.0
    %2649 = vmatpush1.msra.mxu0 0.0
    %2650 = vmatprep.subr.mxu0 0.0
    %2651 = vmatpush1.msra.mxu0 0.0
    %2652 = vmatprep.subr.mxu0 0.0
    %2653 = vmatpush1.msra.mxu0 0.0
    %2654 = vmatprep.subr.mxu0 0.0
    %2655 = vmatpush1.msra.mxu0 0.0
    %2656 = vmatprep.subr.mxu0 0.0
    %2657 = vmatpush1.msra.mxu0 0.0
    %2658 = vmatprep.subr.mxu0 0.0
    %2659 = vmatpush1.msra.mxu0 0.0
    %2660 = vmatprep.subr.mxu0 0.0
    %2661 = vmatpush1.msra.mxu0 0.0
    %2662 = vmatprep.subr.mxu0 0.0
    %2663 = vmatpush1.msra.mxu0 0.0
    %2664 = vmatprep.subr.mxu0 0.0
    %2665 = vmatpush1.msra.mxu0 0.0
    %2666 = vmatprep.subr.mxu0 0.0
    %2667 = vmatpush1.msra.mxu0 0.0
    %2668 = vmatprep.subr.mxu0 0.0
    %2669 = vmatpush1.msra.mxu0 %v2634
    %2670 = vmatprep.subr.mxu0 0.0
    %2671 = vmatpush2.msra.mxu0 0.0
    %2672 = vmatprep.subr.mxu0 0.0
    %2673 = vmatpush2.msra.mxu0 0.0
    %2674 = vmatprep.subr.mxu0 0.0
    %2675 = vmatpush2.msra.mxu0 0.0
    %2676 = vmatprep.subr.mxu0 0.0
    %2677 = vmatpush2.msra.mxu0 0.0
    %2678 = vmatprep.subr.mxu0 0.0
    %2679 = vmatpush2.msra.mxu0 0.0
    %2680 = vmatprep.subr.mxu0 0.0
    %2681 = vmatpush2.msra.mxu0 0.0
    %2682 = vmatprep.subr.mxu0 0.0
    %2683 = vmatpush2.msra.mxu0 0.0
    %2684 = vmatprep.subr.mxu0 0.0
    %2685 = vmatpush2.msra.mxu0 0.0
    %2686 = vmatprep.subr.mxu0 0.0
    %2687 = vmatpush2.msra.mxu0 0.0
    %2688 = vmatprep.subr.mxu0 0.0
    %2689 = vmatpush2.msra.mxu0 0.0
    %2690 = vmatprep.subr.mxu0 0.0
    %2691 = vmatpush2.msra.mxu0 0.0
    %2692 = vmatprep.subr.mxu0 0.0
    %2693 = vmatpush2.msra.mxu0 0.0
    %2694 = vmatprep.subr.mxu0 0.0
    %2695 = vmatpush2.msra.mxu0 0.0
    %2696 = vmatprep.subr.mxu0 0.0
    %2697 = vmatpush2.msra.mxu0 0.0
    %2698 = vmatprep.subr.mxu0 0.0
    %2699 = vmatpush2.msra.mxu0 0.0
    %2700 = vmatprep.subr.mxu0 0.0
    %2701 = vmatpush2.msra.mxu0 0.0
    %2702 = vmatprep.mubr.f32.mxu0 0.0
    %2703 = vmatmul.mubr.f32.gmra.mxu0 %v2636
    %v2704 = vpop.f32.mrf.mxu0
    %v2705 = vadd.f32 0.0, %v2704
    %v2706 = vpop.f32.mrf.mxu0
    %2707 = vdwg.mxu0
    %v2708 = vadd.f32 %v2628, %v2705
    %2709 = vrot.lane.b32.xlu0 %v2479, 104
    %v2710 = vpop.permute.xlu0 %2709
    %2712 = vrot.lane.b32.xlu0 %v2477, 116
    %v2713 = vpop.permute.xlu0 %2712
    %2714 = vrot.lane.b32.xlu0 %v2478, 116
    %v2715 = vpop.permute.xlu0 %2714
    %v2716 = vsel %vm1166, %v2713, %v2715
    %v2718 = vsel %vm936, %v2710, 0
    %2720 = vmatprep.subr.mxu0 0.0
    %2721 = vmatpush1.msra.mxu0 0.0
    %2722 = vmatprep.subr.mxu0 0.0
    %2723 = vmatpush1.msra.mxu0 0.0
    %2724 = vmatprep.subr.mxu0 0.0
    %2725 = vmatpush1.msra.mxu0 0.0
    %2726 = vmatprep.subr.mxu0 0.0
    %2727 = vmatpush1.msra.mxu0 0.0
    %2728 = vmatprep.subr.mxu0 0.0
    %2729 = vmatpush1.msra.mxu0 0.0
    %2730 = vmatprep.subr.mxu0 0.0
    %2731 = vmatpush1.msra.mxu0 0.0
    %2732 = vmatprep.subr.mxu0 0.0
    %2733 = vmatpush1.msra.mxu0 0.0
    %2734 = vmatprep.subr.mxu0 0.0
    %2735 = vmatpush1.msra.mxu0 0.0
    %2736 = vmatprep.subr.mxu0 0.0
    %2737 = vmatpush1.msra.mxu0 0.0
    %2738 = vmatprep.subr.mxu0 0.0
    %2739 = vmatpush1.msra.mxu0 0.0
    %2740 = vmatprep.subr.mxu0 0.0
    %2741 = vmatpush1.msra.mxu0 0.0
    %2742 = vmatprep.subr.mxu0 0.0
    %2743 = vmatpush1.msra.mxu0 0.0
    %2744 = vmatprep.subr.mxu0 0.0
    %2745 = vmatpush1.msra.mxu0 0.0
    %2746 = vmatprep.subr.mxu0 0.0
    %2747 = vmatpush1.msra.mxu0 0.0
    %2748 = vmatprep.subr.mxu0 0.0
    %2749 = vmatpush1.msra.mxu0 0.0
    %2750 = vmatprep.subr.mxu0 0.0
    %2751 = vmatpush1.msra.mxu0 %v2716
    %2752 = vmatprep.subr.mxu0 0.0
    %2753 = vmatpush2.msra.mxu0 0.0
    %2754 = vmatprep.subr.mxu0 0.0
    %2755 = vmatpush2.msra.mxu0 0.0
    %2756 = vmatprep.subr.mxu0 0.0
    %2757 = vmatpush2.msra.mxu0 0.0
    %2758 = vmatprep.subr.mxu0 0.0
    %2759 = vmatpush2.msra.mxu0 0.0
    %2760 = vmatprep.subr.mxu0 0.0
    %2761 = vmatpush2.msra.mxu0 0.0
    %2762 = vmatprep.subr.mxu0 0.0
    %2763 = vmatpush2.msra.mxu0 0.0
    %2764 = vmatprep.subr.mxu0 0.0
    %2765 = vmatpush2.msra.mxu0 0.0
    %2766 = vmatprep.subr.mxu0 0.0
    %2767 = vmatpush2.msra.mxu0 0.0
    %2768 = vmatprep.subr.mxu0 0.0
    %2769 = vmatpush2.msra.mxu0 0.0
    %2770 = vmatprep.subr.mxu0 0.0
    %2771 = vmatpush2.msra.mxu0 0.0
    %2772 = vmatprep.subr.mxu0 0.0
    %2773 = vmatpush2.msra.mxu0 0.0
    %2774 = vmatprep.subr.mxu0 0.0
    %2775 = vmatpush2.msra.mxu0 0.0
    %2776 = vmatprep.subr.mxu0 0.0
    %2777 = vmatpush2.msra.mxu0 0.0
    %2778 = vmatprep.subr.mxu0 0.0
    %2779 = vmatpush2.msra.mxu0 0.0
    %2780 = vmatprep.subr.mxu0 0.0
    %2781 = vmatpush2.msra.mxu0 0.0
    %2782 = vmatprep.subr.mxu0 0.0
    %2783 = vmatpush2.msra.mxu0 0.0
    %2784 = vmatprep.mubr.f32.mxu0 0.0
    %2785 = vmatmul.mubr.f32.gmra.mxu0 %v2718
    %v2786 = vpop.f32.mrf.mxu0
    %v2787 = vadd.f32 0.0, %v2786
    %v2788 = vpop.f32.mrf.mxu0
    %2789 = vdwg.mxu0
    %v2790 = vadd.f32 %v2708, %v2787
    %2791 = vrot.lane.b32.xlu0 %v2479, 96
    %v2792 = vpop.permute.xlu0 %2791
    %2793 = vrot.lane.b32.xlu0 %v2477, 115
    %v2794 = vpop.permute.xlu0 %2793
    %2795 = vrot.lane.b32.xlu0 %v2478, 115
    %v2796 = vpop.permute.xlu0 %2795
    %v2797 = vsel %vm1248, %v2794, %v2796
    %v2799 = vsel %vm936, %v2792, 0
    %2801 = vmatprep.subr.mxu0 0.0
    %2802 = vmatpush1.msra.mxu0 0.0
    %2803 = vmatprep.subr.mxu0 0.0
    %2804 = vmatpush1.msra.mxu0 0.0
    %2805 = vmatprep.subr.mxu0 0.0
    %2806 = vmatpush1.msra.mxu0 0.0
    %2807 = vmatprep.subr.mxu0 0.0
    %2808 = vmatpush1.msra.mxu0 0.0
    %2809 = vmatprep.subr.mxu0 0.0
    %2810 = vmatpush1.msra.mxu0 0.0
    %2811 = vmatprep.subr.mxu0 0.0
    %2812 = vmatpush1.msra.mxu0 0.0
    %2813 = vmatprep.subr.mxu0 0.0
    %2814 = vmatpush1.msra.mxu0 0.0
    %2815 = vmatprep.subr.mxu0 0.0
    %2816 = vmatpush1.msra.mxu0 0.0
    %2817 = vmatprep.subr.mxu0 0.0
    %2818 = vmatpush1.msra.mxu0 0.0
    %2819 = vmatprep.subr.mxu0 0.0
    %2820 = vmatpush1.msra.mxu0 0.0
    %2821 = vmatprep.subr.mxu0 0.0
    %2822 = vmatpush1.msra.mxu0 0.0
    %2823 = vmatprep.subr.mxu0 0.0
    %2824 = vmatpush1.msra.mxu0 0.0
    %2825 = vmatprep.subr.mxu0 0.0
    %2826 = vmatpush1.msra.mxu0 0.0
    %2827 = vmatprep.subr.mxu0 0.0
    %2828 = vmatpush1.msra.mxu0 0.0
    %2829 = vmatprep.subr.mxu0 0.0
    %2830 = vmatpush1.msra.mxu0 0.0
    %2831 = vmatprep.subr.mxu0 0.0
    %2832 = vmatpush1.msra.mxu0 %v2797
    %2833 = vmatprep.subr.mxu0 0.0
    %2834 = vmatpush2.msra.mxu0 0.0
    %2835 = vmatprep.subr.mxu0 0.0
    %2836 = vmatpush2.msra.mxu0 0.0
    %2837 = vmatprep.subr.mxu0 0.0
    %2838 = vmatpush2.msra.mxu0 0.0
    %2839 = vmatprep.subr.mxu0 0.0
    %2840 = vmatpush2.msra.mxu0 0.0
    %2841 = vmatprep.subr.mxu0 0.0
    %2842 = vmatpush2.msra.mxu0 0.0
    %2843 = vmatprep.subr.mxu0 0.0
    %2844 = vmatpush2.msra.mxu0 0.0
    %2845 = vmatprep.subr.mxu0 0.0
    %2846 = vmatpush2.msra.mxu0 0.0
    %2847 = vmatprep.subr.mxu0 0.0
    %2848 = vmatpush2.msra.mxu0 0.0
    %2849 = vmatprep.subr.mxu0 0.0
    %2850 = vmatpush2.msra.mxu0 0.0
    %2851 = vmatprep.subr.mxu0 0.0
    %2852 = vmatpush2.msra.mxu0 0.0
    %2853 = vmatprep.subr.mxu0 0.0
    %2854 = vmatpush2.msra.mxu0 0.0
    %2855 = vmatprep.subr.mxu0 0.0
    %2856 = vmatpush2.msra.mxu0 0.0
    %2857 = vmatprep.subr.mxu0 0.0
    %2858 = vmatpush2.msra.mxu0 0.0
    %2859 = vmatprep.subr.mxu0 0.0
    %2860 = vmatpush2.msra.mxu0 0.0
    %2861 = vmatprep.subr.mxu0 0.0
    %2862 = vmatpush2.msra.mxu0 0.0
    %2863 = vmatprep.subr.mxu0 0.0
    %2864 = vmatpush2.msra.mxu0 0.0
    %2865 = vmatprep.mubr.f32.mxu0 0.0
    %2866 = vmatmul.mubr.f32.gmra.mxu0 %v2799
    %v2867 = vpop.f32.mrf.mxu0
    %v2868 = vadd.f32 0.0, %v2867
    %v2869 = vpop.f32.mrf.mxu0
    %2870 = vdwg.mxu0
    %v2871 = vadd.f32 %v2790, %v2868
    %2872 = vrot.lane.b32.xlu0 %v2479, 88
    %v2873 = vpop.permute.xlu0 %2872
    %2874 = vrot.lane.b32.xlu0 %v2477, 114
    %v2875 = vpop.permute.xlu0 %2874
    %2876 = vrot.lane.b32.xlu0 %v2478, 114
    %v2877 = vpop.permute.xlu0 %2876
    %v2878 = vsel %vm1330, %v2875, %v2877
    %v2880 = vsel %vm936, %v2873, 0
    %2882 = vmatprep.subr.mxu0 0.0
    %2883 = vmatpush1.msra.mxu0 0.0
    %2884 = vmatprep.subr.mxu0 0.0
    %2885 = vmatpush1.msra.mxu0 0.0
    %2886 = vmatprep.subr.mxu0 0.0
    %2887 = vmatpush1.msra.mxu0 0.0
    %2888 = vmatprep.subr.mxu0 0.0
    %2889 = vmatpush1.msra.mxu0 0.0
    %2890 = vmatprep.subr.mxu0 0.0
    %2891 = vmatpush1.msra.mxu0 0.0
    %2892 = vmatprep.subr.mxu0 0.0
    %2893 = vmatpush1.msra.mxu0 0.0
    %2894 = vmatprep.subr.mxu0 0.0
    %2895 = vmatpush1.msra.mxu0 0.0
    %2896 = vmatprep.subr.mxu0 0.0
    %2897 = vmatpush1.msra.mxu0 0.0
    %2898 = vmatprep.subr.mxu0 0.0
    %2899 = vmatpush1.msra.mxu0 0.0
    %2900 = vmatprep.subr.mxu0 0.0
    %2901 = vmatpush1.msra.mxu0 0.0
    %2902 = vmatprep.subr.mxu0 0.0
    %2903 = vmatpush1.msra.mxu0 0.0
    %2904 = vmatprep.subr.mxu0 0.0
    %2905 = vmatpush1.msra.mxu0 0.0
    %2906 = vmatprep.subr.mxu0 0.0
    %2907 = vmatpush1.msra.mxu0 0.0
    %2908 = vmatprep.subr.mxu0 0.0
    %2909 = vmatpush1.msra.mxu0 0.0
    %2910 = vmatprep.subr.mxu0 0.0
    %2911 = vmatpush1.msra.mxu0 0.0
    %2912 = vmatprep.subr.mxu0 0.0
    %2913 = vmatpush1.msra.mxu0 %v2878
    %2914 = vmatprep.subr.mxu0 0.0
    %2915 = vmatpush2.msra.mxu0 0.0
    %2916 = vmatprep.subr.mxu0 0.0
    %2917 = vmatpush2.msra.mxu0 0.0
    %2918 = vmatprep.subr.mxu0 0.0
    %2919 = vmatpush2.msra.mxu0 0.0
    %2920 = vmatprep.subr.mxu0 0.0
    %2921 = vmatpush2.msra.mxu0 0.0
    %2922 = vmatprep.subr.mxu0 0.0
    %2923 = vmatpush2.msra.mxu0 0.0
    %2924 = vmatprep.subr.mxu0 0.0
    %2925 = vmatpush2.msra.mxu0 0.0
    %2926 = vmatprep.subr.mxu0 0.0
    %2927 = vmatpush2.msra.mxu0 0.0
    %2928 = vmatprep.subr.mxu0 0.0
    %2929 = vmatpush2.msra.mxu0 0.0
    %2930 = vmatprep.subr.mxu0 0.0
    %2931 = vmatpush2.msra.mxu0 0.0
    %2932 = vmatprep.subr.mxu0 0.0
    %2933 = vmatpush2.msra.mxu0 0.0
    %2934 = vmatprep.subr.mxu0 0.0
    %2935 = vmatpush2.msra.mxu0 0.0
    %2936 = vmatprep.subr.mxu0 0.0
    %2937 = vmatpush2.msra.mxu0 0.0
    %2938 = vmatprep.subr.mxu0 0.0
    %2939 = vmatpush2.msra.mxu0 0.0
    %2940 = vmatprep.subr.mxu0 0.0
    %2941 = vmatpush2.msra.mxu0 0.0
    %2942 = vmatprep.subr.mxu0 0.0
    %2943 = vmatpush2.msra.mxu0 0.0
    %2944 = vmatprep.subr.mxu0 0.0
    %2945 = vmatpush2.msra.mxu0 0.0
    %2946 = vmatprep.mubr.f32.mxu0 0.0
    %2947 = vmatmul.mubr.f32.gmra.mxu0 %v2880
    %v2948 = vpop.f32.mrf.mxu0
    %v2949 = vadd.f32 0.0, %v2948
    %v2950 = vpop.f32.mrf.mxu0
    %2951 = vdwg.mxu0
    %v2952 = vadd.f32 %v2871, %v2949
    %2953 = vrot.lane.b32.xlu0 %v2479, 80
    %v2954 = vpop.permute.xlu0 %2953
    %2955 = vrot.lane.b32.xlu0 %v2477, 104
    %v2956 = vpop.permute.xlu0 %2955
    %2957 = vrot.lane.b32.xlu0 %v2478, 104
    %v2958 = vpop.permute.xlu0 %2957
    %v2959 = vsel %vm1412, %v2956, %v2958
    %v2961 = vsel %vm936, %v2954, 0
    %2963 = vmatprep.subr.mxu0 0.0
    %2964 = vmatpush1.msra.mxu0 0.0
    %2965 = vmatprep.subr.mxu0 0.0
    %2966 = vmatpush1.msra.mxu0 0.0
    %2967 = vmatprep.subr.mxu0 0.0
    %2968 = vmatpush1.msra.mxu0 0.0
    %2969 = vmatprep.subr.mxu0 0.0
    %2970 = vmatpush1.msra.mxu0 0.0
    %2971 = vmatprep.subr.mxu0 0.0
    %2972 = vmatpush1.msra.mxu0 0.0
    %2973 = vmatprep.subr.mxu0 0.0
    %2974 = vmatpush1.msra.mxu0 0.0
    %2975 = vmatprep.subr.mxu0 0.0
    %2976 = vmatpush1.msra.mxu0 0.0
    %2977 = vmatprep.subr.mxu0 0.0
    %2978 = vmatpush1.msra.mxu0 0.0
    %2979 = vmatprep.subr.mxu0 0.0
    %2980 = vmatpush1.msra.mxu0 0.0
    %2981 = vmatprep.subr.mxu0 0.0
    %2982 = vmatpush1.msra.mxu0 0.0
    %2983 = vmatprep.subr.mxu0 0.0
    %2984 = vmatpush1.msra.mxu0 0.0
    %2985 = vmatprep.subr.mxu0 0.0
    %2986 = vmatpush1.msra.mxu0 0.0
    %2987 = vmatprep.subr.mxu0 0.0
    %2988 = vmatpush1.msra.mxu0 0.0
    %2989 = vmatprep.subr.mxu0 0.0
    %2990 = vmatpush1.msra.mxu0 0.0
    %2991 = vmatprep.subr.mxu0 0.0
    %2992 = vmatpush1.msra.mxu0 0.0
    %2993 = vmatprep.subr.mxu0 0.0
    %2994 = vmatpush1.msra.mxu0 %v2959
    %2995 = vmatprep.subr.mxu0 0.0
    %2996 = vmatpush2.msra.mxu0 0.0
    %2997 = vmatprep.subr.mxu0 0.0
    %2998 = vmatpush2.msra.mxu0 0.0
    %2999 = vmatprep.subr.mxu0 0.0
    %3000 = vmatpush2.msra.mxu0 0.0
    %3001 = vmatprep.subr.mxu0 0.0
    %3002 = vmatpush2.msra.mxu0 0.0
    %3003 = vmatprep.subr.mxu0 0.0
    %3004 = vmatpush2.msra.mxu0 0.0
    %3005 = vmatprep.subr.mxu0 0.0
    %3006 = vmatpush2.msra.mxu0 0.0
    %3007 = vmatprep.subr.mxu0 0.0
    %3008 = vmatpush2.msra.mxu0 0.0
    %3009 = vmatprep.subr.mxu0 0.0
    %3010 = vmatpush2.msra.mxu0 0.0
    %3011 = vmatprep.subr.mxu0 0.0
    %3012 = vmatpush2.msra.mxu0 0.0
    %3013 = vmatprep.subr.mxu0 0.0
    %3014 = vmatpush2.msra.mxu0 0.0
    %3015 = vmatprep.subr.mxu0 0.0
    %3016 = vmatpush2.msra.mxu0 0.0
    %3017 = vmatprep.subr.mxu0 0.0
    %3018 = vmatpush2.msra.mxu0 0.0
    %3019 = vmatprep.subr.mxu0 0.0
    %3020 = vmatpush2.msra.mxu0 0.0
    %3021 = vmatprep.subr.mxu0 0.0
    %3022 = vmatpush2.msra.mxu0 0.0
    %3023 = vmatprep.subr.mxu0 0.0
    %3024 = vmatpush2.msra.mxu0 0.0
    %3025 = vmatprep.subr.mxu0 0.0
    %3026 = vmatpush2.msra.mxu0 0.0
    %3027 = vmatprep.mubr.f32.mxu0 0.0
    %3028 = vmatmul.mubr.f32.gmra.mxu0 %v2961
    %v3029 = vpop.f32.mrf.mxu0
    %v3030 = vadd.f32 0.0, %v3029
    %v3031 = vpop.f32.mrf.mxu0
    %3032 = vdwg.mxu0
    %v3033 = vadd.f32 %v2952, %v3030
    %3034 = vrot.lane.b32.xlu0 %v2479, 72
    %v3035 = vpop.permute.xlu0 %3034
    %3036 = vrot.lane.b32.xlu0 %v2477, 103
    %v3037 = vpop.permute.xlu0 %3036
    %3038 = vrot.lane.b32.xlu0 %v2478, 103
    %v3039 = vpop.permute.xlu0 %3038
    %v3040 = vsel %vm1494, %v3037, %v3039
    %v3042 = vsel %vm936, %v3035, 0
    %3044 = vmatprep.subr.mxu0 0.0
    %3045 = vmatpush1.msra.mxu0 0.0
    %3046 = vmatprep.subr.mxu0 0.0
    %3047 = vmatpush1.msra.mxu0 0.0
    %3048 = vmatprep.subr.mxu0 0.0
    %3049 = vmatpush1.msra.mxu0 0.0
    %3050 = vmatprep.subr.mxu0 0.0
    %3051 = vmatpush1.msra.mxu0 0.0
    %3052 = vmatprep.subr.mxu0 0.0
    %3053 = vmatpush1.msra.mxu0 0.0
    %3054 = vmatprep.subr.mxu0 0.0
    %3055 = vmatpush1.msra.mxu0 0.0
    %3056 = vmatprep.subr.mxu0 0.0
    %3057 = vmatpush1.msra.mxu0 0.0
    %3058 = vmatprep.subr.mxu0 0.0
    %3059 = vmatpush1.msra.mxu0 0.0
    %3060 = vmatprep.subr.mxu0 0.0
    %3061 = vmatpush1.msra.mxu0 0.0
    %3062 = vmatprep.subr.mxu0 0.0
    %3063 = vmatpush1.msra.mxu0 0.0
    %3064 = vmatprep.subr.mxu0 0.0
    %3065 = vmatpush1.msra.mxu0 0.0
    %3066 = vmatprep.subr.mxu0 0.0
    %3067 = vmatpush1.msra.mxu0 0.0
    %3068 = vmatprep.subr.mxu0 0.0
    %3069 = vmatpush1.msra.mxu0 0.0
    %3070 = vmatprep.subr.mxu0 0.0
    %3071 = vmatpush1.msra.mxu0 0.0
    %3072 = vmatprep.subr.mxu0 0.0
    %3073 = vmatpush1.msra.mxu0 0.0
    %3074 = vmatprep.subr.mxu0 0.0
    %3075 = vmatpush1.msra.mxu0 %v3040
    %3076 = vmatprep.subr.mxu0 0.0
    %3077 = vmatpush2.msra.mxu0 0.0
    %3078 = vmatprep.subr.mxu0 0.0
    %3079 = vmatpush2.msra.mxu0 0.0
    %3080 = vmatprep.subr.mxu0 0.0
    %3081 = vmatpush2.msra.mxu0 0.0
    %3082 = vmatprep.subr.mxu0 0.0
    %3083 = vmatpush2.msra.mxu0 0.0
    %3084 = vmatprep.subr.mxu0 0.0
    %3085 = vmatpush2.msra.mxu0 0.0
    %3086 = vmatprep.subr.mxu0 0.0
    %3087 = vmatpush2.msra.mxu0 0.0
    %3088 = vmatprep.subr.mxu0 0.0
    %3089 = vmatpush2.msra.mxu0 0.0
    %3090 = vmatprep.subr.mxu0 0.0
    %3091 = vmatpush2.msra.mxu0 0.0
    %3092 = vmatprep.subr.mxu0 0.0
    %3093 = vmatpush2.msra.mxu0 0.0
    %3094 = vmatprep.subr.mxu0 0.0
    %3095 = vmatpush2.msra.mxu0 0.0
    %3096 = vmatprep.subr.mxu0 0.0
    %3097 = vmatpush2.msra.mxu0 0.0
    %3098 = vmatprep.subr.mxu0 0.0
    %3099 = vmatpush2.msra.mxu0 0.0
    %3100 = vmatprep.subr.mxu0 0.0
    %3101 = vmatpush2.msra.mxu0 0.0
    %3102 = vmatprep.subr.mxu0 0.0
    %3103 = vmatpush2.msra.mxu0 0.0
    %3104 = vmatprep.subr.mxu0 0.0
    %3105 = vmatpush2.msra.mxu0 0.0
    %3106 = vmatprep.subr.mxu0 0.0
    %3107 = vmatpush2.msra.mxu0 0.0
    %3108 = vmatprep.mubr.f32.mxu0 0.0
    %3109 = vmatmul.mubr.f32.gmra.mxu0 %v3042
    %v3110 = vpop.f32.mrf.mxu0
    %v3111 = vadd.f32 0.0, %v3110
    %v3112 = vpop.f32.mrf.mxu0
    %3113 = vdwg.mxu0
    %v3114 = vadd.f32 %v3033, %v3111
    %3115 = vrot.lane.b32.xlu0 %v2479, 64
    %v3116 = vpop.permute.xlu0 %3115
    %3117 = vrot.lane.b32.xlu0 %v2477, 102
    %v3118 = vpop.permute.xlu0 %3117
    %3119 = vrot.lane.b32.xlu0 %v2478, 102
    %v3120 = vpop.permute.xlu0 %3119
    %v3121 = vsel %vm1576, %v3118, %v3120
    %v3123 = vsel %vm936, %v3116, 0
    %3125 = vmatprep.subr.mxu0 0.0
    %3126 = vmatpush1.msra.mxu0 0.0
    %3127 = vmatprep.subr.mxu0 0.0
    %3128 = vmatpush1.msra.mxu0 0.0
    %3129 = vmatprep.subr.mxu0 0.0
    %3130 = vmatpush1.msra.mxu0 0.0
    %3131 = vmatprep.subr.mxu0 0.0
    %3132 = vmatpush1.msra.mxu0 0.0
    %3133 = vmatprep.subr.mxu0 0.0
    %3134 = vmatpush1.msra.mxu0 0.0
    %3135 = vmatprep.subr.mxu0 0.0
    %3136 = vmatpush1.msra.mxu0 0.0
    %3137 = vmatprep.subr.mxu0 0.0
    %3138 = vmatpush1.msra.mxu0 0.0
    %3139 = vmatprep.subr.mxu0 0.0
    %3140 = vmatpush1.msra.mxu0 0.0
    %3141 = vmatprep.subr.mxu0 0.0
    %3142 = vmatpush1.msra.mxu0 0.0
    %3143 = vmatprep.subr.mxu0 0.0
    %3144 = vmatpush1.msra.mxu0 0.0
    %3145 = vmatprep.subr.mxu0 0.0
    %3146 = vmatpush1.msra.mxu0 0.0
    %3147 = vmatprep.subr.mxu0 0.0
    %3148 = vmatpush1.msra.mxu0 0.0
    %3149 = vmatprep.subr.mxu0 0.0
    %3150 = vmatpush1.msra.mxu0 0.0
    %3151 = vmatprep.subr.mxu0 0.0
    %3152 = vmatpush1.msra.mxu0 0.0
    %3153 = vmatprep.subr.mxu0 0.0
    %3154 = vmatpush1.msra.mxu0 0.0
    %3155 = vmatprep.subr.mxu0 0.0
    %3156 = vmatpush1.msra.mxu0 %v3121
    %3157 = vmatprep.subr.mxu0 0.0
    %3158 = vmatpush2.msra.mxu0 0.0
    %3159 = vmatprep.subr.mxu0 0.0
    %3160 = vmatpush2.msra.mxu0 0.0
    %3161 = vmatprep.subr.mxu0 0.0
    %3162 = vmatpush2.msra.mxu0 0.0
    %3163 = vmatprep.subr.mxu0 0.0
    %3164 = vmatpush2.msra.mxu0 0.0
    %3165 = vmatprep.subr.mxu0 0.0
    %3166 = vmatpush2.msra.mxu0 0.0
    %3167 = vmatprep.subr.mxu0 0.0
    %3168 = vmatpush2.msra.mxu0 0.0
    %3169 = vmatprep.subr.mxu0 0.0
    %3170 = vmatpush2.msra.mxu0 0.0
    %3171 = vmatprep.subr.mxu0 0.0
    %3172 = vmatpush2.msra.mxu0 0.0
    %3173 = vmatprep.subr.mxu0 0.0
    %3174 = vmatpush2.msra.mxu0 0.0
    %3175 = vmatprep.subr.mxu0 0.0
    %3176 = vmatpush2.msra.mxu0 0.0
    %3177 = vmatprep.subr.mxu0 0.0
    %3178 = vmatpush2.msra.mxu0 0.0
    %3179 = vmatprep.subr.mxu0 0.0
    %3180 = vmatpush2.msra.mxu0 0.0
    %3181 = vmatprep.subr.mxu0 0.0
    %3182 = vmatpush2.msra.mxu0 0.0
    %3183 = vmatprep.subr.mxu0 0.0
    %3184 = vmatpush2.msra.mxu0 0.0
    %3185 = vmatprep.subr.mxu0 0.0
    %3186 = vmatpush2.msra.mxu0 0.0
    %3187 = vmatprep.subr.mxu0 0.0
    %3188 = vmatpush2.msra.mxu0 0.0
    %3189 = vmatprep.mubr.f32.mxu0 0.0
    %3190 = vmatmul.mubr.f32.gmra.mxu0 %v3123
    %v3191 = vpop.f32.mrf.mxu0
    %v3192 = vadd.f32 0.0, %v3191
    %v3193 = vpop.f32.mrf.mxu0
    %3194 = vdwg.mxu0
    %v3195 = vadd.f32 %v3114, %v3192
    %v3196 = vmax.f32 %v3195, 0.0
    %3197 = vst.msk [vmem:[#allocation4] sm:$0xff] %vm160, %v3196
    %3199 = vrot.lane.b32.xlu0 %v3196, 126
    %v3200 = vpop.permute.xlu0 %3199
    %3202 = vst.msk [vmem:[#allocation4] sm:$0xff] %vm1658, %v3200
    %3203 = vrot.lane.b32.xlu0 %v3196, 124
    %v3204 = vpop.permute.xlu0 %3203
    %3206 = vst.msk [vmem:[#allocation4] sm:$0xff] %vm1663, %v3204
    %3207 = vrot.lane.b32.xlu0 %v3196, 122
    %v3208 = vpop.permute.xlu0 %3207
    %3210 = vst.msk [vmem:[#allocation4] sm:$0xff] %vm1668, %v3208
    %3211 = vrot.lane.b32.xlu0 %v3196, 120
    %v3212 = vpop.permute.xlu0 %3211
    %3214 = vst.msk [vmem:[#allocation4] sm:$0xff] %vm1673, %v3212
    %3215 = vrot.lane.b32.xlu0 %v3196, 118
    %v3216 = vpop.permute.xlu0 %3215
    %3218 = vst.msk [vmem:[#allocation4] sm:$0xff] %vm1678, %v3216
    %3219 = vrot.lane.b32.xlu0 %v3196, 116
    %v3220 = vpop.permute.xlu0 %3219
    %3222 = vst.msk [vmem:[#allocation4] sm:$0xff] %vm1683, %v3220
    %3223 = vrot.lane.b32.xlu0 %v3196, 114
    %v3224 = vpop.permute.xlu0 %3223
    %3226 = vst.msk [vmem:[#allocation4] sm:$0xff] %vm1688, %v3224
    %3227 = vrot.lane.b32.xlu0 %v3196, 112
    %v3228 = vpop.permute.xlu0 %3227
    %3230 = vst.msk [vmem:[#allocation4] sm:$0xff] %vm1693, %v3228
    %3231 = vrot.lane.b32.xlu0 %v3196, 110
    %v3232 = vpop.permute.xlu0 %3231
    %3234 = vst.msk [vmem:[#allocation4] sm:$0xff] %vm1698, %v3232
    %v3235 = vld [vmem:[#allocation4] sm:$0xff]
    %v3236 = vld [vmem:[%s5] sm:$0xff]
    %3238 = vrot.lane.b32.xlu0 %v3236, 120
    %v3239 = vpop.permute.xlu0 %3238
    %3241 = vrot.lane.b32.xlu0 %v3235, 127
    %v3242 = vpop.permute.xlu0 %3241
    %v3244 = vsel %vm936, %v3239, 0
    %3246 = vmatprep.subr.mxu0 0.0
    %3247 = vmatpush1.msra.mxu0 0.0
    %3248 = vmatprep.subr.mxu0 0.0
    %3249 = vmatpush1.msra.mxu0 0.0
    %3250 = vmatprep.subr.mxu0 0.0
    %3251 = vmatpush1.msra.mxu0 0.0
    %3252 = vmatprep.subr.mxu0 0.0
    %3253 = vmatpush1.msra.mxu0 0.0
    %3254 = vmatprep.subr.mxu0 0.0
    %3255 = vmatpush1.msra.mxu0 0.0
    %3256 = vmatprep.subr.mxu0 0.0
    %3257 = vmatpush1.msra.mxu0 0.0
    %3258 = vmatprep.subr.mxu0 0.0
    %3259 = vmatpush1.msra.mxu0 0.0
    %3260 = vmatprep.subr.mxu0 0.0
    %3261 = vmatpush1.msra.mxu0 0.0
    %3262 = vmatprep.subr.mxu0 0.0
    %3263 = vmatpush1.msra.mxu0 0.0
    %3264 = vmatprep.subr.mxu0 0.0
    %3265 = vmatpush1.msra.mxu0 0.0
    %3266 = vmatprep.subr.mxu0 0.0
    %3267 = vmatpush1.msra.mxu0 0.0
    %3268 = vmatprep.subr.mxu0 0.0
    %3269 = vmatpush1.msra.mxu0 0.0
    %3270 = vmatprep.subr.mxu0 0.0
    %3271 = vmatpush1.msra.mxu0 0.0
    %3272 = vmatprep.subr.mxu0 0.0
    %3273 = vmatpush1.msra.mxu0 0.0
    %3274 = vmatprep.subr.mxu0 0.0
    %3275 = vmatpush1.msra.mxu0 0.0
    %3276 = vmatprep.subr.mxu0 0.0
    %3277 = vmatpush1.msra.mxu0 %v3242
    %3278 = vmatprep.subr.mxu0 0.0
    %3279 = vmatpush2.msra.mxu0 0.0
    %3280 = vmatprep.subr.mxu0 0.0
    %3281 = vmatpush2.msra.mxu0 0.0
    %3282 = vmatprep.subr.mxu0 0.0
    %3283 = vmatpush2.msra.mxu0 0.0
    %3284 = vmatprep.subr.mxu0 0.0
    %3285 = vmatpush2.msra.mxu0 0.0
    %3286 = vmatprep.subr.mxu0 0.0
    %3287 = vmatpush2.msra.mxu0 0.0
    %3288 = vmatprep.subr.mxu0 0.0
    %3289 = vmatpush2.msra.mxu0 0.0
    %3290 = vmatprep.subr.mxu0 0.0
    %3291 = vmatpush2.msra.mxu0 0.0
    %3292 = vmatprep.subr.mxu0 0.0
    %3293 = vmatpush2.msra.mxu0 0.0
    %3294 = vmatprep.subr.mxu0 0.0
    %3295 = vmatpush2.msra.mxu0 0.0
    %3296 = vmatprep.subr.mxu0 0.0
    %3297 = vmatpush2.msra.mxu0 0.0
    %3298 = vmatprep.subr.mxu0 0.0
    %3299 = vmatpush2.msra.mxu0 0.0
    %3300 = vmatprep.subr.mxu0 0.0
    %3301 = vmatpush2.msra.mxu0 0.0
    %3302 = vmatprep.subr.mxu0 0.0
    %3303 = vmatpush2.msra.mxu0 0.0
    %3304 = vmatprep.subr.mxu0 0.0
    %3305 = vmatpush2.msra.mxu0 0.0
    %3306 = vmatprep.subr.mxu0 0.0
    %3307 = vmatpush2.msra.mxu0 0.0
    %3308 = vmatprep.subr.mxu0 0.0
    %3309 = vmatpush2.msra.mxu0 0.0
    %3310 = vmatprep.mubr.f32.mxu0 0.0
    %3311 = vmatmul.mubr.f32.gmra.mxu0 %v3244
    %v3312 = vpop.f32.mrf.mxu0
    %v3313 = vadd.f32 0.0, %v3312
    %v3314 = vpop.f32.mrf.mxu0
    %3315 = vdwg.mxu0
    %v3316 = vsel %vm936, %v3236, 0
    %3318 = vmatprep.subr.mxu0 0.0
    %3319 = vmatpush1.msra.mxu0 0.0
    %3320 = vmatprep.subr.mxu0 0.0
    %3321 = vmatpush1.msra.mxu0 0.0
    %3322 = vmatprep.subr.mxu0 0.0
    %3323 = vmatpush1.msra.mxu0 0.0
    %3324 = vmatprep.subr.mxu0 0.0
    %3325 = vmatpush1.msra.mxu0 0.0
    %3326 = vmatprep.subr.mxu0 0.0
    %3327 = vmatpush1.msra.mxu0 0.0
    %3328 = vmatprep.subr.mxu0 0.0
    %3329 = vmatpush1.msra.mxu0 0.0
    %3330 = vmatprep.subr.mxu0 0.0
    %3331 = vmatpush1.msra.mxu0 0.0
    %3332 = vmatprep.subr.mxu0 0.0
    %3333 = vmatpush1.msra.mxu0 0.0
    %3334 = vmatprep.subr.mxu0 0.0
    %3335 = vmatpush1.msra.mxu0 0.0
    %3336 = vmatprep.subr.mxu0 0.0
    %3337 = vmatpush1.msra.mxu0 0.0
    %3338 = vmatprep.subr.mxu0 0.0
    %3339 = vmatpush1.msra.mxu0 0.0
    %3340 = vmatprep.subr.mxu0 0.0
    %3341 = vmatpush1.msra.mxu0 0.0
    %3342 = vmatprep.subr.mxu0 0.0
    %3343 = vmatpush1.msra.mxu0 0.0
    %3344 = vmatprep.subr.mxu0 0.0
    %3345 = vmatpush1.msra.mxu0 0.0
    %3346 = vmatprep.subr.mxu0 0.0
    %3347 = vmatpush1.msra.mxu0 0.0
    %3348 = vmatprep.subr.mxu0 0.0
    %3349 = vmatpush1.msra.mxu0 %v3235
    %3350 = vmatprep.subr.mxu0 0.0
    %3351 = vmatpush2.msra.mxu0 0.0
    %3352 = vmatprep.subr.mxu0 0.0
    %3353 = vmatpush2.msra.mxu0 0.0
    %3354 = vmatprep.subr.mxu0 0.0
    %3355 = vmatpush2.msra.mxu0 0.0
    %3356 = vmatprep.subr.mxu0 0.0
    %3357 = vmatpush2.msra.mxu0 0.0
    %3358 = vmatprep.subr.mxu0 0.0
    %3359 = vmatpush2.msra.mxu0 0.0
    %3360 = vmatprep.subr.mxu0 0.0
    %3361 = vmatpush2.msra.mxu0 0.0
    %3362 = vmatprep.subr.mxu0 0.0
    %3363 = vmatpush2.msra.mxu0 0.0
    %3364 = vmatprep.subr.mxu0 0.0
    %3365 = vmatpush2.msra.mxu0 0.0
    %3366 = vmatprep.subr.mxu0 0.0
    %3367 = vmatpush2.msra.mxu0 0.0
    %3368 = vmatprep.subr.mxu0 0.0
    %3369 = vmatpush2.msra.mxu0 0.0
    %3370 = vmatprep.subr.mxu0 0.0
    %3371 = vmatpush2.msra.mxu0 0.0
    %3372 = vmatprep.subr.mxu0 0.0
    %3373 = vmatpush2.msra.mxu0 0.0
    %3374 = vmatprep.subr.mxu0 0.0
    %3375 = vmatpush2.msra.mxu0 0.0
    %3376 = vmatprep.subr.mxu0 0.0
    %3377 = vmatpush2.msra.mxu0 0.0
    %3378 = vmatprep.subr.mxu0 0.0
    %3379 = vmatpush2.msra.mxu0 0.0
    %3380 = vmatprep.subr.mxu0 0.0
    %3381 = vmatpush2.msra.mxu0 0.0
    %3382 = vmatprep.mubr.f32.mxu0 0.0
    %3383 = vmatmul.mubr.f32.gmra.mxu0 %v3316
    %v3384 = vpop.f32.mrf.mxu0
    %v3385 = vadd.f32 %v3313, %v3384
    %v3386 = vpop.f32.mrf.mxu0
    %3387 = vdwg.mxu0
    %3388 = vrot.lane.b32.xlu0 %v3236, 112
    %v3389 = vpop.permute.xlu0 %3388
    %3390 = vrot.lane.b32.xlu0 %v3235, 126
    %v3391 = vpop.permute.xlu0 %3390
    %v3393 = vsel %vm936, %v3389, 0
    %3395 = vmatprep.subr.mxu0 0.0
    %3396 = vmatpush1.msra.mxu0 0.0
    %3397 = vmatprep.subr.mxu0 0.0
    %3398 = vmatpush1.msra.mxu0 0.0
    %3399 = vmatprep.subr.mxu0 0.0
    %3400 = vmatpush1.msra.mxu0 0.0
    %3401 = vmatprep.subr.mxu0 0.0
    %3402 = vmatpush1.msra.mxu0 0.0
    %3403 = vmatprep.subr.mxu0 0.0
    %3404 = vmatpush1.msra.mxu0 0.0
    %3405 = vmatprep.subr.mxu0 0.0
    %3406 = vmatpush1.msra.mxu0 0.0
    %3407 = vmatprep.subr.mxu0 0.0
    %3408 = vmatpush1.msra.mxu0 0.0
    %3409 = vmatprep.subr.mxu0 0.0
    %3410 = vmatpush1.msra.mxu0 0.0
    %3411 = vmatprep.subr.mxu0 0.0
    %3412 = vmatpush1.msra.mxu0 0.0
    %3413 = vmatprep.subr.mxu0 0.0
    %3414 = vmatpush1.msra.mxu0 0.0
    %3415 = vmatprep.subr.mxu0 0.0
    %3416 = vmatpush1.msra.mxu0 0.0
    %3417 = vmatprep.subr.mxu0 0.0
    %3418 = vmatpush1.msra.mxu0 0.0
    %3419 = vmatprep.subr.mxu0 0.0
    %3420 = vmatpush1.msra.mxu0 0.0
    %3421 = vmatprep.subr.mxu0 0.0
    %3422 = vmatpush1.msra.mxu0 0.0
    %3423 = vmatprep.subr.mxu0 0.0
    %3424 = vmatpush1.msra.mxu0 0.0
    %3425 = vmatprep.subr.mxu0 0.0
    %3426 = vmatpush1.msra.mxu0 %v3391
    %3427 = vmatprep.subr.mxu0 0.0
    %3428 = vmatpush2.msra.mxu0 0.0
    %3429 = vmatprep.subr.mxu0 0.0
    %3430 = vmatpush2.msra.mxu0 0.0
    %3431 = vmatprep.subr.mxu0 0.0
    %3432 = vmatpush2.msra.mxu0 0.0
    %3433 = vmatprep.subr.mxu0 0.0
    %3434 = vmatpush2.msra.mxu0 0.0
    %3435 = vmatprep.subr.mxu0 0.0
    %3436 = vmatpush2.msra.mxu0 0.0
    %3437 = vmatprep.subr.mxu0 0.0
    %3438 = vmatpush2.msra.mxu0 0.0
    %3439 = vmatprep.subr.mxu0 0.0
    %3440 = vmatpush2.msra.mxu0 0.0
    %3441 = vmatprep.subr.mxu0 0.0
    %3442 = vmatpush2.msra.mxu0 0.0
    %3443 = vmatprep.subr.mxu0 0.0
    %3444 = vmatpush2.msra.mxu0 0.0
    %3445 = vmatprep.subr.mxu0 0.0
    %3446 = vmatpush2.msra.mxu0 0.0
    %3447 = vmatprep.subr.mxu0 0.0
    %3448 = vmatpush2.msra.mxu0 0.0
    %3449 = vmatprep.subr.mxu0 0.0
    %3450 = vmatpush2.msra.mxu0 0.0
    %3451 = vmatprep.subr.mxu0 0.0
    %3452 = vmatpush2.msra.mxu0 0.0
    %3453 = vmatprep.subr.mxu0 0.0
    %3454 = vmatpush2.msra.mxu0 0.0
    %3455 = vmatprep.subr.mxu0 0.0
    %3456 = vmatpush2.msra.mxu0 0.0
    %3457 = vmatprep.subr.mxu0 0.0
    %3458 = vmatpush2.msra.mxu0 0.0
    %3459 = vmatprep.mubr.f32.mxu0 0.0
    %3460 = vmatmul.mubr.f32.gmra.mxu0 %v3393
    %v3461 = vpop.f32.mrf.mxu0
    %v3462 = vadd.f32 0.0, %v3461
    %v3463 = vpop.f32.mrf.mxu0
    %3464 = vdwg.mxu0
    %v3465 = vadd.f32 %v3385, %v3462
    %3466 = vrot.lane.b32.xlu0 %v3236, 104
    %v3467 = vpop.permute.xlu0 %3466
    %3468 = vrot.lane.b32.xlu0 %v3235, 118
    %v3469 = vpop.permute.xlu0 %3468
    %v3471 = vsel %vm936, %v3467, 0
    %3473 = vmatprep.subr.mxu0 0.0
    %3474 = vmatpush1.msra.mxu0 0.0
    %3475 = vmatprep.subr.mxu0 0.0
    %3476 = vmatpush1.msra.mxu0 0.0
    %3477 = vmatprep.subr.mxu0 0.0
    %3478 = vmatpush1.msra.mxu0 0.0
    %3479 = vmatprep.subr.mxu0 0.0
    %3480 = vmatpush1.msra.mxu0 0.0
    %3481 = vmatprep.subr.mxu0 0.0
    %3482 = vmatpush1.msra.mxu0 0.0
    %3483 = vmatprep.subr.mxu0 0.0
    %3484 = vmatpush1.msra.mxu0 0.0
    %3485 = vmatprep.subr.mxu0 0.0
    %3486 = vmatpush1.msra.mxu0 0.0
    %3487 = vmatprep.subr.mxu0 0.0
    %3488 = vmatpush1.msra.mxu0 0.0
    %3489 = vmatprep.subr.mxu0 0.0
    %3490 = vmatpush1.msra.mxu0 0.0
    %3491 = vmatprep.subr.mxu0 0.0
    %3492 = vmatpush1.msra.mxu0 0.0
    %3493 = vmatprep.subr.mxu0 0.0
    %3494 = vmatpush1.msra.mxu0 0.0
    %3495 = vmatprep.subr.mxu0 0.0
    %3496 = vmatpush1.msra.mxu0 0.0
    %3497 = vmatprep.subr.mxu0 0.0
    %3498 = vmatpush1.msra.mxu0 0.0
    %3499 = vmatprep.subr.mxu0 0.0
    %3500 = vmatpush1.msra.mxu0 0.0
    %3501 = vmatprep.subr.mxu0 0.0
    %3502 = vmatpush1.msra.mxu0 0.0
    %3503 = vmatprep.subr.mxu0 0.0
    %3504 = vmatpush1.msra.mxu0 %v3469
    %3505 = vmatprep.subr.mxu0 0.0
    %3506 = vmatpush2.msra.mxu0 0.0
    %3507 = vmatprep.subr.mxu0 0.0
    %3508 = vmatpush2.msra.mxu0 0.0
    %3509 = vmatprep.subr.mxu0 0.0
    %3510 = vmatpush2.msra.mxu0 0.0
    %3511 = vmatprep.subr.mxu0 0.0
    %3512 = vmatpush2.msra.mxu0 0.0
    %3513 = vmatprep.subr.mxu0 0.0
    %3514 = vmatpush2.msra.mxu0 0.0
    %3515 = vmatprep.subr.mxu0 0.0
    %3516 = vmatpush2.msra.mxu0 0.0
    %3517 = vmatprep.subr.mxu0 0.0
    %3518 = vmatpush2.msra.mxu0 0.0
    %3519 = vmatprep.subr.mxu0 0.0
    %3520 = vmatpush2.msra.mxu0 0.0
    %3521 = vmatprep.subr.mxu0 0.0
    %3522 = vmatpush2.msra.mxu0 0.0
    %3523 = vmatprep.subr.mxu0 0.0
    %3524 = vmatpush2.msra.mxu0 0.0
    %3525 = vmatprep.subr.mxu0 0.0
    %3526 = vmatpush2.msra.mxu0 0.0
    %3527 = vmatprep.subr.mxu0 0.0
    %3528 = vmatpush2.msra.mxu0 0.0
    %3529 = vmatprep.subr.mxu0 0.0
    %3530 = vmatpush2.msra.mxu0 0.0
    %3531 = vmatprep.subr.mxu0 0.0
    %3532 = vmatpush2.msra.mxu0 0.0
    %3533 = vmatprep.subr.mxu0 0.0
    %3534 = vmatpush2.msra.mxu0 0.0
    %3535 = vmatprep.subr.mxu0 0.0
    %3536 = vmatpush2.msra.mxu0 0.0
    %3537 = vmatprep.mubr.f32.mxu0 0.0
    %3538 = vmatmul.mubr.f32.gmra.mxu0 %v3471
    %v3539 = vpop.f32.mrf.mxu0
    %v3540 = vadd.f32 0.0, %v3539
    %v3541 = vpop.f32.mrf.mxu0
    %3542 = vdwg.mxu0
    %v3543 = vadd.f32 %v3465, %v3540
    %3544 = vrot.lane.b32.xlu0 %v3236, 96
    %v3545 = vpop.permute.xlu0 %3544
    %3546 = vrot.lane.b32.xlu0 %v3235, 117
    %v3547 = vpop.permute.xlu0 %3546
    %v3549 = vsel %vm936, %v3545, 0
    %3551 = vmatprep.subr.mxu0 0.0
    %3552 = vmatpush1.msra.mxu0 0.0
    %3553 = vmatprep.subr.mxu0 0.0
    %3554 = vmatpush1.msra.mxu0 0.0
    %3555 = vmatprep.subr.mxu0 0.0
    %3556 = vmatpush1.msra.mxu0 0.0
    %3557 = vmatprep.subr.mxu0 0.0
    %3558 = vmatpush1.msra.mxu0 0.0
    %3559 = vmatprep.subr.mxu0 0.0
    %3560 = vmatpush1.msra.mxu0 0.0
    %3561 = vmatprep.subr.mxu0 0.0
    %3562 = vmatpush1.msra.mxu0 0.0
    %3563 = vmatprep.subr.mxu0 0.0
    %3564 = vmatpush1.msra.mxu0 0.0
    %3565 = vmatprep.subr.mxu0 0.0
    %3566 = vmatpush1.msra.mxu0 0.0
    %3567 = vmatprep.subr.mxu0 0.0
    %3568 = vmatpush1.msra.mxu0 0.0
    %3569 = vmatprep.subr.mxu0 0.0
    %3570 = vmatpush1.msra.mxu0 0.0
    %3571 = vmatprep.subr.mxu0 0.0
    %3572 = vmatpush1.msra.mxu0 0.0
    %3573 = vmatprep.subr.mxu0 0.0
    %3574 = vmatpush1.msra.mxu0 0.0
    %3575 = vmatprep.subr.mxu0 0.0
    %3576 = vmatpush1.msra.mxu0 0.0
    %3577 = vmatprep.subr.mxu0 0.0
    %3578 = vmatpush1.msra.mxu0 0.0
    %3579 = vmatprep.subr.mxu0 0.0
    %3580 = vmatpush1.msra.mxu0 0.0
    %3581 = vmatprep.subr.mxu0 0.0
    %3582 = vmatpush1.msra.mxu0 %v3547
    %3583 = vmatprep.subr.mxu0 0.0
    %3584 = vmatpush2.msra.mxu0 0.0
    %3585 = vmatprep.subr.mxu0 0.0
    %3586 = vmatpush2.msra.mxu0 0.0
    %3587 = vmatprep.subr.mxu0 0.0
    %3588 = vmatpush2.msra.mxu0 0.0
    %3589 = vmatprep.subr.mxu0 0.0
    %3590 = vmatpush2.msra.mxu0 0.0
    %3591 = vmatprep.subr.mxu0 0.0
    %3592 = vmatpush2.msra.mxu0 0.0
    %3593 = vmatprep.subr.mxu0 0.0
    %3594 = vmatpush2.msra.mxu0 0.0
    %3595 = vmatprep.subr.mxu0 0.0
    %3596 = vmatpush2.msra.mxu0 0.0
    %3597 = vmatprep.subr.mxu0 0.0
    %3598 = vmatpush2.msra.mxu0 0.0
    %3599 = vmatprep.subr.mxu0 0.0
    %3600 = vmatpush2.msra.mxu0 0.0
    %3601 = vmatprep.subr.mxu0 0.0
    %3602 = vmatpush2.msra.mxu0 0.0
    %3603 = vmatprep.subr.mxu0 0.0
    %3604 = vmatpush2.msra.mxu0 0.0
    %3605 = vmatprep.subr.mxu0 0.0
    %3606 = vmatpush2.msra.mxu0 0.0
    %3607 = vmatprep.subr.mxu0 0.0
    %3608 = vmatpush2.msra.mxu0 0.0
    %3609 = vmatprep.subr.mxu0 0.0
    %3610 = vmatpush2.msra.mxu0 0.0
    %3611 = vmatprep.subr.mxu0 0.0
    %3612 = vmatpush2.msra.mxu0 0.0
    %3613 = vmatprep.subr.mxu0 0.0
    %3614 = vmatpush2.msra.mxu0 0.0
    %3615 = vmatprep.mubr.f32.mxu0 0.0
    %3616 = vmatmul.mubr.f32.gmra.mxu0 %v3549
    %v3617 = vpop.f32.mrf.mxu0
    %v3618 = vadd.f32 0.0, %v3617
    %v3619 = vpop.f32.mrf.mxu0
    %3620 = vdwg.mxu0
    %v3621 = vadd.f32 %v3543, %v3618
    %3622 = vrot.lane.b32.xlu0 %v3236, 88
    %v3623 = vpop.permute.xlu0 %3622
    %3624 = vrot.lane.b32.xlu0 %v3235, 116
    %v3625 = vpop.permute.xlu0 %3624
    %v3627 = vsel %vm936, %v3623, 0
    %3629 = vmatprep.subr.mxu0 0.0
    %3630 = vmatpush1.msra.mxu0 0.0
    %3631 = vmatprep.subr.mxu0 0.0
    %3632 = vmatpush1.msra.mxu0 0.0
    %3633 = vmatprep.subr.mxu0 0.0
    %3634 = vmatpush1.msra.mxu0 0.0
    %3635 = vmatprep.subr.mxu0 0.0
    %3636 = vmatpush1.msra.mxu0 0.0
    %3637 = vmatprep.subr.mxu0 0.0
    %3638 = vmatpush1.msra.mxu0 0.0
    %3639 = vmatprep.subr.mxu0 0.0
    %3640 = vmatpush1.msra.mxu0 0.0
    %3641 = vmatprep.subr.mxu0 0.0
    %3642 = vmatpush1.msra.mxu0 0.0
    %3643 = vmatprep.subr.mxu0 0.0
    %3644 = vmatpush1.msra.mxu0 0.0
    %3645 = vmatprep.subr.mxu0 0.0
    %3646 = vmatpush1.msra.mxu0 0.0
    %3647 = vmatprep.subr.mxu0 0.0
    %3648 = vmatpush1.msra.mxu0 0.0
    %3649 = vmatprep.subr.mxu0 0.0
    %3650 = vmatpush1.msra.mxu0 0.0
    %3651 = vmatprep.subr.mxu0 0.0
    %3652 = vmatpush1.msra.mxu0 0.0
    %3653 = vmatprep.subr.mxu0 0.0
    %3654 = vmatpush1.msra.mxu0 0.0
    %3655 = vmatprep.subr.mxu0 0.0
    %3656 = vmatpush1.msra.mxu0 0.0
    %3657 = vmatprep.subr.mxu0 0.0
    %3658 = vmatpush1.msra.mxu0 0.0
    %3659 = vmatprep.subr.mxu0 0.0
    %3660 = vmatpush1.msra.mxu0 %v3625
    %3661 = vmatprep.subr.mxu0 0.0
    %3662 = vmatpush2.msra.mxu0 0.0
    %3663 = vmatprep.subr.mxu0 0.0
    %3664 = vmatpush2.msra.mxu0 0.0
    %3665 = vmatprep.subr.mxu0 0.0
    %3666 = vmatpush2.msra.mxu0 0.0
    %3667 = vmatprep.subr.mxu0 0.0
    %3668 = vmatpush2.msra.mxu0 0.0
    %3669 = vmatprep.subr.mxu0 0.0
    %3670 = vmatpush2.msra.mxu0 0.0
    %3671 = vmatprep.subr.mxu0 0.0
    %3672 = vmatpush2.msra.mxu0 0.0
    %3673 = vmatprep.subr.mxu0 0.0
    %3674 = vmatpush2.msra.mxu0 0.0
    %3675 = vmatprep.subr.mxu0 0.0
    %3676 = vmatpush2.msra.mxu0 0.0
    %3677 = vmatprep.subr.mxu0 0.0
    %3678 = vmatpush2.msra.mxu0 0.0
    %3679 = vmatprep.subr.mxu0 0.0
    %3680 = vmatpush2.msra.mxu0 0.0
    %3681 = vmatprep.subr.mxu0 0.0
    %3682 = vmatpush2.msra.mxu0 0.0
    %3683 = vmatprep.subr.mxu0 0.0
    %3684 = vmatpush2.msra.mxu0 0.0
    %3685 = vmatprep.subr.mxu0 0.0
    %3686 = vmatpush2.msra.mxu0 0.0
    %3687 = vmatprep.subr.mxu0 0.0
    %3688 = vmatpush2.msra.mxu0 0.0
    %3689 = vmatprep.subr.mxu0 0.0
    %3690 = vmatpush2.msra.mxu0 0.0
    %3691 = vmatprep.subr.mxu0 0.0
    %3692 = vmatpush2.msra.mxu0 0.0
    %3693 = vmatprep.mubr.f32.mxu0 0.0
    %3694 = vmatmul.mubr.f32.gmra.mxu0 %v3627
    %v3695 = vpop.f32.mrf.mxu0
    %v3696 = vadd.f32 0.0, %v3695
    %v3697 = vpop.f32.mrf.mxu0
    %3698 = vdwg.mxu0
    %v3699 = vadd.f32 %v3621, %v3696
    %3700 = vrot.lane.b32.xlu0 %v3236, 80
    %v3701 = vpop.permute.xlu0 %3700
    %3702 = vrot.lane.b32.xlu0 %v3235, 108
    %v3703 = vpop.permute.xlu0 %3702
    %v3705 = vsel %vm936, %v3701, 0
    %3707 = vmatprep.subr.mxu0 0.0
    %3708 = vmatpush1.msra.mxu0 0.0
    %3709 = vmatprep.subr.mxu0 0.0
    %3710 = vmatpush1.msra.mxu0 0.0
    %3711 = vmatprep.subr.mxu0 0.0
    %3712 = vmatpush1.msra.mxu0 0.0
    %3713 = vmatprep.subr.mxu0 0.0
    %3714 = vmatpush1.msra.mxu0 0.0
    %3715 = vmatprep.subr.mxu0 0.0
    %3716 = vmatpush1.msra.mxu0 0.0
    %3717 = vmatprep.subr.mxu0 0.0
    %3718 = vmatpush1.msra.mxu0 0.0
    %3719 = vmatprep.subr.mxu0 0.0
    %3720 = vmatpush1.msra.mxu0 0.0
    %3721 = vmatprep.subr.mxu0 0.0
    %3722 = vmatpush1.msra.mxu0 0.0
    %3723 = vmatprep.subr.mxu0 0.0
    %3724 = vmatpush1.msra.mxu0 0.0
    %3725 = vmatprep.subr.mxu0 0.0
    %3726 = vmatpush1.msra.mxu0 0.0
    %3727 = vmatprep.subr.mxu0 0.0
    %3728 = vmatpush1.msra.mxu0 0.0
    %3729 = vmatprep.subr.mxu0 0.0
    %3730 = vmatpush1.msra.mxu0 0.0
    %3731 = vmatprep.subr.mxu0 0.0
    %3732 = vmatpush1.msra.mxu0 0.0
    %3733 = vmatprep.subr.mxu0 0.0
    %3734 = vmatpush1.msra.mxu0 0.0
    %3735 = vmatprep.subr.mxu0 0.0
    %3736 = vmatpush1.msra.mxu0 0.0
    %3737 = vmatprep.subr.mxu0 0.0
    %3738 = vmatpush1.msra.mxu0 %v3703
    %3739 = vmatprep.subr.mxu0 0.0
    %3740 = vmatpush2.msra.mxu0 0.0
    %3741 = vmatprep.subr.mxu0 0.0
    %3742 = vmatpush2.msra.mxu0 0.0
    %3743 = vmatprep.subr.mxu0 0.0
    %3744 = vmatpush2.msra.mxu0 0.0
    %3745 = vmatprep.subr.mxu0 0.0
    %3746 = vmatpush2.msra.mxu0 0.0
    %3747 = vmatprep.subr.mxu0 0.0
    %3748 = vmatpush2.msra.mxu0 0.0
    %3749 = vmatprep.subr.mxu0 0.0
    %3750 = vmatpush2.msra.mxu0 0.0
    %3751 = vmatprep.subr.mxu0 0.0
    %3752 = vmatpush2.msra.mxu0 0.0
    %3753 = vmatprep.subr.mxu0 0.0
    %3754 = vmatpush2.msra.mxu0 0.0
    %3755 = vmatprep.subr.mxu0 0.0
    %3756 = vmatpush2.msra.mxu0 0.0
    %3757 = vmatprep.subr.mxu0 0.0
    %3758 = vmatpush2.msra.mxu0 0.0
    %3759 = vmatprep.subr.mxu0 0.0
    %3760 = vmatpush2.msra.mxu0 0.0
    %3761 = vmatprep.subr.mxu0 0.0
    %3762 = vmatpush2.msra.mxu0 0.0
    %3763 = vmatprep.subr.mxu0 0.0
    %3764 = vmatpush2.msra.mxu0 0.0
    %3765 = vmatprep.subr.mxu0 0.0
    %3766 = vmatpush2.msra.mxu0 0.0
    %3767 = vmatprep.subr.mxu0 0.0
    %3768 = vmatpush2.msra.mxu0 0.0
    %3769 = vmatprep.subr.mxu0 0.0
    %3770 = vmatpush2.msra.mxu0 0.0
    %3771 = vmatprep.mubr.f32.mxu0 0.0
    %3772 = vmatmul.mubr.f32.gmra.mxu0 %v3705
    %v3773 = vpop.f32.mrf.mxu0
    %v3774 = vadd.f32 0.0, %v3773
    %v3775 = vpop.f32.mrf.mxu0
    %3776 = vdwg.mxu0
    %v3777 = vadd.f32 %v3699, %v3774
    %3778 = vrot.lane.b32.xlu0 %v3236, 72
    %v3779 = vpop.permute.xlu0 %3778
    %3780 = vrot.lane.b32.xlu0 %v3235, 107
    %v3781 = vpop.permute.xlu0 %3780
    %v3783 = vsel %vm936, %v3779, 0
    %3785 = vmatprep.subr.mxu0 0.0
    %3786 = vmatpush1.msra.mxu0 0.0
    %3787 = vmatprep.subr.mxu0 0.0
    %3788 = vmatpush1.msra.mxu0 0.0
    %3789 = vmatprep.subr.mxu0 0.0
    %3790 = vmatpush1.msra.mxu0 0.0
    %3791 = vmatprep.subr.mxu0 0.0
    %3792 = vmatpush1.msra.mxu0 0.0
    %3793 = vmatprep.subr.mxu0 0.0
    %3794 = vmatpush1.msra.mxu0 0.0
    %3795 = vmatprep.subr.mxu0 0.0
    %3796 = vmatpush1.msra.mxu0 0.0
    %3797 = vmatprep.subr.mxu0 0.0
    %3798 = vmatpush1.msra.mxu0 0.0
    %3799 = vmatprep.subr.mxu0 0.0
    %3800 = vmatpush1.msra.mxu0 0.0
    %3801 = vmatprep.subr.mxu0 0.0
    %3802 = vmatpush1.msra.mxu0 0.0
    %3803 = vmatprep.subr.mxu0 0.0
    %3804 = vmatpush1.msra.mxu0 0.0
    %3805 = vmatprep.subr.mxu0 0.0
    %3806 = vmatpush1.msra.mxu0 0.0
    %3807 = vmatprep.subr.mxu0 0.0
    %3808 = vmatpush1.msra.mxu0 0.0
    %3809 = vmatprep.subr.mxu0 0.0
    %3810 = vmatpush1.msra.mxu0 0.0
    %3811 = vmatprep.subr.mxu0 0.0
    %3812 = vmatpush1.msra.mxu0 0.0
    %3813 = vmatprep.subr.mxu0 0.0
    %3814 = vmatpush1.msra.mxu0 0.0
    %3815 = vmatprep.subr.mxu0 0.0
    %3816 = vmatpush1.msra.mxu0 %v3781
    %3817 = vmatprep.subr.mxu0 0.0
    %3818 = vmatpush2.msra.mxu0 0.0
    %3819 = vmatprep.subr.mxu0 0.0
    %3820 = vmatpush2.msra.mxu0 0.0
    %3821 = vmatprep.subr.mxu0 0.0
    %3822 = vmatpush2.msra.mxu0 0.0
    %3823 = vmatprep.subr.mxu0 0.0
    %3824 = vmatpush2.msra.mxu0 0.0
    %3825 = vmatprep.subr.mxu0 0.0
    %3826 = vmatpush2.msra.mxu0 0.0
    %3827 = vmatprep.subr.mxu0 0.0
    %3828 = vmatpush2.msra.mxu0 0.0
    %3829 = vmatprep.subr.mxu0 0.0
    %3830 = vmatpush2.msra.mxu0 0.0
    %3831 = vmatprep.subr.mxu0 0.0
    %3832 = vmatpush2.msra.mxu0 0.0
    %3833 = vmatprep.subr.mxu0 0.0
    %3834 = vmatpush2.msra.mxu0 0.0
    %3835 = vmatprep.subr.mxu0 0.0
    %3836 = vmatpush2.msra.mxu0 0.0
    %3837 = vmatprep.subr.mxu0 0.0
    %3838 = vmatpush2.msra.mxu0 0.0
    %3839 = vmatprep.subr.mxu0 0.0
    %3840 = vmatpush2.msra.mxu0 0.0
    %3841 = vmatprep.subr.mxu0 0.0
    %3842 = vmatpush2.msra.mxu0 0.0
    %3843 = vmatprep.subr.mxu0 0.0
    %3844 = vmatpush2.msra.mxu0 0.0
    %3845 = vmatprep.subr.mxu0 0.0
    %3846 = vmatpush2.msra.mxu0 0.0
    %3847 = vmatprep.subr.mxu0 0.0
    %3848 = vmatpush2.msra.mxu0 0.0
    %3849 = vmatprep.mubr.f32.mxu0 0.0
    %3850 = vmatmul.mubr.f32.gmra.mxu0 %v3783
    %v3851 = vpop.f32.mrf.mxu0
    %v3852 = vadd.f32 0.0, %v3851
    %v3853 = vpop.f32.mrf.mxu0
    %3854 = vdwg.mxu0
    %v3855 = vadd.f32 %v3777, %v3852
    %3856 = vrot.lane.b32.xlu0 %v3236, 64
    %v3857 = vpop.permute.xlu0 %3856
    %3858 = vrot.lane.b32.xlu0 %v3235, 106
    %v3859 = vpop.permute.xlu0 %3858
    %v3861 = vsel %vm936, %v3857, 0
    %3863 = vmatprep.subr.mxu0 0.0
    %3864 = vmatpush1.msra.mxu0 0.0
    %3865 = vmatprep.subr.mxu0 0.0
    %3866 = vmatpush1.msra.mxu0 0.0
    %3867 = vmatprep.subr.mxu0 0.0
    %3868 = vmatpush1.msra.mxu0 0.0
    %3869 = vmatprep.subr.mxu0 0.0
    %3870 = vmatpush1.msra.mxu0 0.0
    %3871 = vmatprep.subr.mxu0 0.0
    %3872 = vmatpush1.msra.mxu0 0.0
    %3873 = vmatprep.subr.mxu0 0.0
    %3874 = vmatpush1.msra.mxu0 0.0
    %3875 = vmatprep.subr.mxu0 0.0
    %3876 = vmatpush1.msra.mxu0 0.0
    %3877 = vmatprep.subr.mxu0 0.0
    %3878 = vmatpush1.msra.mxu0 0.0
    %3879 = vmatprep.subr.mxu0 0.0
    %3880 = vmatpush1.msra.mxu0 0.0
    %3881 = vmatprep.subr.mxu0 0.0
    %3882 = vmatpush1.msra.mxu0 0.0
    %3883 = vmatprep.subr.mxu0 0.0
    %3884 = vmatpush1.msra.mxu0 0.0
    %3885 = vmatprep.subr.mxu0 0.0
    %3886 = vmatpush1.msra.mxu0 0.0
    %3887 = vmatprep.subr.mxu0 0.0
    %3888 = vmatpush1.msra.mxu0 0.0
    %3889 = vmatprep.subr.mxu0 0.0
    %3890 = vmatpush1.msra.mxu0 0.0
    %3891 = vmatprep.subr.mxu0 0.0
    %3892 = vmatpush1.msra.mxu0 0.0
    %3893 = vmatprep.subr.mxu0 0.0
    %3894 = vmatpush1.msra.mxu0 %v3859
    %3895 = vmatprep.subr.mxu0 0.0
    %3896 = vmatpush2.msra.mxu0 0.0
    %3897 = vmatprep.subr.mxu0 0.0
    %3898 = vmatpush2.msra.mxu0 0.0
    %3899 = vmatprep.subr.mxu0 0.0
    %3900 = vmatpush2.msra.mxu0 0.0
    %3901 = vmatprep.subr.mxu0 0.0
    %3902 = vmatpush2.msra.mxu0 0.0
    %3903 = vmatprep.subr.mxu0 0.0
    %3904 = vmatpush2.msra.mxu0 0.0
    %3905 = vmatprep.subr.mxu0 0.0
    %3906 = vmatpush2.msra.mxu0 0.0
    %3907 = vmatprep.subr.mxu0 0.0
    %3908 = vmatpush2.msra.mxu0 0.0
    %3909 = vmatprep.subr.mxu0 0.0
    %3910 = vmatpush2.msra.mxu0 0.0
    %3911 = vmatprep.subr.mxu0 0.0
    %3912 = vmatpush2.msra.mxu0 0.0
    %3913 = vmatprep.subr.mxu0 0.0
    %3914 = vmatpush2.msra.mxu0 0.0
    %3915 = vmatprep.subr.mxu0 0.0
    %3916 = vmatpush2.msra.mxu0 0.0
    %3917 = vmatprep.subr.mxu0 0.0
    %3918 = vmatpush2.msra.mxu0 0.0
    %3919 = vmatprep.subr.mxu0 0.0
    %3920 = vmatpush2.msra.mxu0 0.0
    %3921 = vmatprep.subr.mxu0 0.0
    %3922 = vmatpush2.msra.mxu0 0.0
    %3923 = vmatprep.subr.mxu0 0.0
    %3924 = vmatpush2.msra.mxu0 0.0
    %3925 = vmatprep.subr.mxu0 0.0
    %3926 = vmatpush2.msra.mxu0 0.0
    %3927 = vmatprep.mubr.f32.mxu0 0.0
    %3928 = vmatmul.mubr.f32.gmra.mxu0 %v3861
    %v3929 = vpop.f32.mrf.mxu0
    %v3930 = vadd.f32 0.0, %v3929
    %v3931 = vpop.f32.mrf.mxu0
    %3932 = vdwg.mxu0
    %v3933 = vadd.f32 %v3855, %v3930
    %v3935 = vadd.f32 %v3933, %v3118
    %v3936 = vmax.f32 %v3935, 0.0
    %3938 = vrot.lane.b32.xlu0 %v3936, 26
    %v3939 = vpop.permute.xlu0 %3938
    %3941 = vst.msk [vmem:[#allocation3] sm:$0xff] %vm889, %v3939
    %3942 = vrot.lane.b32.xlu0 %v2477, 100
    %v3943 = vpop.permute.xlu0 %3942
    %v3945 = vadd.f32 %v3933, %v3943
    %v3946 = vmax.f32 %v3945, 0.0
    %3948 = vrot.lane.b32.xlu0 %v3946, 28
    %v3949 = vpop.permute.xlu0 %3948
    %3951 = vst.msk [vmem:[#allocation3] sm:$0xff] %vm894, %v3949
    %3952 = vrot.lane.b32.xlu0 %v2477, 98
    %v3953 = vpop.permute.xlu0 %3952
    %v3955 = vadd.f32 %v3933, %v3953
    %v3956 = vmax.f32 %v3955, 0.0
    %3958 = vrot.lane.b32.xlu0 %v3956, 30
    %v3959 = vpop.permute.xlu0 %3958
    %3961 = vst.msk [vmem:[#allocation3] sm:$0xff] %vm899, %v3959
    %3962 = vrot.lane.b32.xlu0 %v2477, 96
    %v3963 = vpop.permute.xlu0 %3962
    %v3965 = vadd.f32 %v3933, %v3963
    %v3966 = vmax.f32 %v3965, 0.0
    %3968 = vrot.lane.b32.xlu0 %v3966, 32
    %v3969 = vpop.permute.xlu0 %3968
    %3971 = vst.msk [vmem:[#allocation3] sm:$0xff] %vm904, %v3969
    %3972 = vrot.lane.b32.xlu0 %v2477, 94
    %v3973 = vpop.permute.xlu0 %3972
    %v3975 = vadd.f32 %v3933, %v3973
    %v3976 = vmax.f32 %v3975, 0.0
    %3978 = vrot.lane.b32.xlu0 %v3976, 34
    %v3979 = vpop.permute.xlu0 %3978
    %3981 = vst.msk [vmem:[#allocation3] sm:$0xff] %vm909, %v3979
    %3982 = vrot.lane.b32.xlu0 %v2477, 92
    %v3983 = vpop.permute.xlu0 %3982
    %v3985 = vadd.f32 %v3933, %v3983
    %v3986 = vmax.f32 %v3985, 0.0
    %3988 = vrot.lane.b32.xlu0 %v3986, 36
    %v3989 = vpop.permute.xlu0 %3988
    %3991 = vst.msk [vmem:[#allocation3] sm:$0xff] %vm914, %v3989
    %3992 = vrot.lane.b32.xlu0 %v2477, 90
    %v3993 = vpop.permute.xlu0 %3992
    %v3995 = vadd.f32 %v3933, %v3993
    %v3996 = vmax.f32 %v3995, 0.0
    %3998 = vrot.lane.b32.xlu0 %v3996, 38
    %v3999 = vpop.permute.xlu0 %3998
    %4001 = vst.msk [vmem:[#allocation3] sm:$0xff] %vm919, %v3999
    %4002 = vrot.lane.b32.xlu0 %v2477, 88
    %v4003 = vpop.permute.xlu0 %4002
    %v4005 = vadd.f32 %v3933, %v4003
    %v4006 = vmax.f32 %v4005, 0.0
    %4008 = vrot.lane.b32.xlu0 %v4006, 40
    %v4009 = vpop.permute.xlu0 %4008
    %4011 = vst.msk [vmem:[#allocation3] sm:$0xff] %vm924, %v4009
    %v4012 = vld [vmem:[#allocation3] sm:$0xff]
    %v4013 = vld [vmem:[#allocation3 + $0x8] sm:$0xff]
    %v4014 = vld [vmem:[%s6] sm:$0xff]
    %4016 = vrot.lane.b32.xlu0 %v4014, 120
    %v4017 = vpop.permute.xlu0 %4016
    %4019 = vrot.lane.b32.xlu0 %v4012, 127
    %v4020 = vpop.permute.xlu0 %4019
    %v4022 = vsel %vm936, %v4017, 0
    %4024 = vmatprep.subr.mxu0 0.0
    %4025 = vmatpush1.msra.mxu0 0.0
    %4026 = vmatprep.subr.mxu0 0.0
    %4027 = vmatpush1.msra.mxu0 0.0
    %4028 = vmatprep.subr.mxu0 0.0
    %4029 = vmatpush1.msra.mxu0 0.0
    %4030 = vmatprep.subr.mxu0 0.0
    %4031 = vmatpush1.msra.mxu0 0.0
    %4032 = vmatprep.subr.mxu0 0.0
    %4033 = vmatpush1.msra.mxu0 0.0
    %4034 = vmatprep.subr.mxu0 0.0
    %4035 = vmatpush1.msra.mxu0 0.0
    %4036 = vmatprep.subr.mxu0 0.0
    %4037 = vmatpush1.msra.mxu0 0.0
    %4038 = vmatprep.subr.mxu0 0.0
    %4039 = vmatpush1.msra.mxu0 0.0
    %4040 = vmatprep.subr.mxu0 0.0
    %4041 = vmatpush1.msra.mxu0 0.0
    %4042 = vmatprep.subr.mxu0 0.0
    %4043 = vmatpush1.msra.mxu0 0.0
    %4044 = vmatprep.subr.mxu0 0.0
    %4045 = vmatpush1.msra.mxu0 0.0
    %4046 = vmatprep.subr.mxu0 0.0
    %4047 = vmatpush1.msra.mxu0 0.0
    %4048 = vmatprep.subr.mxu0 0.0
    %4049 = vmatpush1.msra.mxu0 0.0
    %4050 = vmatprep.subr.mxu0 0.0
    %4051 = vmatpush1.msra.mxu0 0.0
    %4052 = vmatprep.subr.mxu0 0.0
    %4053 = vmatpush1.msra.mxu0 0.0
    %4054 = vmatprep.subr.mxu0 0.0
    %4055 = vmatpush1.msra.mxu0 %v4020
    %4056 = vmatprep.subr.mxu0 0.0
    %4057 = vmatpush2.msra.mxu0 0.0
    %4058 = vmatprep.subr.mxu0 0.0
    %4059 = vmatpush2.msra.mxu0 0.0
    %4060 = vmatprep.subr.mxu0 0.0
    %4061 = vmatpush2.msra.mxu0 0.0
    %4062 = vmatprep.subr.mxu0 0.0
    %4063 = vmatpush2.msra.mxu0 0.0
    %4064 = vmatprep.subr.mxu0 0.0
    %4065 = vmatpush2.msra.mxu0 0.0
    %4066 = vmatprep.subr.mxu0 0.0
    %4067 = vmatpush2.msra.mxu0 0.0
    %4068 = vmatprep.subr.mxu0 0.0
    %4069 = vmatpush2.msra.mxu0 0.0
    %4070 = vmatprep.subr.mxu0 0.0
    %4071 = vmatpush2.msra.mxu0 0.0
    %4072 = vmatprep.subr.mxu0 0.0
    %4073 = vmatpush2.msra.mxu0 0.0
    %4074 = vmatprep.subr.mxu0 0.0
    %4075 = vmatpush2.msra.mxu0 0.0
    %4076 = vmatprep.subr.mxu0 0.0
    %4077 = vmatpush2.msra.mxu0 0.0
    %4078 = vmatprep.subr.mxu0 0.0
    %4079 = vmatpush2.msra.mxu0 0.0
    %4080 = vmatprep.subr.mxu0 0.0
    %4081 = vmatpush2.msra.mxu0 0.0
    %4082 = vmatprep.subr.mxu0 0.0
    %4083 = vmatpush2.msra.mxu0 0.0
    %4084 = vmatprep.subr.mxu0 0.0
    %4085 = vmatpush2.msra.mxu0 0.0
    %4086 = vmatprep.subr.mxu0 0.0
    %4087 = vmatpush2.msra.mxu0 0.0
    %4088 = vmatprep.mubr.f32.mxu0 0.0
    %4089 = vmatmul.mubr.f32.gmra.mxu0 %v4022
    %v4090 = vpop.f32.mrf.mxu0
    %v4091 = vadd.f32 0.0, %v4090
    %v4092 = vpop.f32.mrf.mxu0
    %4093 = vdwg.mxu0
    %v4094 = vsel %vm936, %v4014, 0
    %4096 = vmatprep.subr.mxu0 0.0
    %4097 = vmatpush1.msra.mxu0 0.0
    %4098 = vmatprep.subr.mxu0 0.0
    %4099 = vmatpush1.msra.mxu0 0.0
    %4100 = vmatprep.subr.mxu0 0.0
    %4101 = vmatpush1.msra.mxu0 0.0
    %4102 = vmatprep.subr.mxu0 0.0
    %4103 = vmatpush1.msra.mxu0 0.0
    %4104 = vmatprep.subr.mxu0 0.0
    %4105 = vmatpush1.msra.mxu0 0.0
    %4106 = vmatprep.subr.mxu0 0.0
    %4107 = vmatpush1.msra.mxu0 0.0
    %4108 = vmatprep.subr.mxu0 0.0
    %4109 = vmatpush1.msra.mxu0 0.0
    %4110 = vmatprep.subr.mxu0 0.0
    %4111 = vmatpush1.msra.mxu0 0.0
    %4112 = vmatprep.subr.mxu0 0.0
    %4113 = vmatpush1.msra.mxu0 0.0
    %4114 = vmatprep.subr.mxu0 0.0
    %4115 = vmatpush1.msra.mxu0 0.0
    %4116 = vmatprep.subr.mxu0 0.0
    %4117 = vmatpush1.msra.mxu0 0.0
    %4118 = vmatprep.subr.mxu0 0.0
    %4119 = vmatpush1.msra.mxu0 0.0
    %4120 = vmatprep.subr.mxu0 0.0
    %4121 = vmatpush1.msra.mxu0 0.0
    %4122 = vmatprep.subr.mxu0 0.0
    %4123 = vmatpush1.msra.mxu0 0.0
    %4124 = vmatprep.subr.mxu0 0.0
    %4125 = vmatpush1.msra.mxu0 0.0
    %4126 = vmatprep.subr.mxu0 0.0
    %4127 = vmatpush1.msra.mxu0 %v4012
    %4128 = vmatprep.subr.mxu0 0.0
    %4129 = vmatpush2.msra.mxu0 0.0
    %4130 = vmatprep.subr.mxu0 0.0
    %4131 = vmatpush2.msra.mxu0 0.0
    %4132 = vmatprep.subr.mxu0 0.0
    %4133 = vmatpush2.msra.mxu0 0.0
    %4134 = vmatprep.subr.mxu0 0.0
    %4135 = vmatpush2.msra.mxu0 0.0
    %4136 = vmatprep.subr.mxu0 0.0
    %4137 = vmatpush2.msra.mxu0 0.0
    %4138 = vmatprep.subr.mxu0 0.0
    %4139 = vmatpush2.msra.mxu0 0.0
    %4140 = vmatprep.subr.mxu0 0.0
    %4141 = vmatpush2.msra.mxu0 0.0
    %4142 = vmatprep.subr.mxu0 0.0
    %4143 = vmatpush2.msra.mxu0 0.0
    %4144 = vmatprep.subr.mxu0 0.0
    %4145 = vmatpush2.msra.mxu0 0.0
    %4146 = vmatprep.subr.mxu0 0.0
    %4147 = vmatpush2.msra.mxu0 0.0
    %4148 = vmatprep.subr.mxu0 0.0
    %4149 = vmatpush2.msra.mxu0 0.0
    %4150 = vmatprep.subr.mxu0 0.0
    %4151 = vmatpush2.msra.mxu0 0.0
    %4152 = vmatprep.subr.mxu0 0.0
    %4153 = vmatpush2.msra.mxu0 0.0
    %4154 = vmatprep.subr.mxu0 0.0
    %4155 = vmatpush2.msra.mxu0 0.0
    %4156 = vmatprep.subr.mxu0 0.0
    %4157 = vmatpush2.msra.mxu0 0.0
    %4158 = vmatprep.subr.mxu0 0.0
    %4159 = vmatpush2.msra.mxu0 0.0
    %4160 = vmatprep.mubr.f32.mxu0 0.0
    %4161 = vmatmul.mubr.f32.gmra.mxu0 %v4094
    %v4162 = vpop.f32.mrf.mxu0
    %v4163 = vadd.f32 %v4091, %v4162
    %v4164 = vpop.f32.mrf.mxu0
    %4165 = vdwg.mxu0
    %4166 = vrot.lane.b32.xlu0 %v4014, 112
    %v4167 = vpop.permute.xlu0 %4166
    %4168 = vrot.lane.b32.xlu0 %v4012, 126
    %v4169 = vpop.permute.xlu0 %4168
    %v4171 = vsel %vm936, %v4167, 0
    %4173 = vmatprep.subr.mxu0 0.0
    %4174 = vmatpush1.msra.mxu0 0.0
    %4175 = vmatprep.subr.mxu0 0.0
    %4176 = vmatpush1.msra.mxu0 0.0
    %4177 = vmatprep.subr.mxu0 0.0
    %4178 = vmatpush1.msra.mxu0 0.0
    %4179 = vmatprep.subr.mxu0 0.0
    %4180 = vmatpush1.msra.mxu0 0.0
    %4181 = vmatprep.subr.mxu0 0.0
    %4182 = vmatpush1.msra.mxu0 0.0
    %4183 = vmatprep.subr.mxu0 0.0
    %4184 = vmatpush1.msra.mxu0 0.0
    %4185 = vmatprep.subr.mxu0 0.0
    %4186 = vmatpush1.msra.mxu0 0.0
    %4187 = vmatprep.subr.mxu0 0.0
    %4188 = vmatpush1.msra.mxu0 0.0
    %4189 = vmatprep.subr.mxu0 0.0
    %4190 = vmatpush1.msra.mxu0 0.0
    %4191 = vmatprep.subr.mxu0 0.0
    %4192 = vmatpush1.msra.mxu0 0.0
    %4193 = vmatprep.subr.mxu0 0.0
    %4194 = vmatpush1.msra.mxu0 0.0
    %4195 = vmatprep.subr.mxu0 0.0
    %4196 = vmatpush1.msra.mxu0 0.0
    %4197 = vmatprep.subr.mxu0 0.0
    %4198 = vmatpush1.msra.mxu0 0.0
    %4199 = vmatprep.subr.mxu0 0.0
    %4200 = vmatpush1.msra.mxu0 0.0
    %4201 = vmatprep.subr.mxu0 0.0
    %4202 = vmatpush1.msra.mxu0 0.0
    %4203 = vmatprep.subr.mxu0 0.0
    %4204 = vmatpush1.msra.mxu0 %v4169
    %4205 = vmatprep.subr.mxu0 0.0
    %4206 = vmatpush2.msra.mxu0 0.0
    %4207 = vmatprep.subr.mxu0 0.0
    %4208 = vmatpush2.msra.mxu0 0.0
    %4209 = vmatprep.subr.mxu0 0.0
    %4210 = vmatpush2.msra.mxu0 0.0
    %4211 = vmatprep.subr.mxu0 0.0
    %4212 = vmatpush2.msra.mxu0 0.0
    %4213 = vmatprep.subr.mxu0 0.0
    %4214 = vmatpush2.msra.mxu0 0.0
    %4215 = vmatprep.subr.mxu0 0.0
    %4216 = vmatpush2.msra.mxu0 0.0
    %4217 = vmatprep.subr.mxu0 0.0
    %4218 = vmatpush2.msra.mxu0 0.0
    %4219 = vmatprep.subr.mxu0 0.0
    %4220 = vmatpush2.msra.mxu0 0.0
    %4221 = vmatprep.subr.mxu0 0.0
    %4222 = vmatpush2.msra.mxu0 0.0
    %4223 = vmatprep.subr.mxu0 0.0
    %4224 = vmatpush2.msra.mxu0 0.0
    %4225 = vmatprep.subr.mxu0 0.0
    %4226 = vmatpush2.msra.mxu0 0.0
    %4227 = vmatprep.subr.mxu0 0.0
    %4228 = vmatpush2.msra.mxu0 0.0
    %4229 = vmatprep.subr.mxu0 0.0
    %4230 = vmatpush2.msra.mxu0 0.0
    %4231 = vmatprep.subr.mxu0 0.0
    %4232 = vmatpush2.msra.mxu0 0.0
    %4233 = vmatprep.subr.mxu0 0.0
    %4234 = vmatpush2.msra.mxu0 0.0
    %4235 = vmatprep.subr.mxu0 0.0
    %4236 = vmatpush2.msra.mxu0 0.0
    %4237 = vmatprep.mubr.f32.mxu0 0.0
    %4238 = vmatmul.mubr.f32.gmra.mxu0 %v4171
    %v4239 = vpop.f32.mrf.mxu0
    %v4240 = vadd.f32 0.0, %v4239
    %v4241 = vpop.f32.mrf.mxu0
    %4242 = vdwg.mxu0
    %v4243 = vadd.f32 %v4163, %v4240
    %4244 = vrot.lane.b32.xlu0 %v4014, 104
    %v4245 = vpop.permute.xlu0 %4244
    %4247 = vrot.lane.b32.xlu0 %v4012, 116
    %v4248 = vpop.permute.xlu0 %4247
    %4249 = vrot.lane.b32.xlu0 %v4013, 116
    %v4250 = vpop.permute.xlu0 %4249
    %v4251 = vsel %vm1166, %v4248, %v4250
    %v4253 = vsel %vm936, %v4245, 0
    %4255 = vmatprep.subr.mxu0 0.0
    %4256 = vmatpush1.msra.mxu0 0.0
    %4257 = vmatprep.subr.mxu0 0.0
    %4258 = vmatpush1.msra.mxu0 0.0
    %4259 = vmatprep.subr.mxu0 0.0
    %4260 = vmatpush1.msra.mxu0 0.0
    %4261 = vmatprep.subr.mxu0 0.0
    %4262 = vmatpush1.msra.mxu0 0.0
    %4263 = vmatprep.subr.mxu0 0.0
    %4264 = vmatpush1.msra.mxu0 0.0
    %4265 = vmatprep.subr.mxu0 0.0
    %4266 = vmatpush1.msra.mxu0 0.0
    %4267 = vmatprep.subr.mxu0 0.0
    %4268 = vmatpush1.msra.mxu0 0.0
    %4269 = vmatprep.subr.mxu0 0.0
    %4270 = vmatpush1.msra.mxu0 0.0
    %4271 = vmatprep.subr.mxu0 0.0
    %4272 = vmatpush1.msra.mxu0 0.0
    %4273 = vmatprep.subr.mxu0 0.0
    %4274 = vmatpush1.msra.mxu0 0.0
    %4275 = vmatprep.subr.mxu0 0.0
    %4276 = vmatpush1.msra.mxu0 0.0
    %4277 = vmatprep.subr.mxu0 0.0
    %4278 = vmatpush1.msra.mxu0 0.0
    %4279 = vmatprep.subr.mxu0 0.0
    %4280 = vmatpush1.msra.mxu0 0.0
    %4281 = vmatprep.subr.mxu0 0.0
    %4282 = vmatpush1.msra.mxu0 0.0
    %4283 = vmatprep.subr.mxu0 0.0
    %4284 = vmatpush1.msra.mxu0 0.0
    %4285 = vmatprep.subr.mxu0 0.0
    %4286 = vmatpush1.msra.mxu0 %v4251
    %4287 = vmatprep.subr.mxu0 0.0
    %4288 = vmatpush2.msra.mxu0 0.0
    %4289 = vmatprep.subr.mxu0 0.0
    %4290 = vmatpush2.msra.mxu0 0.0
    %4291 = vmatprep.subr.mxu0 0.0
    %4292 = vmatpush2.msra.mxu0 0.0
    %4293 = vmatprep.subr.mxu0 0.0
    %4294 = vmatpush2.msra.mxu0 0.0
    %4295 = vmatprep.subr.mxu0 0.0
    %4296 = vmatpush2.msra.mxu0 0.0
    %4297 = vmatprep.subr.mxu0 0.0
    %4298 = vmatpush2.msra.mxu0 0.0
    %4299 = vmatprep.subr.mxu0 0.0
    %4300 = vmatpush2.msra.mxu0 0.0
    %4301 = vmatprep.subr.mxu0 0.0
    %4302 = vmatpush2.msra.mxu0 0.0
    %4303 = vmatprep.subr.mxu0 0.0
    %4304 = vmatpush2.msra.mxu0 0.0
    %4305 = vmatprep.subr.mxu0 0.0
    %4306 = vmatpush2.msra.mxu0 0.0
    %4307 = vmatprep.subr.mxu0 0.0
    %4308 = vmatpush2.msra.mxu0 0.0
    %4309 = vmatprep.subr.mxu0 0.0
    %4310 = vmatpush2.msra.mxu0 0.0
    %4311 = vmatprep.subr.mxu0 0.0
    %4312 = vmatpush2.msra.mxu0 0.0
    %4313 = vmatprep.subr.mxu0 0.0
    %4314 = vmatpush2.msra.mxu0 0.0
    %4315 = vmatprep.subr.mxu0 0.0
    %4316 = vmatpush2.msra.mxu0 0.0
    %4317 = vmatprep.subr.mxu0 0.0
    %4318 = vmatpush2.msra.mxu0 0.0
    %4319 = vmatprep.mubr.f32.mxu0 0.0
    %4320 = vmatmul.mubr.f32.gmra.mxu0 %v4253
    %v4321 = vpop.f32.mrf.mxu0
    %v4322 = vadd.f32 0.0, %v4321
    %v4323 = vpop.f32.mrf.mxu0
    %4324 = vdwg.mxu0
    %v4325 = vadd.f32 %v4243, %v4322
    %4326 = vrot.lane.b32.xlu0 %v4014, 96
    %v4327 = vpop.permute.xlu0 %4326
    %4328 = vrot.lane.b32.xlu0 %v4012, 115
    %v4329 = vpop.permute.xlu0 %4328
    %4330 = vrot.lane.b32.xlu0 %v4013, 115
    %v4331 = vpop.permute.xlu0 %4330
    %v4332 = vsel %vm1248, %v4329, %v4331
    %v4334 = vsel %vm936, %v4327, 0
    %4336 = vmatprep.subr.mxu0 0.0
    %4337 = vmatpush1.msra.mxu0 0.0
    %4338 = vmatprep.subr.mxu0 0.0
    %4339 = vmatpush1.msra.mxu0 0.0
    %4340 = vmatprep.subr.mxu0 0.0
    %4341 = vmatpush1.msra.mxu0 0.0
    %4342 = vmatprep.subr.mxu0 0.0
    %4343 = vmatpush1.msra.mxu0 0.0
    %4344 = vmatprep.subr.mxu0 0.0
    %4345 = vmatpush1.msra.mxu0 0.0
    %4346 = vmatprep.subr.mxu0 0.0
    %4347 = vmatpush1.msra.mxu0 0.0
    %4348 = vmatprep.subr.mxu0 0.0
    %4349 = vmatpush1.msra.mxu0 0.0
    %4350 = vmatprep.subr.mxu0 0.0
    %4351 = vmatpush1.msra.mxu0 0.0
    %4352 = vmatprep.subr.mxu0 0.0
    %4353 = vmatpush1.msra.mxu0 0.0
    %4354 = vmatprep.subr.mxu0 0.0
    %4355 = vmatpush1.msra.mxu0 0.0
    %4356 = vmatprep.subr.mxu0 0.0
    %4357 = vmatpush1.msra.mxu0 0.0
    %4358 = vmatprep.subr.mxu0 0.0
    %4359 = vmatpush1.msra.mxu0 0.0
    %4360 = vmatprep.subr.mxu0 0.0
    %4361 = vmatpush1.msra.mxu0 0.0
    %4362 = vmatprep.subr.mxu0 0.0
    %4363 = vmatpush1.msra.mxu0 0.0
    %4364 = vmatprep.subr.mxu0 0.0
    %4365 = vmatpush1.msra.mxu0 0.0
    %4366 = vmatprep.subr.mxu0 0.0
    %4367 = vmatpush1.msra.mxu0 %v4332
    %4368 = vmatprep.subr.mxu0 0.0
    %4369 = vmatpush2.msra.mxu0 0.0
    %4370 = vmatprep.subr.mxu0 0.0
    %4371 = vmatpush2.msra.mxu0 0.0
    %4372 = vmatprep.subr.mxu0 0.0
    %4373 = vmatpush2.msra.mxu0 0.0
    %4374 = vmatprep.subr.mxu0 0.0
    %4375 = vmatpush2.msra.mxu0 0.0
    %4376 = vmatprep.subr.mxu0 0.0
    %4377 = vmatpush2.msra.mxu0 0.0
    %4378 = vmatprep.subr.mxu0 0.0
    %4379 = vmatpush2.msra.mxu0 0.0
    %4380 = vmatprep.subr.mxu0 0.0
    %4381 = vmatpush2.msra.mxu0 0.0
    %4382 = vmatprep.subr.mxu0 0.0
    %4383 = vmatpush2.msra.mxu0 0.0
    %4384 = vmatprep.subr.mxu0 0.0
    %4385 = vmatpush2.msra.mxu0 0.0
    %4386 = vmatprep.subr.mxu0 0.0
    %4387 = vmatpush2.msra.mxu0 0.0
    %4388 = vmatprep.subr.mxu0 0.0
    %4389 = vmatpush2.msra.mxu0 0.0
    %4390 = vmatprep.subr.mxu0 0.0
    %4391 = vmatpush2.msra.mxu0 0.0
    %4392 = vmatprep.subr.mxu0 0.0
    %4393 = vmatpush2.msra.mxu0 0.0
    %4394 = vmatprep.subr.mxu0 0.0
    %4395 = vmatpush2.msra.mxu0 0.0
    %4396 = vmatprep.subr.mxu0 0.0
    %4397 = vmatpush2.msra.mxu0 0.0
    %4398 = vmatprep.subr.mxu0 0.0
    %4399 = vmatpush2.msra.mxu0 0.0
    %4400 = vmatprep.mubr.f32.mxu0 0.0
    %4401 = vmatmul.mubr.f32.gmra.mxu0 %v4334
    %v4402 = vpop.f32.mrf.mxu0
    %v4403 = vadd.f32 0.0, %v4402
    %v4404 = vpop.f32.mrf.mxu0
    %4405 = vdwg.mxu0
    %v4406 = vadd.f32 %v4325, %v4403
    %4407 = vrot.lane.b32.xlu0 %v4014, 88
    %v4408 = vpop.permute.xlu0 %4407
    %4409 = vrot.lane.b32.xlu0 %v4012, 114
    %v4410 = vpop.permute.xlu0 %4409
    %4411 = vrot.lane.b32.xlu0 %v4013, 114
    %v4412 = vpop.permute.xlu0 %4411
    %v4413 = vsel %vm1330, %v4410, %v4412
    %v4415 = vsel %vm936, %v4408, 0
    %4417 = vmatprep.subr.mxu0 0.0
    %4418 = vmatpush1.msra.mxu0 0.0
    %4419 = vmatprep.subr.mxu0 0.0
    %4420 = vmatpush1.msra.mxu0 0.0
    %4421 = vmatprep.subr.mxu0 0.0
    %4422 = vmatpush1.msra.mxu0 0.0
    %4423 = vmatprep.subr.mxu0 0.0
    %4424 = vmatpush1.msra.mxu0 0.0
    %4425 = vmatprep.subr.mxu0 0.0
    %4426 = vmatpush1.msra.mxu0 0.0
    %4427 = vmatprep.subr.mxu0 0.0
    %4428 = vmatpush1.msra.mxu0 0.0
    %4429 = vmatprep.subr.mxu0 0.0
    %4430 = vmatpush1.msra.mxu0 0.0
    %4431 = vmatprep.subr.mxu0 0.0
    %4432 = vmatpush1.msra.mxu0 0.0
    %4433 = vmatprep.subr.mxu0 0.0
    %4434 = vmatpush1.msra.mxu0 0.0
    %4435 = vmatprep.subr.mxu0 0.0
    %4436 = vmatpush1.msra.mxu0 0.0
    %4437 = vmatprep.subr.mxu0 0.0
    %4438 = vmatpush1.msra.mxu0 0.0
    %4439 = vmatprep.subr.mxu0 0.0
    %4440 = vmatpush1.msra.mxu0 0.0
    %4441 = vmatprep.subr.mxu0 0.0
    %4442 = vmatpush1.msra.mxu0 0.0
    %4443 = vmatprep.subr.mxu0 0.0
    %4444 = vmatpush1.msra.mxu0 0.0
    %4445 = vmatprep.subr.mxu0 0.0
    %4446 = vmatpush1.msra.mxu0 0.0
    %4447 = vmatprep.subr.mxu0 0.0
    %4448 = vmatpush1.msra.mxu0 %v4413
    %4449 = vmatprep.subr.mxu0 0.0
    %4450 = vmatpush2.msra.mxu0 0.0
    %4451 = vmatprep.subr.mxu0 0.0
    %4452 = vmatpush2.msra.mxu0 0.0
    %4453 = vmatprep.subr.mxu0 0.0
    %4454 = vmatpush2.msra.mxu0 0.0
    %4455 = vmatprep.subr.mxu0 0.0
    %4456 = vmatpush2.msra.mxu0 0.0
    %4457 = vmatprep.subr.mxu0 0.0
    %4458 = vmatpush2.msra.mxu0 0.0
    %4459 = vmatprep.subr.mxu0 0.0
    %4460 = vmatpush2.msra.mxu0 0.0
    %4461 = vmatprep.subr.mxu0 0.0
    %4462 = vmatpush2.msra.mxu0 0.0
    %4463 = vmatprep.subr.mxu0 0.0
    %4464 = vmatpush2.msra.mxu0 0.0
    %4465 = vmatprep.subr.mxu0 0.0
    %4466 = vmatpush2.msra.mxu0 0.0
    %4467 = vmatprep.subr.mxu0 0.0
    %4468 = vmatpush2.msra.mxu0 0.0
    %4469 = vmatprep.subr.mxu0 0.0
    %4470 = vmatpush2.msra.mxu0 0.0
    %4471 = vmatprep.subr.mxu0 0.0
    %4472 = vmatpush2.msra.mxu0 0.0
    %4473 = vmatprep.subr.mxu0 0.0
    %4474 = vmatpush2.msra.mxu0 0.0
    %4475 = vmatprep.subr.mxu0 0.0
    %4476 = vmatpush2.msra.mxu0 0.0
    %4477 = vmatprep.subr.mxu0 0.0
    %4478 = vmatpush2.msra.mxu0 0.0
    %4479 = vmatprep.subr.mxu0 0.0
    %4480 = vmatpush2.msra.mxu0 0.0
    %4481 = vmatprep.mubr.f32.mxu0 0.0
    %4482 = vmatmul.mubr.f32.gmra.mxu0 %v4415
    %v4483 = vpop.f32.mrf.mxu0
    %v4484 = vadd.f32 0.0, %v4483
    %v4485 = vpop.f32.mrf.mxu0
    %4486 = vdwg.mxu0
    %v4487 = vadd.f32 %v4406, %v4484
    %4488 = vrot.lane.b32.xlu0 %v4014, 80
    %v4489 = vpop.permute.xlu0 %4488
    %4490 = vrot.lane.b32.xlu0 %v4012, 104
    %v4491 = vpop.permute.xlu0 %4490
    %4492 = vrot.lane.b32.xlu0 %v4013, 104
    %v4493 = vpop.permute.xlu0 %4492
    %v4494 = vsel %vm1412, %v4491, %v4493
    %v4496 = vsel %vm936, %v4489, 0
    %4498 = vmatprep.subr.mxu0 0.0
    %4499 = vmatpush1.msra.mxu0 0.0
    %4500 = vmatprep.subr.mxu0 0.0
    %4501 = vmatpush1.msra.mxu0 0.0
    %4502 = vmatprep.subr.mxu0 0.0
    %4503 = vmatpush1.msra.mxu0 0.0
    %4504 = vmatprep.subr.mxu0 0.0
    %4505 = vmatpush1.msra.mxu0 0.0
    %4506 = vmatprep.subr.mxu0 0.0
    %4507 = vmatpush1.msra.mxu0 0.0
    %4508 = vmatprep.subr.mxu0 0.0
    %4509 = vmatpush1.msra.mxu0 0.0
    %4510 = vmatprep.subr.mxu0 0.0
    %4511 = vmatpush1.msra.mxu0 0.0
    %4512 = vmatprep.subr.mxu0 0.0
    %4513 = vmatpush1.msra.mxu0 0.0
    %4514 = vmatprep.subr.mxu0 0.0
    %4515 = vmatpush1.msra.mxu0 0.0
    %4516 = vmatprep.subr.mxu0 0.0
    %4517 = vmatpush1.msra.mxu0 0.0
    %4518 = vmatprep.subr.mxu0 0.0
    %4519 = vmatpush1.msra.mxu0 0.0
    %4520 = vmatprep.subr.mxu0 0.0
    %4521 = vmatpush1.msra.mxu0 0.0
    %4522 = vmatprep.subr.mxu0 0.0
    %4523 = vmatpush1.msra.mxu0 0.0
    %4524 = vmatprep.subr.mxu0 0.0
    %4525 = vmatpush1.msra.mxu0 0.0
    %4526 = vmatprep.subr.mxu0 0.0
    %4527 = vmatpush1.msra.mxu0 0.0
    %4528 = vmatprep.subr.mxu0 0.0
    %4529 = vmatpush1.msra.mxu0 %v4494
    %4530 = vmatprep.subr.mxu0 0.0
    %4531 = vmatpush2.msra.mxu0 0.0
    %4532 = vmatprep.subr.mxu0 0.0
    %4533 = vmatpush2.msra.mxu0 0.0
    %4534 = vmatprep.subr.mxu0 0.0
    %4535 = vmatpush2.msra.mxu0 0.0
    %4536 = vmatprep.subr.mxu0 0.0
    %4537 = vmatpush2.msra.mxu0 0.0
    %4538 = vmatprep.subr.mxu0 0.0
    %4539 = vmatpush2.msra.mxu0 0.0
    %4540 = vmatprep.subr.mxu0 0.0
    %4541 = vmatpush2.msra.mxu0 0.0
    %4542 = vmatprep.subr.mxu0 0.0
    %4543 = vmatpush2.msra.mxu0 0.0
    %4544 = vmatprep.subr.mxu0 0.0
    %4545 = vmatpush2.msra.mxu0 0.0
    %4546 = vmatprep.subr.mxu0 0.0
    %4547 = vmatpush2.msra.mxu0 0.0
    %4548 = vmatprep.subr.mxu0 0.0
    %4549 = vmatpush2.msra.mxu0 0.0
    %4550 = vmatprep.subr.mxu0 0.0
    %4551 = vmatpush2.msra.mxu0 0.0
    %4552 = vmatprep.subr.mxu0 0.0
    %4553 = vmatpush2.msra.mxu0 0.0
    %4554 = vmatprep.subr.mxu0 0.0
    %4555 = vmatpush2.msra.mxu0 0.0
    %4556 = vmatprep.subr.mxu0 0.0
    %4557 = vmatpush2.msra.mxu0 0.0
    %4558 = vmatprep.subr.mxu0 0.0
    %4559 = vmatpush2.msra.mxu0 0.0
    %4560 = vmatprep.subr.mxu0 0.0
    %4561 = vmatpush2.msra.mxu0 0.0
    %4562 = vmatprep.mubr.f32.mxu0 0.0
    %4563 = vmatmul.mubr.f32.gmra.mxu0 %v4496
    %v4564 = vpop.f32.mrf.mxu0
    %v4565 = vadd.f32 0.0, %v4564
    %v4566 = vpop.f32.mrf.mxu0
    %4567 = vdwg.mxu0
    %v4568 = vadd.f32 %v4487, %v4565
    %4569 = vrot.lane.b32.xlu0 %v4014, 72
    %v4570 = vpop.permute.xlu0 %4569
    %4571 = vrot.lane.b32.xlu0 %v4012, 103
    %v4572 = vpop.permute.xlu0 %4571
    %4573 = vrot.lane.b32.xlu0 %v4013, 103
    %v4574 = vpop.permute.xlu0 %4573
    %v4575 = vsel %vm1494, %v4572, %v4574
    %v4577 = vsel %vm936, %v4570, 0
    %4579 = vmatprep.subr.mxu0 0.0
    %4580 = vmatpush1.msra.mxu0 0.0
    %4581 = vmatprep.subr.mxu0 0.0
    %4582 = vmatpush1.msra.mxu0 0.0
    %4583 = vmatprep.subr.mxu0 0.0
    %4584 = vmatpush1.msra.mxu0 0.0
    %4585 = vmatprep.subr.mxu0 0.0
    %4586 = vmatpush1.msra.mxu0 0.0
    %4587 = vmatprep.subr.mxu0 0.0
    %4588 = vmatpush1.msra.mxu0 0.0
    %4589 = vmatprep.subr.mxu0 0.0
    %4590 = vmatpush1.msra.mxu0 0.0
    %4591 = vmatprep.subr.mxu0 0.0
    %4592 = vmatpush1.msra.mxu0 0.0
    %4593 = vmatprep.subr.mxu0 0.0
    %4594 = vmatpush1.msra.mxu0 0.0
    %4595 = vmatprep.subr.mxu0 0.0
    %4596 = vmatpush1.msra.mxu0 0.0
    %4597 = vmatprep.subr.mxu0 0.0
    %4598 = vmatpush1.msra.mxu0 0.0
    %4599 = vmatprep.subr.mxu0 0.0
    %4600 = vmatpush1.msra.mxu0 0.0
    %4601 = vmatprep.subr.mxu0 0.0
    %4602 = vmatpush1.msra.mxu0 0.0
    %4603 = vmatprep.subr.mxu0 0.0
    %4604 = vmatpush1.msra.mxu0 0.0
    %4605 = vmatprep.subr.mxu0 0.0
    %4606 = vmatpush1.msra.mxu0 0.0
    %4607 = vmatprep.subr.mxu0 0.0
    %4608 = vmatpush1.msra.mxu0 0.0
    %4609 = vmatprep.subr.mxu0 0.0
    %4610 = vmatpush1.msra.mxu0 %v4575
    %4611 = vmatprep.subr.mxu0 0.0
    %4612 = vmatpush2.msra.mxu0 0.0
    %4613 = vmatprep.subr.mxu0 0.0
    %4614 = vmatpush2.msra.mxu0 0.0
    %4615 = vmatprep.subr.mxu0 0.0
    %4616 = vmatpush2.msra.mxu0 0.0
    %4617 = vmatprep.subr.mxu0 0.0
    %4618 = vmatpush2.msra.mxu0 0.0
    %4619 = vmatprep.subr.mxu0 0.0
    %4620 = vmatpush2.msra.mxu0 0.0
    %4621 = vmatprep.subr.mxu0 0.0
    %4622 = vmatpush2.msra.mxu0 0.0
    %4623 = vmatprep.subr.mxu0 0.0
    %4624 = vmatpush2.msra.mxu0 0.0
    %4625 = vmatprep.subr.mxu0 0.0
    %4626 = vmatpush2.msra.mxu0 0.0
    %4627 = vmatprep.subr.mxu0 0.0
    %4628 = vmatpush2.msra.mxu0 0.0
    %4629 = vmatprep.subr.mxu0 0.0
    %4630 = vmatpush2.msra.mxu0 0.0
    %4631 = vmatprep.subr.mxu0 0.0
    %4632 = vmatpush2.msra.mxu0 0.0
    %4633 = vmatprep.subr.mxu0 0.0
    %4634 = vmatpush2.msra.mxu0 0.0
    %4635 = vmatprep.subr.mxu0 0.0
    %4636 = vmatpush2.msra.mxu0 0.0
    %4637 = vmatprep.subr.mxu0 0.0
    %4638 = vmatpush2.msra.mxu0 0.0
    %4639 = vmatprep.subr.mxu0 0.0
    %4640 = vmatpush2.msra.mxu0 0.0
    %4641 = vmatprep.subr.mxu0 0.0
    %4642 = vmatpush2.msra.mxu0 0.0
    %4643 = vmatprep.mubr.f32.mxu0 0.0
    %4644 = vmatmul.mubr.f32.gmra.mxu0 %v4577
    %v4645 = vpop.f32.mrf.mxu0
    %v4646 = vadd.f32 0.0, %v4645
    %v4647 = vpop.f32.mrf.mxu0
    %4648 = vdwg.mxu0
    %v4649 = vadd.f32 %v4568, %v4646
    %4650 = vrot.lane.b32.xlu0 %v4014, 64
    %v4651 = vpop.permute.xlu0 %4650
    %4652 = vrot.lane.b32.xlu0 %v4012, 102
    %v4653 = vpop.permute.xlu0 %4652
    %4654 = vrot.lane.b32.xlu0 %v4013, 102
    %v4655 = vpop.permute.xlu0 %4654
    %v4656 = vsel %vm1576, %v4653, %v4655
    %v4658 = vsel %vm936, %v4651, 0
    %4660 = vmatprep.subr.mxu0 0.0
    %4661 = vmatpush1.msra.mxu0 0.0
    %4662 = vmatprep.subr.mxu0 0.0
    %4663 = vmatpush1.msra.mxu0 0.0
    %4664 = vmatprep.subr.mxu0 0.0
    %4665 = vmatpush1.msra.mxu0 0.0
    %4666 = vmatprep.subr.mxu0 0.0
    %4667 = vmatpush1.msra.mxu0 0.0
    %4668 = vmatprep.subr.mxu0 0.0
    %4669 = vmatpush1.msra.mxu0 0.0
    %4670 = vmatprep.subr.mxu0 0.0
    %4671 = vmatpush1.msra.mxu0 0.0
    %4672 = vmatprep.subr.mxu0 0.0
    %4673 = vmatpush1.msra.mxu0 0.0
    %4674 = vmatprep.subr.mxu0 0.0
    %4675 = vmatpush1.msra.mxu0 0.0
    %4676 = vmatprep.subr.mxu0 0.0
    %4677 = vmatpush1.msra.mxu0 0.0
    %4678 = vmatprep.subr.mxu0 0.0
    %4679 = vmatpush1.msra.mxu0 0.0
    %4680 = vmatprep.subr.mxu0 0.0
    %4681 = vmatpush1.msra.mxu0 0.0
    %4682 = vmatprep.subr.mxu0 0.0
    %4683 = vmatpush1.msra.mxu0 0.0
    %4684 = vmatprep.subr.mxu0 0.0
    %4685 = vmatpush1.msra.mxu0 0.0
    %4686 = vmatprep.subr.mxu0 0.0
    %4687 = vmatpush1.msra.mxu0 0.0
    %4688 = vmatprep.subr.mxu0 0.0
    %4689 = vmatpush1.msra.mxu0 0.0
    %4690 = vmatprep.subr.mxu0 0.0
    %4691 = vmatpush1.msra.mxu0 %v4656
    %4692 = vmatprep.subr.mxu0 0.0
    %4693 = vmatpush2.msra.mxu0 0.0
    %4694 = vmatprep.subr.mxu0 0.0
    %4695 = vmatpush2.msra.mxu0 0.0
    %4696 = vmatprep.subr.mxu0 0.0
    %4697 = vmatpush2.msra.mxu0 0.0
    %4698 = vmatprep.subr.mxu0 0.0
    %4699 = vmatpush2.msra.mxu0 0.0
    %4700 = vmatprep.subr.mxu0 0.0
    %4701 = vmatpush2.msra.mxu0 0.0
    %4702 = vmatprep.subr.mxu0 0.0
    %4703 = vmatpush2.msra.mxu0 0.0
    %4704 = vmatprep.subr.mxu0 0.0
    %4705 = vmatpush2.msra.mxu0 0.0
    %4706 = vmatprep.subr.mxu0 0.0
    %4707 = vmatpush2.msra.mxu0 0.0
    %4708 = vmatprep.subr.mxu0 0.0
    %4709 = vmatpush2.msra.mxu0 0.0
    %4710 = vmatprep.subr.mxu0 0.0
    %4711 = vmatpush2.msra.mxu0 0.0
    %4712 = vmatprep.subr.mxu0 0.0
    %4713 = vmatpush2.msra.mxu0 0.0
    %4714 = vmatprep.subr.mxu0 0.0
    %4715 = vmatpush2.msra.mxu0 0.0
    %4716 = vmatprep.subr.mxu0 0.0
    %4717 = vmatpush2.msra.mxu0 0.0
    %4718 = vmatprep.subr.mxu0 0.0
    %4719 = vmatpush2.msra.mxu0 0.0
    %4720 = vmatprep.subr.mxu0 0.0
    %4721 = vmatpush2.msra.mxu0 0.0
    %4722 = vmatprep.subr.mxu0 0.0
    %4723 = vmatpush2.msra.mxu0 0.0
    %4724 = vmatprep.mubr.f32.mxu0 0.0
    %4725 = vmatmul.mubr.f32.gmra.mxu0 %v4658
    %v4726 = vpop.f32.mrf.mxu0
    %v4727 = vadd.f32 0.0, %v4726
    %v4728 = vpop.f32.mrf.mxu0
    %4729 = vdwg.mxu0
    %v4730 = vadd.f32 %v4649, %v4727
    %v4731 = vmax.f32 %v4730, 0.0
    %4732 = vst.msk [vmem:[#allocation4] sm:$0xff] %vm160, %v4731
    %4734 = vrot.lane.b32.xlu0 %v4731, 126
    %v4735 = vpop.permute.xlu0 %4734
    %4737 = vst.msk [vmem:[#allocation4] sm:$0xff] %vm1658, %v4735
    %4738 = vrot.lane.b32.xlu0 %v4731, 124
    %v4739 = vpop.permute.xlu0 %4738
    %4741 = vst.msk [vmem:[#allocation4] sm:$0xff] %vm1663, %v4739
    %4742 = vrot.lane.b32.xlu0 %v4731, 122
    %v4743 = vpop.permute.xlu0 %4742
    %4745 = vst.msk [vmem:[#allocation4] sm:$0xff] %vm1668, %v4743
    %4746 = vrot.lane.b32.xlu0 %v4731, 120
    %v4747 = vpop.permute.xlu0 %4746
    %4749 = vst.msk [vmem:[#allocation4] sm:$0xff] %vm1673, %v4747
    %4750 = vrot.lane.b32.xlu0 %v4731, 118
    %v4751 = vpop.permute.xlu0 %4750
    %4753 = vst.msk [vmem:[#allocation4] sm:$0xff] %vm1678, %v4751
    %4754 = vrot.lane.b32.xlu0 %v4731, 116
    %v4755 = vpop.permute.xlu0 %4754
    %4757 = vst.msk [vmem:[#allocation4] sm:$0xff] %vm1683, %v4755
    %4758 = vrot.lane.b32.xlu0 %v4731, 114
    %v4759 = vpop.permute.xlu0 %4758
    %4761 = vst.msk [vmem:[#allocation4] sm:$0xff] %vm1688, %v4759
    %4762 = vrot.lane.b32.xlu0 %v4731, 112
    %v4763 = vpop.permute.xlu0 %4762
    %4765 = vst.msk [vmem:[#allocation4] sm:$0xff] %vm1693, %v4763
    %4766 = vrot.lane.b32.xlu0 %v4731, 110
    %v4767 = vpop.permute.xlu0 %4766
    %4769 = vst.msk [vmem:[#allocation4] sm:$0xff] %vm1698, %v4767
    %v4770 = vld [vmem:[#allocation4] sm:$0xff]
    %v4771 = vld [vmem:[%s7] sm:$0xff]
    %4773 = vrot.lane.b32.xlu0 %v4771, 120
    %v4774 = vpop.permute.xlu0 %4773
    %4776 = vrot.lane.b32.xlu0 %v4770, 127
    %v4777 = vpop.permute.xlu0 %4776
    %v4779 = vsel %vm936, %v4774, 0
    %4781 = vmatprep.subr.mxu0 0.0
    %4782 = vmatpush1.msra.mxu0 0.0
    %4783 = vmatprep.subr.mxu0 0.0
    %4784 = vmatpush1.msra.mxu0 0.0
    %4785 = vmatprep.subr.mxu0 0.0
    %4786 = vmatpush1.msra.mxu0 0.0
    %4787 = vmatprep.subr.mxu0 0.0
    %4788 = vmatpush1.msra.mxu0 0.0
    %4789 = vmatprep.subr.mxu0 0.0
    %4790 = vmatpush1.msra.mxu0 0.0
    %4791 = vmatprep.subr.mxu0 0.0
    %4792 = vmatpush1.msra.mxu0 0.0
    %4793 = vmatprep.subr.mxu0 0.0
    %4794 = vmatpush1.msra.mxu0 0.0
    %4795 = vmatprep.subr.mxu0 0.0
    %4796 = vmatpush1.msra.mxu0 0.0
    %4797 = vmatprep.subr.mxu0 0.0
    %4798 = vmatpush1.msra.mxu0 0.0
    %4799 = vmatprep.subr.mxu0 0.0
    %4800 = vmatpush1.msra.mxu0 0.0
    %4801 = vmatprep.subr.mxu0 0.0
    %4802 = vmatpush1.msra.mxu0 0.0
    %4803 = vmatprep.subr.mxu0 0.0
    %4804 = vmatpush1.msra.mxu0 0.0
    %4805 = vmatprep.subr.mxu0 0.0
    %4806 = vmatpush1.msra.mxu0 0.0
    %4807 = vmatprep.subr.mxu0 0.0
    %4808 = vmatpush1.msra.mxu0 0.0
    %4809 = vmatprep.subr.mxu0 0.0
    %4810 = vmatpush1.msra.mxu0 0.0
    %4811 = vmatprep.subr.mxu0 0.0
    %4812 = vmatpush1.msra.mxu0 %v4777
    %4813 = vmatprep.subr.mxu0 0.0
    %4814 = vmatpush2.msra.mxu0 0.0
    %4815 = vmatprep.subr.mxu0 0.0
    %4816 = vmatpush2.msra.mxu0 0.0
    %4817 = vmatprep.subr.mxu0 0.0
    %4818 = vmatpush2.msra.mxu0 0.0
    %4819 = vmatprep.subr.mxu0 0.0
    %4820 = vmatpush2.msra.mxu0 0.0
    %4821 = vmatprep.subr.mxu0 0.0
    %4822 = vmatpush2.msra.mxu0 0.0
    %4823 = vmatprep.subr.mxu0 0.0
    %4824 = vmatpush2.msra.mxu0 0.0
    %4825 = vmatprep.subr.mxu0 0.0
    %4826 = vmatpush2.msra.mxu0 0.0
    %4827 = vmatprep.subr.mxu0 0.0
    %4828 = vmatpush2.msra.mxu0 0.0
    %4829 = vmatprep.subr.mxu0 0.0
    %4830 = vmatpush2.msra.mxu0 0.0
    %4831 = vmatprep.subr.mxu0 0.0
    %4832 = vmatpush2.msra.mxu0 0.0
    %4833 = vmatprep.subr.mxu0 0.0
    %4834 = vmatpush2.msra.mxu0 0.0
    %4835 = vmatprep.subr.mxu0 0.0
    %4836 = vmatpush2.msra.mxu0 0.0
    %4837 = vmatprep.subr.mxu0 0.0
    %4838 = vmatpush2.msra.mxu0 0.0
    %4839 = vmatprep.subr.mxu0 0.0
    %4840 = vmatpush2.msra.mxu0 0.0
    %4841 = vmatprep.subr.mxu0 0.0
    %4842 = vmatpush2.msra.mxu0 0.0
    %4843 = vmatprep.subr.mxu0 0.0
    %4844 = vmatpush2.msra.mxu0 0.0
    %4845 = vmatprep.mubr.f32.mxu0 0.0
    %4846 = vmatmul.mubr.f32.gmra.mxu0 %v4779
    %v4847 = vpop.f32.mrf.mxu0
    %v4848 = vadd.f32 0.0, %v4847
    %v4849 = vpop.f32.mrf.mxu0
    %4850 = vdwg.mxu0
    %v4851 = vsel %vm936, %v4771, 0
    %4853 = vmatprep.subr.mxu0 0.0
    %4854 = vmatpush1.msra.mxu0 0.0
    %4855 = vmatprep.subr.mxu0 0.0
    %4856 = vmatpush1.msra.mxu0 0.0
    %4857 = vmatprep.subr.mxu0 0.0
    %4858 = vmatpush1.msra.mxu0 0.0
    %4859 = vmatprep.subr.mxu0 0.0
    %4860 = vmatpush1.msra.mxu0 0.0
    %4861 = vmatprep.subr.mxu0 0.0
    %4862 = vmatpush1.msra.mxu0 0.0
    %4863 = vmatprep.subr.mxu0 0.0
    %4864 = vmatpush1.msra.mxu0 0.0
    %4865 = vmatprep.subr.mxu0 0.0
    %4866 = vmatpush1.msra.mxu0 0.0
    %4867 = vmatprep.subr.mxu0 0.0
    %4868 = vmatpush1.msra.mxu0 0.0
    %4869 = vmatprep.subr.mxu0 0.0
    %4870 = vmatpush1.msra.mxu0 0.0
    %4871 = vmatprep.subr.mxu0 0.0
    %4872 = vmatpush1.msra.mxu0 0.0
    %4873 = vmatprep.subr.mxu0 0.0
    %4874 = vmatpush1.msra.mxu0 0.0
    %4875 = vmatprep.subr.mxu0 0.0
    %4876 = vmatpush1.msra.mxu0 0.0
    %4877 = vmatprep.subr.mxu0 0.0
    %4878 = vmatpush1.msra.mxu0 0.0
    %4879 = vmatprep.subr.mxu0 0.0
    %4880 = vmatpush1.msra.mxu0 0.0
    %4881 = vmatprep.subr.mxu0 0.0
    %4882 = vmatpush1.msra.mxu0 0.0
    %4883 = vmatprep.subr.mxu0 0.0
    %4884 = vmatpush1.msra.mxu0 %v4770
    %4885 = vmatprep.subr.mxu0 0.0
    %4886 = vmatpush2.msra.mxu0 0.0
    %4887 = vmatprep.subr.mxu0 0.0
    %4888 = vmatpush2.msra.mxu0 0.0
    %4889 = vmatprep.subr.mxu0 0.0
    %4890 = vmatpush2.msra.mxu0 0.0
    %4891 = vmatprep.subr.mxu0 0.0
    %4892 = vmatpush2.msra.mxu0 0.0
    %4893 = vmatprep.subr.mxu0 0.0
    %4894 = vmatpush2.msra.mxu0 0.0
    %4895 = vmatprep.subr.mxu0 0.0
    %4896 = vmatpush2.msra.mxu0 0.0
    %4897 = vmatprep.subr.mxu0 0.0
    %4898 = vmatpush2.msra.mxu0 0.0
    %4899 = vmatprep.subr.mxu0 0.0
    %4900 = vmatpush2.msra.mxu0 0.0
    %4901 = vmatprep.subr.mxu0 0.0
    %4902 = vmatpush2.msra.mxu0 0.0
    %4903 = vmatprep.subr.mxu0 0.0
    %4904 = vmatpush2.msra.mxu0 0.0
    %4905 = vmatprep.subr.mxu0 0.0
    %4906 = vmatpush2.msra.mxu0 0.0
    %4907 = vmatprep.subr.mxu0 0.0
    %4908 = vmatpush2.msra.mxu0 0.0
    %4909 = vmatprep.subr.mxu0 0.0
    %4910 = vmatpush2.msra.mxu0 0.0
    %4911 = vmatprep.subr.mxu0 0.0
    %4912 = vmatpush2.msra.mxu0 0.0
    %4913 = vmatprep.subr.mxu0 0.0
    %4914 = vmatpush2.msra.mxu0 0.0
    %4915 = vmatprep.subr.mxu0 0.0
    %4916 = vmatpush2.msra.mxu0 0.0
    %4917 = vmatprep.mubr.f32.mxu0 0.0
    %4918 = vmatmul.mubr.f32.gmra.mxu0 %v4851
    %v4919 = vpop.f32.mrf.mxu0
    %v4920 = vadd.f32 %v4848, %v4919
    %v4921 = vpop.f32.mrf.mxu0
    %4922 = vdwg.mxu0
    %4923 = vrot.lane.b32.xlu0 %v4771, 112
    %v4924 = vpop.permute.xlu0 %4923
    %4925 = vrot.lane.b32.xlu0 %v4770, 126
    %v4926 = vpop.permute.xlu0 %4925
    %v4928 = vsel %vm936, %v4924, 0
    %4930 = vmatprep.subr.mxu0 0.0
    %4931 = vmatpush1.msra.mxu0 0.0
    %4932 = vmatprep.subr.mxu0 0.0
    %4933 = vmatpush1.msra.mxu0 0.0
    %4934 = vmatprep.subr.mxu0 0.0
    %4935 = vmatpush1.msra.mxu0 0.0
    %4936 = vmatprep.subr.mxu0 0.0
    %4937 = vmatpush1.msra.mxu0 0.0
    %4938 = vmatprep.subr.mxu0 0.0
    %4939 = vmatpush1.msra.mxu0 0.0
    %4940 = vmatprep.subr.mxu0 0.0
    %4941 = vmatpush1.msra.mxu0 0.0
    %4942 = vmatprep.subr.mxu0 0.0
    %4943 = vmatpush1.msra.mxu0 0.0
    %4944 = vmatprep.subr.mxu0 0.0
    %4945 = vmatpush1.msra.mxu0 0.0
    %4946 = vmatprep.subr.mxu0 0.0
    %4947 = vmatpush1.msra.mxu0 0.0
    %4948 = vmatprep.subr.mxu0 0.0
    %4949 = vmatpush1.msra.mxu0 0.0
    %4950 = vmatprep.subr.mxu0 0.0
    %4951 = vmatpush1.msra.mxu0 0.0
    %4952 = vmatprep.subr.mxu0 0.0
    %4953 = vmatpush1.msra.mxu0 0.0
    %4954 = vmatprep.subr.mxu0 0.0
    %4955 = vmatpush1.msra.mxu0 0.0
    %4956 = vmatprep.subr.mxu0 0.0
    %4957 = vmatpush1.msra.mxu0 0.0
    %4958 = vmatprep.subr.mxu0 0.0
    %4959 = vmatpush1.msra.mxu0 0.0
    %4960 = vmatprep.subr.mxu0 0.0
    %4961 = vmatpush1.msra.mxu0 %v4926
    %4962 = vmatprep.subr.mxu0 0.0
    %4963 = vmatpush2.msra.mxu0 0.0
    %4964 = vmatprep.subr.mxu0 0.0
    %4965 = vmatpush2.msra.mxu0 0.0
    %4966 = vmatprep.subr.mxu0 0.0
    %4967 = vmatpush2.msra.mxu0 0.0
    %4968 = vmatprep.subr.mxu0 0.0
    %4969 = vmatpush2.msra.mxu0 0.0
    %4970 = vmatprep.subr.mxu0 0.0
    %4971 = vmatpush2.msra.mxu0 0.0
    %4972 = vmatprep.subr.mxu0 0.0
    %4973 = vmatpush2.msra.mxu0 0.0
    %4974 = vmatprep.subr.mxu0 0.0
    %4975 = vmatpush2.msra.mxu0 0.0
    %4976 = vmatprep.subr.mxu0 0.0
    %4977 = vmatpush2.msra.mxu0 0.0
    %4978 = vmatprep.subr.mxu0 0.0
    %4979 = vmatpush2.msra.mxu0 0.0
    %4980 = vmatprep.subr.mxu0 0.0
    %4981 = vmatpush2.msra.mxu0 0.0
    %4982 = vmatprep.subr.mxu0 0.0
    %4983 = vmatpush2.msra.mxu0 0.0
    %4984 = vmatprep.subr.mxu0 0.0
    %4985 = vmatpush2.msra.mxu0 0.0
    %4986 = vmatprep.subr.mxu0 0.0
    %4987 = vmatpush2.msra.mxu0 0.0
    %4988 = vmatprep.subr.mxu0 0.0
    %4989 = vmatpush2.msra.mxu0 0.0
    %4990 = vmatprep.subr.mxu0 0.0
    %4991 = vmatpush2.msra.mxu0 0.0
    %4992 = vmatprep.subr.mxu0 0.0
    %4993 = vmatpush2.msra.mxu0 0.0
    %4994 = vmatprep.mubr.f32.mxu0 0.0
    %4995 = vmatmul.mubr.f32.gmra.mxu0 %v4928
    %v4996 = vpop.f32.mrf.mxu0
    %v4997 = vadd.f32 0.0, %v4996
    %v4998 = vpop.f32.mrf.mxu0
    %4999 = vdwg.mxu0
    %v5000 = vadd.f32 %v4920, %v4997
    %5001 = vrot.lane.b32.xlu0 %v4771, 104
    %v5002 = vpop.permute.xlu0 %5001
    %5003 = vrot.lane.b32.xlu0 %v4770, 118
    %v5004 = vpop.permute.xlu0 %5003
    %v5006 = vsel %vm936, %v5002, 0
    %5008 = vmatprep.subr.mxu0 0.0
    %5009 = vmatpush1.msra.mxu0 0.0
    %5010 = vmatprep.subr.mxu0 0.0
    %5011 = vmatpush1.msra.mxu0 0.0
    %5012 = vmatprep.subr.mxu0 0.0
    %5013 = vmatpush1.msra.mxu0 0.0
    %5014 = vmatprep.subr.mxu0 0.0
    %5015 = vmatpush1.msra.mxu0 0.0
    %5016 = vmatprep.subr.mxu0 0.0
    %5017 = vmatpush1.msra.mxu0 0.0
    %5018 = vmatprep.subr.mxu0 0.0
    %5019 = vmatpush1.msra.mxu0 0.0
    %5020 = vmatprep.subr.mxu0 0.0
    %5021 = vmatpush1.msra.mxu0 0.0
    %5022 = vmatprep.subr.mxu0 0.0
    %5023 = vmatpush1.msra.mxu0 0.0
    %5024 = vmatprep.subr.mxu0 0.0
    %5025 = vmatpush1.msra.mxu0 0.0
    %5026 = vmatprep.subr.mxu0 0.0
    %5027 = vmatpush1.msra.mxu0 0.0
    %5028 = vmatprep.subr.mxu0 0.0
    %5029 = vmatpush1.msra.mxu0 0.0
    %5030 = vmatprep.subr.mxu0 0.0
    %5031 = vmatpush1.msra.mxu0 0.0
    %5032 = vmatprep.subr.mxu0 0.0
    %5033 = vmatpush1.msra.mxu0 0.0
    %5034 = vmatprep.subr.mxu0 0.0
    %5035 = vmatpush1.msra.mxu0 0.0
    %5036 = vmatprep.subr.mxu0 0.0
    %5037 = vmatpush1.msra.mxu0 0.0
    %5038 = vmatprep.subr.mxu0 0.0
    %5039 = vmatpush1.msra.mxu0 %v5004
    %5040 = vmatprep.subr.mxu0 0.0
    %5041 = vmatpush2.msra.mxu0 0.0
    %5042 = vmatprep.subr.mxu0 0.0
    %5043 = vmatpush2.msra.mxu0 0.0
    %5044 = vmatprep.subr.mxu0 0.0
    %5045 = vmatpush2.msra.mxu0 0.0
    %5046 = vmatprep.subr.mxu0 0.0
    %5047 = vmatpush2.msra.mxu0 0.0
    %5048 = vmatprep.subr.mxu0 0.0
    %5049 = vmatpush2.msra.mxu0 0.0
    %5050 = vmatprep.subr.mxu0 0.0
    %5051 = vmatpush2.msra.mxu0 0.0
    %5052 = vmatprep.subr.mxu0 0.0
    %5053 = vmatpush2.msra.mxu0 0.0
    %5054 = vmatprep.subr.mxu0 0.0
    %5055 = vmatpush2.msra.mxu0 0.0
    %5056 = vmatprep.subr.mxu0 0.0
    %5057 = vmatpush2.msra.mxu0 0.0
    %5058 = vmatprep.subr.mxu0 0.0
    %5059 = vmatpush2.msra.mxu0 0.0
    %5060 = vmatprep.subr.mxu0 0.0
    %5061 = vmatpush2.msra.mxu0 0.0
    %5062 = vmatprep.subr.mxu0 0.0
    %5063 = vmatpush2.msra.mxu0 0.0
    %5064 = vmatprep.subr.mxu0 0.0
    %5065 = vmatpush2.msra.mxu0 0.0
    %5066 = vmatprep.subr.mxu0 0.0
    %5067 = vmatpush2.msra.mxu0 0.0
    %5068 = vmatprep.subr.mxu0 0.0
    %5069 = vmatpush2.msra.mxu0 0.0
    %5070 = vmatprep.subr.mxu0 0.0
    %5071 = vmatpush2.msra.mxu0 0.0
    %5072 = vmatprep.mubr.f32.mxu0 0.0
    %5073 = vmatmul.mubr.f32.gmra.mxu0 %v5006
    %v5074 = vpop.f32.mrf.mxu0
    %v5075 = vadd.f32 0.0, %v5074
    %v5076 = vpop.f32.mrf.mxu0
    %5077 = vdwg.mxu0
    %v5078 = vadd.f32 %v5000, %v5075
    %5079 = vrot.lane.b32.xlu0 %v4771, 96
    %v5080 = vpop.permute.xlu0 %5079
    %5081 = vrot.lane.b32.xlu0 %v4770, 117
    %v5082 = vpop.permute.xlu0 %5081
    %v5084 = vsel %vm936, %v5080, 0
    %5086 = vmatprep.subr.mxu0 0.0
    %5087 = vmatpush1.msra.mxu0 0.0
    %5088 = vmatprep.subr.mxu0 0.0
    %5089 = vmatpush1.msra.mxu0 0.0
    %5090 = vmatprep.subr.mxu0 0.0
    %5091 = vmatpush1.msra.mxu0 0.0
    %5092 = vmatprep.subr.mxu0 0.0
    %5093 = vmatpush1.msra.mxu0 0.0
    %5094 = vmatprep.subr.mxu0 0.0
    %5095 = vmatpush1.msra.mxu0 0.0
    %5096 = vmatprep.subr.mxu0 0.0
    %5097 = vmatpush1.msra.mxu0 0.0
    %5098 = vmatprep.subr.mxu0 0.0
    %5099 = vmatpush1.msra.mxu0 0.0
    %5100 = vmatprep.subr.mxu0 0.0
    %5101 = vmatpush1.msra.mxu0 0.0
    %5102 = vmatprep.subr.mxu0 0.0
    %5103 = vmatpush1.msra.mxu0 0.0
    %5104 = vmatprep.subr.mxu0 0.0
    %5105 = vmatpush1.msra.mxu0 0.0
    %5106 = vmatprep.subr.mxu0 0.0
    %5107 = vmatpush1.msra.mxu0 0.0
    %5108 = vmatprep.subr.mxu0 0.0
    %5109 = vmatpush1.msra.mxu0 0.0
    %5110 = vmatprep.subr.mxu0 0.0
    %5111 = vmatpush1.msra.mxu0 0.0
    %5112 = vmatprep.subr.mxu0 0.0
    %5113 = vmatpush1.msra.mxu0 0.0
    %5114 = vmatprep.subr.mxu0 0.0
    %5115 = vmatpush1.msra.mxu0 0.0
    %5116 = vmatprep.subr.mxu0 0.0
    %5117 = vmatpush1.msra.mxu0 %v5082
    %5118 = vmatprep.subr.mxu0 0.0
    %5119 = vmatpush2.msra.mxu0 0.0
    %5120 = vmatprep.subr.mxu0 0.0
    %5121 = vmatpush2.msra.mxu0 0.0
    %5122 = vmatprep.subr.mxu0 0.0
    %5123 = vmatpush2.msra.mxu0 0.0
    %5124 = vmatprep.subr.mxu0 0.0
    %5125 = vmatpush2.msra.mxu0 0.0
    %5126 = vmatprep.subr.mxu0 0.0
    %5127 = vmatpush2.msra.mxu0 0.0
    %5128 = vmatprep.subr.mxu0 0.0
    %5129 = vmatpush2.msra.mxu0 0.0
    %5130 = vmatprep.subr.mxu0 0.0
    %5131 = vmatpush2.msra.mxu0 0.0
    %5132 = vmatprep.subr.mxu0 0.0
    %5133 = vmatpush2.msra.mxu0 0.0
    %5134 = vmatprep.subr.mxu0 0.0
    %5135 = vmatpush2.msra.mxu0 0.0
    %5136 = vmatprep.subr.mxu0 0.0
    %5137 = vmatpush2.msra.mxu0 0.0
    %5138 = vmatprep.subr.mxu0 0.0
    %5139 = vmatpush2.msra.mxu0 0.0
    %5140 = vmatprep.subr.mxu0 0.0
    %5141 = vmatpush2.msra.mxu0 0.0
    %5142 = vmatprep.subr.mxu0 0.0
    %5143 = vmatpush2.msra.mxu0 0.0
    %5144 = vmatprep.subr.mxu0 0.0
    %5145 = vmatpush2.msra.mxu0 0.0
    %5146 = vmatprep.subr.mxu0 0.0
    %5147 = vmatpush2.msra.mxu0 0.0
    %5148 = vmatprep.subr.mxu0 0.0
    %5149 = vmatpush2.msra.mxu0 0.0
    %5150 = vmatprep.mubr.f32.mxu0 0.0
    %5151 = vmatmul.mubr.f32.gmra.mxu0 %v5084
    %v5152 = vpop.f32.mrf.mxu0
    %v5153 = vadd.f32 0.0, %v5152
    %v5154 = vpop.f32.mrf.mxu0
    %5155 = vdwg.mxu0
    %v5156 = vadd.f32 %v5078, %v5153
    %5157 = vrot.lane.b32.xlu0 %v4771, 88
    %v5158 = vpop.permute.xlu0 %5157
    %5159 = vrot.lane.b32.xlu0 %v4770, 116
    %v5160 = vpop.permute.xlu0 %5159
    %v5162 = vsel %vm936, %v5158, 0
    %5164 = vmatprep.subr.mxu0 0.0
    %5165 = vmatpush1.msra.mxu0 0.0
    %5166 = vmatprep.subr.mxu0 0.0
    %5167 = vmatpush1.msra.mxu0 0.0
    %5168 = vmatprep.subr.mxu0 0.0
    %5169 = vmatpush1.msra.mxu0 0.0
    %5170 = vmatprep.subr.mxu0 0.0
    %5171 = vmatpush1.msra.mxu0 0.0
    %5172 = vmatprep.subr.mxu0 0.0
    %5173 = vmatpush1.msra.mxu0 0.0
    %5174 = vmatprep.subr.mxu0 0.0
    %5175 = vmatpush1.msra.mxu0 0.0
    %5176 = vmatprep.subr.mxu0 0.0
    %5177 = vmatpush1.msra.mxu0 0.0
    %5178 = vmatprep.subr.mxu0 0.0
    %5179 = vmatpush1.msra.mxu0 0.0
    %5180 = vmatprep.subr.mxu0 0.0
    %5181 = vmatpush1.msra.mxu0 0.0
    %5182 = vmatprep.subr.mxu0 0.0
    %5183 = vmatpush1.msra.mxu0 0.0
    %5184 = vmatprep.subr.mxu0 0.0
    %5185 = vmatpush1.msra.mxu0 0.0
    %5186 = vmatprep.subr.mxu0 0.0
    %5187 = vmatpush1.msra.mxu0 0.0
    %5188 = vmatprep.subr.mxu0 0.0
    %5189 = vmatpush1.msra.mxu0 0.0
    %5190 = vmatprep.subr.mxu0 0.0
    %5191 = vmatpush1.msra.mxu0 0.0
    %5192 = vmatprep.subr.mxu0 0.0
    %5193 = vmatpush1.msra.mxu0 0.0
    %5194 = vmatprep.subr.mxu0 0.0
    %5195 = vmatpush1.msra.mxu0 %v5160
    %5196 = vmatprep.subr.mxu0 0.0
    %5197 = vmatpush2.msra.mxu0 0.0
    %5198 = vmatprep.subr.mxu0 0.0
    %5199 = vmatpush2.msra.mxu0 0.0
    %5200 = vmatprep.subr.mxu0 0.0
    %5201 = vmatpush2.msra.mxu0 0.0
    %5202 = vmatprep.subr.mxu0 0.0
    %5203 = vmatpush2.msra.mxu0 0.0
    %5204 = vmatprep.subr.mxu0 0.0
    %5205 = vmatpush2.msra.mxu0 0.0
    %5206 = vmatprep.subr.mxu0 0.0
    %5207 = vmatpush2.msra.mxu0 0.0
    %5208 = vmatprep.subr.mxu0 0.0
    %5209 = vmatpush2.msra.mxu0 0.0
    %5210 = vmatprep.subr.mxu0 0.0
    %5211 = vmatpush2.msra.mxu0 0.0
    %5212 = vmatprep.subr.mxu0 0.0
    %5213 = vmatpush2.msra.mxu0 0.0
    %5214 = vmatprep.subr.mxu0 0.0
    %5215 = vmatpush2.msra.mxu0 0.0
    %5216 = vmatprep.subr.mxu0 0.0
    %5217 = vmatpush2.msra.mxu0 0.0
    %5218 = vmatprep.subr.mxu0 0.0
    %5219 = vmatpush2.msra.mxu0 0.0
    %5220 = vmatprep.subr.mxu0 0.0
    %5221 = vmatpush2.msra.mxu0 0.0
    %5222 = vmatprep.subr.mxu0 0.0
    %5223 = vmatpush2.msra.mxu0 0.0
    %5224 = vmatprep.subr.mxu0 0.0
    %5225 = vmatpush2.msra.mxu0 0.0
    %5226 = vmatprep.subr.mxu0 0.0
    %5227 = vmatpush2.msra.mxu0 0.0
    %5228 = vmatprep.mubr.f32.mxu0 0.0
    %5229 = vmatmul.mubr.f32.gmra.mxu0 %v5162
    %v5230 = vpop.f32.mrf.mxu0
    %v5231 = vadd.f32 0.0, %v5230
    %v5232 = vpop.f32.mrf.mxu0
    %5233 = vdwg.mxu0
    %v5234 = vadd.f32 %v5156, %v5231
    %5235 = vrot.lane.b32.xlu0 %v4771, 80
    %v5236 = vpop.permute.xlu0 %5235
    %5237 = vrot.lane.b32.xlu0 %v4770, 108
    %v5238 = vpop.permute.xlu0 %5237
    %v5240 = vsel %vm936, %v5236, 0
    %5242 = vmatprep.subr.mxu0 0.0
    %5243 = vmatpush1.msra.mxu0 0.0
    %5244 = vmatprep.subr.mxu0 0.0
    %5245 = vmatpush1.msra.mxu0 0.0
    %5246 = vmatprep.subr.mxu0 0.0
    %5247 = vmatpush1.msra.mxu0 0.0
    %5248 = vmatprep.subr.mxu0 0.0
    %5249 = vmatpush1.msra.mxu0 0.0
    %5250 = vmatprep.subr.mxu0 0.0
    %5251 = vmatpush1.msra.mxu0 0.0
    %5252 = vmatprep.subr.mxu0 0.0
    %5253 = vmatpush1.msra.mxu0 0.0
    %5254 = vmatprep.subr.mxu0 0.0
    %5255 = vmatpush1.msra.mxu0 0.0
    %5256 = vmatprep.subr.mxu0 0.0
    %5257 = vmatpush1.msra.mxu0 0.0
    %5258 = vmatprep.subr.mxu0 0.0
    %5259 = vmatpush1.msra.mxu0 0.0
    %5260 = vmatprep.subr.mxu0 0.0
    %5261 = vmatpush1.msra.mxu0 0.0
    %5262 = vmatprep.subr.mxu0 0.0
    %5263 = vmatpush1.msra.mxu0 0.0
    %5264 = vmatprep.subr.mxu0 0.0
    %5265 = vmatpush1.msra.mxu0 0.0
    %5266 = vmatprep.subr.mxu0 0.0
    %5267 = vmatpush1.msra.mxu0 0.0
    %5268 = vmatprep.subr.mxu0 0.0
    %5269 = vmatpush1.msra.mxu0 0.0
    %5270 = vmatprep.subr.mxu0 0.0
    %5271 = vmatpush1.msra.mxu0 0.0
    %5272 = vmatprep.subr.mxu0 0.0
    %5273 = vmatpush1.msra.mxu0 %v5238
    %5274 = vmatprep.subr.mxu0 0.0
    %5275 = vmatpush2.msra.mxu0 0.0
    %5276 = vmatprep.subr.mxu0 0.0
    %5277 = vmatpush2.msra.mxu0 0.0
    %5278 = vmatprep.subr.mxu0 0.0
    %5279 = vmatpush2.msra.mxu0 0.0
    %5280 = vmatprep.subr.mxu0 0.0
    %5281 = vmatpush2.msra.mxu0 0.0
    %5282 = vmatprep.subr.mxu0 0.0
    %5283 = vmatpush2.msra.mxu0 0.0
    %5284 = vmatprep.subr.mxu0 0.0
    %5285 = vmatpush2.msra.mxu0 0.0
    %5286 = vmatprep.subr.mxu0 0.0
    %5287 = vmatpush2.msra.mxu0 0.0
    %5288 = vmatprep.subr.mxu0 0.0
    %5289 = vmatpush2.msra.mxu0 0.0
    %5290 = vmatprep.subr.mxu0 0.0
    %5291 = vmatpush2.msra.mxu0 0.0
    %5292 = vmatprep.subr.mxu0 0.0
    %5293 = vmatpush2.msra.mxu0 0.0
    %5294 = vmatprep.subr.mxu0 0.0
    %5295 = vmatpush2.msra.mxu0 0.0
    %5296 = vmatprep.subr.mxu0 0.0
    %5297 = vmatpush2.msra.mxu0 0.0
    %5298 = vmatprep.subr.mxu0 0.0
    %5299 = vmatpush2.msra.mxu0 0.0
    %5300 = vmatprep.subr.mxu0 0.0
    %5301 = vmatpush2.msra.mxu0 0.0
    %5302 = vmatprep.subr.mxu0 0.0
    %5303 = vmatpush2.msra.mxu0 0.0
    %5304 = vmatprep.subr.mxu0 0.0
    %5305 = vmatpush2.msra.mxu0 0.0
    %5306 = vmatprep.mubr.f32.mxu0 0.0
    %5307 = vmatmul.mubr.f32.gmra.mxu0 %v5240
    %v5308 = vpop.f32.mrf.mxu0
    %v5309 = vadd.f32 0.0, %v5308
    %v5310 = vpop.f32.mrf.mxu0
    %5311 = vdwg.mxu0
    %v5312 = vadd.f32 %v5234, %v5309
    %5313 = vrot.lane.b32.xlu0 %v4771, 72
    %v5314 = vpop.permute.xlu0 %5313
    %5315 = vrot.lane.b32.xlu0 %v4770, 107
    %v5316 = vpop.permute.xlu0 %5315
    %v5318 = vsel %vm936, %v5314, 0
    %5320 = vmatprep.subr.mxu0 0.0
    %5321 = vmatpush1.msra.mxu0 0.0
    %5322 = vmatprep.subr.mxu0 0.0
    %5323 = vmatpush1.msra.mxu0 0.0
    %5324 = vmatprep.subr.mxu0 0.0
    %5325 = vmatpush1.msra.mxu0 0.0
    %5326 = vmatprep.subr.mxu0 0.0
    %5327 = vmatpush1.msra.mxu0 0.0
    %5328 = vmatprep.subr.mxu0 0.0
    %5329 = vmatpush1.msra.mxu0 0.0
    %5330 = vmatprep.subr.mxu0 0.0
    %5331 = vmatpush1.msra.mxu0 0.0
    %5332 = vmatprep.subr.mxu0 0.0
    %5333 = vmatpush1.msra.mxu0 0.0
    %5334 = vmatprep.subr.mxu0 0.0
    %5335 = vmatpush1.msra.mxu0 0.0
    %5336 = vmatprep.subr.mxu0 0.0
    %5337 = vmatpush1.msra.mxu0 0.0
    %5338 = vmatprep.subr.mxu0 0.0
    %5339 = vmatpush1.msra.mxu0 0.0
    %5340 = vmatprep.subr.mxu0 0.0
    %5341 = vmatpush1.msra.mxu0 0.0
    %5342 = vmatprep.subr.mxu0 0.0
    %5343 = vmatpush1.msra.mxu0 0.0
    %5344 = vmatprep.subr.mxu0 0.0
    %5345 = vmatpush1.msra.mxu0 0.0
    %5346 = vmatprep.subr.mxu0 0.0
    %5347 = vmatpush1.msra.mxu0 0.0
    %5348 = vmatprep.subr.mxu0 0.0
    %5349 = vmatpush1.msra.mxu0 0.0
    %5350 = vmatprep.subr.mxu0 0.0
    %5351 = vmatpush1.msra.mxu0 %v5316
    %5352 = vmatprep.subr.mxu0 0.0
    %5353 = vmatpush2.msra.mxu0 0.0
    %5354 = vmatprep.subr.mxu0 0.0
    %5355 = vmatpush2.msra.mxu0 0.0
    %5356 = vmatprep.subr.mxu0 0.0
    %5357 = vmatpush2.msra.mxu0 0.0
    %5358 = vmatprep.subr.mxu0 0.0
    %5359 = vmatpush2.msra.mxu0 0.0
    %5360 = vmatprep.subr.mxu0 0.0
    %5361 = vmatpush2.msra.mxu0 0.0
    %5362 = vmatprep.subr.mxu0 0.0
    %5363 = vmatpush2.msra.mxu0 0.0
    %5364 = vmatprep.subr.mxu0 0.0
    %5365 = vmatpush2.msra.mxu0 0.0
    %5366 = vmatprep.subr.mxu0 0.0
    %5367 = vmatpush2.msra.mxu0 0.0
    %5368 = vmatprep.subr.mxu0 0.0
    %5369 = vmatpush2.msra.mxu0 0.0
    %5370 = vmatprep.subr.mxu0 0.0
    %5371 = vmatpush2.msra.mxu0 0.0
    %5372 = vmatprep.subr.mxu0 0.0
    %5373 = vmatpush2.msra.mxu0 0.0
    %5374 = vmatprep.subr.mxu0 0.0
    %5375 = vmatpush2.msra.mxu0 0.0
    %5376 = vmatprep.subr.mxu0 0.0
    %5377 = vmatpush2.msra.mxu0 0.0
    %5378 = vmatprep.subr.mxu0 0.0
    %5379 = vmatpush2.msra.mxu0 0.0
    %5380 = vmatprep.subr.mxu0 0.0
    %5381 = vmatpush2.msra.mxu0 0.0
    %5382 = vmatprep.subr.mxu0 0.0
    %5383 = vmatpush2.msra.mxu0 0.0
    %5384 = vmatprep.mubr.f32.mxu0 0.0
    %5385 = vmatmul.mubr.f32.gmra.mxu0 %v5318
    %v5386 = vpop.f32.mrf.mxu0
    %v5387 = vadd.f32 0.0, %v5386
    %v5388 = vpop.f32.mrf.mxu0
    %5389 = vdwg.mxu0
    %v5390 = vadd.f32 %v5312, %v5387
    %5391 = vrot.lane.b32.xlu0 %v4771, 64
    %v5392 = vpop.permute.xlu0 %5391
    %5393 = vrot.lane.b32.xlu0 %v4770, 106
    %v5394 = vpop.permute.xlu0 %5393
    %v5396 = vsel %vm936, %v5392, 0
    %5398 = vmatprep.subr.mxu0 0.0
    %5399 = vmatpush1.msra.mxu0 0.0
    %5400 = vmatprep.subr.mxu0 0.0
    %5401 = vmatpush1.msra.mxu0 0.0
    %5402 = vmatprep.subr.mxu0 0.0
    %5403 = vmatpush1.msra.mxu0 0.0
    %5404 = vmatprep.subr.mxu0 0.0
    %5405 = vmatpush1.msra.mxu0 0.0
    %5406 = vmatprep.subr.mxu0 0.0
    %5407 = vmatpush1.msra.mxu0 0.0
    %5408 = vmatprep.subr.mxu0 0.0
    %5409 = vmatpush1.msra.mxu0 0.0
    %5410 = vmatprep.subr.mxu0 0.0
    %5411 = vmatpush1.msra.mxu0 0.0
    %5412 = vmatprep.subr.mxu0 0.0
    %5413 = vmatpush1.msra.mxu0 0.0
    %5414 = vmatprep.subr.mxu0 0.0
    %5415 = vmatpush1.msra.mxu0 0.0
    %5416 = vmatprep.subr.mxu0 0.0
    %5417 = vmatpush1.msra.mxu0 0.0
    %5418 = vmatprep.subr.mxu0 0.0
    %5419 = vmatpush1.msra.mxu0 0.0
    %5420 = vmatprep.subr.mxu0 0.0
    %5421 = vmatpush1.msra.mxu0 0.0
    %5422 = vmatprep.subr.mxu0 0.0
    %5423 = vmatpush1.msra.mxu0 0.0
    %5424 = vmatprep.subr.mxu0 0.0
    %5425 = vmatpush1.msra.mxu0 0.0
    %5426 = vmatprep.subr.mxu0 0.0
    %5427 = vmatpush1.msra.mxu0 0.0
    %5428 = vmatprep.subr.mxu0 0.0
    %5429 = vmatpush1.msra.mxu0 %v5394
    %5430 = vmatprep.subr.mxu0 0.0
    %5431 = vmatpush2.msra.mxu0 0.0
    %5432 = vmatprep.subr.mxu0 0.0
    %5433 = vmatpush2.msra.mxu0 0.0
    %5434 = vmatprep.subr.mxu0 0.0
    %5435 = vmatpush2.msra.mxu0 0.0
    %5436 = vmatprep.subr.mxu0 0.0
    %5437 = vmatpush2.msra.mxu0 0.0
    %5438 = vmatprep.subr.mxu0 0.0
    %5439 = vmatpush2.msra.mxu0 0.0
    %5440 = vmatprep.subr.mxu0 0.0
    %5441 = vmatpush2.msra.mxu0 0.0
    %5442 = vmatprep.subr.mxu0 0.0
    %5443 = vmatpush2.msra.mxu0 0.0
    %5444 = vmatprep.subr.mxu0 0.0
    %5445 = vmatpush2.msra.mxu0 0.0
    %5446 = vmatprep.subr.mxu0 0.0
    %5447 = vmatpush2.msra.mxu0 0.0
    %5448 = vmatprep.subr.mxu0 0.0
    %5449 = vmatpush2.msra.mxu0 0.0
    %5450 = vmatprep.subr.mxu0 0.0
    %5451 = vmatpush2.msra.mxu0 0.0
    %5452 = vmatprep.subr.mxu0 0.0
    %5453 = vmatpush2.msra.mxu0 0.0
    %5454 = vmatprep.subr.mxu0 0.0
    %5455 = vmatpush2.msra.mxu0 0.0
    %5456 = vmatprep.subr.mxu0 0.0
    %5457 = vmatpush2.msra.mxu0 0.0
    %5458 = vmatprep.subr.mxu0 0.0
    %5459 = vmatpush2.msra.mxu0 0.0
    %5460 = vmatprep.subr.mxu0 0.0
    %5461 = vmatpush2.msra.mxu0 0.0
    %5462 = vmatprep.mubr.f32.mxu0 0.0
    %5463 = vmatmul.mubr.f32.gmra.mxu0 %v5396
    %v5464 = vpop.f32.mrf.mxu0
    %v5465 = vadd.f32 0.0, %v5464
    %v5466 = vpop.f32.mrf.mxu0
    %5467 = vdwg.mxu0
    %v5468 = vadd.f32 %v5390, %v5465
    %v5470 = vadd.f32 %v5468, %v4653
    %v5471 = vmax.f32 %v5470, 0.0
    %5473 = vrot.lane.b32.xlu0 %v5471, 26
    %v5474 = vpop.permute.xlu0 %5473
    %5476 = vst.msk [vmem:[#allocation3] sm:$0xff] %vm889, %v5474
    %5477 = vrot.lane.b32.xlu0 %v4012, 100
    %v5478 = vpop.permute.xlu0 %5477
    %v5480 = vadd.f32 %v5468, %v5478
    %v5481 = vmax.f32 %v5480, 0.0
    %5483 = vrot.lane.b32.xlu0 %v5481, 28
    %v5484 = vpop.permute.xlu0 %5483
    %5486 = vst.msk [vmem:[#allocation3] sm:$0xff] %vm894, %v5484
    %5487 = vrot.lane.b32.xlu0 %v4012, 98
    %v5488 = vpop.permute.xlu0 %5487
    %v5490 = vadd.f32 %v5468, %v5488
    %v5491 = vmax.f32 %v5490, 0.0
    %5493 = vrot.lane.b32.xlu0 %v5491, 30
    %v5494 = vpop.permute.xlu0 %5493
    %5496 = vst.msk [vmem:[#allocation3] sm:$0xff] %vm899, %v5494
    %5497 = vrot.lane.b32.xlu0 %v4012, 96
    %v5498 = vpop.permute.xlu0 %5497
    %v5500 = vadd.f32 %v5468, %v5498
    %v5501 = vmax.f32 %v5500, 0.0
    %5503 = vrot.lane.b32.xlu0 %v5501, 32
    %v5504 = vpop.permute.xlu0 %5503
    %5506 = vst.msk [vmem:[#allocation3] sm:$0xff] %vm904, %v5504
    %5507 = vrot.lane.b32.xlu0 %v4012, 94
    %v5508 = vpop.permute.xlu0 %5507
    %v5510 = vadd.f32 %v5468, %v5508
    %v5511 = vmax.f32 %v5510, 0.0
    %5513 = vrot.lane.b32.xlu0 %v5511, 34
    %v5514 = vpop.permute.xlu0 %5513
    %5516 = vst.msk [vmem:[#allocation3] sm:$0xff] %vm909, %v5514
    %5517 = vrot.lane.b32.xlu0 %v4012, 92
    %v5518 = vpop.permute.xlu0 %5517
    %v5520 = vadd.f32 %v5468, %v5518
    %v5521 = vmax.f32 %v5520, 0.0
    %5523 = vrot.lane.b32.xlu0 %v5521, 36
    %v5524 = vpop.permute.xlu0 %5523
    %5526 = vst.msk [vmem:[#allocation3] sm:$0xff] %vm914, %v5524
    %5527 = vrot.lane.b32.xlu0 %v4012, 90
    %v5528 = vpop.permute.xlu0 %5527
    %v5530 = vadd.f32 %v5468, %v5528
    %v5531 = vmax.f32 %v5530, 0.0
    %5533 = vrot.lane.b32.xlu0 %v5531, 38
    %v5534 = vpop.permute.xlu0 %5533
    %5536 = vst.msk [vmem:[#allocation3] sm:$0xff] %vm919, %v5534
    %5537 = vrot.lane.b32.xlu0 %v4012, 88
    %v5538 = vpop.permute.xlu0 %5537
    %v5540 = vadd.f32 %v5468, %v5538
    %v5541 = vmax.f32 %v5540, 0.0
    %5543 = vrot.lane.b32.xlu0 %v5541, 40
    %v5544 = vpop.permute.xlu0 %5543
    %5546 = vst.msk [vmem:[#allocation3] sm:$0xff] %vm924, %v5544
    %v5547 = vld [vmem:[#allocation3] sm:$0xff]
    %v5548 = vld [vmem:[#allocation3 + $0x8] sm:$0xff]
    %v5549 = vld [vmem:[%s8] sm:$0xff]
    %5551 = vrot.lane.b32.xlu0 %v5549, 120
    %v5552 = vpop.permute.xlu0 %5551
    %5554 = vrot.lane.b32.xlu0 %v5547, 127
    %v5555 = vpop.permute.xlu0 %5554
    %v5557 = vsel %vm936, %v5552, 0
    %5559 = vmatprep.subr.mxu0 0.0
    %5560 = vmatpush1.msra.mxu0 0.0
    %5561 = vmatprep.subr.mxu0 0.0
    %5562 = vmatpush1.msra.mxu0 0.0
    %5563 = vmatprep.subr.mxu0 0.0
    %5564 = vmatpush1.msra.mxu0 0.0
    %5565 = vmatprep.subr.mxu0 0.0
    %5566 = vmatpush1.msra.mxu0 0.0
    %5567 = vmatprep.subr.mxu0 0.0
    %5568 = vmatpush1.msra.mxu0 0.0
    %5569 = vmatprep.subr.mxu0 0.0
    %5570 = vmatpush1.msra.mxu0 0.0
    %5571 = vmatprep.subr.mxu0 0.0
    %5572 = vmatpush1.msra.mxu0 0.0
    %5573 = vmatprep.subr.mxu0 0.0
    %5574 = vmatpush1.msra.mxu0 0.0
    %5575 = vmatprep.subr.mxu0 0.0
    %5576 = vmatpush1.msra.mxu0 0.0
    %5577 = vmatprep.subr.mxu0 0.0
    %5578 = vmatpush1.msra.mxu0 0.0
    %5579 = vmatprep.subr.mxu0 0.0
    %5580 = vmatpush1.msra.mxu0 0.0
    %5581 = vmatprep.subr.mxu0 0.0
    %5582 = vmatpush1.msra.mxu0 0.0
    %5583 = vmatprep.subr.mxu0 0.0
    %5584 = vmatpush1.msra.mxu0 0.0
    %5585 = vmatprep.subr.mxu0 0.0
    %5586 = vmatpush1.msra.mxu0 0.0
    %5587 = vmatprep.subr.mxu0 0.0
    %5588 = vmatpush1.msra.mxu0 0.0
    %5589 = vmatprep.subr.mxu0 0.0
    %5590 = vmatpush1.msra.mxu0 %v5555
    %5591 = vmatprep.subr.mxu0 0.0
    %5592 = vmatpush2.msra.mxu0 0.0
    %5593 = vmatprep.subr.mxu0 0.0
    %5594 = vmatpush2.msra.mxu0 0.0
    %5595 = vmatprep.subr.mxu0 0.0
    %5596 = vmatpush2.msra.mxu0 0.0
    %5597 = vmatprep.subr.mxu0 0.0
    %5598 = vmatpush2.msra.mxu0 0.0
    %5599 = vmatprep.subr.mxu0 0.0
    %5600 = vmatpush2.msra.mxu0 0.0
    %5601 = vmatprep.subr.mxu0 0.0
    %5602 = vmatpush2.msra.mxu0 0.0
    %5603 = vmatprep.subr.mxu0 0.0
    %5604 = vmatpush2.msra.mxu0 0.0
    %5605 = vmatprep.subr.mxu0 0.0
    %5606 = vmatpush2.msra.mxu0 0.0
    %5607 = vmatprep.subr.mxu0 0.0
    %5608 = vmatpush2.msra.mxu0 0.0
    %5609 = vmatprep.subr.mxu0 0.0
    %5610 = vmatpush2.msra.mxu0 0.0
    %5611 = vmatprep.subr.mxu0 0.0
    %5612 = vmatpush2.msra.mxu0 0.0
    %5613 = vmatprep.subr.mxu0 0.0
    %5614 = vmatpush2.msra.mxu0 0.0
    %5615 = vmatprep.subr.mxu0 0.0
    %5616 = vmatpush2.msra.mxu0 0.0
    %5617 = vmatprep.subr.mxu0 0.0
    %5618 = vmatpush2.msra.mxu0 0.0
    %5619 = vmatprep.subr.mxu0 0.0
    %5620 = vmatpush2.msra.mxu0 0.0
    %5621 = vmatprep.subr.mxu0 0.0
    %5622 = vmatpush2.msra.mxu0 0.0
    %5623 = vmatprep.mubr.f32.mxu0 0.0
    %5624 = vmatmul.mubr.f32.gmra.mxu0 %v5557
    %v5625 = vpop.f32.mrf.mxu0
    %v5626 = vadd.f32 0.0, %v5625
    %v5627 = vpop.f32.mrf.mxu0
    %5628 = vdwg.mxu0
    %v5629 = vsel %vm936, %v5549, 0
    %5631 = vmatprep.subr.mxu0 0.0
    %5632 = vmatpush1.msra.mxu0 0.0
    %5633 = vmatprep.subr.mxu0 0.0
    %5634 = vmatpush1.msra.mxu0 0.0
    %5635 = vmatprep.subr.mxu0 0.0
    %5636 = vmatpush1.msra.mxu0 0.0
    %5637 = vmatprep.subr.mxu0 0.0
    %5638 = vmatpush1.msra.mxu0 0.0
    %5639 = vmatprep.subr.mxu0 0.0
    %5640 = vmatpush1.msra.mxu0 0.0
    %5641 = vmatprep.subr.mxu0 0.0
    %5642 = vmatpush1.msra.mxu0 0.0
    %5643 = vmatprep.subr.mxu0 0.0
    %5644 = vmatpush1.msra.mxu0 0.0
    %5645 = vmatprep.subr.mxu0 0.0
    %5646 = vmatpush1.msra.mxu0 0.0
    %5647 = vmatprep.subr.mxu0 0.0
    %5648 = vmatpush1.msra.mxu0 0.0
    %5649 = vmatprep.subr.mxu0 0.0
    %5650 = vmatpush1.msra.mxu0 0.0
    %5651 = vmatprep.subr.mxu0 0.0
    %5652 = vmatpush1.msra.mxu0 0.0
    %5653 = vmatprep.subr.mxu0 0.0
    %5654 = vmatpush1.msra.mxu0 0.0
    %5655 = vmatprep.subr.mxu0 0.0
    %5656 = vmatpush1.msra.mxu0 0.0
    %5657 = vmatprep.subr.mxu0 0.0
    %5658 = vmatpush1.msra.mxu0 0.0
    %5659 = vmatprep.subr.mxu0 0.0
    %5660 = vmatpush1.msra.mxu0 0.0
    %5661 = vmatprep.subr.mxu0 0.0
    %5662 = vmatpush1.msra.mxu0 %v5547
    %5663 = vmatprep.subr.mxu0 0.0
    %5664 = vmatpush2.msra.mxu0 0.0
    %5665 = vmatprep.subr.mxu0 0.0
    %5666 = vmatpush2.msra.mxu0 0.0
    %5667 = vmatprep.subr.mxu0 0.0
    %5668 = vmatpush2.msra.mxu0 0.0
    %5669 = vmatprep.subr.mxu0 0.0
    %5670 = vmatpush2.msra.mxu0 0.0
    %5671 = vmatprep.subr.mxu0 0.0
    %5672 = vmatpush2.msra.mxu0 0.0
    %5673 = vmatprep.subr.mxu0 0.0
    %5674 = vmatpush2.msra.mxu0 0.0
    %5675 = vmatprep.subr.mxu0 0.0
    %5676 = vmatpush2.msra.mxu0 0.0
    %5677 = vmatprep.subr.mxu0 0.0
    %5678 = vmatpush2.msra.mxu0 0.0
    %5679 = vmatprep.subr.mxu0 0.0
    %5680 = vmatpush2.msra.mxu0 0.0
    %5681 = vmatprep.subr.mxu0 0.0
    %5682 = vmatpush2.msra.mxu0 0.0
    %5683 = vmatprep.subr.mxu0 0.0
    %5684 = vmatpush2.msra.mxu0 0.0
    %5685 = vmatprep.subr.mxu0 0.0
    %5686 = vmatpush2.msra.mxu0 0.0
    %5687 = vmatprep.subr.mxu0 0.0
    %5688 = vmatpush2.msra.mxu0 0.0
    %5689 = vmatprep.subr.mxu0 0.0
    %5690 = vmatpush2.msra.mxu0 0.0
    %5691 = vmatprep.subr.mxu0 0.0
    %5692 = vmatpush2.msra.mxu0 0.0
    %5693 = vmatprep.subr.mxu0 0.0
    %5694 = vmatpush2.msra.mxu0 0.0
    %5695 = vmatprep.mubr.f32.mxu0 0.0
    %5696 = vmatmul.mubr.f32.gmra.mxu0 %v5629
    %v5697 = vpop.f32.mrf.mxu0
    %v5698 = vadd.f32 %v5626, %v5697
    %v5699 = vpop.f32.mrf.mxu0
    %5700 = vdwg.mxu0
    %5701 = vrot.lane.b32.xlu0 %v5549, 112
    %v5702 = vpop.permute.xlu0 %5701
    %5703 = vrot.lane.b32.xlu0 %v5547, 126
    %v5704 = vpop.permute.xlu0 %5703
    %v5706 = vsel %vm936, %v5702, 0
    %5708 = vmatprep.subr.mxu0 0.0
    %5709 = vmatpush1.msra.mxu0 0.0
    %5710 = vmatprep.subr.mxu0 0.0
    %5711 = vmatpush1.msra.mxu0 0.0
    %5712 = vmatprep.subr.mxu0 0.0
    %5713 = vmatpush1.msra.mxu0 0.0
    %5714 = vmatprep.subr.mxu0 0.0
    %5715 = vmatpush1.msra.mxu0 0.0
    %5716 = vmatprep.subr.mxu0 0.0
    %5717 = vmatpush1.msra.mxu0 0.0
    %5718 = vmatprep.subr.mxu0 0.0
    %5719 = vmatpush1.msra.mxu0 0.0
    %5720 = vmatprep.subr.mxu0 0.0
    %5721 = vmatpush1.msra.mxu0 0.0
    %5722 = vmatprep.subr.mxu0 0.0
    %5723 = vmatpush1.msra.mxu0 0.0
    %5724 = vmatprep.subr.mxu0 0.0
    %5725 = vmatpush1.msra.mxu0 0.0
    %5726 = vmatprep.subr.mxu0 0.0
    %5727 = vmatpush1.msra.mxu0 0.0
    %5728 = vmatprep.subr.mxu0 0.0
    %5729 = vmatpush1.msra.mxu0 0.0
    %5730 = vmatprep.subr.mxu0 0.0
    %5731 = vmatpush1.msra.mxu0 0.0
    %5732 = vmatprep.subr.mxu0 0.0
    %5733 = vmatpush1.msra.mxu0 0.0
    %5734 = vmatprep.subr.mxu0 0.0
    %5735 = vmatpush1.msra.mxu0 0.0
    %5736 = vmatprep.subr.mxu0 0.0
    %5737 = vmatpush1.msra.mxu0 0.0
    %5738 = vmatprep.subr.mxu0 0.0
    %5739 = vmatpush1.msra.mxu0 %v5704
    %5740 = vmatprep.subr.mxu0 0.0
    %5741 = vmatpush2.msra.mxu0 0.0
    %5742 = vmatprep.subr.mxu0 0.0
    %5743 = vmatpush2.msra.mxu0 0.0
    %5744 = vmatprep.subr.mxu0 0.0
    %5745 = vmatpush2.msra.mxu0 0.0
    %5746 = vmatprep.subr.mxu0 0.0
    %5747 = vmatpush2.msra.mxu0 0.0
    %5748 = vmatprep.subr.mxu0 0.0
    %5749 = vmatpush2.msra.mxu0 0.0
    %5750 = vmatprep.subr.mxu0 0.0
    %5751 = vmatpush2.msra.mxu0 0.0
    %5752 = vmatprep.subr.mxu0 0.0
    %5753 = vmatpush2.msra.mxu0 0.0
    %5754 = vmatprep.subr.mxu0 0.0
    %5755 = vmatpush2.msra.mxu0 0.0
    %5756 = vmatprep.subr.mxu0 0.0
    %5757 = vmatpush2.msra.mxu0 0.0
    %5758 = vmatprep.subr.mxu0 0.0
    %5759 = vmatpush2.msra.mxu0 0.0
    %5760 = vmatprep.subr.mxu0 0.0
    %5761 = vmatpush2.msra.mxu0 0.0
    %5762 = vmatprep.subr.mxu0 0.0
    %5763 = vmatpush2.msra.mxu0 0.0
    %5764 = vmatprep.subr.mxu0 0.0
    %5765 = vmatpush2.msra.mxu0 0.0
    %5766 = vmatprep.subr.mxu0 0.0
    %5767 = vmatpush2.msra.mxu0 0.0
    %5768 = vmatprep.subr.mxu0 0.0
    %5769 = vmatpush2.msra.mxu0 0.0
    %5770 = vmatprep.subr.mxu0 0.0
    %5771 = vmatpush2.msra.mxu0 0.0
    %5772 = vmatprep.mubr.f32.mxu0 0.0
    %5773 = vmatmul.mubr.f32.gmra.mxu0 %v5706
    %v5774 = vpop.f32.mrf.mxu0
    %v5775 = vadd.f32 0.0, %v5774
    %v5776 = vpop.f32.mrf.mxu0
    %5777 = vdwg.mxu0
    %v5778 = vadd.f32 %v5698, %v5775
    %5779 = vrot.lane.b32.xlu0 %v5549, 104
    %v5780 = vpop.permute.xlu0 %5779
    %5782 = vrot.lane.b32.xlu0 %v5547, 116
    %v5783 = vpop.permute.xlu0 %5782
    %5784 = vrot.lane.b32.xlu0 %v5548, 116
    %v5785 = vpop.permute.xlu0 %5784
    %v5786 = vsel %vm1166, %v5783, %v5785
    %v5788 = vsel %vm936, %v5780, 0
    %5790 = vmatprep.subr.mxu0 0.0
    %5791 = vmatpush1.msra.mxu0 0.0
    %5792 = vmatprep.subr.mxu0 0.0
    %5793 = vmatpush1.msra.mxu0 0.0
    %5794 = vmatprep.subr.mxu0 0.0
    %5795 = vmatpush1.msra.mxu0 0.0
    %5796 = vmatprep.subr.mxu0 0.0
    %5797 = vmatpush1.msra.mxu0 0.0
    %5798 = vmatprep.subr.mxu0 0.0
    %5799 = vmatpush1.msra.mxu0 0.0
    %5800 = vmatprep.subr.mxu0 0.0
    %5801 = vmatpush1.msra.mxu0 0.0
    %5802 = vmatprep.subr.mxu0 0.0
    %5803 = vmatpush1.msra.mxu0 0.0
    %5804 = vmatprep.subr.mxu0 0.0
    %5805 = vmatpush1.msra.mxu0 0.0
    %5806 = vmatprep.subr.mxu0 0.0
    %5807 = vmatpush1.msra.mxu0 0.0
    %5808 = vmatprep.subr.mxu0 0.0
    %5809 = vmatpush1.msra.mxu0 0.0
    %5810 = vmatprep.subr.mxu0 0.0
    %5811 = vmatpush1.msra.mxu0 0.0
    %5812 = vmatprep.subr.mxu0 0.0
    %5813 = vmatpush1.msra.mxu0 0.0
    %5814 = vmatprep.subr.mxu0 0.0
    %5815 = vmatpush1.msra.mxu0 0.0
    %5816 = vmatprep.subr.mxu0 0.0
    %5817 = vmatpush1.msra.mxu0 0.0
    %5818 = vmatprep.subr.mxu0 0.0
    %5819 = vmatpush1.msra.mxu0 0.0
    %5820 = vmatprep.subr.mxu0 0.0
    %5821 = vmatpush1.msra.mxu0 %v5786
    %5822 = vmatprep.subr.mxu0 0.0
    %5823 = vmatpush2.msra.mxu0 0.0
    %5824 = vmatprep.subr.mxu0 0.0
    %5825 = vmatpush2.msra.mxu0 0.0
    %5826 = vmatprep.subr.mxu0 0.0
    %5827 = vmatpush2.msra.mxu0 0.0
    %5828 = vmatprep.subr.mxu0 0.0
    %5829 = vmatpush2.msra.mxu0 0.0
    %5830 = vmatprep.subr.mxu0 0.0
    %5831 = vmatpush2.msra.mxu0 0.0
    %5832 = vmatprep.subr.mxu0 0.0
    %5833 = vmatpush2.msra.mxu0 0.0
    %5834 = vmatprep.subr.mxu0 0.0
    %5835 = vmatpush2.msra.mxu0 0.0
    %5836 = vmatprep.subr.mxu0 0.0
    %5837 = vmatpush2.msra.mxu0 0.0
    %5838 = vmatprep.subr.mxu0 0.0
    %5839 = vmatpush2.msra.mxu0 0.0
    %5840 = vmatprep.subr.mxu0 0.0
    %5841 = vmatpush2.msra.mxu0 0.0
    %5842 = vmatprep.subr.mxu0 0.0
    %5843 = vmatpush2.msra.mxu0 0.0
    %5844 = vmatprep.subr.mxu0 0.0
    %5845 = vmatpush2.msra.mxu0 0.0
    %5846 = vmatprep.subr.mxu0 0.0
    %5847 = vmatpush2.msra.mxu0 0.0
    %5848 = vmatprep.subr.mxu0 0.0
    %5849 = vmatpush2.msra.mxu0 0.0
    %5850 = vmatprep.subr.mxu0 0.0
    %5851 = vmatpush2.msra.mxu0 0.0
    %5852 = vmatprep.subr.mxu0 0.0
    %5853 = vmatpush2.msra.mxu0 0.0
    %5854 = vmatprep.mubr.f32.mxu0 0.0
    %5855 = vmatmul.mubr.f32.gmra.mxu0 %v5788
    %v5856 = vpop.f32.mrf.mxu0
    %v5857 = vadd.f32 0.0, %v5856
    %v5858 = vpop.f32.mrf.mxu0
    %5859 = vdwg.mxu0
    %v5860 = vadd.f32 %v5778, %v5857
    %5861 = vrot.lane.b32.xlu0 %v5549, 96
    %v5862 = vpop.permute.xlu0 %5861
    %5863 = vrot.lane.b32.xlu0 %v5547, 115
    %v5864 = vpop.permute.xlu0 %5863
    %5865 = vrot.lane.b32.xlu0 %v5548, 115
    %v5866 = vpop.permute.xlu0 %5865
    %v5867 = vsel %vm1248, %v5864, %v5866
    %v5869 = vsel %vm936, %v5862, 0
    %5871 = vmatprep.subr.mxu0 0.0
    %5872 = vmatpush1.msra.mxu0 0.0
    %5873 = vmatprep.subr.mxu0 0.0
    %5874 = vmatpush1.msra.mxu0 0.0
    %5875 = vmatprep.subr.mxu0 0.0
    %5876 = vmatpush1.msra.mxu0 0.0
    %5877 = vmatprep.subr.mxu0 0.0
    %5878 = vmatpush1.msra.mxu0 0.0
    %5879 = vmatprep.subr.mxu0 0.0
    %5880 = vmatpush1.msra.mxu0 0.0
    %5881 = vmatprep.subr.mxu0 0.0
    %5882 = vmatpush1.msra.mxu0 0.0
    %5883 = vmatprep.subr.mxu0 0.0
    %5884 = vmatpush1.msra.mxu0 0.0
    %5885 = vmatprep.subr.mxu0 0.0
    %5886 = vmatpush1.msra.mxu0 0.0
    %5887 = vmatprep.subr.mxu0 0.0
    %5888 = vmatpush1.msra.mxu0 0.0
    %5889 = vmatprep.subr.mxu0 0.0
    %5890 = vmatpush1.msra.mxu0 0.0
    %5891 = vmatprep.subr.mxu0 0.0
    %5892 = vmatpush1.msra.mxu0 0.0
    %5893 = vmatprep.subr.mxu0 0.0
    %5894 = vmatpush1.msra.mxu0 0.0
    %5895 = vmatprep.subr.mxu0 0.0
    %5896 = vmatpush1.msra.mxu0 0.0
    %5897 = vmatprep.subr.mxu0 0.0
    %5898 = vmatpush1.msra.mxu0 0.0
    %5899 = vmatprep.subr.mxu0 0.0
    %5900 = vmatpush1.msra.mxu0 0.0
    %5901 = vmatprep.subr.mxu0 0.0
    %5902 = vmatpush1.msra.mxu0 %v5867
    %5903 = vmatprep.subr.mxu0 0.0
    %5904 = vmatpush2.msra.mxu0 0.0
    %5905 = vmatprep.subr.mxu0 0.0
    %5906 = vmatpush2.msra.mxu0 0.0
    %5907 = vmatprep.subr.mxu0 0.0
    %5908 = vmatpush2.msra.mxu0 0.0
    %5909 = vmatprep.subr.mxu0 0.0
    %5910 = vmatpush2.msra.mxu0 0.0
    %5911 = vmatprep.subr.mxu0 0.0
    %5912 = vmatpush2.msra.mxu0 0.0
    %5913 = vmatprep.subr.mxu0 0.0
    %5914 = vmatpush2.msra.mxu0 0.0
    %5915 = vmatprep.subr.mxu0 0.0
    %5916 = vmatpush2.msra.mxu0 0.0
    %5917 = vmatprep.subr.mxu0 0.0
    %5918 = vmatpush2.msra.mxu0 0.0
    %5919 = vmatprep.subr.mxu0 0.0
    %5920 = vmatpush2.msra.mxu0 0.0
    %5921 = vmatprep.subr.mxu0 0.0
    %5922 = vmatpush2.msra.mxu0 0.0
    %5923 = vmatprep.subr.mxu0 0.0
    %5924 = vmatpush2.msra.mxu0 0.0
    %5925 = vmatprep.subr.mxu0 0.0
    %5926 = vmatpush2.msra.mxu0 0.0
    %5927 = vmatprep.subr.mxu0 0.0
    %5928 = vmatpush2.msra.mxu0 0.0
    %5929 = vmatprep.subr.mxu0 0.0
    %5930 = vmatpush2.msra.mxu0 0.0
    %5931 = vmatprep.subr.mxu0 0.0
    %5932 = vmatpush2.msra.mxu0 0.0
    %5933 = vmatprep.subr.mxu0 0.0
    %5934 = vmatpush2.msra.mxu0 0.0
    %5935 = vmatprep.mubr.f32.mxu0 0.0
    %5936 = vmatmul.mubr.f32.gmra.mxu0 %v5869
    %v5937 = vpop.f32.mrf.mxu0
    %v5938 = vadd.f32 0.0, %v5937
    %v5939 = vpop.f32.mrf.mxu0
    %5940 = vdwg.mxu0
    %v5941 = vadd.f32 %v5860, %v5938
    %5942 = vrot.lane.b32.xlu0 %v5549, 88
    %v5943 = vpop.permute.xlu0 %5942
    %5944 = vrot.lane.b32.xlu0 %v5547, 114
    %v5945 = vpop.permute.xlu0 %5944
    %5946 = vrot.lane.b32.xlu0 %v5548, 114
    %v5947 = vpop.permute.xlu0 %5946
    %v5948 = vsel %vm1330, %v5945, %v5947
    %v5950 = vsel %vm936, %v5943, 0
    %5952 = vmatprep.subr.mxu0 0.0
    %5953 = vmatpush1.msra.mxu0 0.0
    %5954 = vmatprep.subr.mxu0 0.0
    %5955 = vmatpush1.msra.mxu0 0.0
    %5956 = vmatprep.subr.mxu0 0.0
    %5957 = vmatpush1.msra.mxu0 0.0
    %5958 = vmatprep.subr.mxu0 0.0
    %5959 = vmatpush1.msra.mxu0 0.0
    %5960 = vmatprep.subr.mxu0 0.0
    %5961 = vmatpush1.msra.mxu0 0.0
    %5962 = vmatprep.subr.mxu0 0.0
    %5963 = vmatpush1.msra.mxu0 0.0
    %5964 = vmatprep.subr.mxu0 0.0
    %5965 = vmatpush1.msra.mxu0 0.0
    %5966 = vmatprep.subr.mxu0 0.0
    %5967 = vmatpush1.msra.mxu0 0.0
    %5968 = vmatprep.subr.mxu0 0.0
    %5969 = vmatpush1.msra.mxu0 0.0
    %5970 = vmatprep.subr.mxu0 0.0
    %5971 = vmatpush1.msra.mxu0 0.0
    %5972 = vmatprep.subr.mxu0 0.0
    %5973 = vmatpush1.msra.mxu0 0.0
    %5974 = vmatprep.subr.mxu0 0.0
    %5975 = vmatpush1.msra.mxu0 0.0
    %5976 = vmatprep.subr.mxu0 0.0
    %5977 = vmatpush1.msra.mxu0 0.0
    %5978 = vmatprep.subr.mxu0 0.0
    %5979 = vmatpush1.msra.mxu0 0.0
    %5980 = vmatprep.subr.mxu0 0.0
    %5981 = vmatpush1.msra.mxu0 0.0
    %5982 = vmatprep.subr.mxu0 0.0
    %5983 = vmatpush1.msra.mxu0 %v5948
    %5984 = vmatprep.subr.mxu0 0.0
    %5985 = vmatpush2.msra.mxu0 0.0
    %5986 = vmatprep.subr.mxu0 0.0
    %5987 = vmatpush2.msra.mxu0 0.0
    %5988 = vmatprep.subr.mxu0 0.0
    %5989 = vmatpush2.msra.mxu0 0.0
    %5990 = vmatprep.subr.mxu0 0.0
    %5991 = vmatpush2.msra.mxu0 0.0
    %5992 = vmatprep.subr.mxu0 0.0
    %5993 = vmatpush2.msra.mxu0 0.0
    %5994 = vmatprep.subr.mxu0 0.0
    %5995 = vmatpush2.msra.mxu0 0.0
    %5996 = vmatprep.subr.mxu0 0.0
    %5997 = vmatpush2.msra.mxu0 0.0
    %5998 = vmatprep.subr.mxu0 0.0
    %5999 = vmatpush2.msra.mxu0 0.0
    %6000 = vmatprep.subr.mxu0 0.0
    %6001 = vmatpush2.msra.mxu0 0.0
    %6002 = vmatprep.subr.mxu0 0.0
    %6003 = vmatpush2.msra.mxu0 0.0
    %6004 = vmatprep.subr.mxu0 0.0
    %6005 = vmatpush2.msra.mxu0 0.0
    %6006 = vmatprep.subr.mxu0 0.0
    %6007 = vmatpush2.msra.mxu0 0.0
    %6008 = vmatprep.subr.mxu0 0.0
    %6009 = vmatpush2.msra.mxu0 0.0
    %6010 = vmatprep.subr.mxu0 0.0
    %6011 = vmatpush2.msra.mxu0 0.0
    %6012 = vmatprep.subr.mxu0 0.0
    %6013 = vmatpush2.msra.mxu0 0.0
    %6014 = vmatprep.subr.mxu0 0.0
    %6015 = vmatpush2.msra.mxu0 0.0
    %6016 = vmatprep.mubr.f32.mxu0 0.0
    %6017 = vmatmul.mubr.f32.gmra.mxu0 %v5950
    %v6018 = vpop.f32.mrf.mxu0
    %v6019 = vadd.f32 0.0, %v6018
    %v6020 = vpop.f32.mrf.mxu0
    %6021 = vdwg.mxu0
    %v6022 = vadd.f32 %v5941, %v6019
    %6023 = vrot.lane.b32.xlu0 %v5549, 80
    %v6024 = vpop.permute.xlu0 %6023
    %6025 = vrot.lane.b32.xlu0 %v5547, 104
    %v6026 = vpop.permute.xlu0 %6025
    %6027 = vrot.lane.b32.xlu0 %v5548, 104
    %v6028 = vpop.permute.xlu0 %6027
    %v6029 = vsel %vm1412, %v6026, %v6028
    %v6031 = vsel %vm936, %v6024, 0
    %6033 = vmatprep.subr.mxu0 0.0
    %6034 = vmatpush1.msra.mxu0 0.0
    %6035 = vmatprep.subr.mxu0 0.0
    %6036 = vmatpush1.msra.mxu0 0.0
    %6037 = vmatprep.subr.mxu0 0.0
    %6038 = vmatpush1.msra.mxu0 0.0
    %6039 = vmatprep.subr.mxu0 0.0
    %6040 = vmatpush1.msra.mxu0 0.0
    %6041 = vmatprep.subr.mxu0 0.0
    %6042 = vmatpush1.msra.mxu0 0.0
    %6043 = vmatprep.subr.mxu0 0.0
    %6044 = vmatpush1.msra.mxu0 0.0
    %6045 = vmatprep.subr.mxu0 0.0
    %6046 = vmatpush1.msra.mxu0 0.0
    %6047 = vmatprep.subr.mxu0 0.0
    %6048 = vmatpush1.msra.mxu0 0.0
    %6049 = vmatprep.subr.mxu0 0.0
    %6050 = vmatpush1.msra.mxu0 0.0
    %6051 = vmatprep.subr.mxu0 0.0
    %6052 = vmatpush1.msra.mxu0 0.0
    %6053 = vmatprep.subr.mxu0 0.0
    %6054 = vmatpush1.msra.mxu0 0.0
    %6055 = vmatprep.subr.mxu0 0.0
    %6056 = vmatpush1.msra.mxu0 0.0
    %6057 = vmatprep.subr.mxu0 0.0
    %6058 = vmatpush1.msra.mxu0 0.0
    %6059 = vmatprep.subr.mxu0 0.0
    %6060 = vmatpush1.msra.mxu0 0.0
    %6061 = vmatprep.subr.mxu0 0.0
    %6062 = vmatpush1.msra.mxu0 0.0
    %6063 = vmatprep.subr.mxu0 0.0
    %6064 = vmatpush1.msra.mxu0 %v6029
    %6065 = vmatprep.subr.mxu0 0.0
    %6066 = vmatpush2.msra.mxu0 0.0
    %6067 = vmatprep.subr.mxu0 0.0
    %6068 = vmatpush2.msra.mxu0 0.0
    %6069 = vmatprep.subr.mxu0 0.0
    %6070 = vmatpush2.msra.mxu0 0.0
    %6071 = vmatprep.subr.mxu0 0.0
    %6072 = vmatpush2.msra.mxu0 0.0
    %6073 = vmatprep.subr.mxu0 0.0
    %6074 = vmatpush2.msra.mxu0 0.0
    %6075 = vmatprep.subr.mxu0 0.0
    %6076 = vmatpush2.msra.mxu0 0.0
    %6077 = vmatprep.subr.mxu0 0.0
    %6078 = vmatpush2.msra.mxu0 0.0
    %6079 = vmatprep.subr.mxu0 0.0
    %6080 = vmatpush2.msra.mxu0 0.0
    %6081 = vmatprep.subr.mxu0 0.0
    %6082 = vmatpush2.msra.mxu0 0.0
    %6083 = vmatprep.subr.mxu0 0.0
    %6084 = vmatpush2.msra.mxu0 0.0
    %6085 = vmatprep.subr.mxu0 0.0
    %6086 = vmatpush2.msra.mxu0 0.0
    %6087 = vmatprep.subr.mxu0 0.0
    %6088 = vmatpush2.msra.mxu0 0.0
    %6089 = vmatprep.subr.mxu0 0.0
    %6090 = vmatpush2.msra.mxu0 0.0
    %6091 = vmatprep.subr.mxu0 0.0
    %6092 = vmatpush2.msra.mxu0 0.0
    %6093 = vmatprep.subr.mxu0 0.0
    %6094 = vmatpush2.msra.mxu0 0.0
    %6095 = vmatprep.subr.mxu0 0.0
    %6096 = vmatpush2.msra.mxu0 0.0
    %6097 = vmatprep.mubr.f32.mxu0 0.0
    %6098 = vmatmul.mubr.f32.gmra.mxu0 %v6031
    %v6099 = vpop.f32.mrf.mxu0
    %v6100 = vadd.f32 0.0, %v6099
    %v6101 = vpop.f32.mrf.mxu0
    %6102 = vdwg.mxu0
    %v6103 = vadd.f32 %v6022, %v6100
    %6104 = vrot.lane.b32.xlu0 %v5549, 72
    %v6105 = vpop.permute.xlu0 %6104
    %6106 = vrot.lane.b32.xlu0 %v5547, 103
    %v6107 = vpop.permute.xlu0 %6106
    %6108 = vrot.lane.b32.xlu0 %v5548, 103
    %v6109 = vpop.permute.xlu0 %6108
    %v6110 = vsel %vm1494, %v6107, %v6109
    %v6112 = vsel %vm936, %v6105, 0
    %6114 = vmatprep.subr.mxu0 0.0
    %6115 = vmatpush1.msra.mxu0 0.0
    %6116 = vmatprep.subr.mxu0 0.0
    %6117 = vmatpush1.msra.mxu0 0.0
    %6118 = vmatprep.subr.mxu0 0.0
    %6119 = vmatpush1.msra.mxu0 0.0
    %6120 = vmatprep.subr.mxu0 0.0
    %6121 = vmatpush1.msra.mxu0 0.0
    %6122 = vmatprep.subr.mxu0 0.0
    %6123 = vmatpush1.msra.mxu0 0.0
    %6124 = vmatprep.subr.mxu0 0.0
    %6125 = vmatpush1.msra.mxu0 0.0
    %6126 = vmatprep.subr.mxu0 0.0
    %6127 = vmatpush1.msra.mxu0 0.0
    %6128 = vmatprep.subr.mxu0 0.0
    %6129 = vmatpush1.msra.mxu0 0.0
    %6130 = vmatprep.subr.mxu0 0.0
    %6131 = vmatpush1.msra.mxu0 0.0
    %6132 = vmatprep.subr.mxu0 0.0
    %6133 = vmatpush1.msra.mxu0 0.0
    %6134 = vmatprep.subr.mxu0 0.0
    %6135 = vmatpush1.msra.mxu0 0.0
    %6136 = vmatprep.subr.mxu0 0.0
    %6137 = vmatpush1.msra.mxu0 0.0
    %6138 = vmatprep.subr.mxu0 0.0
    %6139 = vmatpush1.msra.mxu0 0.0
    %6140 = vmatprep.subr.mxu0 0.0
    %6141 = vmatpush1.msra.mxu0 0.0
    %6142 = vmatprep.subr.mxu0 0.0
    %6143 = vmatpush1.msra.mxu0 0.0
    %6144 = vmatprep.subr.mxu0 0.0
    %6145 = vmatpush1.msra.mxu0 %v6110
    %6146 = vmatprep.subr.mxu0 0.0
    %6147 = vmatpush2.msra.mxu0 0.0
    %6148 = vmatprep.subr.mxu0 0.0
    %6149 = vmatpush2.msra.mxu0 0.0
    %6150 = vmatprep.subr.mxu0 0.0
    %6151 = vmatpush2.msra.mxu0 0.0
    %6152 = vmatprep.subr.mxu0 0.0
    %6153 = vmatpush2.msra.mxu0 0.0
    %6154 = vmatprep.subr.mxu0 0.0
    %6155 = vmatpush2.msra.mxu0 0.0
    %6156 = vmatprep.subr.mxu0 0.0
    %6157 = vmatpush2.msra.mxu0 0.0
    %6158 = vmatprep.subr.mxu0 0.0
    %6159 = vmatpush2.msra.mxu0 0.0
    %6160 = vmatprep.subr.mxu0 0.0
    %6161 = vmatpush2.msra.mxu0 0.0
    %6162 = vmatprep.subr.mxu0 0.0
    %6163 = vmatpush2.msra.mxu0 0.0
    %6164 = vmatprep.subr.mxu0 0.0
    %6165 = vmatpush2.msra.mxu0 0.0
    %6166 = vmatprep.subr.mxu0 0.0
    %6167 = vmatpush2.msra.mxu0 0.0
    %6168 = vmatprep.subr.mxu0 0.0
    %6169 = vmatpush2.msra.mxu0 0.0
    %6170 = vmatprep.subr.mxu0 0.0
    %6171 = vmatpush2.msra.mxu0 0.0
    %6172 = vmatprep.subr.mxu0 0.0
    %6173 = vmatpush2.msra.mxu0 0.0
    %6174 = vmatprep.subr.mxu0 0.0
    %6175 = vmatpush2.msra.mxu0 0.0
    %6176 = vmatprep.subr.mxu0 0.0
    %6177 = vmatpush2.msra.mxu0 0.0
    %6178 = vmatprep.mubr.f32.mxu0 0.0
    %6179 = vmatmul.mubr.f32.gmra.mxu0 %v6112
    %v6180 = vpop.f32.mrf.mxu0
    %v6181 = vadd.f32 0.0, %v6180
    %v6182 = vpop.f32.mrf.mxu0
    %6183 = vdwg.mxu0
    %v6184 = vadd.f32 %v6103, %v6181
    %6185 = vrot.lane.b32.xlu0 %v5549, 64
    %v6186 = vpop.permute.xlu0 %6185
    %6187 = vrot.lane.b32.xlu0 %v5547, 102
    %v6188 = vpop.permute.xlu0 %6187
    %6189 = vrot.lane.b32.xlu0 %v5548, 102
    %v6190 = vpop.permute.xlu0 %6189
    %v6191 = vsel %vm1576, %v6188, %v6190
    %v6193 = vsel %vm936, %v6186, 0
    %6195 = vmatprep.subr.mxu0 0.0
    %6196 = vmatpush1.msra.mxu0 0.0
    %6197 = vmatprep.subr.mxu0 0.0
    %6198 = vmatpush1.msra.mxu0 0.0
    %6199 = vmatprep.subr.mxu0 0.0
    %6200 = vmatpush1.msra.mxu0 0.0
    %6201 = vmatprep.subr.mxu0 0.0
    %6202 = vmatpush1.msra.mxu0 0.0
    %6203 = vmatprep.subr.mxu0 0.0
    %6204 = vmatpush1.msra.mxu0 0.0
    %6205 = vmatprep.subr.mxu0 0.0
    %6206 = vmatpush1.msra.mxu0 0.0
    %6207 = vmatprep.subr.mxu0 0.0
    %6208 = vmatpush1.msra.mxu0 0.0
    %6209 = vmatprep.subr.mxu0 0.0
    %6210 = vmatpush1.msra.mxu0 0.0
    %6211 = vmatprep.subr.mxu0 0.0
    %6212 = vmatpush1.msra.mxu0 0.0
    %6213 = vmatprep.subr.mxu0 0.0
    %6214 = vmatpush1.msra.mxu0 0.0
    %6215 = vmatprep.subr.mxu0 0.0
    %6216 = vmatpush1.msra.mxu0 0.0
    %6217 = vmatprep.subr.mxu0 0.0
    %6218 = vmatpush1.msra.mxu0 0.0
    %6219 = vmatprep.subr.mxu0 0.0
    %6220 = vmatpush1.msra.mxu0 0.0
    %6221 = vmatprep.subr.mxu0 0.0
    %6222 = vmatpush1.msra.mxu0 0.0
    %6223 = vmatprep.subr.mxu0 0.0
    %6224 = vmatpush1.msra.mxu0 0.0
    %6225 = vmatprep.subr.mxu0 0.0
    %6226 = vmatpush1.msra.mxu0 %v6191
    %6227 = vmatprep.subr.mxu0 0.0
    %6228 = vmatpush2.msra.mxu0 0.0
    %6229 = vmatprep.subr.mxu0 0.0
    %6230 = vmatpush2.msra.mxu0 0.0
    %6231 = vmatprep.subr.mxu0 0.0
    %6232 = vmatpush2.msra.mxu0 0.0
    %6233 = vmatprep.subr.mxu0 0.0
    %6234 = vmatpush2.msra.mxu0 0.0
    %6235 = vmatprep.subr.mxu0 0.0
    %6236 = vmatpush2.msra.mxu0 0.0
    %6237 = vmatprep.subr.mxu0 0.0
    %6238 = vmatpush2.msra.mxu0 0.0
    %6239 = vmatprep.subr.mxu0 0.0
    %6240 = vmatpush2.msra.mxu0 0.0
    %6241 = vmatprep.subr.mxu0 0.0
    %6242 = vmatpush2.msra.mxu0 0.0
    %6243 = vmatprep.subr.mxu0 0.0
    %6244 = vmatpush2.msra.mxu0 0.0
    %6245 = vmatprep.subr.mxu0 0.0
    %6246 = vmatpush2.msra.mxu0 0.0
    %6247 = vmatprep.subr.mxu0 0.0
    %6248 = vmatpush2.msra.mxu0 0.0
    %6249 = vmatprep.subr.mxu0 0.0
    %6250 = vmatpush2.msra.mxu0 0.0
    %6251 = vmatprep.subr.mxu0 0.0
    %6252 = vmatpush2.msra.mxu0 0.0
    %6253 = vmatprep.subr.mxu0 0.0
    %6254 = vmatpush2.msra.mxu0 0.0
    %6255 = vmatprep.subr.mxu0 0.0
    %6256 = vmatpush2.msra.mxu0 0.0
    %6257 = vmatprep.subr.mxu0 0.0
    %6258 = vmatpush2.msra.mxu0 0.0
    %6259 = vmatprep.mubr.f32.mxu0 0.0
    %6260 = vmatmul.mubr.f32.gmra.mxu0 %v6193
    %v6261 = vpop.f32.mrf.mxu0
    %v6262 = vadd.f32 0.0, %v6261
    %v6263 = vpop.f32.mrf.mxu0
    %6264 = vdwg.mxu0
    %v6265 = vadd.f32 %v6184, %v6262
    %v6266 = vmax.f32 %v6265, 0.0
    %6267 = vst.msk [vmem:[#allocation4] sm:$0xff] %vm160, %v6266
    %6269 = vrot.lane.b32.xlu0 %v6266, 126
    %v6270 = vpop.permute.xlu0 %6269
    %6272 = vst.msk [vmem:[#allocation4] sm:$0xff] %vm1658, %v6270
    %6273 = vrot.lane.b32.xlu0 %v6266, 124
    %v6274 = vpop.permute.xlu0 %6273
    %6276 = vst.msk [vmem:[#allocation4] sm:$0xff] %vm1663, %v6274
    %6277 = vrot.lane.b32.xlu0 %v6266, 122
    %v6278 = vpop.permute.xlu0 %6277
    %6280 = vst.msk [vmem:[#allocation4] sm:$0xff] %vm1668, %v6278
    %6281 = vrot.lane.b32.xlu0 %v6266, 120
    %v6282 = vpop.permute.xlu0 %6281
    %6284 = vst.msk [vmem:[#allocation4] sm:$0xff] %vm1673, %v6282
    %6285 = vrot.lane.b32.xlu0 %v6266, 118
    %v6286 = vpop.permute.xlu0 %6285
    %6288 = vst.msk [vmem:[#allocation4] sm:$0xff] %vm1678, %v6286
    %6289 = vrot.lane.b32.xlu0 %v6266, 116
    %v6290 = vpop.permute.xlu0 %6289
    %6292 = vst.msk [vmem:[#allocation4] sm:$0xff] %vm1683, %v6290
    %6293 = vrot.lane.b32.xlu0 %v6266, 114
    %v6294 = vpop.permute.xlu0 %6293
    %6296 = vst.msk [vmem:[#allocation4] sm:$0xff] %vm1688, %v6294
    %6297 = vrot.lane.b32.xlu0 %v6266, 112
    %v6298 = vpop.permute.xlu0 %6297
    %6300 = vst.msk [vmem:[#allocation4] sm:$0xff] %vm1693, %v6298
    %6301 = vrot.lane.b32.xlu0 %v6266, 110
    %v6302 = vpop.permute.xlu0 %6301
    %6304 = vst.msk [vmem:[#allocation4] sm:$0xff] %vm1698, %v6302
    %v6305 = vld [vmem:[#allocation4] sm:$0xff]
    %v6306 = vld [vmem:[%s9] sm:$0xff]
    %6308 = vrot.lane.b32.xlu0 %v6306, 120
    %v6309 = vpop.permute.xlu0 %6308
    %6311 = vrot.lane.b32.xlu0 %v6305, 127
    %v6312 = vpop.permute.xlu0 %6311
    %v6314 = vsel %vm936, %v6309, 0
    %6316 = vmatprep.subr.mxu0 0.0
    %6317 = vmatpush1.msra.mxu0 0.0
    %6318 = vmatprep.subr.mxu0 0.0
    %6319 = vmatpush1.msra.mxu0 0.0
    %6320 = vmatprep.subr.mxu0 0.0
    %6321 = vmatpush1.msra.mxu0 0.0
    %6322 = vmatprep.subr.mxu0 0.0
    %6323 = vmatpush1.msra.mxu0 0.0
    %6324 = vmatprep.subr.mxu0 0.0
    %6325 = vmatpush1.msra.mxu0 0.0
    %6326 = vmatprep.subr.mxu0 0.0
    %6327 = vmatpush1.msra.mxu0 0.0
    %6328 = vmatprep.subr.mxu0 0.0
    %6329 = vmatpush1.msra.mxu0 0.0
    %6330 = vmatprep.subr.mxu0 0.0
    %6331 = vmatpush1.msra.mxu0 0.0
    %6332 = vmatprep.subr.mxu0 0.0
    %6333 = vmatpush1.msra.mxu0 0.0
    %6334 = vmatprep.subr.mxu0 0.0
    %6335 = vmatpush1.msra.mxu0 0.0
    %6336 = vmatprep.subr.mxu0 0.0
    %6337 = vmatpush1.msra.mxu0 0.0
    %6338 = vmatprep.subr.mxu0 0.0
    %6339 = vmatpush1.msra.mxu0 0.0
    %6340 = vmatprep.subr.mxu0 0.0
    %6341 = vmatpush1.msra.mxu0 0.0
    %6342 = vmatprep.subr.mxu0 0.0
    %6343 = vmatpush1.msra.mxu0 0.0
    %6344 = vmatprep.subr.mxu0 0.0
    %6345 = vmatpush1.msra.mxu0 0.0
    %6346 = vmatprep.subr.mxu0 0.0
    %6347 = vmatpush1.msra.mxu0 %v6312
    %6348 = vmatprep.subr.mxu0 0.0
    %6349 = vmatpush2.msra.mxu0 0.0
    %6350 = vmatprep.subr.mxu0 0.0
    %6351 = vmatpush2.msra.mxu0 0.0
    %6352 = vmatprep.subr.mxu0 0.0
    %6353 = vmatpush2.msra.mxu0 0.0
    %6354 = vmatprep.subr.mxu0 0.0
    %6355 = vmatpush2.msra.mxu0 0.0
    %6356 = vmatprep.subr.mxu0 0.0
    %6357 = vmatpush2.msra.mxu0 0.0
    %6358 = vmatprep.subr.mxu0 0.0
    %6359 = vmatpush2.msra.mxu0 0.0
    %6360 = vmatprep.subr.mxu0 0.0
    %6361 = vmatpush2.msra.mxu0 0.0
    %6362 = vmatprep.subr.mxu0 0.0
    %6363 = vmatpush2.msra.mxu0 0.0
    %6364 = vmatprep.subr.mxu0 0.0
    %6365 = vmatpush2.msra.mxu0 0.0
    %6366 = vmatprep.subr.mxu0 0.0
    %6367 = vmatpush2.msra.mxu0 0.0
    %6368 = vmatprep.subr.mxu0 0.0
    %6369 = vmatpush2.msra.mxu0 0.0
    %6370 = vmatprep.subr.mxu0 0.0
    %6371 = vmatpush2.msra.mxu0 0.0
    %6372 = vmatprep.subr.mxu0 0.0
    %6373 = vmatpush2.msra.mxu0 0.0
    %6374 = vmatprep.subr.mxu0 0.0
    %6375 = vmatpush2.msra.mxu0 0.0
    %6376 = vmatprep.subr.mxu0 0.0
    %6377 = vmatpush2.msra.mxu0 0.0
    %6378 = vmatprep.subr.mxu0 0.0
    %6379 = vmatpush2.msra.mxu0 0.0
    %6380 = vmatprep.mubr.f32.mxu0 0.0
    %6381 = vmatmul.mubr.f32.gmra.mxu0 %v6314
    %v6382 = vpop.f32.mrf.mxu0
    %v6383 = vadd.f32 0.0, %v6382
    %v6384 = vpop.f32.mrf.mxu0
    %6385 = vdwg.mxu0
    %v6386 = vsel %vm936, %v6306, 0
    %6388 = vmatprep.subr.mxu0 0.0
    %6389 = vmatpush1.msra.mxu0 0.0
    %6390 = vmatprep.subr.mxu0 0.0
    %6391 = vmatpush1.msra.mxu0 0.0
    %6392 = vmatprep.subr.mxu0 0.0
    %6393 = vmatpush1.msra.mxu0 0.0
    %6394 = vmatprep.subr.mxu0 0.0
    %6395 = vmatpush1.msra.mxu0 0.0
    %6396 = vmatprep.subr.mxu0 0.0
    %6397 = vmatpush1.msra.mxu0 0.0
    %6398 = vmatprep.subr.mxu0 0.0
    %6399 = vmatpush1.msra.mxu0 0.0
    %6400 = vmatprep.subr.mxu0 0.0
    %6401 = vmatpush1.msra.mxu0 0.0
    %6402 = vmatprep.subr.mxu0 0.0
    %6403 = vmatpush1.msra.mxu0 0.0
    %6404 = vmatprep.subr.mxu0 0.0
    %6405 = vmatpush1.msra.mxu0 0.0
    %6406 = vmatprep.subr.mxu0 0.0
    %6407 = vmatpush1.msra.mxu0 0.0
    %6408 = vmatprep.subr.mxu0 0.0
    %6409 = vmatpush1.msra.mxu0 0.0
    %6410 = vmatprep.subr.mxu0 0.0
    %6411 = vmatpush1.msra.mxu0 0.0
    %6412 = vmatprep.subr.mxu0 0.0
    %6413 = vmatpush1.msra.mxu0 0.0
    %6414 = vmatprep.subr.mxu0 0.0
    %6415 = vmatpush1.msra.mxu0 0.0
    %6416 = vmatprep.subr.mxu0 0.0
    %6417 = vmatpush1.msra.mxu0 0.0
    %6418 = vmatprep.subr.mxu0 0.0
    %6419 = vmatpush1.msra.mxu0 %v6305
    %6420 = vmatprep.subr.mxu0 0.0
    %6421 = vmatpush2.msra.mxu0 0.0
    %6422 = vmatprep.subr.mxu0 0.0
    %6423 = vmatpush2.msra.mxu0 0.0
    %6424 = vmatprep.subr.mxu0 0.0
    %6425 = vmatpush2.msra.mxu0 0.0
    %6426 = vmatprep.subr.mxu0 0.0
    %6427 = vmatpush2.msra.mxu0 0.0
    %6428 = vmatprep.subr.mxu0 0.0
    %6429 = vmatpush2.msra.mxu0 0.0
    %6430 = vmatprep.subr.mxu0 0.0
    %6431 = vmatpush2.msra.mxu0 0.0
    %6432 = vmatprep.subr.mxu0 0.0
    %6433 = vmatpush2.msra.mxu0 0.0
    %6434 = vmatprep.subr.mxu0 0.0
    %6435 = vmatpush2.msra.mxu0 0.0
    %6436 = vmatprep.subr.mxu0 0.0
    %6437 = vmatpush2.msra.mxu0 0.0
    %6438 = vmatprep.subr.mxu0 0.0
    %6439 = vmatpush2.msra.mxu0 0.0
    %6440 = vmatprep.subr.mxu0 0.0
    %6441 = vmatpush2.msra.mxu0 0.0
    %6442 = vmatprep.subr.mxu0 0.0
    %6443 = vmatpush2.msra.mxu0 0.0
    %6444 = vmatprep.subr.mxu0 0.0
    %6445 = vmatpush2.msra.mxu0 0.0
    %6446 = vmatprep.subr.mxu0 0.0
    %6447 = vmatpush2.msra.mxu0 0.0
    %6448 = vmatprep.subr.mxu0 0.0
    %6449 = vmatpush2.msra.mxu0 0.0
    %6450 = vmatprep.subr.mxu0 0.0
    %6451 = vmatpush2.msra.mxu0 0.0
    %6452 = vmatprep.mubr.f32.mxu0 0.0
    %6453 = vmatmul.mubr.f32.gmra.mxu0 %v6386
    %v6454 = vpop.f32.mrf.mxu0
    %v6455 = vadd.f32 %v6383, %v6454
    %v6456 = vpop.f32.mrf.mxu0
    %6457 = vdwg.mxu0
    %6458 = vrot.lane.b32.xlu0 %v6306, 112
    %v6459 = vpop.permute.xlu0 %6458
    %6460 = vrot.lane.b32.xlu0 %v6305, 126
    %v6461 = vpop.permute.xlu0 %6460
    %v6463 = vsel %vm936, %v6459, 0
    %6465 = vmatprep.subr.mxu0 0.0
    %6466 = vmatpush1.msra.mxu0 0.0
    %6467 = vmatprep.subr.mxu0 0.0
    %6468 = vmatpush1.msra.mxu0 0.0
    %6469 = vmatprep.subr.mxu0 0.0
    %6470 = vmatpush1.msra.mxu0 0.0
    %6471 = vmatprep.subr.mxu0 0.0
    %6472 = vmatpush1.msra.mxu0 0.0
    %6473 = vmatprep.subr.mxu0 0.0
    %6474 = vmatpush1.msra.mxu0 0.0
    %6475 = vmatprep.subr.mxu0 0.0
    %6476 = vmatpush1.msra.mxu0 0.0
    %6477 = vmatprep.subr.mxu0 0.0
    %6478 = vmatpush1.msra.mxu0 0.0
    %6479 = vmatprep.subr.mxu0 0.0
    %6480 = vmatpush1.msra.mxu0 0.0
    %6481 = vmatprep.subr.mxu0 0.0
    %6482 = vmatpush1.msra.mxu0 0.0
    %6483 = vmatprep.subr.mxu0 0.0
    %6484 = vmatpush1.msra.mxu0 0.0
    %6485 = vmatprep.subr.mxu0 0.0
    %6486 = vmatpush1.msra.mxu0 0.0
    %6487 = vmatprep.subr.mxu0 0.0
    %6488 = vmatpush1.msra.mxu0 0.0
    %6489 = vmatprep.subr.mxu0 0.0
    %6490 = vmatpush1.msra.mxu0 0.0
    %6491 = vmatprep.subr.mxu0 0.0
    %6492 = vmatpush1.msra.mxu0 0.0
    %6493 = vmatprep.subr.mxu0 0.0
    %6494 = vmatpush1.msra.mxu0 0.0
    %6495 = vmatprep.subr.mxu0 0.0
    %6496 = vmatpush1.msra.mxu0 %v6461
    %6497 = vmatprep.subr.mxu0 0.0
    %6498 = vmatpush2.msra.mxu0 0.0
    %6499 = vmatprep.subr.mxu0 0.0
    %6500 = vmatpush2.msra.mxu0 0.0
    %6501 = vmatprep.subr.mxu0 0.0
    %6502 = vmatpush2.msra.mxu0 0.0
    %6503 = vmatprep.subr.mxu0 0.0
    %6504 = vmatpush2.msra.mxu0 0.0
    %6505 = vmatprep.subr.mxu0 0.0
    %6506 = vmatpush2.msra.mxu0 0.0
    %6507 = vmatprep.subr.mxu0 0.0
    %6508 = vmatpush2.msra.mxu0 0.0
    %6509 = vmatprep.subr.mxu0 0.0
    %6510 = vmatpush2.msra.mxu0 0.0
    %6511 = vmatprep.subr.mxu0 0.0
    %6512 = vmatpush2.msra.mxu0 0.0
    %6513 = vmatprep.subr.mxu0 0.0
    %6514 = vmatpush2.msra.mxu0 0.0
    %6515 = vmatprep.subr.mxu0 0.0
    %6516 = vmatpush2.msra.mxu0 0.0
    %6517 = vmatprep.subr.mxu0 0.0
    %6518 = vmatpush2.msra.mxu0 0.0
    %6519 = vmatprep.subr.mxu0 0.0
    %6520 = vmatpush2.msra.mxu0 0.0
    %6521 = vmatprep.subr.mxu0 0.0
    %6522 = vmatpush2.msra.mxu0 0.0
    %6523 = vmatprep.subr.mxu0 0.0
    %6524 = vmatpush2.msra.mxu0 0.0
    %6525 = vmatprep.subr.mxu0 0.0
    %6526 = vmatpush2.msra.mxu0 0.0
    %6527 = vmatprep.subr.mxu0 0.0
    %6528 = vmatpush2.msra.mxu0 0.0
    %6529 = vmatprep.mubr.f32.mxu0 0.0
    %6530 = vmatmul.mubr.f32.gmra.mxu0 %v6463
    %v6531 = vpop.f32.mrf.mxu0
    %v6532 = vadd.f32 0.0, %v6531
    %v6533 = vpop.f32.mrf.mxu0
    %6534 = vdwg.mxu0
    %v6535 = vadd.f32 %v6455, %v6532
    %6536 = vrot.lane.b32.xlu0 %v6306, 104
    %v6537 = vpop.permute.xlu0 %6536
    %6538 = vrot.lane.b32.xlu0 %v6305, 118
    %v6539 = vpop.permute.xlu0 %6538
    %v6541 = vsel %vm936, %v6537, 0
    %6543 = vmatprep.subr.mxu0 0.0
    %6544 = vmatpush1.msra.mxu0 0.0
    %6545 = vmatprep.subr.mxu0 0.0
    %6546 = vmatpush1.msra.mxu0 0.0
    %6547 = vmatprep.subr.mxu0 0.0
    %6548 = vmatpush1.msra.mxu0 0.0
    %6549 = vmatprep.subr.mxu0 0.0
    %6550 = vmatpush1.msra.mxu0 0.0
    %6551 = vmatprep.subr.mxu0 0.0
    %6552 = vmatpush1.msra.mxu0 0.0
    %6553 = vmatprep.subr.mxu0 0.0
    %6554 = vmatpush1.msra.mxu0 0.0
    %6555 = vmatprep.subr.mxu0 0.0
    %6556 = vmatpush1.msra.mxu0 0.0
    %6557 = vmatprep.subr.mxu0 0.0
    %6558 = vmatpush1.msra.mxu0 0.0
    %6559 = vmatprep.subr.mxu0 0.0
    %6560 = vmatpush1.msra.mxu0 0.0
    %6561 = vmatprep.subr.mxu0 0.0
    %6562 = vmatpush1.msra.mxu0 0.0
    %6563 = vmatprep.subr.mxu0 0.0
    %6564 = vmatpush1.msra.mxu0 0.0
    %6565 = vmatprep.subr.mxu0 0.0
    %6566 = vmatpush1.msra.mxu0 0.0
    %6567 = vmatprep.subr.mxu0 0.0
    %6568 = vmatpush1.msra.mxu0 0.0
    %6569 = vmatprep.subr.mxu0 0.0
    %6570 = vmatpush1.msra.mxu0 0.0
    %6571 = vmatprep.subr.mxu0 0.0
    %6572 = vmatpush1.msra.mxu0 0.0
    %6573 = vmatprep.subr.mxu0 0.0
    %6574 = vmatpush1.msra.mxu0 %v6539
    %6575 = vmatprep.subr.mxu0 0.0
    %6576 = vmatpush2.msra.mxu0 0.0
    %6577 = vmatprep.subr.mxu0 0.0
    %6578 = vmatpush2.msra.mxu0 0.0
    %6579 = vmatprep.subr.mxu0 0.0
    %6580 = vmatpush2.msra.mxu0 0.0
    %6581 = vmatprep.subr.mxu0 0.0
    %6582 = vmatpush2.msra.mxu0 0.0
    %6583 = vmatprep.subr.mxu0 0.0
    %6584 = vmatpush2.msra.mxu0 0.0
    %6585 = vmatprep.subr.mxu0 0.0
    %6586 = vmatpush2.msra.mxu0 0.0
    %6587 = vmatprep.subr.mxu0 0.0
    %6588 = vmatpush2.msra.mxu0 0.0
    %6589 = vmatprep.subr.mxu0 0.0
    %6590 = vmatpush2.msra.mxu0 0.0
    %6591 = vmatprep.subr.mxu0 0.0
    %6592 = vmatpush2.msra.mxu0 0.0
    %6593 = vmatprep.subr.mxu0 0.0
    %6594 = vmatpush2.msra.mxu0 0.0
    %6595 = vmatprep.subr.mxu0 0.0
    %6596 = vmatpush2.msra.mxu0 0.0
    %6597 = vmatprep.subr.mxu0 0.0
    %6598 = vmatpush2.msra.mxu0 0.0
    %6599 = vmatprep.subr.mxu0 0.0
    %6600 = vmatpush2.msra.mxu0 0.0
    %6601 = vmatprep.subr.mxu0 0.0
    %6602 = vmatpush2.msra.mxu0 0.0
    %6603 = vmatprep.subr.mxu0 0.0
    %6604 = vmatpush2.msra.mxu0 0.0
    %6605 = vmatprep.subr.mxu0 0.0
    %6606 = vmatpush2.msra.mxu0 0.0
    %6607 = vmatprep.mubr.f32.mxu0 0.0
    %6608 = vmatmul.mubr.f32.gmra.mxu0 %v6541
    %v6609 = vpop.f32.mrf.mxu0
    %v6610 = vadd.f32 0.0, %v6609
    %v6611 = vpop.f32.mrf.mxu0
    %6612 = vdwg.mxu0
    %v6613 = vadd.f32 %v6535, %v6610
    %6614 = vrot.lane.b32.xlu0 %v6306, 96
    %v6615 = vpop.permute.xlu0 %6614
    %6616 = vrot.lane.b32.xlu0 %v6305, 117
    %v6617 = vpop.permute.xlu0 %6616
    %v6619 = vsel %vm936, %v6615, 0
    %6621 = vmatprep.subr.mxu0 0.0
    %6622 = vmatpush1.msra.mxu0 0.0
    %6623 = vmatprep.subr.mxu0 0.0
    %6624 = vmatpush1.msra.mxu0 0.0
    %6625 = vmatprep.subr.mxu0 0.0
    %6626 = vmatpush1.msra.mxu0 0.0
    %6627 = vmatprep.subr.mxu0 0.0
    %6628 = vmatpush1.msra.mxu0 0.0
    %6629 = vmatprep.subr.mxu0 0.0
    %6630 = vmatpush1.msra.mxu0 0.0
    %6631 = vmatprep.subr.mxu0 0.0
    %6632 = vmatpush1.msra.mxu0 0.0
    %6633 = vmatprep.subr.mxu0 0.0
    %6634 = vmatpush1.msra.mxu0 0.0
    %6635 = vmatprep.subr.mxu0 0.0
    %6636 = vmatpush1.msra.mxu0 0.0
    %6637 = vmatprep.subr.mxu0 0.0
    %6638 = vmatpush1.msra.mxu0 0.0
    %6639 = vmatprep.subr.mxu0 0.0
    %6640 = vmatpush1.msra.mxu0 0.0
    %6641 = vmatprep.subr.mxu0 0.0
    %6642 = vmatpush1.msra.mxu0 0.0
    %6643 = vmatprep.subr.mxu0 0.0
    %6644 = vmatpush1.msra.mxu0 0.0
    %6645 = vmatprep.subr.mxu0 0.0
    %6646 = vmatpush1.msra.mxu0 0.0
    %6647 = vmatprep.subr.mxu0 0.0
    %6648 = vmatpush1.msra.mxu0 0.0
    %6649 = vmatprep.subr.mxu0 0.0
    %6650 = vmatpush1.msra.mxu0 0.0
    %6651 = vmatprep.subr.mxu0 0.0
    %6652 = vmatpush1.msra.mxu0 %v6617
    %6653 = vmatprep.subr.mxu0 0.0
    %6654 = vmatpush2.msra.mxu0 0.0
    %6655 = vmatprep.subr.mxu0 0.0
    %6656 = vmatpush2.msra.mxu0 0.0
    %6657 = vmatprep.subr.mxu0 0.0
    %6658 = vmatpush2.msra.mxu0 0.0
    %6659 = vmatprep.subr.mxu0 0.0
    %6660 = vmatpush2.msra.mxu0 0.0
    %6661 = vmatprep.subr.mxu0 0.0
    %6662 = vmatpush2.msra.mxu0 0.0
    %6663 = vmatprep.subr.mxu0 0.0
    %6664 = vmatpush2.msra.mxu0 0.0
    %6665 = vmatprep.subr.mxu0 0.0
    %6666 = vmatpush2.msra.mxu0 0.0
    %6667 = vmatprep.subr.mxu0 0.0
    %6668 = vmatpush2.msra.mxu0 0.0
    %6669 = vmatprep.subr.mxu0 0.0
    %6670 = vmatpush2.msra.mxu0 0.0
    %6671 = vmatprep.subr.mxu0 0.0
    %6672 = vmatpush2.msra.mxu0 0.0
    %6673 = vmatprep.subr.mxu0 0.0
    %6674 = vmatpush2.msra.mxu0 0.0
    %6675 = vmatprep.subr.mxu0 0.0
    %6676 = vmatpush2.msra.mxu0 0.0
    %6677 = vmatprep.subr.mxu0 0.0
    %6678 = vmatpush2.msra.mxu0 0.0
    %6679 = vmatprep.subr.mxu0 0.0
    %6680 = vmatpush2.msra.mxu0 0.0
    %6681 = vmatprep.subr.mxu0 0.0
    %6682 = vmatpush2.msra.mxu0 0.0
    %6683 = vmatprep.subr.mxu0 0.0
    %6684 = vmatpush2.msra.mxu0 0.0
    %6685 = vmatprep.mubr.f32.mxu0 0.0
    %6686 = vmatmul.mubr.f32.gmra.mxu0 %v6619
    %v6687 = vpop.f32.mrf.mxu0
    %v6688 = vadd.f32 0.0, %v6687
    %v6689 = vpop.f32.mrf.mxu0
    %6690 = vdwg.mxu0
    %v6691 = vadd.f32 %v6613, %v6688
    %6692 = vrot.lane.b32.xlu0 %v6306, 88
    %v6693 = vpop.permute.xlu0 %6692
    %6694 = vrot.lane.b32.xlu0 %v6305, 116
    %v6695 = vpop.permute.xlu0 %6694
    %v6697 = vsel %vm936, %v6693, 0
    %6699 = vmatprep.subr.mxu0 0.0
    %6700 = vmatpush1.msra.mxu0 0.0
    %6701 = vmatprep.subr.mxu0 0.0
    %6702 = vmatpush1.msra.mxu0 0.0
    %6703 = vmatprep.subr.mxu0 0.0
    %6704 = vmatpush1.msra.mxu0 0.0
    %6705 = vmatprep.subr.mxu0 0.0
    %6706 = vmatpush1.msra.mxu0 0.0
    %6707 = vmatprep.subr.mxu0 0.0
    %6708 = vmatpush1.msra.mxu0 0.0
    %6709 = vmatprep.subr.mxu0 0.0
    %6710 = vmatpush1.msra.mxu0 0.0
    %6711 = vmatprep.subr.mxu0 0.0
    %6712 = vmatpush1.msra.mxu0 0.0
    %6713 = vmatprep.subr.mxu0 0.0
    %6714 = vmatpush1.msra.mxu0 0.0
    %6715 = vmatprep.subr.mxu0 0.0
    %6716 = vmatpush1.msra.mxu0 0.0
    %6717 = vmatprep.subr.mxu0 0.0
    %6718 = vmatpush1.msra.mxu0 0.0
    %6719 = vmatprep.subr.mxu0 0.0
    %6720 = vmatpush1.msra.mxu0 0.0
    %6721 = vmatprep.subr.mxu0 0.0
    %6722 = vmatpush1.msra.mxu0 0.0
    %6723 = vmatprep.subr.mxu0 0.0
    %6724 = vmatpush1.msra.mxu0 0.0
    %6725 = vmatprep.subr.mxu0 0.0
    %6726 = vmatpush1.msra.mxu0 0.0
    %6727 = vmatprep.subr.mxu0 0.0
    %6728 = vmatpush1.msra.mxu0 0.0
    %6729 = vmatprep.subr.mxu0 0.0
    %6730 = vmatpush1.msra.mxu0 %v6695
    %6731 = vmatprep.subr.mxu0 0.0
    %6732 = vmatpush2.msra.mxu0 0.0
    %6733 = vmatprep.subr.mxu0 0.0
    %6734 = vmatpush2.msra.mxu0 0.0
    %6735 = vmatprep.subr.mxu0 0.0
    %6736 = vmatpush2.msra.mxu0 0.0
    %6737 = vmatprep.subr.mxu0 0.0
    %6738 = vmatpush2.msra.mxu0 0.0
    %6739 = vmatprep.subr.mxu0 0.0
    %6740 = vmatpush2.msra.mxu0 0.0
    %6741 = vmatprep.subr.mxu0 0.0
    %6742 = vmatpush2.msra.mxu0 0.0
    %6743 = vmatprep.subr.mxu0 0.0
    %6744 = vmatpush2.msra.mxu0 0.0
    %6745 = vmatprep.subr.mxu0 0.0
    %6746 = vmatpush2.msra.mxu0 0.0
    %6747 = vmatprep.subr.mxu0 0.0
    %6748 = vmatpush2.msra.mxu0 0.0
    %6749 = vmatprep.subr.mxu0 0.0
    %6750 = vmatpush2.msra.mxu0 0.0
    %6751 = vmatprep.subr.mxu0 0.0
    %6752 = vmatpush2.msra.mxu0 0.0
    %6753 = vmatprep.subr.mxu0 0.0
    %6754 = vmatpush2.msra.mxu0 0.0
    %6755 = vmatprep.subr.mxu0 0.0
    %6756 = vmatpush2.msra.mxu0 0.0
    %6757 = vmatprep.subr.mxu0 0.0
    %6758 = vmatpush2.msra.mxu0 0.0
    %6759 = vmatprep.subr.mxu0 0.0
    %6760 = vmatpush2.msra.mxu0 0.0
    %6761 = vmatprep.subr.mxu0 0.0
    %6762 = vmatpush2.msra.mxu0 0.0
    %6763 = vmatprep.mubr.f32.mxu0 0.0
    %6764 = vmatmul.mubr.f32.gmra.mxu0 %v6697
    %v6765 = vpop.f32.mrf.mxu0
    %v6766 = vadd.f32 0.0, %v6765
    %v6767 = vpop.f32.mrf.mxu0
    %6768 = vdwg.mxu0
    %v6769 = vadd.f32 %v6691, %v6766
    %6770 = vrot.lane.b32.xlu0 %v6306, 80
    %v6771 = vpop.permute.xlu0 %6770
    %6772 = vrot.lane.b32.xlu0 %v6305, 108
    %v6773 = vpop.permute.xlu0 %6772
    %v6775 = vsel %vm936, %v6771, 0
    %6777 = vmatprep.subr.mxu0 0.0
    %6778 = vmatpush1.msra.mxu0 0.0
    %6779 = vmatprep.subr.mxu0 0.0
    %6780 = vmatpush1.msra.mxu0 0.0
    %6781 = vmatprep.subr.mxu0 0.0
    %6782 = vmatpush1.msra.mxu0 0.0
    %6783 = vmatprep.subr.mxu0 0.0
    %6784 = vmatpush1.msra.mxu0 0.0
    %6785 = vmatprep.subr.mxu0 0.0
    %6786 = vmatpush1.msra.mxu0 0.0
    %6787 = vmatprep.subr.mxu0 0.0
    %6788 = vmatpush1.msra.mxu0 0.0
    %6789 = vmatprep.subr.mxu0 0.0
    %6790 = vmatpush1.msra.mxu0 0.0
    %6791 = vmatprep.subr.mxu0 0.0
    %6792 = vmatpush1.msra.mxu0 0.0
    %6793 = vmatprep.subr.mxu0 0.0
    %6794 = vmatpush1.msra.mxu0 0.0
    %6795 = vmatprep.subr.mxu0 0.0
    %6796 = vmatpush1.msra.mxu0 0.0
    %6797 = vmatprep.subr.mxu0 0.0
    %6798 = vmatpush1.msra.mxu0 0.0
    %6799 = vmatprep.subr.mxu0 0.0
    %6800 = vmatpush1.msra.mxu0 0.0
    %6801 = vmatprep.subr.mxu0 0.0
    %6802 = vmatpush1.msra.mxu0 0.0
    %6803 = vmatprep.subr.mxu0 0.0
    %6804 = vmatpush1.msra.mxu0 0.0
    %6805 = vmatprep.subr.mxu0 0.0
    %6806 = vmatpush1.msra.mxu0 0.0
    %6807 = vmatprep.subr.mxu0 0.0
    %6808 = vmatpush1.msra.mxu0 %v6773
    %6809 = vmatprep.subr.mxu0 0.0
    %6810 = vmatpush2.msra.mxu0 0.0
    %6811 = vmatprep.subr.mxu0 0.0
    %6812 = vmatpush2.msra.mxu0 0.0
    %6813 = vmatprep.subr.mxu0 0.0
    %6814 = vmatpush2.msra.mxu0 0.0
    %6815 = vmatprep.subr.mxu0 0.0
    %6816 = vmatpush2.msra.mxu0 0.0
    %6817 = vmatprep.subr.mxu0 0.0
    %6818 = vmatpush2.msra.mxu0 0.0
    %6819 = vmatprep.subr.mxu0 0.0
    %6820 = vmatpush2.msra.mxu0 0.0
    %6821 = vmatprep.subr.mxu0 0.0
    %6822 = vmatpush2.msra.mxu0 0.0
    %6823 = vmatprep.subr.mxu0 0.0
    %6824 = vmatpush2.msra.mxu0 0.0
    %6825 = vmatprep.subr.mxu0 0.0
    %6826 = vmatpush2.msra.mxu0 0.0
    %6827 = vmatprep.subr.mxu0 0.0
    %6828 = vmatpush2.msra.mxu0 0.0
    %6829 = vmatprep.subr.mxu0 0.0
    %6830 = vmatpush2.msra.mxu0 0.0
    %6831 = vmatprep.subr.mxu0 0.0
    %6832 = vmatpush2.msra.mxu0 0.0
    %6833 = vmatprep.subr.mxu0 0.0
    %6834 = vmatpush2.msra.mxu0 0.0
    %6835 = vmatprep.subr.mxu0 0.0
    %6836 = vmatpush2.msra.mxu0 0.0
    %6837 = vmatprep.subr.mxu0 0.0
    %6838 = vmatpush2.msra.mxu0 0.0
    %6839 = vmatprep.subr.mxu0 0.0
    %6840 = vmatpush2.msra.mxu0 0.0
    %6841 = vmatprep.mubr.f32.mxu0 0.0
    %6842 = vmatmul.mubr.f32.gmra.mxu0 %v6775
    %v6843 = vpop.f32.mrf.mxu0
    %v6844 = vadd.f32 0.0, %v6843
    %v6845 = vpop.f32.mrf.mxu0
    %6846 = vdwg.mxu0
    %v6847 = vadd.f32 %v6769, %v6844
    %6848 = vrot.lane.b32.xlu0 %v6306, 72
    %v6849 = vpop.permute.xlu0 %6848
    %6850 = vrot.lane.b32.xlu0 %v6305, 107
    %v6851 = vpop.permute.xlu0 %6850
    %v6853 = vsel %vm936, %v6849, 0
    %6855 = vmatprep.subr.mxu0 0.0
    %6856 = vmatpush1.msra.mxu0 0.0
    %6857 = vmatprep.subr.mxu0 0.0
    %6858 = vmatpush1.msra.mxu0 0.0
    %6859 = vmatprep.subr.mxu0 0.0
    %6860 = vmatpush1.msra.mxu0 0.0
    %6861 = vmatprep.subr.mxu0 0.0
    %6862 = vmatpush1.msra.mxu0 0.0
    %6863 = vmatprep.subr.mxu0 0.0
    %6864 = vmatpush1.msra.mxu0 0.0
    %6865 = vmatprep.subr.mxu0 0.0
    %6866 = vmatpush1.msra.mxu0 0.0
    %6867 = vmatprep.subr.mxu0 0.0
    %6868 = vmatpush1.msra.mxu0 0.0
    %6869 = vmatprep.subr.mxu0 0.0
    %6870 = vmatpush1.msra.mxu0 0.0
    %6871 = vmatprep.subr.mxu0 0.0
    %6872 = vmatpush1.msra.mxu0 0.0
    %6873 = vmatprep.subr.mxu0 0.0
    %6874 = vmatpush1.msra.mxu0 0.0
    %6875 = vmatprep.subr.mxu0 0.0
    %6876 = vmatpush1.msra.mxu0 0.0
    %6877 = vmatprep.subr.mxu0 0.0
    %6878 = vmatpush1.msra.mxu0 0.0
    %6879 = vmatprep.subr.mxu0 0.0
    %6880 = vmatpush1.msra.mxu0 0.0
    %6881 = vmatprep.subr.mxu0 0.0
    %6882 = vmatpush1.msra.mxu0 0.0
    %6883 = vmatprep.subr.mxu0 0.0
    %6884 = vmatpush1.msra.mxu0 0.0
    %6885 = vmatprep.subr.mxu0 0.0
    %6886 = vmatpush1.msra.mxu0 %v6851
    %6887 = vmatprep.subr.mxu0 0.0
    %6888 = vmatpush2.msra.mxu0 0.0
    %6889 = vmatprep.subr.mxu0 0.0
    %6890 = vmatpush2.msra.mxu0 0.0
    %6891 = vmatprep.subr.mxu0 0.0
    %6892 = vmatpush2.msra.mxu0 0.0
    %6893 = vmatprep.subr.mxu0 0.0
    %6894 = vmatpush2.msra.mxu0 0.0
    %6895 = vmatprep.subr.mxu0 0.0
    %6896 = vmatpush2.msra.mxu0 0.0
    %6897 = vmatprep.subr.mxu0 0.0
    %6898 = vmatpush2.msra.mxu0 0.0
    %6899 = vmatprep.subr.mxu0 0.0
    %6900 = vmatpush2.msra.mxu0 0.0
    %6901 = vmatprep.subr.mxu0 0.0
    %6902 = vmatpush2.msra.mxu0 0.0
    %6903 = vmatprep.subr.mxu0 0.0
    %6904 = vmatpush2.msra.mxu0 0.0
    %6905 = vmatprep.subr.mxu0 0.0
    %6906 = vmatpush2.msra.mxu0 0.0
    %6907 = vmatprep.subr.mxu0 0.0
    %6908 = vmatpush2.msra.mxu0 0.0
    %6909 = vmatprep.subr.mxu0 0.0
    %6910 = vmatpush2.msra.mxu0 0.0
    %6911 = vmatprep.subr.mxu0 0.0
    %6912 = vmatpush2.msra.mxu0 0.0
    %6913 = vmatprep.subr.mxu0 0.0
    %6914 = vmatpush2.msra.mxu0 0.0
    %6915 = vmatprep.subr.mxu0 0.0
    %6916 = vmatpush2.msra.mxu0 0.0
    %6917 = vmatprep.subr.mxu0 0.0
    %6918 = vmatpush2.msra.mxu0 0.0
    %6919 = vmatprep.mubr.f32.mxu0 0.0
    %6920 = vmatmul.mubr.f32.gmra.mxu0 %v6853
    %v6921 = vpop.f32.mrf.mxu0
    %v6922 = vadd.f32 0.0, %v6921
    %v6923 = vpop.f32.mrf.mxu0
    %6924 = vdwg.mxu0
    %v6925 = vadd.f32 %v6847, %v6922
    %6926 = vrot.lane.b32.xlu0 %v6306, 64
    %v6927 = vpop.permute.xlu0 %6926
    %6928 = vrot.lane.b32.xlu0 %v6305, 106
    %v6929 = vpop.permute.xlu0 %6928
    %v6931 = vsel %vm936, %v6927, 0
    %6933 = vmatprep.subr.mxu0 0.0
    %6934 = vmatpush1.msra.mxu0 0.0
    %6935 = vmatprep.subr.mxu0 0.0
    %6936 = vmatpush1.msra.mxu0 0.0
    %6937 = vmatprep.subr.mxu0 0.0
    %6938 = vmatpush1.msra.mxu0 0.0
    %6939 = vmatprep.subr.mxu0 0.0
    %6940 = vmatpush1.msra.mxu0 0.0
    %6941 = vmatprep.subr.mxu0 0.0
    %6942 = vmatpush1.msra.mxu0 0.0
    %6943 = vmatprep.subr.mxu0 0.0
    %6944 = vmatpush1.msra.mxu0 0.0
    %6945 = vmatprep.subr.mxu0 0.0
    %6946 = vmatpush1.msra.mxu0 0.0
    %6947 = vmatprep.subr.mxu0 0.0
    %6948 = vmatpush1.msra.mxu0 0.0
    %6949 = vmatprep.subr.mxu0 0.0
    %6950 = vmatpush1.msra.mxu0 0.0
    %6951 = vmatprep.subr.mxu0 0.0
    %6952 = vmatpush1.msra.mxu0 0.0
    %6953 = vmatprep.subr.mxu0 0.0
    %6954 = vmatpush1.msra.mxu0 0.0
    %6955 = vmatprep.subr.mxu0 0.0
    %6956 = vmatpush1.msra.mxu0 0.0
    %6957 = vmatprep.subr.mxu0 0.0
    %6958 = vmatpush1.msra.mxu0 0.0
    %6959 = vmatprep.subr.mxu0 0.0
    %6960 = vmatpush1.msra.mxu0 0.0
    %6961 = vmatprep.subr.mxu0 0.0
    %6962 = vmatpush1.msra.mxu0 0.0
    %6963 = vmatprep.subr.mxu0 0.0
    %6964 = vmatpush1.msra.mxu0 %v6929
    %6965 = vmatprep.subr.mxu0 0.0
    %6966 = vmatpush2.msra.mxu0 0.0
    %6967 = vmatprep.subr.mxu0 0.0
    %6968 = vmatpush2.msra.mxu0 0.0
    %6969 = vmatprep.subr.mxu0 0.0
    %6970 = vmatpush2.msra.mxu0 0.0
    %6971 = vmatprep.subr.mxu0 0.0
    %6972 = vmatpush2.msra.mxu0 0.0
    %6973 = vmatprep.subr.mxu0 0.0
    %6974 = vmatpush2.msra.mxu0 0.0
    %6975 = vmatprep.subr.mxu0 0.0
    %6976 = vmatpush2.msra.mxu0 0.0
    %6977 = vmatprep.subr.mxu0 0.0
    %6978 = vmatpush2.msra.mxu0 0.0
    %6979 = vmatprep.subr.mxu0 0.0
    %6980 = vmatpush2.msra.mxu0 0.0
    %6981 = vmatprep.subr.mxu0 0.0
    %6982 = vmatpush2.msra.mxu0 0.0
    %6983 = vmatprep.subr.mxu0 0.0
    %6984 = vmatpush2.msra.mxu0 0.0
    %6985 = vmatprep.subr.mxu0 0.0
    %6986 = vmatpush2.msra.mxu0 0.0
    %6987 = vmatprep.subr.mxu0 0.0
    %6988 = vmatpush2.msra.mxu0 0.0
    %6989 = vmatprep.subr.mxu0 0.0
    %6990 = vmatpush2.msra.mxu0 0.0
    %6991 = vmatprep.subr.mxu0 0.0
    %6992 = vmatpush2.msra.mxu0 0.0
    %6993 = vmatprep.subr.mxu0 0.0
    %6994 = vmatpush2.msra.mxu0 0.0
    %6995 = vmatprep.subr.mxu0 0.0
    %6996 = vmatpush2.msra.mxu0 0.0
    %6997 = vmatprep.mubr.f32.mxu0 0.0
    %6998 = vmatmul.mubr.f32.gmra.mxu0 %v6931
    %v6999 = vpop.f32.mrf.mxu0
    %v7000 = vadd.f32 0.0, %v6999
    %v7001 = vpop.f32.mrf.mxu0
    %7002 = vdwg.mxu0
    %v7003 = vadd.f32 %v6925, %v7000
    %v7005 = vadd.f32 %v7003, %v6188
    %v7006 = vmax.f32 %v7005, 0.0
    %7007 = vst.msk [vmem:[#allocation5] sm:$0xff] %vm936, %v7006
    %7008 = vrot.lane.b32.xlu0 %v5547, 100
    %v7009 = vpop.permute.xlu0 %7008
    %v7011 = vadd.f32 %v7003, %v7009
    %v7012 = vmax.f32 %v7011, 0.0
    %7014 = vrot.lane.b32.xlu0 %v7012, 126
    %v7015 = vpop.permute.xlu0 %7014
    %vm7017 = vcmask 130112
    %7018 = vst.msk [vmem:[#allocation5] sm:$0xff] %vm7017, %v7015
    %7019 = vrot.lane.b32.xlu0 %v5547, 98
    %v7020 = vpop.permute.xlu0 %7019
    %v7022 = vadd.f32 %v7003, %v7020
    %v7023 = vmax.f32 %v7022, 0.0
    %7025 = vrot.lane.b32.xlu0 %v7023, 124
    %v7026 = vpop.permute.xlu0 %7025
    %vm7028 = vcmask 195712
    %7029 = vst.msk [vmem:[#allocation5] sm:$0xff] %vm7028, %v7026
    %7030 = vrot.lane.b32.xlu0 %v5547, 96
    %v7031 = vpop.permute.xlu0 %7030
    %v7033 = vadd.f32 %v7003, %v7031
    %v7034 = vmax.f32 %v7033, 0.0
    %7036 = vrot.lane.b32.xlu0 %v7034, 122
    %v7037 = vpop.permute.xlu0 %7036
    %vm7039 = vcmask 261312
    %7040 = vst.msk [vmem:[#allocation5] sm:$0xff] %vm7039, %v7037
    %7041 = vrot.lane.b32.xlu0 %v5547, 94
    %v7042 = vpop.permute.xlu0 %7041
    %v7044 = vadd.f32 %v7003, %v7042
    %v7045 = vmax.f32 %v7044, 0.0
    %7047 = vrot.lane.b32.xlu0 %v7045, 120
    %v7048 = vpop.permute.xlu0 %7047
    %vm7050 = vcmask 326912
    %7051 = vst.msk [vmem:[#allocation5] sm:$0xff] %vm7050, %v7048
    %7052 = vrot.lane.b32.xlu0 %v5547, 92
    %v7053 = vpop.permute.xlu0 %7052
    %v7055 = vadd.f32 %v7003, %v7053
    %v7056 = vmax.f32 %v7055, 0.0
    %7058 = vrot.lane.b32.xlu0 %v7056, 118
    %v7059 = vpop.permute.xlu0 %7058
    %vm7061 = vcmask 392512
    %7062 = vst.msk [vmem:[#allocation5] sm:$0xff] %vm7061, %v7059
    %7063 = vrot.lane.b32.xlu0 %v5547, 90
    %v7064 = vpop.permute.xlu0 %7063
    %v7066 = vadd.f32 %v7003, %v7064
    %v7067 = vmax.f32 %v7066, 0.0
    %7069 = vrot.lane.b32.xlu0 %v7067, 116
    %v7070 = vpop.permute.xlu0 %7069
    %vm7072 = vcmask 458112
    %7073 = vst.msk [vmem:[#allocation5] sm:$0xff] %vm7072, %v7070
    %7074 = vrot.lane.b32.xlu0 %v5547, 88
    %v7075 = vpop.permute.xlu0 %7074
    %v7077 = vadd.f32 %v7003, %v7075
    %v7078 = vmax.f32 %v7077, 0.0
    %7080 = vrot.lane.b32.xlu0 %v7078, 114
    %v7081 = vpop.permute.xlu0 %7080
    %vm7083 = vcmask 523712
    %7084 = vst.msk [vmem:[#allocation5] sm:$0xff] %vm7083, %v7081
    %v7085 = vld [vmem:[%s11] sm:$0x1f]
    %v7086 = vld [vmem:[#allocation5] sm:$0x1]
    %v7087 = vpack.c.bf16 %v7086, %v7086
    %v7088 = vld [vmem:[#allocation6] sm:$0xff]
    %v7089 = vld [vmem:[#allocation6 + $0x8] sm:$0xff]
    %v7090 = vld [vmem:[#allocation6 + $0x10] sm:$0xf]
    %v7091 = vld [vmem:[#allocation6 + $0x14] sm:$0xff]
    %v7092 = vld [vmem:[#allocation6 + $0x1c] sm:$0xff]
    %v7093 = vld [vmem:[#allocation6 + $0x24] sm:$0xf]
    %v7094 = vld [vmem:[#allocation6 + $0x28] sm:$0xff]
    %v7095 = vld [vmem:[#allocation6 + $0x30] sm:$0xff]
    %v7096 = vld [vmem:[#allocation6 + $0x38] sm:$0xf]
    %v7097 = vld [vmem:[#allocation6 + $0x3c] sm:$0xff]
    %v7098 = vld [vmem:[#allocation6 + $0x44] sm:$0xff]
    %v7099 = vld [vmem:[#allocation6 + $0x4c] sm:$0xf]
    %v7100 = vld [vmem:[#allocation6 + $0x50] sm:$0xff]
    %v7101 = vld [vmem:[#allocation6 + $0x58] sm:$0xff]
    %v7102 = vld [vmem:[#allocation6 + $0x60] sm:$0xf]
    %v7103 = vld [vmem:[#allocation6 + $0x64] sm:$0xff]
    %v7104 = vld [vmem:[#allocation6 + $0x6c] sm:$0xff]
    %v7105 = vld [vmem:[#allocation6 + $0x74] sm:$0xf]
    %v7106 = vld [vmem:[#allocation6 + $0x78] sm:$0xff]
    %v7107 = vld [vmem:[#allocation6 + $0x80] sm:$0xff]
    %v7108 = vld [vmem:[#allocation6 + $0x88] sm:$0xf]
    %v7109 = vld [vmem:[#allocation6 + $0x8c] sm:$0xff]
    %v7110 = vld [vmem:[#allocation6 + $0x94] sm:$0xff]
    %v7111 = vld [vmem:[#allocation6 + $0x9c] sm:$0xf]
    %v7136 = vunpack.c.l.b16 %v7088
    %v7137 = vunpack.c.h.b16 %v7088
    %v7138 = vunpack.c.l.b16 %v7089
    %v7139 = vunpack.c.h.b16 %v7089
    %v7140 = vunpack.c.l.b16 %v7090
    %v7141 = vunpack.c.l.b16 %v7091
    %v7142 = vunpack.c.h.b16 %v7091
    %v7143 = vunpack.c.l.b16 %v7092
    %v7144 = vunpack.c.h.b16 %v7092
    %v7145 = vunpack.c.l.b16 %v7093
    %v7146 = vunpack.c.l.b16 %v7094
    %v7147 = vunpack.c.h.b16 %v7094
    %v7148 = vunpack.c.l.b16 %v7095
    %v7149 = vunpack.c.h.b16 %v7095
    %v7150 = vunpack.c.l.b16 %v7096
    %v7151 = vunpack.c.l.b16 %v7097
    %v7152 = vunpack.c.h.b16 %v7097
    %v7153 = vunpack.c.l.b16 %v7098
    %v7154 = vunpack.c.h.b16 %v7098
    %v7155 = vunpack.c.l.b16 %v7099
    %v7156 = vunpack.c.l.b16 %v7100
    %v7157 = vunpack.c.h.b16 %v7100
    %v7158 = vunpack.c.l.b16 %v7101
    %v7159 = vunpack.c.h.b16 %v7101
    %v7160 = vunpack.c.l.b16 %v7102
    %v7161 = vunpack.c.l.b16 %v7103
    %v7162 = vunpack.c.h.b16 %v7103
    %v7163 = vunpack.c.l.b16 %v7104
    %v7164 = vunpack.c.h.b16 %v7104
    %v7165 = vunpack.c.l.b16 %v7105
    %v7166 = vunpack.c.l.b16 %v7106
    %v7167 = vunpack.c.h.b16 %v7106
    %v7168 = vunpack.c.l.b16 %v7107
    %v7169 = vunpack.c.h.b16 %v7107
    %v7170 = vunpack.c.l.b16 %v7108
    %v7171 = vunpack.c.l.b16 %v7109
    %v7172 = vunpack.c.h.b16 %v7109
    %v7173 = vunpack.c.l.b16 %v7110
    %v7174 = vunpack.c.h.b16 %v7110
    %v7175 = vunpack.c.l.b16 %v7111
    %v7176 = vpack.c.b16 %v7141, %v7136
    %v7177 = vpack.c.b16 %v7142, %v7137
    %v7178 = vpack.c.b16 %v7143, %v7138
    %v7179 = vpack.c.b16 %v7144, %v7139
    %v7180 = vpack.c.b16 %v7145, %v7140
    %v7181 = vpack.c.b16 %v7151, %v7146
    %v7182 = vpack.c.b16 %v7152, %v7147
    %v7183 = vpack.c.b16 %v7153, %v7148
    %v7184 = vpack.c.b16 %v7154, %v7149
    %v7185 = vpack.c.b16 %v7155, %v7150
    %v7186 = vpack.c.b16 %v7161, %v7156
    %v7187 = vpack.c.b16 %v7162, %v7157
    %v7188 = vpack.c.b16 %v7163, %v7158
    %v7189 = vpack.c.b16 %v7164, %v7159
    %v7190 = vpack.c.b16 %v7165, %v7160
    %v7191 = vpack.c.b16 %v7171, %v7166
    %v7192 = vpack.c.b16 %v7172, %v7167
    %v7193 = vpack.c.b16 %v7173, %v7168
    %v7194 = vpack.c.b16 %v7174, %v7169
    %v7195 = vpack.c.b16 %v7175, %v7170
    %vm7216 = vcmask 523264
    %v7218 = vsel %vm7216, %v7087, 0
    %7220 = vmatprep.subr.bf16.mxu0 0
    %7221 = vmatpush1.bf16.msra.mxu0 0
    %7222 = vmatprep.subr.bf16.mxu0 0
    %7223 = vmatpush1.bf16.msra.mxu0 0
    %7224 = vmatprep.subr.bf16.mxu0 0
    %7225 = vmatpush1.bf16.msra.mxu0 0
    %7226 = vmatprep.subr.bf16.mxu0 0
    %7227 = vmatpush1.bf16.msra.mxu0 0
    %7228 = vmatprep.subr.bf16.mxu0 %v7192
    %7229 = vmatpush1.bf16.msra.mxu0 %v7191
    %7230 = vmatprep.subr.bf16.mxu0 %v7187
    %7231 = vmatpush1.bf16.msra.mxu0 %v7186
    %7232 = vmatprep.subr.bf16.mxu0 %v7182
    %7233 = vmatpush1.bf16.msra.mxu0 %v7181
    %7234 = vmatprep.subr.bf16.mxu0 %v7177
    %7235 = vmatpush1.bf16.msra.mxu0 %v7176
    %7236 = vmatprep.subr.bf16.mxu0 0
    %7237 = vmatpush2.bf16.msra.mxu0 0
    %7238 = vmatprep.subr.bf16.mxu0 0
    %7239 = vmatpush2.bf16.msra.mxu0 0
    %7240 = vmatprep.subr.bf16.mxu0 0
    %7241 = vmatpush2.bf16.msra.mxu0 0
    %7242 = vmatprep.subr.bf16.mxu0 0
    %7243 = vmatpush2.bf16.msra.mxu0 0
    %7244 = vmatprep.subr.bf16.mxu0 0
    %7245 = vmatpush2.bf16.msra.mxu0 0
    %7246 = vmatprep.subr.bf16.mxu0 0
    %7247 = vmatpush2.bf16.msra.mxu0 0
    %7248 = vmatprep.subr.bf16.mxu0 0
    %7249 = vmatpush2.bf16.msra.mxu0 0
    %7250 = vmatprep.subr.bf16.mxu0 0
    %7251 = vmatpush2.bf16.msra.mxu0 0
    %7252 = vmatprep.mubr.bf16.mxu0 0
    %7253 = vmatmul.mubr.bf16.gmra.mxu0 %v7218
    %v7254 = vpop.f32.mrf.mxu0
    %v7255 = vadd.f32 0.0, %v7254
    %v7256 = vpop.f32.mrf.mxu0
    %v7257 = vadd.f32 0.0, %v7256
    %v7258 = vpop.f32.mrf.mxu0
    %v7259 = vpop.f32.mrf.mxu0
    %7260 = vdwg.mxu0
    %7261 = vmatprep.subr.bf16.mxu0 0
    %7262 = vmatpush1.bf16.msra.mxu0 0
    %7263 = vmatprep.subr.bf16.mxu0 0
    %7264 = vmatpush1.bf16.msra.mxu0 0
    %7265 = vmatprep.subr.bf16.mxu0 0
    %7266 = vmatpush1.bf16.msra.mxu0 0
    %7267 = vmatprep.subr.bf16.mxu0 0
    %7268 = vmatpush1.bf16.msra.mxu0 0
    %7269 = vmatprep.subr.bf16.mxu0 %v7194
    %7270 = vmatpush1.bf16.msra.mxu0 %v7193
    %7271 = vmatprep.subr.bf16.mxu0 %v7189
    %7272 = vmatpush1.bf16.msra.mxu0 %v7188
    %7273 = vmatprep.subr.bf16.mxu0 %v7184
    %7274 = vmatpush1.bf16.msra.mxu0 %v7183
    %7275 = vmatprep.subr.bf16.mxu0 %v7179
    %7276 = vmatpush1.bf16.msra.mxu0 %v7178
    %7277 = vmatprep.subr.bf16.mxu0 0
    %7278 = vmatpush2.bf16.msra.mxu0 0
    %7279 = vmatprep.subr.bf16.mxu0 0
    %7280 = vmatpush2.bf16.msra.mxu0 0
    %7281 = vmatprep.subr.bf16.mxu0 0
    %7282 = vmatpush2.bf16.msra.mxu0 0
    %7283 = vmatprep.subr.bf16.mxu0 0
    %7284 = vmatpush2.bf16.msra.mxu0 0
    %7285 = vmatprep.subr.bf16.mxu0 0
    %7286 = vmatpush2.bf16.msra.mxu0 0
    %7287 = vmatprep.subr.bf16.mxu0 0
    %7288 = vmatpush2.bf16.msra.mxu0 0
    %7289 = vmatprep.subr.bf16.mxu0 0
    %7290 = vmatpush2.bf16.msra.mxu0 0
    %7291 = vmatprep.subr.bf16.mxu0 0
    %7292 = vmatpush2.bf16.msra.mxu0 0
    %7293 = vmatprep.mubr.bf16.mxu0 0
    %7294 = vmatmul.mubr.bf16.gmra.mxu0 %v7218
    %v7295 = vpop.f32.mrf.mxu0
    %v7296 = vadd.f32 0.0, %v7295
    %v7297 = vpop.f32.mrf.mxu0
    %v7298 = vadd.f32 0.0, %v7297
    %v7299 = vpop.f32.mrf.mxu0
    %v7300 = vpop.f32.mrf.mxu0
    %7301 = vdwg.mxu0
    %7302 = vmatprep.subr.bf16.mxu0 0
    %7303 = vmatpush1.bf16.msra.mxu0 0
    %7304 = vmatprep.subr.bf16.mxu0 0
    %7305 = vmatpush1.bf16.msra.mxu0 0
    %7306 = vmatprep.subr.bf16.mxu0 0
    %7307 = vmatpush1.bf16.msra.mxu0 0
    %7308 = vmatprep.subr.bf16.mxu0 0
    %7309 = vmatpush1.bf16.msra.mxu0 0
    %7310 = vmatprep.subr.bf16.mxu0 0
    %7311 = vmatpush1.bf16.msra.mxu0 %v7195
    %7312 = vmatprep.subr.bf16.mxu0 0
    %7313 = vmatpush1.bf16.msra.mxu0 %v7190
    %7314 = vmatprep.subr.bf16.mxu0 0
    %7315 = vmatpush1.bf16.msra.mxu0 %v7185
    %7316 = vmatprep.subr.bf16.mxu0 0
    %7317 = vmatpush1.bf16.msra.mxu0 %v7180
    %7318 = vmatprep.subr.bf16.mxu0 0
    %7319 = vmatpush2.bf16.msra.mxu0 0
    %7320 = vmatprep.subr.bf16.mxu0 0
    %7321 = vmatpush2.bf16.msra.mxu0 0
    %7322 = vmatprep.subr.bf16.mxu0 0
    %7323 = vmatpush2.bf16.msra.mxu0 0
    %7324 = vmatprep.subr.bf16.mxu0 0
    %7325 = vmatpush2.bf16.msra.mxu0 0
    %7326 = vmatprep.subr.bf16.mxu0 0
    %7327 = vmatpush2.bf16.msra.mxu0 0
    %7328 = vmatprep.subr.bf16.mxu0 0
    %7329 = vmatpush2.bf16.msra.mxu0 0
    %7330 = vmatprep.subr.bf16.mxu0 0
    %7331 = vmatpush2.bf16.msra.mxu0 0
    %7332 = vmatprep.subr.bf16.mxu0 0
    %7333 = vmatpush2.bf16.msra.mxu0 0
    %7334 = vmatprep.mubr.bf16.mxu0 0
    %7335 = vmatmul.mubr.bf16.gmra.mxu0 %v7218
    %v7336 = vpop.f32.mrf.mxu0
    %v7337 = vadd.f32 0.0, %v7336
    %v7338 = vpop.f32.mrf.mxu0
    %v7339 = vpop.f32.mrf.mxu0
    %v7340 = vpop.f32.mrf.mxu0
    %7341 = vdwg.mxu0
    %v7347 = vcombine.low %v7255, %v7257
    %v7348 = vcombine.low %v7296, %v7298
    %v7350 = vunpack.c.l.s4 1966171168
    %v7351 = vunpack.c.0.s8 %v7350
    %v7352 = vlaneseq
    %v7353 = vshrl.u32 %v7352, 7
    %v7354 = vsub.s32 %v7351, %v7353
    %v7355 = vrot.slane %v7347, %v7354
    %v7357 = vunpack.c.l.s4 1966171168
    %v7358 = vunpack.c.0.s8 %v7357
    %v7359 = vlaneseq
    %v7360 = vshrl.u32 %v7359, 7
    %v7361 = vsub.s32 %v7358, %v7360
    %v7362 = vrot.slane %v7348, %v7361
    %v7364 = vunpack.c.l.s4 1966171168
    %v7365 = vunpack.c.0.s8 %v7364
    %v7366 = vlaneseq
    %v7367 = vshrl.u32 %v7366, 7
    %v7368 = vsub.s32 %v7365, %v7367
    %v7369 = vrot.slane %v7337, %v7368
    %v7370 = vcombine.low %v7355, %v7362
    %v7372 = vunpack.c.l.s4 1966171168
    %v7373 = vunpack.c.0.s8 %v7372
    %v7374 = vlaneseq
    %v7375 = vshrl.u32 %v7374, 7
    %v7376 = vsub.s32 %v7373, %v7375
    %v7377 = vrot.slane %v7370, %v7376
    %v7379 = vunpack.c.l.s4 1966171168
    %v7380 = vunpack.c.0.s8 %v7379
    %v7381 = vlaneseq
    %v7382 = vshrl.u32 %v7381, 7
    %v7383 = vsub.s32 %v7380, %v7382
    %v7384 = vrot.slane %v7369, %v7383
    %v7385 = vcombine.low %v7377, %v7384
    %v7387 = vadd.f32 %v7085, %v7385
    %v7388 = vld [vmem:[#allocation5 + $0x1] sm:$0x1]
    %v7389 = vpack.c.bf16 %v7388, %v7388
    %s7390 = scalar_lea.vmem [#allocation6], 160
    %v7391 = vld [vmem:[%s7390] sm:$0xff]
    %v7392 = vld [vmem:[%s7390 + $0x8] sm:$0xff]
    %v7393 = vld [vmem:[%s7390 + $0x10] sm:$0xf]
    %v7394 = vld [vmem:[%s7390 + $0x14] sm:$0xff]
    %v7395 = vld [vmem:[%s7390 + $0x1c] sm:$0xff]
    %v7396 = vld [vmem:[%s7390 + $0x24] sm:$0xf]
    %v7397 = vld [vmem:[%s7390 + $0x28] sm:$0xff]
    %v7398 = vld [vmem:[%s7390 + $0x30] sm:$0xff]
    %v7399 = vld [vmem:[%s7390 + $0x38] sm:$0xf]
    %v7400 = vld [vmem:[%s7390 + $0x3c] sm:$0xff]
    %v7401 = vld [vmem:[%s7390 + $0x44] sm:$0xff]
    %v7402 = vld [vmem:[%s7390 + $0x4c] sm:$0xf]
    %v7403 = vld [vmem:[%s7390 + $0x50] sm:$0xff]
    %v7404 = vld [vmem:[%s7390 + $0x58] sm:$0xff]
    %v7405 = vld [vmem:[%s7390 + $0x60] sm:$0xf]
    %v7406 = vld [vmem:[%s7390 + $0x64] sm:$0xff]
    %v7407 = vld [vmem:[%s7390 + $0x6c] sm:$0xff]
    %v7408 = vld [vmem:[%s7390 + $0x74] sm:$0xf]
    %v7409 = vld [vmem:[%s7390 + $0x78] sm:$0xff]
    %v7410 = vld [vmem:[%s7390 + $0x80] sm:$0xff]
    %v7411 = vld [vmem:[%s7390 + $0x88] sm:$0xf]
    %v7412 = vld [vmem:[%s7390 + $0x8c] sm:$0xff]
    %v7413 = vld [vmem:[%s7390 + $0x94] sm:$0xff]
    %v7414 = vld [vmem:[%s7390 + $0x9c] sm:$0xf]
    %v7439 = vunpack.c.l.b16 %v7391
    %v7440 = vunpack.c.h.b16 %v7391
    %v7441 = vunpack.c.l.b16 %v7392
    %v7442 = vunpack.c.h.b16 %v7392
    %v7443 = vunpack.c.l.b16 %v7393
    %v7444 = vunpack.c.l.b16 %v7394
    %v7445 = vunpack.c.h.b16 %v7394
    %v7446 = vunpack.c.l.b16 %v7395
    %v7447 = vunpack.c.h.b16 %v7395
    %v7448 = vunpack.c.l.b16 %v7396
    %v7449 = vunpack.c.l.b16 %v7397
    %v7450 = vunpack.c.h.b16 %v7397
    %v7451 = vunpack.c.l.b16 %v7398
    %v7452 = vunpack.c.h.b16 %v7398
    %v7453 = vunpack.c.l.b16 %v7399
    %v7454 = vunpack.c.l.b16 %v7400
    %v7455 = vunpack.c.h.b16 %v7400
    %v7456 = vunpack.c.l.b16 %v7401
    %v7457 = vunpack.c.h.b16 %v7401
    %v7458 = vunpack.c.l.b16 %v7402
    %v7459 = vunpack.c.l.b16 %v7403
    %v7460 = vunpack.c.h.b16 %v7403
    %v7461 = vunpack.c.l.b16 %v7404
    %v7462 = vunpack.c.h.b16 %v7404
    %v7463 = vunpack.c.l.b16 %v7405
    %v7464 = vunpack.c.l.b16 %v7406
    %v7465 = vunpack.c.h.b16 %v7406
    %v7466 = vunpack.c.l.b16 %v7407
    %v7467 = vunpack.c.h.b16 %v7407
    %v7468 = vunpack.c.l.b16 %v7408
    %v7469 = vunpack.c.l.b16 %v7409
    %v7470 = vunpack.c.h.b16 %v7409
    %v7471 = vunpack.c.l.b16 %v7410
    %v7472 = vunpack.c.h.b16 %v7410
    %v7473 = vunpack.c.l.b16 %v7411
    %v7474 = vunpack.c.l.b16 %v7412
    %v7475 = vunpack.c.h.b16 %v7412
    %v7476 = vunpack.c.l.b16 %v7413
    %v7477 = vunpack.c.h.b16 %v7413
    %v7478 = vunpack.c.l.b16 %v7414
    %v7479 = vpack.c.b16 %v7444, %v7439
    %v7480 = vpack.c.b16 %v7445, %v7440
    %v7481 = vpack.c.b16 %v7446, %v7441
    %v7482 = vpack.c.b16 %v7447, %v7442
    %v7483 = vpack.c.b16 %v7448, %v7443
    %v7484 = vpack.c.b16 %v7454, %v7449
    %v7485 = vpack.c.b16 %v7455, %v7450
    %v7486 = vpack.c.b16 %v7456, %v7451
    %v7487 = vpack.c.b16 %v7457, %v7452
    %v7488 = vpack.c.b16 %v7458, %v7453
    %v7489 = vpack.c.b16 %v7464, %v7459
    %v7490 = vpack.c.b16 %v7465, %v7460
    %v7491 = vpack.c.b16 %v7466, %v7461
    %v7492 = vpack.c.b16 %v7467, %v7462
    %v7493 = vpack.c.b16 %v7468, %v7463
    %v7494 = vpack.c.b16 %v7474, %v7469
    %v7495 = vpack.c.b16 %v7475, %v7470
    %v7496 = vpack.c.b16 %v7476, %v7471
    %v7497 = vpack.c.b16 %v7477, %v7472
    %v7498 = vpack.c.b16 %v7478, %v7473
    %v7520 = vsel %vm7216, %v7389, 0
    %7522 = vmatprep.subr.bf16.mxu0 0
    %7523 = vmatpush1.bf16.msra.mxu0 0
    %7524 = vmatprep.subr.bf16.mxu0 0
    %7525 = vmatpush1.bf16.msra.mxu0 0
    %7526 = vmatprep.subr.bf16.mxu0 0
    %7527 = vmatpush1.bf16.msra.mxu0 0
    %7528 = vmatprep.subr.bf16.mxu0 0
    %7529 = vmatpush1.bf16.msra.mxu0 0
    %7530 = vmatprep.subr.bf16.mxu0 %v7495
    %7531 = vmatpush1.bf16.msra.mxu0 %v7494
    %7532 = vmatprep.subr.bf16.mxu0 %v7490
    %7533 = vmatpush1.bf16.msra.mxu0 %v7489
    %7534 = vmatprep.subr.bf16.mxu0 %v7485
    %7535 = vmatpush1.bf16.msra.mxu0 %v7484
    %7536 = vmatprep.subr.bf16.mxu0 %v7480
    %7537 = vmatpush1.bf16.msra.mxu0 %v7479
    %7538 = vmatprep.subr.bf16.mxu0 0
    %7539 = vmatpush2.bf16.msra.mxu0 0
    %7540 = vmatprep.subr.bf16.mxu0 0
    %7541 = vmatpush2.bf16.msra.mxu0 0
    %7542 = vmatprep.subr.bf16.mxu0 0
    %7543 = vmatpush2.bf16.msra.mxu0 0
    %7544 = vmatprep.subr.bf16.mxu0 0
    %7545 = vmatpush2.bf16.msra.mxu0 0
    %7546 = vmatprep.subr.bf16.mxu0 0
    %7547 = vmatpush2.bf16.msra.mxu0 0
    %7548 = vmatprep.subr.bf16.mxu0 0
    %7549 = vmatpush2.bf16.msra.mxu0 0
    %7550 = vmatprep.subr.bf16.mxu0 0
    %7551 = vmatpush2.bf16.msra.mxu0 0
    %7552 = vmatprep.subr.bf16.mxu0 0
    %7553 = vmatpush2.bf16.msra.mxu0 0
    %7554 = vmatprep.mubr.bf16.mxu0 0
    %7555 = vmatmul.mubr.bf16.gmra.mxu0 %v7520
    %v7556 = vpop.f32.mrf.mxu0
    %v7557 = vadd.f32 0.0, %v7556
    %v7558 = vpop.f32.mrf.mxu0
    %v7559 = vadd.f32 0.0, %v7558
    %v7560 = vpop.f32.mrf.mxu0
    %v7561 = vpop.f32.mrf.mxu0
    %7562 = vdwg.mxu0
    %7563 = vmatprep.subr.bf16.mxu0 0
    %7564 = vmatpush1.bf16.msra.mxu0 0
    %7565 = vmatprep.subr.bf16.mxu0 0
    %7566 = vmatpush1.bf16.msra.mxu0 0
    %7567 = vmatprep.subr.bf16.mxu0 0
    %7568 = vmatpush1.bf16.msra.mxu0 0
    %7569 = vmatprep.subr.bf16.mxu0 0
    %7570 = vmatpush1.bf16.msra.mxu0 0
    %7571 = vmatprep.subr.bf16.mxu0 %v7497
    %7572 = vmatpush1.bf16.msra.mxu0 %v7496
    %7573 = vmatprep.subr.bf16.mxu0 %v7492
    %7574 = vmatpush1.bf16.msra.mxu0 %v7491
    %7575 = vmatprep.subr.bf16.mxu0 %v7487
    %7576 = vmatpush1.bf16.msra.mxu0 %v7486
    %7577 = vmatprep.subr.bf16.mxu0 %v7482
    %7578 = vmatpush1.bf16.msra.mxu0 %v7481
    %7579 = vmatprep.subr.bf16.mxu0 0
    %7580 = vmatpush2.bf16.msra.mxu0 0
    %7581 = vmatprep.subr.bf16.mxu0 0
    %7582 = vmatpush2.bf16.msra.mxu0 0
    %7583 = vmatprep.subr.bf16.mxu0 0
    %7584 = vmatpush2.bf16.msra.mxu0 0
    %7585 = vmatprep.subr.bf16.mxu0 0
    %7586 = vmatpush2.bf16.msra.mxu0 0
    %7587 = vmatprep.subr.bf16.mxu0 0
    %7588 = vmatpush2.bf16.msra.mxu0 0
    %7589 = vmatprep.subr.bf16.mxu0 0
    %7590 = vmatpush2.bf16.msra.mxu0 0
    %7591 = vmatprep.subr.bf16.mxu0 0
    %7592 = vmatpush2.bf16.msra.mxu0 0
    %7593 = vmatprep.subr.bf16.mxu0 0
    %7594 = vmatpush2.bf16.msra.mxu0 0
    %7595 = vmatprep.mubr.bf16.mxu0 0
    %7596 = vmatmul.mubr.bf16.gmra.mxu0 %v7520
    %v7597 = vpop.f32.mrf.mxu0
    %v7598 = vadd.f32 0.0, %v7597
    %v7599 = vpop.f32.mrf.mxu0
    %v7600 = vadd.f32 0.0, %v7599
    %v7601 = vpop.f32.mrf.mxu0
    %v7602 = vpop.f32.mrf.mxu0
    %7603 = vdwg.mxu0
    %7604 = vmatprep.subr.bf16.mxu0 0
    %7605 = vmatpush1.bf16.msra.mxu0 0
    %7606 = vmatprep.subr.bf16.mxu0 0
    %7607 = vmatpush1.bf16.msra.mxu0 0
    %7608 = vmatprep.subr.bf16.mxu0 0
    %7609 = vmatpush1.bf16.msra.mxu0 0
    %7610 = vmatprep.subr.bf16.mxu0 0
    %7611 = vmatpush1.bf16.msra.mxu0 0
    %7612 = vmatprep.subr.bf16.mxu0 0
    %7613 = vmatpush1.bf16.msra.mxu0 %v7498
    %7614 = vmatprep.subr.bf16.mxu0 0
    %7615 = vmatpush1.bf16.msra.mxu0 %v7493
    %7616 = vmatprep.subr.bf16.mxu0 0
    %7617 = vmatpush1.bf16.msra.mxu0 %v7488
    %7618 = vmatprep.subr.bf16.mxu0 0
    %7619 = vmatpush1.bf16.msra.mxu0 %v7483
    %7620 = vmatprep.subr.bf16.mxu0 0
    %7621 = vmatpush2.bf16.msra.mxu0 0
    %7622 = vmatprep.subr.bf16.mxu0 0
    %7623 = vmatpush2.bf16.msra.mxu0 0
    %7624 = vmatprep.subr.bf16.mxu0 0
    %7625 = vmatpush2.bf16.msra.mxu0 0
    %7626 = vmatprep.subr.bf16.mxu0 0
    %7627 = vmatpush2.bf16.msra.mxu0 0
    %7628 = vmatprep.subr.bf16.mxu0 0
    %7629 = vmatpush2.bf16.msra.mxu0 0
    %7630 = vmatprep.subr.bf16.mxu0 0
    %7631 = vmatpush2.bf16.msra.mxu0 0
    %7632 = vmatprep.subr.bf16.mxu0 0
    %7633 = vmatpush2.bf16.msra.mxu0 0
    %7634 = vmatprep.subr.bf16.mxu0 0
    %7635 = vmatpush2.bf16.msra.mxu0 0
    %7636 = vmatprep.mubr.bf16.mxu0 0
    %7637 = vmatmul.mubr.bf16.gmra.mxu0 %v7520
    %v7638 = vpop.f32.mrf.mxu0
    %v7639 = vadd.f32 0.0, %v7638
    %v7640 = vpop.f32.mrf.mxu0
    %v7641 = vpop.f32.mrf.mxu0
    %v7642 = vpop.f32.mrf.mxu0
    %7643 = vdwg.mxu0
    %v7649 = vcombine.low %v7557, %v7559
    %v7650 = vcombine.low %v7598, %v7600
    %v7652 = vunpack.c.l.s4 1966171168
    %v7653 = vunpack.c.0.s8 %v7652
    %v7654 = vlaneseq
    %v7655 = vshrl.u32 %v7654, 7
    %v7656 = vsub.s32 %v7653, %v7655
    %v7657 = vrot.slane %v7649, %v7656
    %v7659 = vunpack.c.l.s4 1966171168
    %v7660 = vunpack.c.0.s8 %v7659
    %v7661 = vlaneseq
    %v7662 = vshrl.u32 %v7661, 7
    %v7663 = vsub.s32 %v7660, %v7662
    %v7664 = vrot.slane %v7650, %v7663
    %v7666 = vunpack.c.l.s4 1966171168
    %v7667 = vunpack.c.0.s8 %v7666
    %v7668 = vlaneseq
    %v7669 = vshrl.u32 %v7668, 7
    %v7670 = vsub.s32 %v7667, %v7669
    %v7671 = vrot.slane %v7639, %v7670
    %v7672 = vcombine.low %v7657, %v7664
    %v7674 = vunpack.c.l.s4 1966171168
    %v7675 = vunpack.c.0.s8 %v7674
    %v7676 = vlaneseq
    %v7677 = vshrl.u32 %v7676, 7
    %v7678 = vsub.s32 %v7675, %v7677
    %v7679 = vrot.slane %v7672, %v7678
    %v7681 = vunpack.c.l.s4 1966171168
    %v7682 = vunpack.c.0.s8 %v7681
    %v7683 = vlaneseq
    %v7684 = vshrl.u32 %v7683, 7
    %v7685 = vsub.s32 %v7682, %v7684
    %v7686 = vrot.slane %v7671, %v7685
    %v7687 = vcombine.low %v7679, %v7686
    %v7689 = vadd.f32 %v7387, %v7687
    %v7690 = vld [vmem:[#allocation5 + $0x2] sm:$0x1]
    %v7691 = vpack.c.bf16 %v7690, %v7690
    %s7692 = scalar_lea.vmem [#allocation6], 320
    %v7693 = vld [vmem:[%s7692] sm:$0xff]
    %v7694 = vld [vmem:[%s7692 + $0x8] sm:$0xff]
    %v7695 = vld [vmem:[%s7692 + $0x10] sm:$0xf]
    %v7696 = vld [vmem:[%s7692 + $0x14] sm:$0xff]
    %v7697 = vld [vmem:[%s7692 + $0x1c] sm:$0xff]
    %v7698 = vld [vmem:[%s7692 + $0x24] sm:$0xf]
    %v7699 = vld [vmem:[%s7692 + $0x28] sm:$0xff]
    %v7700 = vld [vmem:[%s7692 + $0x30] sm:$0xff]
    %v7701 = vld [vmem:[%s7692 + $0x38] sm:$0xf]
    %v7702 = vld [vmem:[%s7692 + $0x3c] sm:$0xff]
    %v7703 = vld [vmem:[%s7692 + $0x44] sm:$0xff]
    %v7704 = vld [vmem:[%s7692 + $0x4c] sm:$0xf]
    %v7705 = vld [vmem:[%s7692 + $0x50] sm:$0xff]
    %v7706 = vld [vmem:[%s7692 + $0x58] sm:$0xff]
    %v7707 = vld [vmem:[%s7692 + $0x60] sm:$0xf]
    %v7708 = vld [vmem:[%s7692 + $0x64] sm:$0xff]
    %v7709 = vld [vmem:[%s7692 + $0x6c] sm:$0xff]
    %v7710 = vld [vmem:[%s7692 + $0x74] sm:$0xf]
    %v7711 = vld [vmem:[%s7692 + $0x78] sm:$0xff]
    %v7712 = vld [vmem:[%s7692 + $0x80] sm:$0xff]
    %v7713 = vld [vmem:[%s7692 + $0x88] sm:$0xf]
    %v7714 = vld [vmem:[%s7692 + $0x8c] sm:$0xff]
    %v7715 = vld [vmem:[%s7692 + $0x94] sm:$0xff]
    %v7716 = vld [vmem:[%s7692 + $0x9c] sm:$0xf]
    %v7741 = vunpack.c.l.b16 %v7693
    %v7742 = vunpack.c.h.b16 %v7693
    %v7743 = vunpack.c.l.b16 %v7694
    %v7744 = vunpack.c.h.b16 %v7694
    %v7745 = vunpack.c.l.b16 %v7695
    %v7746 = vunpack.c.l.b16 %v7696
    %v7747 = vunpack.c.h.b16 %v7696
    %v7748 = vunpack.c.l.b16 %v7697
    %v7749 = vunpack.c.h.b16 %v7697
    %v7750 = vunpack.c.l.b16 %v7698
    %v7751 = vunpack.c.l.b16 %v7699
    %v7752 = vunpack.c.h.b16 %v7699
    %v7753 = vunpack.c.l.b16 %v7700
    %v7754 = vunpack.c.h.b16 %v7700
    %v7755 = vunpack.c.l.b16 %v7701
    %v7756 = vunpack.c.l.b16 %v7702
    %v7757 = vunpack.c.h.b16 %v7702
    %v7758 = vunpack.c.l.b16 %v7703
    %v7759 = vunpack.c.h.b16 %v7703
    %v7760 = vunpack.c.l.b16 %v7704
    %v7761 = vunpack.c.l.b16 %v7705
    %v7762 = vunpack.c.h.b16 %v7705
    %v7763 = vunpack.c.l.b16 %v7706
    %v7764 = vunpack.c.h.b16 %v7706
    %v7765 = vunpack.c.l.b16 %v7707
    %v7766 = vunpack.c.l.b16 %v7708
    %v7767 = vunpack.c.h.b16 %v7708
    %v7768 = vunpack.c.l.b16 %v7709
    %v7769 = vunpack.c.h.b16 %v7709
    %v7770 = vunpack.c.l.b16 %v7710
    %v7771 = vunpack.c.l.b16 %v7711
    %v7772 = vunpack.c.h.b16 %v7711
    %v7773 = vunpack.c.l.b16 %v7712
    %v7774 = vunpack.c.h.b16 %v7712
    %v7775 = vunpack.c.l.b16 %v7713
    %v7776 = vunpack.c.l.b16 %v7714
    %v7777 = vunpack.c.h.b16 %v7714
    %v7778 = vunpack.c.l.b16 %v7715
    %v7779 = vunpack.c.h.b16 %v7715
    %v7780 = vunpack.c.l.b16 %v7716
    %v7781 = vpack.c.b16 %v7746, %v7741
    %v7782 = vpack.c.b16 %v7747, %v7742
    %v7783 = vpack.c.b16 %v7748, %v7743
    %v7784 = vpack.c.b16 %v7749, %v7744
    %v7785 = vpack.c.b16 %v7750, %v7745
    %v7786 = vpack.c.b16 %v7756, %v7751
    %v7787 = vpack.c.b16 %v7757, %v7752
    %v7788 = vpack.c.b16 %v7758, %v7753
    %v7789 = vpack.c.b16 %v7759, %v7754
    %v7790 = vpack.c.b16 %v7760, %v7755
    %v7791 = vpack.c.b16 %v7766, %v7761
    %v7792 = vpack.c.b16 %v7767, %v7762
    %v7793 = vpack.c.b16 %v7768, %v7763
    %v7794 = vpack.c.b16 %v7769, %v7764
    %v7795 = vpack.c.b16 %v7770, %v7765
    %v7796 = vpack.c.b16 %v7776, %v7771
    %v7797 = vpack.c.b16 %v7777, %v7772
    %v7798 = vpack.c.b16 %v7778, %v7773
    %v7799 = vpack.c.b16 %v7779, %v7774
    %v7800 = vpack.c.b16 %v7780, %v7775
    %v7822 = vsel %vm7216, %v7691, 0
    %7824 = vmatprep.subr.bf16.mxu0 0
    %7825 = vmatpush1.bf16.msra.mxu0 0
    %7826 = vmatprep.subr.bf16.mxu0 0
    %7827 = vmatpush1.bf16.msra.mxu0 0
    %7828 = vmatprep.subr.bf16.mxu0 0
    %7829 = vmatpush1.bf16.msra.mxu0 0
    %7830 = vmatprep.subr.bf16.mxu0 0
    %7831 = vmatpush1.bf16.msra.mxu0 0
    %7832 = vmatprep.subr.bf16.mxu0 %v7797
    %7833 = vmatpush1.bf16.msra.mxu0 %v7796
    %7834 = vmatprep.subr.bf16.mxu0 %v7792
    %7835 = vmatpush1.bf16.msra.mxu0 %v7791
    %7836 = vmatprep.subr.bf16.mxu0 %v7787
    %7837 = vmatpush1.bf16.msra.mxu0 %v7786
    %7838 = vmatprep.subr.bf16.mxu0 %v7782
    %7839 = vmatpush1.bf16.msra.mxu0 %v7781
    %7840 = vmatprep.subr.bf16.mxu0 0
    %7841 = vmatpush2.bf16.msra.mxu0 0
    %7842 = vmatprep.subr.bf16.mxu0 0
    %7843 = vmatpush2.bf16.msra.mxu0 0
    %7844 = vmatprep.subr.bf16.mxu0 0
    %7845 = vmatpush2.bf16.msra.mxu0 0
    %7846 = vmatprep.subr.bf16.mxu0 0
    %7847 = vmatpush2.bf16.msra.mxu0 0
    %7848 = vmatprep.subr.bf16.mxu0 0
    %7849 = vmatpush2.bf16.msra.mxu0 0
    %7850 = vmatprep.subr.bf16.mxu0 0
    %7851 = vmatpush2.bf16.msra.mxu0 0
    %7852 = vmatprep.subr.bf16.mxu0 0
    %7853 = vmatpush2.bf16.msra.mxu0 0
    %7854 = vmatprep.subr.bf16.mxu0 0
    %7855 = vmatpush2.bf16.msra.mxu0 0
    %7856 = vmatprep.mubr.bf16.mxu0 0
    %7857 = vmatmul.mubr.bf16.gmra.mxu0 %v7822
    %v7858 = vpop.f32.mrf.mxu0
    %v7859 = vadd.f32 0.0, %v7858
    %v7860 = vpop.f32.mrf.mxu0
    %v7861 = vadd.f32 0.0, %v7860
    %v7862 = vpop.f32.mrf.mxu0
    %v7863 = vpop.f32.mrf.mxu0
    %7864 = vdwg.mxu0
    %7865 = vmatprep.subr.bf16.mxu0 0
    %7866 = vmatpush1.bf16.msra.mxu0 0
    %7867 = vmatprep.subr.bf16.mxu0 0
    %7868 = vmatpush1.bf16.msra.mxu0 0
    %7869 = vmatprep.subr.bf16.mxu0 0
    %7870 = vmatpush1.bf16.msra.mxu0 0
    %7871 = vmatprep.subr.bf16.mxu0 0
    %7872 = vmatpush1.bf16.msra.mxu0 0
    %7873 = vmatprep.subr.bf16.mxu0 %v7799
    %7874 = vmatpush1.bf16.msra.mxu0 %v7798
    %7875 = vmatprep.subr.bf16.mxu0 %v7794
    %7876 = vmatpush1.bf16.msra.mxu0 %v7793
    %7877 = vmatprep.subr.bf16.mxu0 %v7789
    %7878 = vmatpush1.bf16.msra.mxu0 %v7788
    %7879 = vmatprep.subr.bf16.mxu0 %v7784
    %7880 = vmatpush1.bf16.msra.mxu0 %v7783
    %7881 = vmatprep.subr.bf16.mxu0 0
    %7882 = vmatpush2.bf16.msra.mxu0 0
    %7883 = vmatprep.subr.bf16.mxu0 0
    %7884 = vmatpush2.bf16.msra.mxu0 0
    %7885 = vmatprep.subr.bf16.mxu0 0
    %7886 = vmatpush2.bf16.msra.mxu0 0
    %7887 = vmatprep.subr.bf16.mxu0 0
    %7888 = vmatpush2.bf16.msra.mxu0 0
    %7889 = vmatprep.subr.bf16.mxu0 0
    %7890 = vmatpush2.bf16.msra.mxu0 0
    %7891 = vmatprep.subr.bf16.mxu0 0
    %7892 = vmatpush2.bf16.msra.mxu0 0
    %7893 = vmatprep.subr.bf16.mxu0 0
    %7894 = vmatpush2.bf16.msra.mxu0 0
    %7895 = vmatprep.subr.bf16.mxu0 0
    %7896 = vmatpush2.bf16.msra.mxu0 0
    %7897 = vmatprep.mubr.bf16.mxu0 0
    %7898 = vmatmul.mubr.bf16.gmra.mxu0 %v7822
    %v7899 = vpop.f32.mrf.mxu0
    %v7900 = vadd.f32 0.0, %v7899
    %v7901 = vpop.f32.mrf.mxu0
    %v7902 = vadd.f32 0.0, %v7901
    %v7903 = vpop.f32.mrf.mxu0
    %v7904 = vpop.f32.mrf.mxu0
    %7905 = vdwg.mxu0
    %7906 = vmatprep.subr.bf16.mxu0 0
    %7907 = vmatpush1.bf16.msra.mxu0 0
    %7908 = vmatprep.subr.bf16.mxu0 0
    %7909 = vmatpush1.bf16.msra.mxu0 0
    %7910 = vmatprep.subr.bf16.mxu0 0
    %7911 = vmatpush1.bf16.msra.mxu0 0
    %7912 = vmatprep.subr.bf16.mxu0 0
    %7913 = vmatpush1.bf16.msra.mxu0 0
    %7914 = vmatprep.subr.bf16.mxu0 0
    %7915 = vmatpush1.bf16.msra.mxu0 %v7800
    %7916 = vmatprep.subr.bf16.mxu0 0
    %7917 = vmatpush1.bf16.msra.mxu0 %v7795
    %7918 = vmatprep.subr.bf16.mxu0 0
    %7919 = vmatpush1.bf16.msra.mxu0 %v7790
    %7920 = vmatprep.subr.bf16.mxu0 0
    %7921 = vmatpush1.bf16.msra.mxu0 %v7785
    %7922 = vmatprep.subr.bf16.mxu0 0
    %7923 = vmatpush2.bf16.msra.mxu0 0
    %7924 = vmatprep.subr.bf16.mxu0 0
    %7925 = vmatpush2.bf16.msra.mxu0 0
    %7926 = vmatprep.subr.bf16.mxu0 0
    %7927 = vmatpush2.bf16.msra.mxu0 0
    %7928 = vmatprep.subr.bf16.mxu0 0
    %7929 = vmatpush2.bf16.msra.mxu0 0
    %7930 = vmatprep.subr.bf16.mxu0 0
    %7931 = vmatpush2.bf16.msra.mxu0 0
    %7932 = vmatprep.subr.bf16.mxu0 0
    %7933 = vmatpush2.bf16.msra.mxu0 0
    %7934 = vmatprep.subr.bf16.mxu0 0
    %7935 = vmatpush2.bf16.msra.mxu0 0
    %7936 = vmatprep.subr.bf16.mxu0 0
    %7937 = vmatpush2.bf16.msra.mxu0 0
    %7938 = vmatprep.mubr.bf16.mxu0 0
    %7939 = vmatmul.mubr.bf16.gmra.mxu0 %v7822
    %v7940 = vpop.f32.mrf.mxu0
    %v7941 = vadd.f32 0.0, %v7940
    %v7942 = vpop.f32.mrf.mxu0
    %v7943 = vpop.f32.mrf.mxu0
    %v7944 = vpop.f32.mrf.mxu0
    %7945 = vdwg.mxu0
    %v7951 = vcombine.low %v7859, %v7861
    %v7952 = vcombine.low %v7900, %v7902
    %v7954 = vunpack.c.l.s4 1966171168
    %v7955 = vunpack.c.0.s8 %v7954
    %v7956 = vlaneseq
    %v7957 = vshrl.u32 %v7956, 7
    %v7958 = vsub.s32 %v7955, %v7957
    %v7959 = vrot.slane %v7951, %v7958
    %v7961 = vunpack.c.l.s4 1966171168
    %v7962 = vunpack.c.0.s8 %v7961
    %v7963 = vlaneseq
    %v7964 = vshrl.u32 %v7963, 7
    %v7965 = vsub.s32 %v7962, %v7964
    %v7966 = vrot.slane %v7952, %v7965
    %v7968 = vunpack.c.l.s4 1966171168
    %v7969 = vunpack.c.0.s8 %v7968
    %v7970 = vlaneseq
    %v7971 = vshrl.u32 %v7970, 7
    %v7972 = vsub.s32 %v7969, %v7971
    %v7973 = vrot.slane %v7941, %v7972
    %v7974 = vcombine.low %v7959, %v7966
    %v7976 = vunpack.c.l.s4 1966171168
    %v7977 = vunpack.c.0.s8 %v7976
    %v7978 = vlaneseq
    %v7979 = vshrl.u32 %v7978, 7
    %v7980 = vsub.s32 %v7977, %v7979
    %v7981 = vrot.slane %v7974, %v7980
    %v7983 = vunpack.c.l.s4 1966171168
    %v7984 = vunpack.c.0.s8 %v7983
    %v7985 = vlaneseq
    %v7986 = vshrl.u32 %v7985, 7
    %v7987 = vsub.s32 %v7984, %v7986
    %v7988 = vrot.slane %v7973, %v7987
    %v7989 = vcombine.low %v7981, %v7988
    %v7991 = vadd.f32 %v7689, %v7989
    %v7992 = vld [vmem:[#allocation5 + $0x3] sm:$0x1]
    %v7993 = vpack.c.bf16 %v7992, %v7992
    %s7994 = scalar_lea.vmem [#allocation6], 480
    %v7995 = vld [vmem:[%s7994] sm:$0xff]
    %v7996 = vld [vmem:[%s7994 + $0x8] sm:$0xff]
    %v7997 = vld [vmem:[%s7994 + $0x10] sm:$0xf]
    %v7998 = vld [vmem:[%s7994 + $0x14] sm:$0xff]
    %v7999 = vld [vmem:[%s7994 + $0x1c] sm:$0xff]
    %v8000 = vld [vmem:[%s7994 + $0x24] sm:$0xf]
    %v8001 = vld [vmem:[%s7994 + $0x28] sm:$0xff]
    %v8002 = vld [vmem:[%s7994 + $0x30] sm:$0xff]
    %v8003 = vld [vmem:[%s7994 + $0x38] sm:$0xf]
    %v8004 = vld [vmem:[%s7994 + $0x3c] sm:$0xff]
    %v8005 = vld [vmem:[%s7994 + $0x44] sm:$0xff]
    %v8006 = vld [vmem:[%s7994 + $0x4c] sm:$0xf]
    %v8007 = vld [vmem:[%s7994 + $0x50] sm:$0xff]
    %v8008 = vld [vmem:[%s7994 + $0x58] sm:$0xff]
    %v8009 = vld [vmem:[%s7994 + $0x60] sm:$0xf]
    %v8010 = vld [vmem:[%s7994 + $0x64] sm:$0xff]
    %v8011 = vld [vmem:[%s7994 + $0x6c] sm:$0xff]
    %v8012 = vld [vmem:[%s7994 + $0x74] sm:$0xf]
    %v8013 = vld [vmem:[%s7994 + $0x78] sm:$0xff]
    %v8014 = vld [vmem:[%s7994 + $0x80] sm:$0xff]
    %v8015 = vld [vmem:[%s7994 + $0x88] sm:$0xf]
    %v8016 = vld [vmem:[%s7994 + $0x8c] sm:$0xff]
    %v8017 = vld [vmem:[%s7994 + $0x94] sm:$0xff]
    %v8018 = vld [vmem:[%s7994 + $0x9c] sm:$0xf]
    %v8043 = vunpack.c.l.b16 %v7995
    %v8044 = vunpack.c.h.b16 %v7995
    %v8045 = vunpack.c.l.b16 %v7996
    %v8046 = vunpack.c.h.b16 %v7996
    %v8047 = vunpack.c.l.b16 %v7997
    %v8048 = vunpack.c.l.b16 %v7998
    %v8049 = vunpack.c.h.b16 %v7998
    %v8050 = vunpack.c.l.b16 %v7999
    %v8051 = vunpack.c.h.b16 %v7999
    %v8052 = vunpack.c.l.b16 %v8000
    %v8053 = vunpack.c.l.b16 %v8001
    %v8054 = vunpack.c.h.b16 %v8001
    %v8055 = vunpack.c.l.b16 %v8002
    %v8056 = vunpack.c.h.b16 %v8002
    %v8057 = vunpack.c.l.b16 %v8003
    %v8058 = vunpack.c.l.b16 %v8004
    %v8059 = vunpack.c.h.b16 %v8004
    %v8060 = vunpack.c.l.b16 %v8005
    %v8061 = vunpack.c.h.b16 %v8005
    %v8062 = vunpack.c.l.b16 %v8006
    %v8063 = vunpack.c.l.b16 %v8007
    %v8064 = vunpack.c.h.b16 %v8007
    %v8065 = vunpack.c.l.b16 %v8008
    %v8066 = vunpack.c.h.b16 %v8008
    %v8067 = vunpack.c.l.b16 %v8009
    %v8068 = vunpack.c.l.b16 %v8010
    %v8069 = vunpack.c.h.b16 %v8010
    %v8070 = vunpack.c.l.b16 %v8011
    %v8071 = vunpack.c.h.b16 %v8011
    %v8072 = vunpack.c.l.b16 %v8012
    %v8073 = vunpack.c.l.b16 %v8013
    %v8074 = vunpack.c.h.b16 %v8013
    %v8075 = vunpack.c.l.b16 %v8014
    %v8076 = vunpack.c.h.b16 %v8014
    %v8077 = vunpack.c.l.b16 %v8015
    %v8078 = vunpack.c.l.b16 %v8016
    %v8079 = vunpack.c.h.b16 %v8016
    %v8080 = vunpack.c.l.b16 %v8017
    %v8081 = vunpack.c.h.b16 %v8017
    %v8082 = vunpack.c.l.b16 %v8018
    %v8083 = vpack.c.b16 %v8048, %v8043
    %v8084 = vpack.c.b16 %v8049, %v8044
    %v8085 = vpack.c.b16 %v8050, %v8045
    %v8086 = vpack.c.b16 %v8051, %v8046
    %v8087 = vpack.c.b16 %v8052, %v8047
    %v8088 = vpack.c.b16 %v8058, %v8053
    %v8089 = vpack.c.b16 %v8059, %v8054
    %v8090 = vpack.c.b16 %v8060, %v8055
    %v8091 = vpack.c.b16 %v8061, %v8056
    %v8092 = vpack.c.b16 %v8062, %v8057
    %v8093 = vpack.c.b16 %v8068, %v8063
    %v8094 = vpack.c.b16 %v8069, %v8064
    %v8095 = vpack.c.b16 %v8070, %v8065
    %v8096 = vpack.c.b16 %v8071, %v8066
    %v8097 = vpack.c.b16 %v8072, %v8067
    %v8098 = vpack.c.b16 %v8078, %v8073
    %v8099 = vpack.c.b16 %v8079, %v8074
    %v8100 = vpack.c.b16 %v8080, %v8075
    %v8101 = vpack.c.b16 %v8081, %v8076
    %v8102 = vpack.c.b16 %v8082, %v8077
    %v8124 = vsel %vm7216, %v7993, 0
    %8126 = vmatprep.subr.bf16.mxu0 0
    %8127 = vmatpush1.bf16.msra.mxu0 0
    %8128 = vmatprep.subr.bf16.mxu0 0
    %8129 = vmatpush1.bf16.msra.mxu0 0
    %8130 = vmatprep.subr.bf16.mxu0 0
    %8131 = vmatpush1.bf16.msra.mxu0 0
    %8132 = vmatprep.subr.bf16.mxu0 0
    %8133 = vmatpush1.bf16.msra.mxu0 0
    %8134 = vmatprep.subr.bf16.mxu0 %v8099
    %8135 = vmatpush1.bf16.msra.mxu0 %v8098
    %8136 = vmatprep.subr.bf16.mxu0 %v8094
    %8137 = vmatpush1.bf16.msra.mxu0 %v8093
    %8138 = vmatprep.subr.bf16.mxu0 %v8089
    %8139 = vmatpush1.bf16.msra.mxu0 %v8088
    %8140 = vmatprep.subr.bf16.mxu0 %v8084
    %8141 = vmatpush1.bf16.msra.mxu0 %v8083
    %8142 = vmatprep.subr.bf16.mxu0 0
    %8143 = vmatpush2.bf16.msra.mxu0 0
    %8144 = vmatprep.subr.bf16.mxu0 0
    %8145 = vmatpush2.bf16.msra.mxu0 0
    %8146 = vmatprep.subr.bf16.mxu0 0
    %8147 = vmatpush2.bf16.msra.mxu0 0
    %8148 = vmatprep.subr.bf16.mxu0 0
    %8149 = vmatpush2.bf16.msra.mxu0 0
    %8150 = vmatprep.subr.bf16.mxu0 0
    %8151 = vmatpush2.bf16.msra.mxu0 0
    %8152 = vmatprep.subr.bf16.mxu0 0
    %8153 = vmatpush2.bf16.msra.mxu0 0
    %8154 = vmatprep.subr.bf16.mxu0 0
    %8155 = vmatpush2.bf16.msra.mxu0 0
    %8156 = vmatprep.subr.bf16.mxu0 0
    %8157 = vmatpush2.bf16.msra.mxu0 0
    %8158 = vmatprep.mubr.bf16.mxu0 0
    %8159 = vmatmul.mubr.bf16.gmra.mxu0 %v8124
    %v8160 = vpop.f32.mrf.mxu0
    %v8161 = vadd.f32 0.0, %v8160
    %v8162 = vpop.f32.mrf.mxu0
    %v8163 = vadd.f32 0.0, %v8162
    %v8164 = vpop.f32.mrf.mxu0
    %v8165 = vpop.f32.mrf.mxu0
    %8166 = vdwg.mxu0
    %8167 = vmatprep.subr.bf16.mxu0 0
    %8168 = vmatpush1.bf16.msra.mxu0 0
    %8169 = vmatprep.subr.bf16.mxu0 0
    %8170 = vmatpush1.bf16.msra.mxu0 0
    %8171 = vmatprep.subr.bf16.mxu0 0
    %8172 = vmatpush1.bf16.msra.mxu0 0
    %8173 = vmatprep.subr.bf16.mxu0 0
    %8174 = vmatpush1.bf16.msra.mxu0 0
    %8175 = vmatprep.subr.bf16.mxu0 %v8101
    %8176 = vmatpush1.bf16.msra.mxu0 %v8100
    %8177 = vmatprep.subr.bf16.mxu0 %v8096
    %8178 = vmatpush1.bf16.msra.mxu0 %v8095
    %8179 = vmatprep.subr.bf16.mxu0 %v8091
    %8180 = vmatpush1.bf16.msra.mxu0 %v8090
    %8181 = vmatprep.subr.bf16.mxu0 %v8086
    %8182 = vmatpush1.bf16.msra.mxu0 %v8085
    %8183 = vmatprep.subr.bf16.mxu0 0
    %8184 = vmatpush2.bf16.msra.mxu0 0
    %8185 = vmatprep.subr.bf16.mxu0 0
    %8186 = vmatpush2.bf16.msra.mxu0 0
    %8187 = vmatprep.subr.bf16.mxu0 0
    %8188 = vmatpush2.bf16.msra.mxu0 0
    %8189 = vmatprep.subr.bf16.mxu0 0
    %8190 = vmatpush2.bf16.msra.mxu0 0
    %8191 = vmatprep.subr.bf16.mxu0 0
    %8192 = vmatpush2.bf16.msra.mxu0 0
    %8193 = vmatprep.subr.bf16.mxu0 0
    %8194 = vmatpush2.bf16.msra.mxu0 0
    %8195 = vmatprep.subr.bf16.mxu0 0
    %8196 = vmatpush2.bf16.msra.mxu0 0
    %8197 = vmatprep.subr.bf16.mxu0 0
    %8198 = vmatpush2.bf16.msra.mxu0 0
    %8199 = vmatprep.mubr.bf16.mxu0 0
    %8200 = vmatmul.mubr.bf16.gmra.mxu0 %v8124
    %v8201 = vpop.f32.mrf.mxu0
    %v8202 = vadd.f32 0.0, %v8201
    %v8203 = vpop.f32.mrf.mxu0
    %v8204 = vadd.f32 0.0, %v8203
    %v8205 = vpop.f32.mrf.mxu0
    %v8206 = vpop.f32.mrf.mxu0
    %8207 = vdwg.mxu0
    %8208 = vmatprep.subr.bf16.mxu0 0
    %8209 = vmatpush1.bf16.msra.mxu0 0
    %8210 = vmatprep.subr.bf16.mxu0 0
    %8211 = vmatpush1.bf16.msra.mxu0 0
    %8212 = vmatprep.subr.bf16.mxu0 0
    %8213 = vmatpush1.bf16.msra.mxu0 0
    %8214 = vmatprep.subr.bf16.mxu0 0
    %8215 = vmatpush1.bf16.msra.mxu0 0
    %8216 = vmatprep.subr.bf16.mxu0 0
    %8217 = vmatpush1.bf16.msra.mxu0 %v8102
    %8218 = vmatprep.subr.bf16.mxu0 0
    %8219 = vmatpush1.bf16.msra.mxu0 %v8097
    %8220 = vmatprep.subr.bf16.mxu0 0
    %8221 = vmatpush1.bf16.msra.mxu0 %v8092
    %8222 = vmatprep.subr.bf16.mxu0 0
    %8223 = vmatpush1.bf16.msra.mxu0 %v8087
    %8224 = vmatprep.subr.bf16.mxu0 0
    %8225 = vmatpush2.bf16.msra.mxu0 0
    %8226 = vmatprep.subr.bf16.mxu0 0
    %8227 = vmatpush2.bf16.msra.mxu0 0
    %8228 = vmatprep.subr.bf16.mxu0 0
    %8229 = vmatpush2.bf16.msra.mxu0 0
    %8230 = vmatprep.subr.bf16.mxu0 0
    %8231 = vmatpush2.bf16.msra.mxu0 0
    %8232 = vmatprep.subr.bf16.mxu0 0
    %8233 = vmatpush2.bf16.msra.mxu0 0
    %8234 = vmatprep.subr.bf16.mxu0 0
    %8235 = vmatpush2.bf16.msra.mxu0 0
    %8236 = vmatprep.subr.bf16.mxu0 0
    %8237 = vmatpush2.bf16.msra.mxu0 0
    %8238 = vmatprep.subr.bf16.mxu0 0
    %8239 = vmatpush2.bf16.msra.mxu0 0
    %8240 = vmatprep.mubr.bf16.mxu0 0
    %8241 = vmatmul.mubr.bf16.gmra.mxu0 %v8124
    %v8242 = vpop.f32.mrf.mxu0
    %v8243 = vadd.f32 0.0, %v8242
    %v8244 = vpop.f32.mrf.mxu0
    %v8245 = vpop.f32.mrf.mxu0
    %v8246 = vpop.f32.mrf.mxu0
    %8247 = vdwg.mxu0
    %v8253 = vcombine.low %v8161, %v8163
    %v8254 = vcombine.low %v8202, %v8204
    %v8256 = vunpack.c.l.s4 1966171168
    %v8257 = vunpack.c.0.s8 %v8256
    %v8258 = vlaneseq
    %v8259 = vshrl.u32 %v8258, 7
    %v8260 = vsub.s32 %v8257, %v8259
    %v8261 = vrot.slane %v8253, %v8260
    %v8263 = vunpack.c.l.s4 1966171168
    %v8264 = vunpack.c.0.s8 %v8263
    %v8265 = vlaneseq
    %v8266 = vshrl.u32 %v8265, 7
    %v8267 = vsub.s32 %v8264, %v8266
    %v8268 = vrot.slane %v8254, %v8267
    %v8270 = vunpack.c.l.s4 1966171168
    %v8271 = vunpack.c.0.s8 %v8270
    %v8272 = vlaneseq
    %v8273 = vshrl.u32 %v8272, 7
    %v8274 = vsub.s32 %v8271, %v8273
    %v8275 = vrot.slane %v8243, %v8274
    %v8276 = vcombine.low %v8261, %v8268
    %v8278 = vunpack.c.l.s4 1966171168
    %v8279 = vunpack.c.0.s8 %v8278
    %v8280 = vlaneseq
    %v8281 = vshrl.u32 %v8280, 7
    %v8282 = vsub.s32 %v8279, %v8281
    %v8283 = vrot.slane %v8276, %v8282
    %v8285 = vunpack.c.l.s4 1966171168
    %v8286 = vunpack.c.0.s8 %v8285
    %v8287 = vlaneseq
    %v8288 = vshrl.u32 %v8287, 7
    %v8289 = vsub.s32 %v8286, %v8288
    %v8290 = vrot.slane %v8275, %v8289
    %v8291 = vcombine.low %v8283, %v8290
    %v8293 = vadd.f32 %v7991, %v8291
    %v8294 = vld [vmem:[#allocation5 + $0x4] sm:$0x1]
    %v8295 = vpack.c.bf16 %v8294, %v8294
    %s8296 = scalar_lea.vmem [#allocation6], 640
    %v8297 = vld [vmem:[%s8296] sm:$0xff]
    %v8298 = vld [vmem:[%s8296 + $0x8] sm:$0xff]
    %v8299 = vld [vmem:[%s8296 + $0x10] sm:$0xf]
    %v8300 = vld [vmem:[%s8296 + $0x14] sm:$0xff]
    %v8301 = vld [vmem:[%s8296 + $0x1c] sm:$0xff]
    %v8302 = vld [vmem:[%s8296 + $0x24] sm:$0xf]
    %v8303 = vld [vmem:[%s8296 + $0x28] sm:$0xff]
    %v8304 = vld [vmem:[%s8296 + $0x30] sm:$0xff]
    %v8305 = vld [vmem:[%s8296 + $0x38] sm:$0xf]
    %v8306 = vld [vmem:[%s8296 + $0x3c] sm:$0xff]
    %v8307 = vld [vmem:[%s8296 + $0x44] sm:$0xff]
    %v8308 = vld [vmem:[%s8296 + $0x4c] sm:$0xf]
    %v8309 = vld [vmem:[%s8296 + $0x50] sm:$0xff]
    %v8310 = vld [vmem:[%s8296 + $0x58] sm:$0xff]
    %v8311 = vld [vmem:[%s8296 + $0x60] sm:$0xf]
    %v8312 = vld [vmem:[%s8296 + $0x64] sm:$0xff]
    %v8313 = vld [vmem:[%s8296 + $0x6c] sm:$0xff]
    %v8314 = vld [vmem:[%s8296 + $0x74] sm:$0xf]
    %v8315 = vld [vmem:[%s8296 + $0x78] sm:$0xff]
    %v8316 = vld [vmem:[%s8296 + $0x80] sm:$0xff]
    %v8317 = vld [vmem:[%s8296 + $0x88] sm:$0xf]
    %v8318 = vld [vmem:[%s8296 + $0x8c] sm:$0xff]
    %v8319 = vld [vmem:[%s8296 + $0x94] sm:$0xff]
    %v8320 = vld [vmem:[%s8296 + $0x9c] sm:$0xf]
    %v8345 = vunpack.c.l.b16 %v8297
    %v8346 = vunpack.c.h.b16 %v8297
    %v8347 = vunpack.c.l.b16 %v8298
    %v8348 = vunpack.c.h.b16 %v8298
    %v8349 = vunpack.c.l.b16 %v8299
    %v8350 = vunpack.c.l.b16 %v8300
    %v8351 = vunpack.c.h.b16 %v8300
    %v8352 = vunpack.c.l.b16 %v8301
    %v8353 = vunpack.c.h.b16 %v8301
    %v8354 = vunpack.c.l.b16 %v8302
    %v8355 = vunpack.c.l.b16 %v8303
    %v8356 = vunpack.c.h.b16 %v8303
    %v8357 = vunpack.c.l.b16 %v8304
    %v8358 = vunpack.c.h.b16 %v8304
    %v8359 = vunpack.c.l.b16 %v8305
    %v8360 = vunpack.c.l.b16 %v8306
    %v8361 = vunpack.c.h.b16 %v8306
    %v8362 = vunpack.c.l.b16 %v8307
    %v8363 = vunpack.c.h.b16 %v8307
    %v8364 = vunpack.c.l.b16 %v8308
    %v8365 = vunpack.c.l.b16 %v8309
    %v8366 = vunpack.c.h.b16 %v8309
    %v8367 = vunpack.c.l.b16 %v8310
    %v8368 = vunpack.c.h.b16 %v8310
    %v8369 = vunpack.c.l.b16 %v8311
    %v8370 = vunpack.c.l.b16 %v8312
    %v8371 = vunpack.c.h.b16 %v8312
    %v8372 = vunpack.c.l.b16 %v8313
    %v8373 = vunpack.c.h.b16 %v8313
    %v8374 = vunpack.c.l.b16 %v8314
    %v8375 = vunpack.c.l.b16 %v8315
    %v8376 = vunpack.c.h.b16 %v8315
    %v8377 = vunpack.c.l.b16 %v8316
    %v8378 = vunpack.c.h.b16 %v8316
    %v8379 = vunpack.c.l.b16 %v8317
    %v8380 = vunpack.c.l.b16 %v8318
    %v8381 = vunpack.c.h.b16 %v8318
    %v8382 = vunpack.c.l.b16 %v8319
    %v8383 = vunpack.c.h.b16 %v8319
    %v8384 = vunpack.c.l.b16 %v8320
    %v8385 = vpack.c.b16 %v8350, %v8345
    %v8386 = vpack.c.b16 %v8351, %v8346
    %v8387 = vpack.c.b16 %v8352, %v8347
    %v8388 = vpack.c.b16 %v8353, %v8348
    %v8389 = vpack.c.b16 %v8354, %v8349
    %v8390 = vpack.c.b16 %v8360, %v8355
    %v8391 = vpack.c.b16 %v8361, %v8356
    %v8392 = vpack.c.b16 %v8362, %v8357
    %v8393 = vpack.c.b16 %v8363, %v8358
    %v8394 = vpack.c.b16 %v8364, %v8359
    %v8395 = vpack.c.b16 %v8370, %v8365
    %v8396 = vpack.c.b16 %v8371, %v8366
    %v8397 = vpack.c.b16 %v8372, %v8367
    %v8398 = vpack.c.b16 %v8373, %v8368
    %v8399 = vpack.c.b16 %v8374, %v8369
    %v8400 = vpack.c.b16 %v8380, %v8375
    %v8401 = vpack.c.b16 %v8381, %v8376
    %v8402 = vpack.c.b16 %v8382, %v8377
    %v8403 = vpack.c.b16 %v8383, %v8378
    %v8404 = vpack.c.b16 %v8384, %v8379
    %v8426 = vsel %vm7216, %v8295, 0
    %8428 = vmatprep.subr.bf16.mxu0 0
    %8429 = vmatpush1.bf16.msra.mxu0 0
    %8430 = vmatprep.subr.bf16.mxu0 0
    %8431 = vmatpush1.bf16.msra.mxu0 0
    %8432 = vmatprep.subr.bf16.mxu0 0
    %8433 = vmatpush1.bf16.msra.mxu0 0
    %8434 = vmatprep.subr.bf16.mxu0 0
    %8435 = vmatpush1.bf16.msra.mxu0 0
    %8436 = vmatprep.subr.bf16.mxu0 %v8401
    %8437 = vmatpush1.bf16.msra.mxu0 %v8400
    %8438 = vmatprep.subr.bf16.mxu0 %v8396
    %8439 = vmatpush1.bf16.msra.mxu0 %v8395
    %8440 = vmatprep.subr.bf16.mxu0 %v8391
    %8441 = vmatpush1.bf16.msra.mxu0 %v8390
    %8442 = vmatprep.subr.bf16.mxu0 %v8386
    %8443 = vmatpush1.bf16.msra.mxu0 %v8385
    %8444 = vmatprep.subr.bf16.mxu0 0
    %8445 = vmatpush2.bf16.msra.mxu0 0
    %8446 = vmatprep.subr.bf16.mxu0 0
    %8447 = vmatpush2.bf16.msra.mxu0 0
    %8448 = vmatprep.subr.bf16.mxu0 0
    %8449 = vmatpush2.bf16.msra.mxu0 0
    %8450 = vmatprep.subr.bf16.mxu0 0
    %8451 = vmatpush2.bf16.msra.mxu0 0
    %8452 = vmatprep.subr.bf16.mxu0 0
    %8453 = vmatpush2.bf16.msra.mxu0 0
    %8454 = vmatprep.subr.bf16.mxu0 0
    %8455 = vmatpush2.bf16.msra.mxu0 0
    %8456 = vmatprep.subr.bf16.mxu0 0
    %8457 = vmatpush2.bf16.msra.mxu0 0
    %8458 = vmatprep.subr.bf16.mxu0 0
    %8459 = vmatpush2.bf16.msra.mxu0 0
    %8460 = vmatprep.mubr.bf16.mxu0 0
    %8461 = vmatmul.mubr.bf16.gmra.mxu0 %v8426
    %v8462 = vpop.f32.mrf.mxu0
    %v8463 = vadd.f32 0.0, %v8462
    %v8464 = vpop.f32.mrf.mxu0
    %v8465 = vadd.f32 0.0, %v8464
    %v8466 = vpop.f32.mrf.mxu0
    %v8467 = vpop.f32.mrf.mxu0
    %8468 = vdwg.mxu0
    %8469 = vmatprep.subr.bf16.mxu0 0
    %8470 = vmatpush1.bf16.msra.mxu0 0
    %8471 = vmatprep.subr.bf16.mxu0 0
    %8472 = vmatpush1.bf16.msra.mxu0 0
    %8473 = vmatprep.subr.bf16.mxu0 0
    %8474 = vmatpush1.bf16.msra.mxu0 0
    %8475 = vmatprep.subr.bf16.mxu0 0
    %8476 = vmatpush1.bf16.msra.mxu0 0
    %8477 = vmatprep.subr.bf16.mxu0 %v8403
    %8478 = vmatpush1.bf16.msra.mxu0 %v8402
    %8479 = vmatprep.subr.bf16.mxu0 %v8398
    %8480 = vmatpush1.bf16.msra.mxu0 %v8397
    %8481 = vmatprep.subr.bf16.mxu0 %v8393
    %8482 = vmatpush1.bf16.msra.mxu0 %v8392
    %8483 = vmatprep.subr.bf16.mxu0 %v8388
    %8484 = vmatpush1.bf16.msra.mxu0 %v8387
    %8485 = vmatprep.subr.bf16.mxu0 0
    %8486 = vmatpush2.bf16.msra.mxu0 0
    %8487 = vmatprep.subr.bf16.mxu0 0
    %8488 = vmatpush2.bf16.msra.mxu0 0
    %8489 = vmatprep.subr.bf16.mxu0 0
    %8490 = vmatpush2.bf16.msra.mxu0 0
    %8491 = vmatprep.subr.bf16.mxu0 0
    %8492 = vmatpush2.bf16.msra.mxu0 0
    %8493 = vmatprep.subr.bf16.mxu0 0
    %8494 = vmatpush2.bf16.msra.mxu0 0
    %8495 = vmatprep.subr.bf16.mxu0 0
    %8496 = vmatpush2.bf16.msra.mxu0 0
    %8497 = vmatprep.subr.bf16.mxu0 0
    %8498 = vmatpush2.bf16.msra.mxu0 0
    %8499 = vmatprep.subr.bf16.mxu0 0
    %8500 = vmatpush2.bf16.msra.mxu0 0
    %8501 = vmatprep.mubr.bf16.mxu0 0
    %8502 = vmatmul.mubr.bf16.gmra.mxu0 %v8426
    %v8503 = vpop.f32.mrf.mxu0
    %v8504 = vadd.f32 0.0, %v8503
    %v8505 = vpop.f32.mrf.mxu0
    %v8506 = vadd.f32 0.0, %v8505
    %v8507 = vpop.f32.mrf.mxu0
    %v8508 = vpop.f32.mrf.mxu0
    %8509 = vdwg.mxu0
    %8510 = vmatprep.subr.bf16.mxu0 0
    %8511 = vmatpush1.bf16.msra.mxu0 0
    %8512 = vmatprep.subr.bf16.mxu0 0
    %8513 = vmatpush1.bf16.msra.mxu0 0
    %8514 = vmatprep.subr.bf16.mxu0 0
    %8515 = vmatpush1.bf16.msra.mxu0 0
    %8516 = vmatprep.subr.bf16.mxu0 0
    %8517 = vmatpush1.bf16.msra.mxu0 0
    %8518 = vmatprep.subr.bf16.mxu0 0
    %8519 = vmatpush1.bf16.msra.mxu0 %v8404
    %8520 = vmatprep.subr.bf16.mxu0 0
    %8521 = vmatpush1.bf16.msra.mxu0 %v8399
    %8522 = vmatprep.subr.bf16.mxu0 0
    %8523 = vmatpush1.bf16.msra.mxu0 %v8394
    %8524 = vmatprep.subr.bf16.mxu0 0
    %8525 = vmatpush1.bf16.msra.mxu0 %v8389
    %8526 = vmatprep.subr.bf16.mxu0 0
    %8527 = vmatpush2.bf16.msra.mxu0 0
    %8528 = vmatprep.subr.bf16.mxu0 0
    %8529 = vmatpush2.bf16.msra.mxu0 0
    %8530 = vmatprep.subr.bf16.mxu0 0
    %8531 = vmatpush2.bf16.msra.mxu0 0
    %8532 = vmatprep.subr.bf16.mxu0 0
    %8533 = vmatpush2.bf16.msra.mxu0 0
    %8534 = vmatprep.subr.bf16.mxu0 0
    %8535 = vmatpush2.bf16.msra.mxu0 0
    %8536 = vmatprep.subr.bf16.mxu0 0
    %8537 = vmatpush2.bf16.msra.mxu0 0
    %8538 = vmatprep.subr.bf16.mxu0 0
    %8539 = vmatpush2.bf16.msra.mxu0 0
    %8540 = vmatprep.subr.bf16.mxu0 0
    %8541 = vmatpush2.bf16.msra.mxu0 0
    %8542 = vmatprep.mubr.bf16.mxu0 0
    %8543 = vmatmul.mubr.bf16.gmra.mxu0 %v8426
    %v8544 = vpop.f32.mrf.mxu0
    %v8545 = vadd.f32 0.0, %v8544
    %v8546 = vpop.f32.mrf.mxu0
    %v8547 = vpop.f32.mrf.mxu0
    %v8548 = vpop.f32.mrf.mxu0
    %8549 = vdwg.mxu0
    %v8555 = vcombine.low %v8463, %v8465
    %v8556 = vcombine.low %v8504, %v8506
    %v8558 = vunpack.c.l.s4 1966171168
    %v8559 = vunpack.c.0.s8 %v8558
    %v8560 = vlaneseq
    %v8561 = vshrl.u32 %v8560, 7
    %v8562 = vsub.s32 %v8559, %v8561
    %v8563 = vrot.slane %v8555, %v8562
    %v8565 = vunpack.c.l.s4 1966171168
    %v8566 = vunpack.c.0.s8 %v8565
    %v8567 = vlaneseq
    %v8568 = vshrl.u32 %v8567, 7
    %v8569 = vsub.s32 %v8566, %v8568
    %v8570 = vrot.slane %v8556, %v8569
    %v8572 = vunpack.c.l.s4 1966171168
    %v8573 = vunpack.c.0.s8 %v8572
    %v8574 = vlaneseq
    %v8575 = vshrl.u32 %v8574, 7
    %v8576 = vsub.s32 %v8573, %v8575
    %v8577 = vrot.slane %v8545, %v8576
    %v8578 = vcombine.low %v8563, %v8570
    %v8580 = vunpack.c.l.s4 1966171168
    %v8581 = vunpack.c.0.s8 %v8580
    %v8582 = vlaneseq
    %v8583 = vshrl.u32 %v8582, 7
    %v8584 = vsub.s32 %v8581, %v8583
    %v8585 = vrot.slane %v8578, %v8584
    %v8587 = vunpack.c.l.s4 1966171168
    %v8588 = vunpack.c.0.s8 %v8587
    %v8589 = vlaneseq
    %v8590 = vshrl.u32 %v8589, 7
    %v8591 = vsub.s32 %v8588, %v8590
    %v8592 = vrot.slane %v8577, %v8591
    %v8593 = vcombine.low %v8585, %v8592
    %v8595 = vadd.f32 %v8293, %v8593
    %v8596 = vld [vmem:[#allocation5 + $0x5] sm:$0x1]
    %v8597 = vpack.c.bf16 %v8596, %v8596
    %s8598 = scalar_lea.vmem [#allocation6], 800
    %v8599 = vld [vmem:[%s8598] sm:$0xff]
    %v8600 = vld [vmem:[%s8598 + $0x8] sm:$0xff]
    %v8601 = vld [vmem:[%s8598 + $0x10] sm:$0xf]
    %v8602 = vld [vmem:[%s8598 + $0x14] sm:$0xff]
    %v8603 = vld [vmem:[%s8598 + $0x1c] sm:$0xff]
    %v8604 = vld [vmem:[%s8598 + $0x24] sm:$0xf]
    %v8605 = vld [vmem:[%s8598 + $0x28] sm:$0xff]
    %v8606 = vld [vmem:[%s8598 + $0x30] sm:$0xff]
    %v8607 = vld [vmem:[%s8598 + $0x38] sm:$0xf]
    %v8608 = vld [vmem:[%s8598 + $0x3c] sm:$0xff]
    %v8609 = vld [vmem:[%s8598 + $0x44] sm:$0xff]
    %v8610 = vld [vmem:[%s8598 + $0x4c] sm:$0xf]
    %v8611 = vld [vmem:[%s8598 + $0x50] sm:$0xff]
    %v8612 = vld [vmem:[%s8598 + $0x58] sm:$0xff]
    %v8613 = vld [vmem:[%s8598 + $0x60] sm:$0xf]
    %v8614 = vld [vmem:[%s8598 + $0x64] sm:$0xff]
    %v8615 = vld [vmem:[%s8598 + $0x6c] sm:$0xff]
    %v8616 = vld [vmem:[%s8598 + $0x74] sm:$0xf]
    %v8617 = vld [vmem:[%s8598 + $0x78] sm:$0xff]
    %v8618 = vld [vmem:[%s8598 + $0x80] sm:$0xff]
    %v8619 = vld [vmem:[%s8598 + $0x88] sm:$0xf]
    %v8620 = vld [vmem:[%s8598 + $0x8c] sm:$0xff]
    %v8621 = vld [vmem:[%s8598 + $0x94] sm:$0xff]
    %v8622 = vld [vmem:[%s8598 + $0x9c] sm:$0xf]
    %v8647 = vunpack.c.l.b16 %v8599
    %v8648 = vunpack.c.h.b16 %v8599
    %v8649 = vunpack.c.l.b16 %v8600
    %v8650 = vunpack.c.h.b16 %v8600
    %v8651 = vunpack.c.l.b16 %v8601
    %v8652 = vunpack.c.l.b16 %v8602
    %v8653 = vunpack.c.h.b16 %v8602
    %v8654 = vunpack.c.l.b16 %v8603
    %v8655 = vunpack.c.h.b16 %v8603
    %v8656 = vunpack.c.l.b16 %v8604
    %v8657 = vunpack.c.l.b16 %v8605
    %v8658 = vunpack.c.h.b16 %v8605
    %v8659 = vunpack.c.l.b16 %v8606
    %v8660 = vunpack.c.h.b16 %v8606
    %v8661 = vunpack.c.l.b16 %v8607
    %v8662 = vunpack.c.l.b16 %v8608
    %v8663 = vunpack.c.h.b16 %v8608
    %v8664 = vunpack.c.l.b16 %v8609
    %v8665 = vunpack.c.h.b16 %v8609
    %v8666 = vunpack.c.l.b16 %v8610
    %v8667 = vunpack.c.l.b16 %v8611
    %v8668 = vunpack.c.h.b16 %v8611
    %v8669 = vunpack.c.l.b16 %v8612
    %v8670 = vunpack.c.h.b16 %v8612
    %v8671 = vunpack.c.l.b16 %v8613
    %v8672 = vunpack.c.l.b16 %v8614
    %v8673 = vunpack.c.h.b16 %v8614
    %v8674 = vunpack.c.l.b16 %v8615
    %v8675 = vunpack.c.h.b16 %v8615
    %v8676 = vunpack.c.l.b16 %v8616
    %v8677 = vunpack.c.l.b16 %v8617
    %v8678 = vunpack.c.h.b16 %v8617
    %v8679 = vunpack.c.l.b16 %v8618
    %v8680 = vunpack.c.h.b16 %v8618
    %v8681 = vunpack.c.l.b16 %v8619
    %v8682 = vunpack.c.l.b16 %v8620
    %v8683 = vunpack.c.h.b16 %v8620
    %v8684 = vunpack.c.l.b16 %v8621
    %v8685 = vunpack.c.h.b16 %v8621
    %v8686 = vunpack.c.l.b16 %v8622
    %v8687 = vpack.c.b16 %v8652, %v8647
    %v8688 = vpack.c.b16 %v8653, %v8648
    %v8689 = vpack.c.b16 %v8654, %v8649
    %v8690 = vpack.c.b16 %v8655, %v8650
    %v8691 = vpack.c.b16 %v8656, %v8651
    %v8692 = vpack.c.b16 %v8662, %v8657
    %v8693 = vpack.c.b16 %v8663, %v8658
    %v8694 = vpack.c.b16 %v8664, %v8659
    %v8695 = vpack.c.b16 %v8665, %v8660
    %v8696 = vpack.c.b16 %v8666, %v8661
    %v8697 = vpack.c.b16 %v8672, %v8667
    %v8698 = vpack.c.b16 %v8673, %v8668
    %v8699 = vpack.c.b16 %v8674, %v8669
    %v8700 = vpack.c.b16 %v8675, %v8670
    %v8701 = vpack.c.b16 %v8676, %v8671
    %v8702 = vpack.c.b16 %v8682, %v8677
    %v8703 = vpack.c.b16 %v8683, %v8678
    %v8704 = vpack.c.b16 %v8684, %v8679
    %v8705 = vpack.c.b16 %v8685, %v8680
    %v8706 = vpack.c.b16 %v8686, %v8681
    %v8728 = vsel %vm7216, %v8597, 0
    %8730 = vmatprep.subr.bf16.mxu0 0
    %8731 = vmatpush1.bf16.msra.mxu0 0
    %8732 = vmatprep.subr.bf16.mxu0 0
    %8733 = vmatpush1.bf16.msra.mxu0 0
    %8734 = vmatprep.subr.bf16.mxu0 0
    %8735 = vmatpush1.bf16.msra.mxu0 0
    %8736 = vmatprep.subr.bf16.mxu0 0
    %8737 = vmatpush1.bf16.msra.mxu0 0
    %8738 = vmatprep.subr.bf16.mxu0 %v8703
    %8739 = vmatpush1.bf16.msra.mxu0 %v8702
    %8740 = vmatprep.subr.bf16.mxu0 %v8698
    %8741 = vmatpush1.bf16.msra.mxu0 %v8697
    %8742 = vmatprep.subr.bf16.mxu0 %v8693
    %8743 = vmatpush1.bf16.msra.mxu0 %v8692
    %8744 = vmatprep.subr.bf16.mxu0 %v8688
    %8745 = vmatpush1.bf16.msra.mxu0 %v8687
    %8746 = vmatprep.subr.bf16.mxu0 0
    %8747 = vmatpush2.bf16.msra.mxu0 0
    %8748 = vmatprep.subr.bf16.mxu0 0
    %8749 = vmatpush2.bf16.msra.mxu0 0
    %8750 = vmatprep.subr.bf16.mxu0 0
    %8751 = vmatpush2.bf16.msra.mxu0 0
    %8752 = vmatprep.subr.bf16.mxu0 0
    %8753 = vmatpush2.bf16.msra.mxu0 0
    %8754 = vmatprep.subr.bf16.mxu0 0
    %8755 = vmatpush2.bf16.msra.mxu0 0
    %8756 = vmatprep.subr.bf16.mxu0 0
    %8757 = vmatpush2.bf16.msra.mxu0 0
    %8758 = vmatprep.subr.bf16.mxu0 0
    %8759 = vmatpush2.bf16.msra.mxu0 0
    %8760 = vmatprep.subr.bf16.mxu0 0
    %8761 = vmatpush2.bf16.msra.mxu0 0
    %8762 = vmatprep.mubr.bf16.mxu0 0
    %8763 = vmatmul.mubr.bf16.gmra.mxu0 %v8728
    %v8764 = vpop.f32.mrf.mxu0
    %v8765 = vadd.f32 0.0, %v8764
    %v8766 = vpop.f32.mrf.mxu0
    %v8767 = vadd.f32 0.0, %v8766
    %v8768 = vpop.f32.mrf.mxu0
    %v8769 = vpop.f32.mrf.mxu0
    %8770 = vdwg.mxu0
    %8771 = vmatprep.subr.bf16.mxu0 0
    %8772 = vmatpush1.bf16.msra.mxu0 0
    %8773 = vmatprep.subr.bf16.mxu0 0
    %8774 = vmatpush1.bf16.msra.mxu0 0
    %8775 = vmatprep.subr.bf16.mxu0 0
    %8776 = vmatpush1.bf16.msra.mxu0 0
    %8777 = vmatprep.subr.bf16.mxu0 0
    %8778 = vmatpush1.bf16.msra.mxu0 0
    %8779 = vmatprep.subr.bf16.mxu0 %v8705
    %8780 = vmatpush1.bf16.msra.mxu0 %v8704
    %8781 = vmatprep.subr.bf16.mxu0 %v8700
    %8782 = vmatpush1.bf16.msra.mxu0 %v8699
    %8783 = vmatprep.subr.bf16.mxu0 %v8695
    %8784 = vmatpush1.bf16.msra.mxu0 %v8694
    %8785 = vmatprep.subr.bf16.mxu0 %v8690
    %8786 = vmatpush1.bf16.msra.mxu0 %v8689
    %8787 = vmatprep.subr.bf16.mxu0 0
    %8788 = vmatpush2.bf16.msra.mxu0 0
    %8789 = vmatprep.subr.bf16.mxu0 0
    %8790 = vmatpush2.bf16.msra.mxu0 0
    %8791 = vmatprep.subr.bf16.mxu0 0
    %8792 = vmatpush2.bf16.msra.mxu0 0
    %8793 = vmatprep.subr.bf16.mxu0 0
    %8794 = vmatpush2.bf16.msra.mxu0 0
    %8795 = vmatprep.subr.bf16.mxu0 0
    %8796 = vmatpush2.bf16.msra.mxu0 0
    %8797 = vmatprep.subr.bf16.mxu0 0
    %8798 = vmatpush2.bf16.msra.mxu0 0
    %8799 = vmatprep.subr.bf16.mxu0 0
    %8800 = vmatpush2.bf16.msra.mxu0 0
    %8801 = vmatprep.subr.bf16.mxu0 0
    %8802 = vmatpush2.bf16.msra.mxu0 0
    %8803 = vmatprep.mubr.bf16.mxu0 0
    %8804 = vmatmul.mubr.bf16.gmra.mxu0 %v8728
    %v8805 = vpop.f32.mrf.mxu0
    %v8806 = vadd.f32 0.0, %v8805
    %v8807 = vpop.f32.mrf.mxu0
    %v8808 = vadd.f32 0.0, %v8807
    %v8809 = vpop.f32.mrf.mxu0
    %v8810 = vpop.f32.mrf.mxu0
    %8811 = vdwg.mxu0
    %8812 = vmatprep.subr.bf16.mxu0 0
    %8813 = vmatpush1.bf16.msra.mxu0 0
    %8814 = vmatprep.subr.bf16.mxu0 0
    %8815 = vmatpush1.bf16.msra.mxu0 0
    %8816 = vmatprep.subr.bf16.mxu0 0
    %8817 = vmatpush1.bf16.msra.mxu0 0
    %8818 = vmatprep.subr.bf16.mxu0 0
    %8819 = vmatpush1.bf16.msra.mxu0 0
    %8820 = vmatprep.subr.bf16.mxu0 0
    %8821 = vmatpush1.bf16.msra.mxu0 %v8706
    %8822 = vmatprep.subr.bf16.mxu0 0
    %8823 = vmatpush1.bf16.msra.mxu0 %v8701
    %8824 = vmatprep.subr.bf16.mxu0 0
    %8825 = vmatpush1.bf16.msra.mxu0 %v8696
    %8826 = vmatprep.subr.bf16.mxu0 0
    %8827 = vmatpush1.bf16.msra.mxu0 %v8691
    %8828 = vmatprep.subr.bf16.mxu0 0
    %8829 = vmatpush2.bf16.msra.mxu0 0
    %8830 = vmatprep.subr.bf16.mxu0 0
    %8831 = vmatpush2.bf16.msra.mxu0 0
    %8832 = vmatprep.subr.bf16.mxu0 0
    %8833 = vmatpush2.bf16.msra.mxu0 0
    %8834 = vmatprep.subr.bf16.mxu0 0
    %8835 = vmatpush2.bf16.msra.mxu0 0
    %8836 = vmatprep.subr.bf16.mxu0 0
    %8837 = vmatpush2.bf16.msra.mxu0 0
    %8838 = vmatprep.subr.bf16.mxu0 0
    %8839 = vmatpush2.bf16.msra.mxu0 0
    %8840 = vmatprep.subr.bf16.mxu0 0
    %8841 = vmatpush2.bf16.msra.mxu0 0
    %8842 = vmatprep.subr.bf16.mxu0 0
    %8843 = vmatpush2.bf16.msra.mxu0 0
    %8844 = vmatprep.mubr.bf16.mxu0 0
    %8845 = vmatmul.mubr.bf16.gmra.mxu0 %v8728
    %v8846 = vpop.f32.mrf.mxu0
    %v8847 = vadd.f32 0.0, %v8846
    %v8848 = vpop.f32.mrf.mxu0
    %v8849 = vpop.f32.mrf.mxu0
    %v8850 = vpop.f32.mrf.mxu0
    %8851 = vdwg.mxu0
    %v8857 = vcombine.low %v8765, %v8767
    %v8858 = vcombine.low %v8806, %v8808
    %v8860 = vunpack.c.l.s4 1966171168
    %v8861 = vunpack.c.0.s8 %v8860
    %v8862 = vlaneseq
    %v8863 = vshrl.u32 %v8862, 7
    %v8864 = vsub.s32 %v8861, %v8863
    %v8865 = vrot.slane %v8857, %v8864
    %v8867 = vunpack.c.l.s4 1966171168
    %v8868 = vunpack.c.0.s8 %v8867
    %v8869 = vlaneseq
    %v8870 = vshrl.u32 %v8869, 7
    %v8871 = vsub.s32 %v8868, %v8870
    %v8872 = vrot.slane %v8858, %v8871
    %v8874 = vunpack.c.l.s4 1966171168
    %v8875 = vunpack.c.0.s8 %v8874
    %v8876 = vlaneseq
    %v8877 = vshrl.u32 %v8876, 7
    %v8878 = vsub.s32 %v8875, %v8877
    %v8879 = vrot.slane %v8847, %v8878
    %v8880 = vcombine.low %v8865, %v8872
    %v8882 = vunpack.c.l.s4 1966171168
    %v8883 = vunpack.c.0.s8 %v8882
    %v8884 = vlaneseq
    %v8885 = vshrl.u32 %v8884, 7
    %v8886 = vsub.s32 %v8883, %v8885
    %v8887 = vrot.slane %v8880, %v8886
    %v8889 = vunpack.c.l.s4 1966171168
    %v8890 = vunpack.c.0.s8 %v8889
    %v8891 = vlaneseq
    %v8892 = vshrl.u32 %v8891, 7
    %v8893 = vsub.s32 %v8890, %v8892
    %v8894 = vrot.slane %v8879, %v8893
    %v8895 = vcombine.low %v8887, %v8894
    %v8897 = vadd.f32 %v8595, %v8895
    %v8898 = vld [vmem:[#allocation5 + $0x6] sm:$0x1]
    %v8899 = vpack.c.bf16 %v8898, %v8898
    %s8900 = scalar_lea.vmem [#allocation6], 960
    %v8901 = vld [vmem:[%s8900] sm:$0xff]
    %v8902 = vld [vmem:[%s8900 + $0x8] sm:$0xff]
    %v8903 = vld [vmem:[%s8900 + $0x10] sm:$0xf]
    %v8904 = vld [vmem:[%s8900 + $0x14] sm:$0xff]
    %v8905 = vld [vmem:[%s8900 + $0x1c] sm:$0xff]
    %v8906 = vld [vmem:[%s8900 + $0x24] sm:$0xf]
    %v8907 = vld [vmem:[%s8900 + $0x28] sm:$0xff]
    %v8908 = vld [vmem:[%s8900 + $0x30] sm:$0xff]
    %v8909 = vld [vmem:[%s8900 + $0x38] sm:$0xf]
    %v8910 = vld [vmem:[%s8900 + $0x3c] sm:$0xff]
    %v8911 = vld [vmem:[%s8900 + $0x44] sm:$0xff]
    %v8912 = vld [vmem:[%s8900 + $0x4c] sm:$0xf]
    %v8913 = vld [vmem:[%s8900 + $0x50] sm:$0xff]
    %v8914 = vld [vmem:[%s8900 + $0x58] sm:$0xff]
    %v8915 = vld [vmem:[%s8900 + $0x60] sm:$0xf]
    %v8916 = vld [vmem:[%s8900 + $0x64] sm:$0xff]
    %v8917 = vld [vmem:[%s8900 + $0x6c] sm:$0xff]
    %v8918 = vld [vmem:[%s8900 + $0x74] sm:$0xf]
    %v8919 = vld [vmem:[%s8900 + $0x78] sm:$0xff]
    %v8920 = vld [vmem:[%s8900 + $0x80] sm:$0xff]
    %v8921 = vld [vmem:[%s8900 + $0x88] sm:$0xf]
    %v8922 = vld [vmem:[%s8900 + $0x8c] sm:$0xff]
    %v8923 = vld [vmem:[%s8900 + $0x94] sm:$0xff]
    %v8924 = vld [vmem:[%s8900 + $0x9c] sm:$0xf]
    %v8949 = vunpack.c.l.b16 %v8901
    %v8950 = vunpack.c.h.b16 %v8901
    %v8951 = vunpack.c.l.b16 %v8902
    %v8952 = vunpack.c.h.b16 %v8902
    %v8953 = vunpack.c.l.b16 %v8903
    %v8954 = vunpack.c.l.b16 %v8904
    %v8955 = vunpack.c.h.b16 %v8904
    %v8956 = vunpack.c.l.b16 %v8905
    %v8957 = vunpack.c.h.b16 %v8905
    %v8958 = vunpack.c.l.b16 %v8906
    %v8959 = vunpack.c.l.b16 %v8907
    %v8960 = vunpack.c.h.b16 %v8907
    %v8961 = vunpack.c.l.b16 %v8908
    %v8962 = vunpack.c.h.b16 %v8908
    %v8963 = vunpack.c.l.b16 %v8909
    %v8964 = vunpack.c.l.b16 %v8910
    %v8965 = vunpack.c.h.b16 %v8910
    %v8966 = vunpack.c.l.b16 %v8911
    %v8967 = vunpack.c.h.b16 %v8911
    %v8968 = vunpack.c.l.b16 %v8912
    %v8969 = vunpack.c.l.b16 %v8913
    %v8970 = vunpack.c.h.b16 %v8913
    %v8971 = vunpack.c.l.b16 %v8914
    %v8972 = vunpack.c.h.b16 %v8914
    %v8973 = vunpack.c.l.b16 %v8915
    %v8974 = vunpack.c.l.b16 %v8916
    %v8975 = vunpack.c.h.b16 %v8916
    %v8976 = vunpack.c.l.b16 %v8917
    %v8977 = vunpack.c.h.b16 %v8917
    %v8978 = vunpack.c.l.b16 %v8918
    %v8979 = vunpack.c.l.b16 %v8919
    %v8980 = vunpack.c.h.b16 %v8919
    %v8981 = vunpack.c.l.b16 %v8920
    %v8982 = vunpack.c.h.b16 %v8920
    %v8983 = vunpack.c.l.b16 %v8921
    %v8984 = vunpack.c.l.b16 %v8922
    %v8985 = vunpack.c.h.b16 %v8922
    %v8986 = vunpack.c.l.b16 %v8923
    %v8987 = vunpack.c.h.b16 %v8923
    %v8988 = vunpack.c.l.b16 %v8924
    %v8989 = vpack.c.b16 %v8954, %v8949
    %v8990 = vpack.c.b16 %v8955, %v8950
    %v8991 = vpack.c.b16 %v8956, %v8951
    %v8992 = vpack.c.b16 %v8957, %v8952
    %v8993 = vpack.c.b16 %v8958, %v8953
    %v8994 = vpack.c.b16 %v8964, %v8959
    %v8995 = vpack.c.b16 %v8965, %v8960
    %v8996 = vpack.c.b16 %v8966, %v8961
    %v8997 = vpack.c.b16 %v8967, %v8962
    %v8998 = vpack.c.b16 %v8968, %v8963
    %v8999 = vpack.c.b16 %v8974, %v8969
    %v9000 = vpack.c.b16 %v8975, %v8970
    %v9001 = vpack.c.b16 %v8976, %v8971
    %v9002 = vpack.c.b16 %v8977, %v8972
    %v9003 = vpack.c.b16 %v8978, %v8973
    %v9004 = vpack.c.b16 %v8984, %v8979
    %v9005 = vpack.c.b16 %v8985, %v8980
    %v9006 = vpack.c.b16 %v8986, %v8981
    %v9007 = vpack.c.b16 %v8987, %v8982
    %v9008 = vpack.c.b16 %v8988, %v8983
    %v9030 = vsel %vm7216, %v8899, 0
    %9032 = vmatprep.subr.bf16.mxu0 0
    %9033 = vmatpush1.bf16.msra.mxu0 0
    %9034 = vmatprep.subr.bf16.mxu0 0
    %9035 = vmatpush1.bf16.msra.mxu0 0
    %9036 = vmatprep.subr.bf16.mxu0 0
    %9037 = vmatpush1.bf16.msra.mxu0 0
    %9038 = vmatprep.subr.bf16.mxu0 0
    %9039 = vmatpush1.bf16.msra.mxu0 0
    %9040 = vmatprep.subr.bf16.mxu0 %v9005
    %9041 = vmatpush1.bf16.msra.mxu0 %v9004
    %9042 = vmatprep.subr.bf16.mxu0 %v9000
    %9043 = vmatpush1.bf16.msra.mxu0 %v8999
    %9044 = vmatprep.subr.bf16.mxu0 %v8995
    %9045 = vmatpush1.bf16.msra.mxu0 %v8994
    %9046 = vmatprep.subr.bf16.mxu0 %v8990
    %9047 = vmatpush1.bf16.msra.mxu0 %v8989
    %9048 = vmatprep.subr.bf16.mxu0 0
    %9049 = vmatpush2.bf16.msra.mxu0 0
    %9050 = vmatprep.subr.bf16.mxu0 0
    %9051 = vmatpush2.bf16.msra.mxu0 0
    %9052 = vmatprep.subr.bf16.mxu0 0
    %9053 = vmatpush2.bf16.msra.mxu0 0
    %9054 = vmatprep.subr.bf16.mxu0 0
    %9055 = vmatpush2.bf16.msra.mxu0 0
    %9056 = vmatprep.subr.bf16.mxu0 0
    %9057 = vmatpush2.bf16.msra.mxu0 0
    %9058 = vmatprep.subr.bf16.mxu0 0
    %9059 = vmatpush2.bf16.msra.mxu0 0
    %9060 = vmatprep.subr.bf16.mxu0 0
    %9061 = vmatpush2.bf16.msra.mxu0 0
    %9062 = vmatprep.subr.bf16.mxu0 0
    %9063 = vmatpush2.bf16.msra.mxu0 0
    %9064 = vmatprep.mubr.bf16.mxu0 0
    %9065 = vmatmul.mubr.bf16.gmra.mxu0 %v9030
    %v9066 = vpop.f32.mrf.mxu0
    %v9067 = vadd.f32 0.0, %v9066
    %v9068 = vpop.f32.mrf.mxu0
    %v9069 = vadd.f32 0.0, %v9068
    %v9070 = vpop.f32.mrf.mxu0
    %v9071 = vpop.f32.mrf.mxu0
    %9072 = vdwg.mxu0
    %9073 = vmatprep.subr.bf16.mxu0 0
    %9074 = vmatpush1.bf16.msra.mxu0 0
    %9075 = vmatprep.subr.bf16.mxu0 0
    %9076 = vmatpush1.bf16.msra.mxu0 0
    %9077 = vmatprep.subr.bf16.mxu0 0
    %9078 = vmatpush1.bf16.msra.mxu0 0
    %9079 = vmatprep.subr.bf16.mxu0 0
    %9080 = vmatpush1.bf16.msra.mxu0 0
    %9081 = vmatprep.subr.bf16.mxu0 %v9007
    %9082 = vmatpush1.bf16.msra.mxu0 %v9006
    %9083 = vmatprep.subr.bf16.mxu0 %v9002
    %9084 = vmatpush1.bf16.msra.mxu0 %v9001
    %9085 = vmatprep.subr.bf16.mxu0 %v8997
    %9086 = vmatpush1.bf16.msra.mxu0 %v8996
    %9087 = vmatprep.subr.bf16.mxu0 %v8992
    %9088 = vmatpush1.bf16.msra.mxu0 %v8991
    %9089 = vmatprep.subr.bf16.mxu0 0
    %9090 = vmatpush2.bf16.msra.mxu0 0
    %9091 = vmatprep.subr.bf16.mxu0 0
    %9092 = vmatpush2.bf16.msra.mxu0 0
    %9093 = vmatprep.subr.bf16.mxu0 0
    %9094 = vmatpush2.bf16.msra.mxu0 0
    %9095 = vmatprep.subr.bf16.mxu0 0
    %9096 = vmatpush2.bf16.msra.mxu0 0
    %9097 = vmatprep.subr.bf16.mxu0 0
    %9098 = vmatpush2.bf16.msra.mxu0 0
    %9099 = vmatprep.subr.bf16.mxu0 0
    %9100 = vmatpush2.bf16.msra.mxu0 0
    %9101 = vmatprep.subr.bf16.mxu0 0
    %9102 = vmatpush2.bf16.msra.mxu0 0
    %9103 = vmatprep.subr.bf16.mxu0 0
    %9104 = vmatpush2.bf16.msra.mxu0 0
    %9105 = vmatprep.mubr.bf16.mxu0 0
    %9106 = vmatmul.mubr.bf16.gmra.mxu0 %v9030
    %v9107 = vpop.f32.mrf.mxu0
    %v9108 = vadd.f32 0.0, %v9107
    %v9109 = vpop.f32.mrf.mxu0
    %v9110 = vadd.f32 0.0, %v9109
    %v9111 = vpop.f32.mrf.mxu0
    %v9112 = vpop.f32.mrf.mxu0
    %9113 = vdwg.mxu0
    %9114 = vmatprep.subr.bf16.mxu0 0
    %9115 = vmatpush1.bf16.msra.mxu0 0
    %9116 = vmatprep.subr.bf16.mxu0 0
    %9117 = vmatpush1.bf16.msra.mxu0 0
    %9118 = vmatprep.subr.bf16.mxu0 0
    %9119 = vmatpush1.bf16.msra.mxu0 0
    %9120 = vmatprep.subr.bf16.mxu0 0
    %9121 = vmatpush1.bf16.msra.mxu0 0
    %9122 = vmatprep.subr.bf16.mxu0 0
    %9123 = vmatpush1.bf16.msra.mxu0 %v9008
    %9124 = vmatprep.subr.bf16.mxu0 0
    %9125 = vmatpush1.bf16.msra.mxu0 %v9003
    %9126 = vmatprep.subr.bf16.mxu0 0
    %9127 = vmatpush1.bf16.msra.mxu0 %v8998
    %9128 = vmatprep.subr.bf16.mxu0 0
    %9129 = vmatpush1.bf16.msra.mxu0 %v8993
    %9130 = vmatprep.subr.bf16.mxu0 0
    %9131 = vmatpush2.bf16.msra.mxu0 0
    %9132 = vmatprep.subr.bf16.mxu0 0
    %9133 = vmatpush2.bf16.msra.mxu0 0
    %9134 = vmatprep.subr.bf16.mxu0 0
    %9135 = vmatpush2.bf16.msra.mxu0 0
    %9136 = vmatprep.subr.bf16.mxu0 0
    %9137 = vmatpush2.bf16.msra.mxu0 0
    %9138 = vmatprep.subr.bf16.mxu0 0
    %9139 = vmatpush2.bf16.msra.mxu0 0
    %9140 = vmatprep.subr.bf16.mxu0 0
    %9141 = vmatpush2.bf16.msra.mxu0 0
    %9142 = vmatprep.subr.bf16.mxu0 0
    %9143 = vmatpush2.bf16.msra.mxu0 0
    %9144 = vmatprep.subr.bf16.mxu0 0
    %9145 = vmatpush2.bf16.msra.mxu0 0
    %9146 = vmatprep.mubr.bf16.mxu0 0
    %9147 = vmatmul.mubr.bf16.gmra.mxu0 %v9030
    %v9148 = vpop.f32.mrf.mxu0
    %v9149 = vadd.f32 0.0, %v9148
    %v9150 = vpop.f32.mrf.mxu0
    %v9151 = vpop.f32.mrf.mxu0
    %v9152 = vpop.f32.mrf.mxu0
    %9153 = vdwg.mxu0
    %v9159 = vcombine.low %v9067, %v9069
    %v9160 = vcombine.low %v9108, %v9110
    %v9162 = vunpack.c.l.s4 1966171168
    %v9163 = vunpack.c.0.s8 %v9162
    %v9164 = vlaneseq
    %v9165 = vshrl.u32 %v9164, 7
    %v9166 = vsub.s32 %v9163, %v9165
    %v9167 = vrot.slane %v9159, %v9166
    %v9169 = vunpack.c.l.s4 1966171168
    %v9170 = vunpack.c.0.s8 %v9169
    %v9171 = vlaneseq
    %v9172 = vshrl.u32 %v9171, 7
    %v9173 = vsub.s32 %v9170, %v9172
    %v9174 = vrot.slane %v9160, %v9173
    %v9176 = vunpack.c.l.s4 1966171168
    %v9177 = vunpack.c.0.s8 %v9176
    %v9178 = vlaneseq
    %v9179 = vshrl.u32 %v9178, 7
    %v9180 = vsub.s32 %v9177, %v9179
    %v9181 = vrot.slane %v9149, %v9180
    %v9182 = vcombine.low %v9167, %v9174
    %v9184 = vunpack.c.l.s4 1966171168
    %v9185 = vunpack.c.0.s8 %v9184
    %v9186 = vlaneseq
    %v9187 = vshrl.u32 %v9186, 7
    %v9188 = vsub.s32 %v9185, %v9187
    %v9189 = vrot.slane %v9182, %v9188
    %v9191 = vunpack.c.l.s4 1966171168
    %v9192 = vunpack.c.0.s8 %v9191
    %v9193 = vlaneseq
    %v9194 = vshrl.u32 %v9193, 7
    %v9195 = vsub.s32 %v9192, %v9194
    %v9196 = vrot.slane %v9181, %v9195
    %v9197 = vcombine.low %v9189, %v9196
    %v9199 = vadd.f32 %v8897, %v9197
    %v9200 = vld [vmem:[#allocation5 + $0x7] sm:$0x1]
    %v9201 = vpack.c.bf16 %v9200, %v9200
    %s9202 = scalar_lea.vmem [#allocation6], 1120
    %v9203 = vld [vmem:[%s9202] sm:$0xff]
    %v9204 = vld [vmem:[%s9202 + $0x8] sm:$0xff]
    %v9205 = vld [vmem:[%s9202 + $0x10] sm:$0xf]
    %v9206 = vld [vmem:[%s9202 + $0x14] sm:$0xff]
    %v9207 = vld [vmem:[%s9202 + $0x1c] sm:$0xff]
    %v9208 = vld [vmem:[%s9202 + $0x24] sm:$0xf]
    %v9209 = vld [vmem:[%s9202 + $0x28] sm:$0xff]
    %v9210 = vld [vmem:[%s9202 + $0x30] sm:$0xff]
    %v9211 = vld [vmem:[%s9202 + $0x38] sm:$0xf]
    %v9212 = vld [vmem:[%s9202 + $0x3c] sm:$0xff]
    %v9213 = vld [vmem:[%s9202 + $0x44] sm:$0xff]
    %v9214 = vld [vmem:[%s9202 + $0x4c] sm:$0xf]
    %v9215 = vld [vmem:[%s9202 + $0x50] sm:$0xff]
    %v9216 = vld [vmem:[%s9202 + $0x58] sm:$0xff]
    %v9217 = vld [vmem:[%s9202 + $0x60] sm:$0xf]
    %v9218 = vld [vmem:[%s9202 + $0x64] sm:$0xff]
    %v9219 = vld [vmem:[%s9202 + $0x6c] sm:$0xff]
    %v9220 = vld [vmem:[%s9202 + $0x74] sm:$0xf]
    %v9221 = vld [vmem:[%s9202 + $0x78] sm:$0xff]
    %v9222 = vld [vmem:[%s9202 + $0x80] sm:$0xff]
    %v9223 = vld [vmem:[%s9202 + $0x88] sm:$0xf]
    %v9224 = vld [vmem:[%s9202 + $0x8c] sm:$0xff]
    %v9225 = vld [vmem:[%s9202 + $0x94] sm:$0xff]
    %v9226 = vld [vmem:[%s9202 + $0x9c] sm:$0xf]
    %v9251 = vunpack.c.l.b16 %v9203
    %v9252 = vunpack.c.h.b16 %v9203
    %v9253 = vunpack.c.l.b16 %v9204
    %v9254 = vunpack.c.h.b16 %v9204
    %v9255 = vunpack.c.l.b16 %v9205
    %v9256 = vunpack.c.l.b16 %v9206
    %v9257 = vunpack.c.h.b16 %v9206
    %v9258 = vunpack.c.l.b16 %v9207
    %v9259 = vunpack.c.h.b16 %v9207
    %v9260 = vunpack.c.l.b16 %v9208
    %v9261 = vunpack.c.l.b16 %v9209
    %v9262 = vunpack.c.h.b16 %v9209
    %v9263 = vunpack.c.l.b16 %v9210
    %v9264 = vunpack.c.h.b16 %v9210
    %v9265 = vunpack.c.l.b16 %v9211
    %v9266 = vunpack.c.l.b16 %v9212
    %v9267 = vunpack.c.h.b16 %v9212
    %v9268 = vunpack.c.l.b16 %v9213
    %v9269 = vunpack.c.h.b16 %v9213
    %v9270 = vunpack.c.l.b16 %v9214
    %v9271 = vunpack.c.l.b16 %v9215
    %v9272 = vunpack.c.h.b16 %v9215
    %v9273 = vunpack.c.l.b16 %v9216
    %v9274 = vunpack.c.h.b16 %v9216
    %v9275 = vunpack.c.l.b16 %v9217
    %v9276 = vunpack.c.l.b16 %v9218
    %v9277 = vunpack.c.h.b16 %v9218
    %v9278 = vunpack.c.l.b16 %v9219
    %v9279 = vunpack.c.h.b16 %v9219
    %v9280 = vunpack.c.l.b16 %v9220
    %v9281 = vunpack.c.l.b16 %v9221
    %v9282 = vunpack.c.h.b16 %v9221
    %v9283 = vunpack.c.l.b16 %v9222
    %v9284 = vunpack.c.h.b16 %v9222
    %v9285 = vunpack.c.l.b16 %v9223
    %v9286 = vunpack.c.l.b16 %v9224
    %v9287 = vunpack.c.h.b16 %v9224
    %v9288 = vunpack.c.l.b16 %v9225
    %v9289 = vunpack.c.h.b16 %v9225
    %v9290 = vunpack.c.l.b16 %v9226
    %v9291 = vpack.c.b16 %v9256, %v9251
    %v9292 = vpack.c.b16 %v9257, %v9252
    %v9293 = vpack.c.b16 %v9258, %v9253
    %v9294 = vpack.c.b16 %v9259, %v9254
    %v9295 = vpack.c.b16 %v9260, %v9255
    %v9296 = vpack.c.b16 %v9266, %v9261
    %v9297 = vpack.c.b16 %v9267, %v9262
    %v9298 = vpack.c.b16 %v9268, %v9263
    %v9299 = vpack.c.b16 %v9269, %v9264
    %v9300 = vpack.c.b16 %v9270, %v9265
    %v9301 = vpack.c.b16 %v9276, %v9271
    %v9302 = vpack.c.b16 %v9277, %v9272
    %v9303 = vpack.c.b16 %v9278, %v9273
    %v9304 = vpack.c.b16 %v9279, %v9274
    %v9305 = vpack.c.b16 %v9280, %v9275
    %v9306 = vpack.c.b16 %v9286, %v9281
    %v9307 = vpack.c.b16 %v9287, %v9282
    %v9308 = vpack.c.b16 %v9288, %v9283
    %v9309 = vpack.c.b16 %v9289, %v9284
    %v9310 = vpack.c.b16 %v9290, %v9285
    %v9332 = vsel %vm7216, %v9201, 0
    %9334 = vmatprep.subr.bf16.mxu0 0
    %9335 = vmatpush1.bf16.msra.mxu0 0
    %9336 = vmatprep.subr.bf16.mxu0 0
    %9337 = vmatpush1.bf16.msra.mxu0 0
    %9338 = vmatprep.subr.bf16.mxu0 0
    %9339 = vmatpush1.bf16.msra.mxu0 0
    %9340 = vmatprep.subr.bf16.mxu0 0
    %9341 = vmatpush1.bf16.msra.mxu0 0
    %9342 = vmatprep.subr.bf16.mxu0 %v9307
    %9343 = vmatpush1.bf16.msra.mxu0 %v9306
    %9344 = vmatprep.subr.bf16.mxu0 %v9302
    %9345 = vmatpush1.bf16.msra.mxu0 %v9301
    %9346 = vmatprep.subr.bf16.mxu0 %v9297
    %9347 = vmatpush1.bf16.msra.mxu0 %v9296
    %9348 = vmatprep.subr.bf16.mxu0 %v9292
    %9349 = vmatpush1.bf16.msra.mxu0 %v9291
    %9350 = vmatprep.subr.bf16.mxu0 0
    %9351 = vmatpush2.bf16.msra.mxu0 0
    %9352 = vmatprep.subr.bf16.mxu0 0
    %9353 = vmatpush2.bf16.msra.mxu0 0
    %9354 = vmatprep.subr.bf16.mxu0 0
    %9355 = vmatpush2.bf16.msra.mxu0 0
    %9356 = vmatprep.subr.bf16.mxu0 0
    %9357 = vmatpush2.bf16.msra.mxu0 0
    %9358 = vmatprep.subr.bf16.mxu0 0
    %9359 = vmatpush2.bf16.msra.mxu0 0
    %9360 = vmatprep.subr.bf16.mxu0 0
    %9361 = vmatpush2.bf16.msra.mxu0 0
    %9362 = vmatprep.subr.bf16.mxu0 0
    %9363 = vmatpush2.bf16.msra.mxu0 0
    %9364 = vmatprep.subr.bf16.mxu0 0
    %9365 = vmatpush2.bf16.msra.mxu0 0
    %9366 = vmatprep.mubr.bf16.mxu0 0
    %9367 = vmatmul.mubr.bf16.gmra.mxu0 %v9332
    %v9368 = vpop.f32.mrf.mxu0
    %v9369 = vadd.f32 0.0, %v9368
    %v9370 = vpop.f32.mrf.mxu0
    %v9371 = vadd.f32 0.0, %v9370
    %v9372 = vpop.f32.mrf.mxu0
    %v9373 = vpop.f32.mrf.mxu0
    %9374 = vdwg.mxu0
    %9375 = vmatprep.subr.bf16.mxu0 0
    %9376 = vmatpush1.bf16.msra.mxu0 0
    %9377 = vmatprep.subr.bf16.mxu0 0
    %9378 = vmatpush1.bf16.msra.mxu0 0
    %9379 = vmatprep.subr.bf16.mxu0 0
    %9380 = vmatpush1.bf16.msra.mxu0 0
    %9381 = vmatprep.subr.bf16.mxu0 0
    %9382 = vmatpush1.bf16.msra.mxu0 0
    %9383 = vmatprep.subr.bf16.mxu0 %v9309
    %9384 = vmatpush1.bf16.msra.mxu0 %v9308
    %9385 = vmatprep.subr.bf16.mxu0 %v9304
    %9386 = vmatpush1.bf16.msra.mxu0 %v9303
    %9387 = vmatprep.subr.bf16.mxu0 %v9299
    %9388 = vmatpush1.bf16.msra.mxu0 %v9298
    %9389 = vmatprep.subr.bf16.mxu0 %v9294
    %9390 = vmatpush1.bf16.msra.mxu0 %v9293
    %9391 = vmatprep.subr.bf16.mxu0 0
    %9392 = vmatpush2.bf16.msra.mxu0 0
    %9393 = vmatprep.subr.bf16.mxu0 0
    %9394 = vmatpush2.bf16.msra.mxu0 0
    %9395 = vmatprep.subr.bf16.mxu0 0
    %9396 = vmatpush2.bf16.msra.mxu0 0
    %9397 = vmatprep.subr.bf16.mxu0 0
    %9398 = vmatpush2.bf16.msra.mxu0 0
    %9399 = vmatprep.subr.bf16.mxu0 0
    %9400 = vmatpush2.bf16.msra.mxu0 0
    %9401 = vmatprep.subr.bf16.mxu0 0
    %9402 = vmatpush2.bf16.msra.mxu0 0
    %9403 = vmatprep.subr.bf16.mxu0 0
    %9404 = vmatpush2.bf16.msra.mxu0 0
    %9405 = vmatprep.subr.bf16.mxu0 0
    %9406 = vmatpush2.bf16.msra.mxu0 0
    %9407 = vmatprep.mubr.bf16.mxu0 0
    %9408 = vmatmul.mubr.bf16.gmra.mxu0 %v9332
    %v9409 = vpop.f32.mrf.mxu0
    %v9410 = vadd.f32 0.0, %v9409
    %v9411 = vpop.f32.mrf.mxu0
    %v9412 = vadd.f32 0.0, %v9411
    %v9413 = vpop.f32.mrf.mxu0
    %v9414 = vpop.f32.mrf.mxu0
    %9415 = vdwg.mxu0
    %9416 = vmatprep.subr.bf16.mxu0 0
    %9417 = vmatpush1.bf16.msra.mxu0 0
    %9418 = vmatprep.subr.bf16.mxu0 0
    %9419 = vmatpush1.bf16.msra.mxu0 0
    %9420 = vmatprep.subr.bf16.mxu0 0
    %9421 = vmatpush1.bf16.msra.mxu0 0
    %9422 = vmatprep.subr.bf16.mxu0 0
    %9423 = vmatpush1.bf16.msra.mxu0 0
    %9424 = vmatprep.subr.bf16.mxu0 0
    %9425 = vmatpush1.bf16.msra.mxu0 %v9310
    %9426 = vmatprep.subr.bf16.mxu0 0
    %9427 = vmatpush1.bf16.msra.mxu0 %v9305
    %9428 = vmatprep.subr.bf16.mxu0 0
    %9429 = vmatpush1.bf16.msra.mxu0 %v9300
    %9430 = vmatprep.subr.bf16.mxu0 0
    %9431 = vmatpush1.bf16.msra.mxu0 %v9295
    %9432 = vmatprep.subr.bf16.mxu0 0
    %9433 = vmatpush2.bf16.msra.mxu0 0
    %9434 = vmatprep.subr.bf16.mxu0 0
    %9435 = vmatpush2.bf16.msra.mxu0 0
    %9436 = vmatprep.subr.bf16.mxu0 0
    %9437 = vmatpush2.bf16.msra.mxu0 0
    %9438 = vmatprep.subr.bf16.mxu0 0
    %9439 = vmatpush2.bf16.msra.mxu0 0
    %9440 = vmatprep.subr.bf16.mxu0 0
    %9441 = vmatpush2.bf16.msra.mxu0 0
    %9442 = vmatprep.subr.bf16.mxu0 0
    %9443 = vmatpush2.bf16.msra.mxu0 0
    %9444 = vmatprep.subr.bf16.mxu0 0
    %9445 = vmatpush2.bf16.msra.mxu0 0
    %9446 = vmatprep.subr.bf16.mxu0 0
    %9447 = vmatpush2.bf16.msra.mxu0 0
    %9448 = vmatprep.mubr.bf16.mxu0 0
    %9449 = vmatmul.mubr.bf16.gmra.mxu0 %v9332
    %v9450 = vpop.f32.mrf.mxu0
    %v9451 = vadd.f32 0.0, %v9450
    %v9452 = vpop.f32.mrf.mxu0
    %v9453 = vpop.f32.mrf.mxu0
    %v9454 = vpop.f32.mrf.mxu0
    %9455 = vdwg.mxu0
    %v9461 = vcombine.low %v9369, %v9371
    %v9462 = vcombine.low %v9410, %v9412
    %v9464 = vunpack.c.l.s4 1966171168
    %v9465 = vunpack.c.0.s8 %v9464
    %v9466 = vlaneseq
    %v9467 = vshrl.u32 %v9466, 7
    %v9468 = vsub.s32 %v9465, %v9467
    %v9469 = vrot.slane %v9461, %v9468
    %v9471 = vunpack.c.l.s4 1966171168
    %v9472 = vunpack.c.0.s8 %v9471
    %v9473 = vlaneseq
    %v9474 = vshrl.u32 %v9473, 7
    %v9475 = vsub.s32 %v9472, %v9474
    %v9476 = vrot.slane %v9462, %v9475
    %v9478 = vunpack.c.l.s4 1966171168
    %v9479 = vunpack.c.0.s8 %v9478
    %v9480 = vlaneseq
    %v9481 = vshrl.u32 %v9480, 7
    %v9482 = vsub.s32 %v9479, %v9481
    %v9483 = vrot.slane %v9451, %v9482
    %v9484 = vcombine.low %v9469, %v9476
    %v9486 = vunpack.c.l.s4 1966171168
    %v9487 = vunpack.c.0.s8 %v9486
    %v9488 = vlaneseq
    %v9489 = vshrl.u32 %v9488, 7
    %v9490 = vsub.s32 %v9487, %v9489
    %v9491 = vrot.slane %v9484, %v9490
    %v9493 = vunpack.c.l.s4 1966171168
    %v9494 = vunpack.c.0.s8 %v9493
    %v9495 = vlaneseq
    %v9496 = vshrl.u32 %v9495, 7
    %v9497 = vsub.s32 %v9494, %v9496
    %v9498 = vrot.slane %v9483, %v9497
    %v9499 = vcombine.low %v9491, %v9498
    %v9501 = vadd.f32 %v9199, %v9499
    %v9502 = vlaneseq
    %vm9503 = vcmp.ge.s32.totalorder %v9502, 0
    %vm9504 = vcmp.lt.s32.totalorder %v9502, 640
    %vm9505 = vmand %vm9503, %vm9504
    %9506 = vst.msk [vmem:[%s12] sm:$0x1f] %vm9505, %v9501
    // Predicated region
    $region54: #{forward.1} parent=1 // pred_check
      _
    $region55: #{forward.1} parent=1 // pred_check_branch
      %9508 = sbr.rel (0) target = $region57
    $region56: #{forward.1} parent=1 // pred_region
      _
    $region57: #{forward.1} parent=1 // pred_fallthru
      _
    // Predicated region
    $region58: #{forward.1} parent=1 // pred_check
      _
    $region59: #{forward.1} parent=1 // pred_check_branch
      %9510 = sbr.rel (0) target = $region61
    $region60: #{forward.1} parent=1 // pred_region
      _
    $region61: #{forward.1} parent=1 // pred_fallthru
      _
    %9511 = vsyncpa [#allocation7], 1

</llo_original>
